<compile_context>
chip_gen: v7x
topology: tpu7x:2x2x1
jax: 0.10.0
libtpu: 0.0.40
codegen_flags: <defaults>
</compile_context>

<pallas_src>
import functools
import math

import jax
import jax.numpy as jnp
from jax import lax
from jax.experimental import pallas as pl
from jax.experimental.pallas import tpu as pltpu

LANE = 128


def _rup(x, m=LANE):
    return ((x + m - 1) // m) * m


def _vmem_limit_bytes():
    try:
        info = pltpu.get_tpu_info()
        cap = int(getattr(info, "vmem_capacity_bytes", 128 * 1024 * 1024))
    except Exception:
        cap = 128 * 1024 * 1024
    # leave headroom: ~half of physical VMEM, clamped to [32, 96] MiB
    return int(min(96 * 1024 * 1024, max(32 * 1024 * 1024, cap // 2)))


_VMEM_LIMIT = _vmem_limit_bytes()


# ----------------------------------------------------------------------------
# In-kernel helpers
# ----------------------------------------------------------------------------
def _swish(y):  # relu_fn(x) = x * sigmoid(x); exact reciprocal (EUP-resident)
    return y * pl.reciprocal(1.0 + jnp.exp(-y), approx=False)


def _zero_border(pad_ref, H, W):
    """Zero only the 1-pixel halo of a (H+2, W+2, C) VMEM scratch.  Done every
    grid step (cheap) so correctness does not depend on grid sharding."""
    C = pad_ref.shape[2]
    zrow = jnp.zeros((1, W + 2, C), pad_ref.dtype)
    pad_ref[0:1, :, :] = zrow
    pad_ref[H + 1:H + 2, :, :] = zrow
    zcol = jnp.zeros((H, 1, C), pad_ref.dtype)
    pad_ref[1:H + 1, 0:1, :] = zcol
    pad_ref[1:H + 1, W + 1:W + 2, :] = zcol


def _conv3x3_taps(pad_ref, w_ref, Ho, Wo, stride):
    """Fused im2col: 9 shifted-window matmuls accumulated in f32.
    pad_ref: (H+2, W+2, Cin) zero-haloed scratch; w_ref: (9, Cin, Cout)."""
    Cin = pad_ref.shape[-1]
    Cout = w_ref.shape[-1]
    acc = jnp.zeros((Ho * Wo, Cout), jnp.float32)
    for kh in range(3):
        for kw in range(3):
            if stride == 1:
                win = pad_ref[kh:kh + Ho, kw:kw + Wo, :]
            else:
                win = pad_ref[pl.ds(kh, Ho, stride=stride),
                              pl.ds(kw, Wo, stride=stride), :]
            acc = acc + jnp.dot(win.reshape(Ho * Wo, Cin), w_ref[kh * 3 + kw],
                                preferred_element_type=jnp.float32)
    return acc


def _bneck_down(x_ref, wb, pad_ref, stride):
    """Bottleneck with stride + 1x1 downsample residual.  Returns f32 2-D out."""
    (w1, s1, b1, w2, s2, b2, w3, s3, b3, wd, sd, bd) = wb
    H, W, Cin = x_ref.shape
    P = w1.shape[1]
    Cout = w3.shape[1]
    Ho = (H - 1) // stride + 1
    Wo = (W - 1) // stride + 1

    x2d = x_ref[...].reshape(H * W, Cin)
    y1 = jnp.dot(x2d, w1[...], preferred_element_type=jnp.float32)
    y1 = jnp.maximum(y1 * s1[...] + b1[...], 0.0)

    _zero_border(pad_ref, H, W)
    pad_ref[1:H + 1, 1:W + 1, :] = y1.reshape(H, W, P).astype(pad_ref.dtype)

    acc = _conv3x3_taps(pad_ref, w2, Ho, Wo, stride)
    y2 = jnp.maximum(acc * s2[...] + b2[...], 0.0).astype(jnp.bfloat16)

    y3 = jnp.dot(y2, w3[...], preferred_element_type=jnp.float32)
    y3 = y3 * s3[...] + b3[...]

    xs = x_ref[pl.ds(0, Ho, stride=stride), pl.ds(0, Wo, stride=stride), :]
    res = jnp.dot(xs.reshape(Ho * Wo, Cin), wd[...],
                  preferred_element_type=jnp.float32)
    res = res * sd[...] + bd[...]

    return jnp.maximum(y3 + res, 0.0), Ho, Wo, Cout


def _bneck_id(x, wb, pad_ref):
    """Bottleneck with identity residual (stride 1, Cin == Cout)."""
    (w1, s1, b1, w2, s2, b2, w3, s3, b3) = wb
    H, W, Cin = x.shape
    P = w1.shape[1]
    Cout = w3.shape[1]

    x2d = x.reshape(H * W, Cin)
    y1 = jnp.dot(x2d, w1[...], preferred_element_type=jnp.float32)
    y1 = jnp.maximum(y1 * s1[...] + b1[...], 0.0)

    _zero_border(pad_ref, H, W)
    pad_ref[1:H + 1, 1:W + 1, :] = y1.reshape(H, W, P).astype(pad_ref.dtype)

    acc = _conv3x3_taps(pad_ref, w2, H, W, 1)
    y2 = jnp.maximum(acc * s2[...] + b2[...], 0.0).astype(jnp.bfloat16)

    y3 = jnp.dot(y2, w3[...], preferred_element_type=jnp.float32)
    y3 = y3 * s3[...] + b3[...]
    return jnp.maximum(y3 + x2d.astype(jnp.float32), 0.0)   # (H*W, Cout) f32


# ----------------------------------------------------------------------------
# Pallas kernels
# ----------------------------------------------------------------------------
def _chain_kernel(x_ref, *refs, n_stages):
    """Fused stem (as a single im2col matmul) + layer1..layer4:
    n_stages x [1x1 matmul + folded-BN + swish] on a (tm, 128) row tile."""
    o_ref = refs[-1]
    y = x_ref[...]
    for i in range(n_stages):
        w, s, b = refs[3 * i], refs[3 * i + 1], refs[3 * i + 2]
        t = jnp.dot(y, w[...], preferred_element_type=jnp.float32)
        y = _swish(t * s[...] + b[...]).astype(jnp.bfloat16)
    o_ref[...] = y


def _stage_kernel(*refs, stride0, emit_full):
    """One whole residual stage (conv5 or conv6): Bottleneck(stride=2,
    downsample) -> Bottleneck(identity), with fused global-avg-pool epilogue.
    When emit_full is False only the pooled vector is written (no HBM map)."""
    x_ref = refs[0]
    b0 = refs[1:13]     # w1,s1,b1,w2,s2,b2,w3,s3,b3,wd,sd,bd
    b1 = refs[13:22]    # w1,s1,b1,w2,s2,b2,w3,s3,b3
    if emit_full:
        o_ref, p_ref, pad0_ref, pad1_ref = refs[22:26]
    else:
        p_ref, pad0_ref, pad1_ref = refs[22:25]
        o_ref = None

    y0, Ho, Wo, Cmid = _bneck_down(x_ref, b0, pad0_ref, stride0)
    x1 = y0.reshape(Ho, Wo, Cmid).astype(jnp.bfloat16)
    y1 = _bneck_id(x1, b1, pad1_ref)                       # (Ho*Wo, Cout) f32
    Cout = b1[6].shape[1]

    if emit_full:
        o_ref[...] = y1.reshape(Ho, Wo, Cout).astype(o_ref.dtype)
    # fused AdaptiveAvgPool2d(1) epilogue
    p_ref[...] = jnp.mean(y1, axis=0, keepdims=True).reshape(1, 1, Cout)


def _adv_pool_kernel(x_ref, w3_ref, s3_ref, b3_ref, w1_ref, s1_ref, b1_ref,
                     p_ref, pad_ref):
    """layer4_adv + pool fused: 3x3 conv + BN -> 1x1 conv (+bias) -> ReLU
       -> global average pool."""
    H, W, C = x_ref.shape
    Cout = w1_ref.shape[1]

    _zero_border(pad_ref, H, W)
    pad_ref[1:H + 1, 1:W + 1, :] = x_ref[...]

    acc = _conv3x3_taps(pad_ref, w3_ref, H, W, 1)
    y = (acc * s3_ref[...] + b3_ref[...]).astype(jnp.bfloat16)   # BN, no act
    z = jnp.dot(y, w1_ref[...], preferred_element_type=jnp.float32)
    z = jnp.maximum(z * s1_ref[...] + b1_ref[...], 0.0)          # bias + ReLU
    p_ref[...] = jnp.mean(z, axis=0, keepdims=True).reshape(1, 1, Cout)


def _fc_kernel(x_ref, w1_ref, b1_ref, w2_ref, b2_ref, o_ref):
    """fc head: Linear -> ReLU -> Linear, fused.  Dropout = identity (eval)."""
    h = jnp.dot(x_ref[...], w1_ref[...], preferred_element_type=jnp.float32)
    h = jnp.maximum(h + b1_ref[...], 0.0).astype(jnp.bfloat16)
    o = jnp.dot(h, w2_ref[...], preferred_element_type=jnp.float32) + b2_ref[...]
    o_ref[...] = o


# ----------------------------------------------------------------------------
# pallas_call wrappers
# ----------------------------------------------------------------------------
def _bcast_spec(a):
    nd = a.ndim

    def idx(*_):
        return (0,) * nd

    return pl.BlockSpec(a.shape, idx)


def chain_call(stages, xm):
    """Fused stem + layer1..layer4 (five matmul + BN + swish stages)."""
    M, C = xm.shape
    tm = M
    for cand in (1024, 512, 256, 128, 64, 32, 16, 8):
        if M % cand == 0:
            tm = cand
            break
    Cout = stages[-1][0].shape[1]

    in_specs = [pl.BlockSpec((tm, C), lambda i: (i, 0))]
    args = [xm]
    for (w, s, b) in stages:
        in_specs += [_bcast_spec(w), _bcast_spec(s), _bcast_spec(b)]
        args += [w, s, b]

    return pl.pallas_call(
        functools.partial(_chain_kernel, n_stages=len(stages)),
        grid=(M // tm,),
        in_specs=in_specs,
        out_specs=pl.BlockSpec((tm, Cout), lambda i: (i, 0)),
        out_shape=jax.ShapeDtypeStruct((M, Cout), jnp.bfloat16),
        compiler_params=pltpu.CompilerParams(
            dimension_semantics=("parallel",), vmem_limit_bytes=_VMEM_LIMIT),
    )(*args)


def stage_call(bp0, bp1, x, emit_full=True):
    """One residual stage (two Bottlenecks) per batch element, pool fused."""
    N, H, W, Cin = x.shape
    stride0 = bp0["stride"]
    assert stride0 == 2 and "wd" in bp0, "first block must downsample"
    assert bp1["stride"] == 1 and "wd" not in bp1, "second block is identity"
    # identity residual of the second block requires Cin == Cout
    assert bp1["w1"].shape[0] == bp1["w3"].shape[1]

    Ho = (H - 1) // stride0 + 1
    Wo = (W - 1) // stride0 + 1
    P0 = bp0["w1"].shape[1]
    P1 = bp1["w1"].shape[1]
    Cout = bp1["w3"].shape[1]

    keys0 = ("w1", "s1", "b1", "w2", "s2", "b2", "w3", "s3", "b3",
             "wd", "sd", "bd")
    keys1 = ("w1", "s1", "b1", "w2", "s2", "b2", "w3", "s3", "b3")
    in_specs = ([pl.BlockSpec((None, H, W, Cin), lambda n: (n, 0, 0, 0))]
                + [_bcast_spec(bp0[k]) for k in keys0]
                + [_bcast_spec(bp1[k]) for k in keys1])
    args = [x] + [bp0[k] for k in keys0] + [bp1[k] for k in keys1]

    pooled_spec = pl.BlockSpec((1, 1, Cout), lambda n: (n, 0, 0))
    pooled_shape = jax.ShapeDtypeStruct((N, 1, Cout), jnp.float32)
    if emit_full:
        out_specs = [pl.BlockSpec((None, Ho, Wo, Cout), lambda n: (n, 0, 0, 0)),
                     pooled_spec]
        out_shape = [jax.ShapeDtypeStruct((N, Ho, Wo, Cout), jnp.bfloat16),
                     pooled_shape]
    else:
        out_specs = [pooled_spec]
        out_shape = [pooled_shape]

    outs = pl.pallas_call(
        functools.partial(_stage_kernel, stride0=stride0, emit_full=emit_full),
        grid=(N,),
        in_specs=in_specs,
        out_specs=out_specs,
        out_shape=out_shape,
        scratch_shapes=[pltpu.VMEM((H + 2, W + 2, P0), jnp.bfloat16),
                        pltpu.VMEM((Ho + 2, Wo + 2, P1), jnp.bfloat16)],
        compiler_params=pltpu.CompilerParams(
            dimension_semantics=("parallel",), vmem_limit_bytes=_VMEM_LIMIT),
    )(*args)

    if emit_full:
        full, pooled = outs
        return full, pooled.reshape(N, Cout)
    (pooled,) = outs
    return pooled.reshape(N, Cout)


def adv_pool_call(ap, x):
    N, H, W, C = x.shape
    Cout = ap["w1"].shape[1]
    pooled = pl.pallas_call(
        _adv_pool_kernel,
        grid=(N,),
        in_specs=[pl.BlockSpec((None, H, W, C), lambda n: (n, 0, 0, 0)),
                  _bcast_spec(ap["w3"]), _bcast_spec(ap["s3"]), _bcast_spec(ap["b3"]),
                  _bcast_spec(ap["w1"]), _bcast_spec(ap["s1"]), _bcast_spec(ap["b1"])],
        out_specs=pl.BlockSpec((1, 1, Cout), lambda n: (n, 0, 0)),
        out_shape=jax.ShapeDtypeStruct((N, 1, Cout), jnp.float32),
        scratch_shapes=[pltpu.VMEM((H + 2, W + 2, C), jnp.bfloat16)],
        compiler_params=pltpu.CompilerParams(
            dimension_semantics=("parallel",), vmem_limit_bytes=_VMEM_LIMIT),
    )(x, ap["w3"], ap["s3"], ap["b3"], ap["w1"], ap["s1"], ap["b1"])
    return pooled.reshape(N, Cout)


def fc_call(fp, feat, num_classes):
    N, F = feat.shape
    Mp = max(8, _rup(N, 8))
    xp = jnp.zeros((Mp, F), jnp.bfloat16).at[:N, :].set(feat.astype(jnp.bfloat16))
    Np = fp["w2"].shape[1]
    out = pl.pallas_call(
        _fc_kernel,
        grid=(1,),
        in_specs=[_bcast_spec(xp), _bcast_spec(fp["w1"]), _bcast_spec(fp["b1"]),
                  _bcast_spec(fp["w2"]), _bcast_spec(fp["b2"])],
        out_specs=pl.BlockSpec((Mp, Np), lambda i: (0, 0)),
        out_shape=jax.ShapeDtypeStruct((Mp, Np), jnp.float32),
        compiler_params=pltpu.CompilerParams(vmem_limit_bytes=_VMEM_LIMIT),
    )(xp, fp["w1"], fp["b1"], fp["w2"], fp["b2"])
    return out[:N, :num_classes]


# ----------------------------------------------------------------------------
# Parameter construction (raw, PyTorch-like layouts) and one-time preparation
# (BN folding, channel padding to 128, bf16 cast).
# ----------------------------------------------------------------------------
class _Init:
    def __init__(self, key):
        self.key = key

    def normal(self, shape, scale=0.05):
        self.key, sub = jax.random.split(self.key)
        return scale * jax.random.normal(sub, shape, jnp.float32)


def make_params(n2=64, num_classes=6):
    g = _Init(jax.random.PRNGKey(0))

    def conv1x1_p(cin, cout, bias=True):
        return {"w": g.normal((cout, cin), 1.0 / math.sqrt(cin)),
                "b": g.normal((cout,), 0.01) if bias else None}

    def conv3x3_p(cin, cout, bias=True):
        return {"w": g.normal((cout, cin, 3, 3), 1.0 / math.sqrt(cin * 9)),
                "b": g.normal((cout,), 0.01) if bias else None}

    def bn_p(c):
        return {"gamma": 1.0 + g.normal((c,), 0.1),
                "beta": g.normal((c,), 0.05),
                "mean": g.normal((c,), 0.02),
                "var": 1.0 + jnp.abs(g.normal((c,), 0.1)),
                "eps": 1e-5}

    def bottleneck_p(cin, planes, expansion, stride=1, downsample=False):
        d = {"conv1": conv1x1_p(cin, planes), "bn1": bn_p(planes),
             "conv2": conv3x3_p(planes, planes), "bn2": bn_p(planes),
             "conv3": conv1x1_p(planes, planes * expansion),
             "bn3": bn_p(planes * expansion),
             "stride": stride}
        if downsample:
            d["down"] = {"conv": conv1x1_p(cin, planes * expansion),
                         "bn": bn_p(planes * expansion)}
        return d

    params = {
        # TODO(synk): EfficientNet backbone (model._conv_stem / _blocks /
        # _conv_head) is external to the given source; stand-in conv+BN+swish
        # stages with the same dataflow.
        "stem": conv3x3_p(3, 16, bias=False),
        "bn0": bn_p(16),
        "layer1": {"conv": conv1x1_p(16, 24), "bn": bn_p(24)},
        "layer2": {"conv": conv1x1_p(24, 40), "bn": bn_p(40)},
        "layer3": {"conv": conv1x1_p(40, 48), "bn": bn_p(48)},
        "layer4": {"conv": conv1x1_p(48, n2, bias=False), "bn": bn_p(n2)},
        "layer4_adv": {"conv3": conv3x3_p(n2, n2), "bn": bn_p(n2),
                       "conv1": conv1x1_p(n2, n2)},
        "conv5": [bottleneck_p(n2, 128, 2, stride=2, downsample=True),
                  bottleneck_p(256, 128, 2)],
        "conv6": [bottleneck_p(256, 64, 2, stride=2, downsample=True),
                  bottleneck_p(128, 64, 2)],
        "fc1": {"w": g.normal((512, n2 + 256 + 128), 1.0 / math.sqrt(n2 + 256 + 128)),
                "b": g.normal((512,), 0.01)},
        "fc2": {"w": g.normal((num_classes, 512), 1.0 / math.sqrt(512)),
                "b": g.normal((num_classes,), 0.01)},
    }
    return params


def _fold_bn(bias, bn, cout):
    if bn is None:
        scale = jnp.ones((cout,), jnp.float32)
        shift = bias if bias is not None else jnp.zeros((cout,), jnp.float32)
    else:
        scale = bn["gamma"] / jnp.sqrt(bn["var"] + bn["eps"])
        shift = bn["beta"] - bn["mean"] * scale
        if bias is not None:
            shift = shift + bias * scale
    return scale.astype(jnp.float32), shift.astype(jnp.float32)


def _pack_vec(v, n_p):
    return jnp.zeros((1, n_p), jnp.float32).at[0, :v.shape[0]].set(v)


def _pack_1x1(conv, bn, cin_p, cout_p):
    w = conv["w"]                                     # (cout, cin)
    cout, cin = w.shape
    scale, shift = _fold_bn(conv["b"], bn, cout)
    wp = jnp.zeros((cin_p, cout_p), jnp.float32).at[:cin, :cout].set(w.T)
    return wp.astype(jnp.bfloat16), _pack_vec(scale, cout_p), _pack_vec(shift, cout_p)


def _pack_3x3(conv, bn, cin_p, cout_p):
    """Tap-major layout (9, cin_p, cout_p) for in-kernel fused im2col."""
    w = conv["w"]                                     # (cout, cin, 3, 3)
    cout, cin = w.shape[0], w.shape[1]
    scale, shift = _fold_bn(conv["b"], bn, cout)
    wt = jnp.transpose(w, (2, 3, 1, 0)).reshape(9, cin, cout)
    wp = jnp.zeros((9, cin_p, cout_p), jnp.float32).at[:, :cin, :cout].set(wt)
    return wp.astype(jnp.bfloat16), _pack_vec(scale, cout_p), _pack_vec(shift, cout_p)


def _pack_3x3_im2col(conv, bn, kin_p, cout_p):
    """K-major layout (9*cin -> kin_p, cout_p): one matmul per 3x3 conv when
    the lhs is an im2col patch tensor ordered (kh, kw, cin)."""
    w = conv["w"]                                     # (cout, cin, 3, 3)
    cout, cin = w.shape[0], w.shape[1]
    assert 9 * cin <= kin_p
    scale, shift = _fold_bn(conv["b"], bn, cout)
    wt = jnp.transpose(w, (2, 3, 1, 0)).reshape(9 * cin, cout)
    wp = jnp.zeros((kin_p, cout_p), jnp.float32).at[:9 * cin, :cout].set(wt)
    return wp.astype(jnp.bfloat16), _pack_vec(scale, cout_p), _pack_vec(shift, cout_p)


def _prep_bottleneck(bp):
    cin = bp["conv1"]["w"].shape[1]
    planes = bp["conv1"]["w"].shape[0]
    cout = bp["conv3"]["w"].shape[0]
    cin_p, p_p, cout_p = _rup(cin), _rup(planes), _rup(cout)
    w1, s1, b1 = _pack_1x1(bp["conv1"], bp["bn1"], cin_p, p_p)
    w2, s2, b2 = _pack_3x3(bp["conv2"], bp["bn2"], p_p, p_p)
    w3, s3, b3 = _pack_1x1(bp["conv3"], bp["bn3"], p_p, cout_p)
    out = dict(w1=w1, s1=s1, b1=b1, w2=w2, s2=s2, b2=b2, w3=w3, s3=s3, b3=b3,
               stride=bp["stride"])
    if "down" in bp:
        wd, sd, bd = _pack_1x1(bp["down"]["conv"], bp["down"]["bn"], cin_p, cout_p)
        out.update(wd=wd, sd=sd, bd=bd)
    return out


def prepare_params(params, n2=64, num_classes=6):
    prep = {}
    # stem packed for wrapper-side im2col: K = 9*3 = 27 real of 128 lanes
    stem = _pack_3x3_im2col(params["stem"], params["bn0"], LANE, _rup(16))

    # fused chain = stem stage + layer1..layer4 (all (128,128) matmuls)
    chain = [stem]
    for name in ("layer1", "layer2", "layer3", "layer4"):
        blk = params[name]
        cin = blk["conv"]["w"].shape[1]
        cout = blk["conv"]["w"].shape[0]
        chain.append(_pack_1x1(blk["conv"], blk["bn"], _rup(cin), _rup(cout)))
    prep["chain"] = chain

    a = params["layer4_adv"]
    w3, s3, b3 = _pack_3x3(a["conv3"], a["bn"], _rup(n2), _rup(n2))
    w1, s1, b1 = _pack_1x1(a["conv1"], None, _rup(n2), _rup(n2))
    prep["adv"] = dict(w3=w3, s3=s3, b3=b3, w1=w1, s1=s1, b1=b1)

    prep["conv5"] = [_prep_bottleneck(bp) for bp in params["conv5"]]
    prep["conv6"] = [_prep_bottleneck(bp) for bp in params["conv6"]]

    # fc head: real input layout [n2 | 256 | 128] scattered into the padded
    # pooled-feature layout [n2_p | 256 | 128] (zero rows for padded lanes).
    n2_p = _rup(n2)
    fin_p = n2_p + 256 + 128
    w1r, b1r = params["fc1"]["w"], params["fc1"]["b"]        # (512, n2+384), (512,)
    hid = w1r.shape[0]
    w1p = jnp.zeros((fin_p, hid), jnp.float32)
    w1p = w1p.at[:n2, :].set(w1r[:, :n2].T)
    w1p = w1p.at[n2_p:n2_p + 256, :].set(w1r[:, n2:n2 + 256].T)
    w1p = w1p.at[n2_p + 256:, :].set(w1r[:, n2 + 256:].T)
    w2r, b2r = params["fc2"]["w"], params["fc2"]["b"]        # (nc, 512), (nc,)
    nc_p = _rup(num_classes)
    w2p = jnp.zeros((hid, nc_p), jnp.float32).at[:, :num_classes].set(w2r.T)
    prep["fc"] = dict(w1=w1p.astype(jnp.bfloat16),
                      b1=b1r.reshape(1, hid).astype(jnp.float32),
                      w2=w2p.astype(jnp.bfloat16),
                      b2=_pack_vec(b2r, nc_p))
    return prep


# ----------------------------------------------------------------------------
# Forward pass (mirrors multiScale_Bx.forward; inference mode)
# ----------------------------------------------------------------------------
def multiscale_bx_forward(prep, x_nchw, num_classes=6):
    N, Cin, H, W = x_nchw.shape
    Ho = (H - 1) // 2 + 1
    Wo = (W - 1) // 2 + 1
    assert 9 * Cin <= LANE

    # One-time layout transform: NCHW -> NHWC, spatial pad 1, im2col of the
    # stride-2 3x3 stem (taps packed along channels in (kh, kw, cin) order),
    # zero-pad the 27-wide K axis to 128 lanes, cast to bf16.  The stem then
    # becomes a single matmul fused into the chain kernel.
    x = jnp.transpose(x_nchw, (0, 2, 3, 1)).astype(jnp.float32)
    xp = jnp.pad(x, ((0, 0), (1, 1), (1, 1), (0, 0)))
    taps = []
    for kh in range(3):
        for kw in range(3):
            taps.append(xp[:, kh:kh + 2 * Ho - 1:2, kw:kw + 2 * Wo - 1:2, :])
    xim = jnp.concatenate(taps, axis=-1)                         # (N,Ho,Wo,9*Cin)
    xim = jnp.pad(xim, ((0, 0), (0, 0), (0, 0), (0, LANE - 9 * Cin)))
    xim = xim.astype(jnp.bfloat16)

    # stem + layer1..layer3 (stand-in MBConv stacks) + layer4, one fused kernel
    xm = chain_call(prep["chain"], xim.reshape(N * Ho * Wo, LANE))
    x_l4 = xm.reshape(N, Ho, Wo, LANE)          # n2=64 real lanes, rest zero

    # conv5 / conv6 residual stages (two Bottlenecks per kernel, pool fused);
    # conv6's full feature map is never consumed -> pooled-only kernel.
    x_c5, p_c5 = stage_call(prep["conv5"][0], prep["conv5"][1], x_l4,
                            emit_full=True)
    p_c6 = stage_call(prep["conv6"][0], prep["conv6"][1], x_c5,
                      emit_full=False)

    # layer4_adv (3x3 -> BN -> 1x1 -> ReLU) with fused global average pool
    p_adv = adv_pool_call(prep["adv"], x_l4)

    # concat pooled features and run the fc head.
    # TODO(synk): nn.Dropout treated as identity (inference mode).
    feat = jnp.concatenate([p_adv, p_c5, p_c6], axis=1)
    return fc_call(prep["fc"], feat, num_classes)


# ----------------------------------------------------------------------------
if __name__ == "__main__":
    key = jax.random.PRNGKey(0)
    # 64x64 keeps every feature map >= 8x8 so all in-kernel tiles stay
    # (8,128)-aligned through the three stride-2 stages (stem, conv5, conv6).
    x = jax.random.normal(key, (2, 3, 64, 64), jnp.float32)   # NCHW like PyTorch
    params = make_params(n2=64, num_classes=6)
    prep = prepare_params(params, n2=64, num_classes=6)

    y = multiscale_bx_forward(prep, x, num_classes=6)
    y = jax.block_until_ready(y)

    assert y.shape == (2, 6), y.shape
    assert bool(jnp.all(jnp.isfinite(y)))
    print("KERNEL_OK")
</pallas_src>

<mosaic_0001>
module attributes {stable_mosaic.version = 11 : i64} {
  func.func @_chain_kernel(%arg0: i32, %arg1: memref<1024x128xbf16, #tpu.memory_space<vmem>>, %arg2: memref<128x128xbf16, #tpu.memory_space<vmem>>, %arg3: memref<1x128xf32, #tpu.memory_space<vmem>>, %arg4: memref<1x128xf32, #tpu.memory_space<vmem>>, %arg5: memref<128x128xbf16, #tpu.memory_space<vmem>>, %arg6: memref<1x128xf32, #tpu.memory_space<vmem>>, %arg7: memref<1x128xf32, #tpu.memory_space<vmem>>, %arg8: memref<128x128xbf16, #tpu.memory_space<vmem>>, %arg9: memref<1x128xf32, #tpu.memory_space<vmem>>, %arg10: memref<1x128xf32, #tpu.memory_space<vmem>>, %arg11: memref<128x128xbf16, #tpu.memory_space<vmem>>, %arg12: memref<1x128xf32, #tpu.memory_space<vmem>>, %arg13: memref<1x128xf32, #tpu.memory_space<vmem>>, %arg14: memref<128x128xbf16, #tpu.memory_space<vmem>>, %arg15: memref<1x128xf32, #tpu.memory_space<vmem>>, %arg16: memref<1x128xf32, #tpu.memory_space<vmem>>, %arg17: memref<1024x128xbf16, #tpu.memory_space<vmem>>) attributes {dimension_semantics = [#tpu.dimension_semantics<parallel>], iteration_bounds = array<i64: 2>, scalar_prefetch = 0 : i64, scratch_operands = 0 : i64, tpu.core_type = #tpu.core_type<tc>, window_params = [{transform_indices = @transform_0, window_bounds = array<i64: 1024, 128>}, {pipeline_mode = #tpu.pipeline_mode<synchronous>, transform_indices = @transform_1, window_bounds = array<i64: 128, 128>}, {pipeline_mode = #tpu.pipeline_mode<synchronous>, transform_indices = @transform_2, window_bounds = array<i64: 1, 128>}, {pipeline_mode = #tpu.pipeline_mode<synchronous>, transform_indices = @transform_3, window_bounds = array<i64: 1, 128>}, {pipeline_mode = #tpu.pipeline_mode<synchronous>, transform_indices = @transform_4, window_bounds = array<i64: 128, 128>}, {pipeline_mode = #tpu.pipeline_mode<synchronous>, transform_indices = @transform_5, window_bounds = array<i64: 1, 128>}, {pipeline_mode = #tpu.pipeline_mode<synchronous>, transform_indices = @transform_6, window_bounds = array<i64: 1, 128>}, {pipeline_mode = #tpu.pipeline_mode<synchronous>, transform_indices = @transform_7, window_bounds = array<i64: 128, 128>}, {pipeline_mode = #tpu.pipeline_mode<synchronous>, transform_indices = @transform_8, window_bounds = array<i64: 1, 128>}, {pipeline_mode = #tpu.pipeline_mode<synchronous>, transform_indices = @transform_9, window_bounds = array<i64: 1, 128>}, {pipeline_mode = #tpu.pipeline_mode<synchronous>, transform_indices = @transform_10, window_bounds = array<i64: 128, 128>}, {pipeline_mode = #tpu.pipeline_mode<synchronous>, transform_indices = @transform_11, window_bounds = array<i64: 1, 128>}, {pipeline_mode = #tpu.pipeline_mode<synchronous>, transform_indices = @transform_12, window_bounds = array<i64: 1, 128>}, {pipeline_mode = #tpu.pipeline_mode<synchronous>, transform_indices = @transform_13, window_bounds = array<i64: 128, 128>}, {pipeline_mode = #tpu.pipeline_mode<synchronous>, transform_indices = @transform_14, window_bounds = array<i64: 1, 128>}, {pipeline_mode = #tpu.pipeline_mode<synchronous>, transform_indices = @transform_15, window_bounds = array<i64: 1, 128>}, {transform_indices = @transform_16, window_bounds = array<i64: 1024, 128>}]} {
    %c0 = arith.constant 0 : index
    %c0_0 = arith.constant 0 : index
    %0 = vector.load %arg1[%c0, %c0_0] : memref<1024x128xbf16, #tpu.memory_space<vmem>>, vector<1024x128xbf16>
    %c0_1 = arith.constant 0 : index
    %c0_2 = arith.constant 0 : index
    %1 = vector.load %arg2[%c0_1, %c0_2] : memref<128x128xbf16, #tpu.memory_space<vmem>>, vector<128x128xbf16>
    %cst = arith.constant dense<0.000000e+00> : vector<1024x128xf32>
    %2 = tpu.matmul %0, %1, %cst {dimension_numbers = #tpu.dot_dimension_numbers<[1], [0], [0], [1], [0, 0, 1, 1], [], []>} : vector<1024x128xbf16>, vector<128x128xbf16>, vector<1024x128xf32> -> vector<1024x128xf32>
    %c0_3 = arith.constant 0 : index
    %c0_4 = arith.constant 0 : index
    %3 = vector.load %arg3[%c0_3, %c0_4] : memref<1x128xf32, #tpu.memory_space<vmem>>, vector<1x128xf32>
    %4 = vector.broadcast %3 : vector<1x128xf32> to vector<1024x128xf32>
    %5 = arith.mulf %2, %4 : vector<1024x128xf32>
    %c0_5 = arith.constant 0 : index
    %c0_6 = arith.constant 0 : index
    %6 = vector.load %arg4[%c0_5, %c0_6] : memref<1x128xf32, #tpu.memory_space<vmem>>, vector<1x128xf32>
    %7 = vector.broadcast %6 : vector<1x128xf32> to vector<1024x128xf32>
    %8 = arith.addf %5, %7 : vector<1024x128xf32>
    %cst_7 = arith.constant 0.000000e+00 : f32
    %9 = vector.broadcast %cst_7 : f32 to vector<1024x128xf32>
    %10 = arith.subf %9, %8 : vector<1024x128xf32>
    %11 = math.exp %10 : vector<1024x128xf32>
    %cst_8 = arith.constant 1.000000e+00 : f32
    %12 = vector.broadcast %cst_8 : f32 to vector<1024x128xf32>
    %13 = arith.addf %12, %11 : vector<1024x128xf32>
    %14 = tpu.reciprocal %13 : vector<1024x128xf32> -> vector<1024x128xf32>
    %15 = arith.mulf %8, %14 : vector<1024x128xf32>
    %16 = arith.truncf %15 : vector<1024x128xf32> to vector<1024x128xbf16>
    %c0_9 = arith.constant 0 : index
    %c0_10 = arith.constant 0 : index
    %17 = vector.load %arg5[%c0_9, %c0_10] : memref<128x128xbf16, #tpu.memory_space<vmem>>, vector<128x128xbf16>
    %cst_11 = arith.constant dense<0.000000e+00> : vector<1024x128xf32>
    %18 = tpu.matmul %16, %17, %cst_11 {dimension_numbers = #tpu.dot_dimension_numbers<[1], [0], [0], [1], [0, 0, 1, 1], [], []>} : vector<1024x128xbf16>, vector<128x128xbf16>, vector<1024x128xf32> -> vector<1024x128xf32>
    %c0_12 = arith.constant 0 : index
    %c0_13 = arith.constant 0 : index
    %19 = vector.load %arg6[%c0_12, %c0_13] : memref<1x128xf32, #tpu.memory_space<vmem>>, vector<1x128xf32>
    %20 = vector.broadcast %19 : vector<1x128xf32> to vector<1024x128xf32>
    %21 = arith.mulf %18, %20 : vector<1024x128xf32>
    %c0_14 = arith.constant 0 : index
    %c0_15 = arith.constant 0 : index
    %22 = vector.load %arg7[%c0_14, %c0_15] : memref<1x128xf32, #tpu.memory_space<vmem>>, vector<1x128xf32>
    %23 = vector.broadcast %22 : vector<1x128xf32> to vector<1024x128xf32>
    %24 = arith.addf %21, %23 : vector<1024x128xf32>
    %cst_16 = arith.constant 0.000000e+00 : f32
    %25 = vector.broadcast %cst_16 : f32 to vector<1024x128xf32>
    %26 = arith.subf %25, %24 : vector<1024x128xf32>
    %27 = math.exp %26 : vector<1024x128xf32>
    %cst_17 = arith.constant 1.000000e+00 : f32
    %28 = vector.broadcast %cst_17 : f32 to vector<1024x128xf32>
    %29 = arith.addf %28, %27 : vector<1024x128xf32>
    %30 = tpu.reciprocal %29 : vector<1024x128xf32> -> vector<1024x128xf32>
    %31 = arith.mulf %24, %30 : vector<1024x128xf32>
    %32 = arith.truncf %31 : vector<1024x128xf32> to vector<1024x128xbf16>
    %c0_18 = arith.constant 0 : index
    %c0_19 = arith.constant 0 : index
    %33 = vector.load %arg8[%c0_18, %c0_19] : memref<128x128xbf16, #tpu.memory_space<vmem>>, vector<128x128xbf16>
    %cst_20 = arith.constant dense<0.000000e+00> : vector<1024x128xf32>
    %34 = tpu.matmul %32, %33, %cst_20 {dimension_numbers = #tpu.dot_dimension_numbers<[1], [0], [0], [1], [0, 0, 1, 1], [], []>} : vector<1024x128xbf16>, vector<128x128xbf16>, vector<1024x128xf32> -> vector<1024x128xf32>
    %c0_21 = arith.constant 0 : index
    %c0_22 = arith.constant 0 : index
    %35 = vector.load %arg9[%c0_21, %c0_22] : memref<1x128xf32, #tpu.memory_space<vmem>>, vector<1x128xf32>
    %36 = vector.broadcast %35 : vector<1x128xf32> to vector<1024x128xf32>
    %37 = arith.mulf %34, %36 : vector<1024x128xf32>
    %c0_23 = arith.constant 0 : index
    %c0_24 = arith.constant 0 : index
    %38 = vector.load %arg10[%c0_23, %c0_24] : memref<1x128xf32, #tpu.memory_space<vmem>>, vector<1x128xf32>
    %39 = vector.broadcast %38 : vector<1x128xf32> to vector<1024x128xf32>
    %40 = arith.addf %37, %39 : vector<1024x128xf32>
    %cst_25 = arith.constant 0.000000e+00 : f32
    %41 = vector.broadcast %cst_25 : f32 to vector<1024x128xf32>
    %42 = arith.subf %41, %40 : vector<1024x128xf32>
    %43 = math.exp %42 : vector<1024x128xf32>
    %cst_26 = arith.constant 1.000000e+00 : f32
    %44 = vector.broadcast %cst_26 : f32 to vector<1024x128xf32>
    %45 = arith.addf %44, %43 : vector<1024x128xf32>
    %46 = tpu.reciprocal %45 : vector<1024x128xf32> -> vector<1024x128xf32>
    %47 = arith.mulf %40, %46 : vector<1024x128xf32>
    %48 = arith.truncf %47 : vector<1024x128xf32> to vector<1024x128xbf16>
    %c0_27 = arith.constant 0 : index
    %c0_28 = arith.constant 0 : index
    %49 = vector.load %arg11[%c0_27, %c0_28] : memref<128x128xbf16, #tpu.memory_space<vmem>>, vector<128x128xbf16>
    %cst_29 = arith.constant dense<0.000000e+00> : vector<1024x128xf32>
    %50 = tpu.matmul %48, %49, %cst_29 {dimension_numbers = #tpu.dot_dimension_numbers<[1], [0], [0], [1], [0, 0, 1, 1], [], []>} : vector<1024x128xbf16>, vector<128x128xbf16>, vector<1024x128xf32> -> vector<1024x128xf32>
    %c0_30 = arith.constant 0 : index
    %c0_31 = arith.constant 0 : index
    %51 = vector.load %arg12[%c0_30, %c0_31] : memref<1x128xf32, #tpu.memory_space<vmem>>, vector<1x128xf32>
    %52 = vector.broadcast %51 : vector<1x128xf32> to vector<1024x128xf32>
    %53 = arith.mulf %50, %52 : vector<1024x128xf32>
    %c0_32 = arith.constant 0 : index
    %c0_33 = arith.constant 0 : index
    %54 = vector.load %arg13[%c0_32, %c0_33] : memref<1x128xf32, #tpu.memory_space<vmem>>, vector<1x128xf32>
    %55 = vector.broadcast %54 : vector<1x128xf32> to vector<1024x128xf32>
    %56 = arith.addf %53, %55 : vector<1024x128xf32>
    %cst_34 = arith.constant 0.000000e+00 : f32
    %57 = vector.broadcast %cst_34 : f32 to vector<1024x128xf32>
    %58 = arith.subf %57, %56 : vector<1024x128xf32>
    %59 = math.exp %58 : vector<1024x128xf32>
    %cst_35 = arith.constant 1.000000e+00 : f32
    %60 = vector.broadcast %cst_35 : f32 to vector<1024x128xf32>
    %61 = arith.addf %60, %59 : vector<1024x128xf32>
    %62 = tpu.reciprocal %61 : vector<1024x128xf32> -> vector<1024x128xf32>
    %63 = arith.mulf %56, %62 : vector<1024x128xf32>
    %64 = arith.truncf %63 : vector<1024x128xf32> to vector<1024x128xbf16>
    %c0_36 = arith.constant 0 : index
    %c0_37 = arith.constant 0 : index
    %65 = vector.load %arg14[%c0_36, %c0_37] : memref<128x128xbf16, #tpu.memory_space<vmem>>, vector<128x128xbf16>
    %cst_38 = arith.constant dense<0.000000e+00> : vector<1024x128xf32>
    %66 = tpu.matmul %64, %65, %cst_38 {dimension_numbers = #tpu.dot_dimension_numbers<[1], [0], [0], [1], [0, 0, 1, 1], [], []>} : vector<1024x128xbf16>, vector<128x128xbf16>, vector<1024x128xf32> -> vector<1024x128xf32>
    %c0_39 = arith.constant 0 : index
    %c0_40 = arith.constant 0 : index
    %67 = vector.load %arg15[%c0_39, %c0_40] : memref<1x128xf32, #tpu.memory_space<vmem>>, vector<1x128xf32>
    %68 = vector.broadcast %67 : vector<1x128xf32> to vector<1024x128xf32>
    %69 = arith.mulf %66, %68 : vector<1024x128xf32>
    %c0_41 = arith.constant 0 : index
    %c0_42 = arith.constant 0 : index
    %70 = vector.load %arg16[%c0_41, %c0_42] : memref<1x128xf32, #tpu.memory_space<vmem>>, vector<1x128xf32>
    %71 = vector.broadcast %70 : vector<1x128xf32> to vector<1024x128xf32>
    %72 = arith.addf %69, %71 : vector<1024x128xf32>
    %cst_43 = arith.constant 0.000000e+00 : f32
    %73 = vector.broadcast %cst_43 : f32 to vector<1024x128xf32>
    %74 = arith.subf %73, %72 : vector<1024x128xf32>
    %75 = math.exp %74 : vector<1024x128xf32>
    %cst_44 = arith.constant 1.000000e+00 : f32
    %76 = vector.broadcast %cst_44 : f32 to vector<1024x128xf32>
    %77 = arith.addf %76, %75 : vector<1024x128xf32>
    %78 = tpu.reciprocal %77 : vector<1024x128xf32> -> vector<1024x128xf32>
    %79 = arith.mulf %72, %78 : vector<1024x128xf32>
    %80 = arith.truncf %79 : vector<1024x128xf32> to vector<1024x128xbf16>
    %c0_45 = arith.constant 0 : index
    %c0_46 = arith.constant 0 : index
    %81 = vector.load %arg17[%c0_45, %c0_46] : memref<1024x128xbf16, #tpu.memory_space<vmem>>, vector<1024x128xbf16>
    tpu.vector_store %arg17[%c0_45, %c0_46], %80 {strides = array<i32>} : memref<1024x128xbf16, #tpu.memory_space<vmem>>, vector<1024x128xbf16>,
    return
  }
  func.func @transform_0(%arg0: i32) -> (i32, i32) {
    %c0_i32 = arith.constant 0 : i32
    %c0_i32_0 = arith.constant 0 : i32
    return %arg0, %c0_i32 : i32, i32
  }
  func.func @transform_1(%arg0: i32) -> (i32, i32) {
    %c0_i32 = arith.constant 0 : i32
    %c0_i32_0 = arith.constant 0 : i32
    %c0_i32_1 = arith.constant 0 : i32
    return %c0_i32, %c0_i32_0 : i32, i32
  }
  func.func @transform_2(%arg0: i32) -> (i32, i32) {
    %c0_i32 = arith.constant 0 : i32
    %c0_i32_0 = arith.constant 0 : i32
    %c0_i32_1 = arith.constant 0 : i32
    return %c0_i32, %c0_i32_0 : i32, i32
  }
  func.func @transform_3(%arg0: i32) -> (i32, i32) {
    %c0_i32 = arith.constant 0 : i32
    %c0_i32_0 = arith.constant 0 : i32
    %c0_i32_1 = arith.constant 0 : i32
    return %c0_i32, %c0_i32_0 : i32, i32
  }
  func.func @transform_4(%arg0: i32) -> (i32, i32) {
    %c0_i32 = arith.constant 0 : i32
    %c0_i32_0 = arith.constant 0 : i32
    %c0_i32_1 = arith.constant 0 : i32
    return %c0_i32, %c0_i32_0 : i32, i32
  }
  func.func @transform_5(%arg0: i32) -> (i32, i32) {
    %c0_i32 = arith.constant 0 : i32
    %c0_i32_0 = arith.constant 0 : i32
    %c0_i32_1 = arith.constant 0 : i32
    return %c0_i32, %c0_i32_0 : i32, i32
  }
  func.func @transform_6(%arg0: i32) -> (i32, i32) {
    %c0_i32 = arith.constant 0 : i32
    %c0_i32_0 = arith.constant 0 : i32
    %c0_i32_1 = arith.constant 0 : i32
    return %c0_i32, %c0_i32_0 : i32, i32
  }
  func.func @transform_7(%arg0: i32) -> (i32, i32) {
    %c0_i32 = arith.constant 0 : i32
    %c0_i32_0 = arith.constant 0 : i32
    %c0_i32_1 = arith.constant 0 : i32
    return %c0_i32, %c0_i32_0 : i32, i32
  }
  func.func @transform_8(%arg0: i32) -> (i32, i32) {
    %c0_i32 = arith.constant 0 : i32
    %c0_i32_0 = arith.constant 0 : i32
    %c0_i32_1 = arith.constant 0 : i32
    return %c0_i32, %c0_i32_0 : i32, i32
  }
  func.func @transform_9(%arg0: i32) -> (i32, i32) {
    %c0_i32 = arith.constant 0 : i32
    %c0_i32_0 = arith.constant 0 : i32
    %c0_i32_1 = arith.constant 0 : i32
    return %c0_i32, %c0_i32_0 : i32, i32
  }
  func.func @transform_10(%arg0: i32) -> (i32, i32) {
    %c0_i32 = arith.constant 0 : i32
    %c0_i32_0 = arith.constant 0 : i32
    %c0_i32_1 = arith.constant 0 : i32
    return %c0_i32, %c0_i32_0 : i32, i32
  }
  func.func @transform_11(%arg0: i32) -> (i32, i32) {
    %c0_i32 = arith.constant 0 : i32
    %c0_i32_0 = arith.constant 0 : i32
    %c0_i32_1 = arith.constant 0 : i32
    return %c0_i32, %c0_i32_0 : i32, i32
  }
  func.func @transform_12(%arg0: i32) -> (i32, i32) {
    %c0_i32 = arith.constant 0 : i32
    %c0_i32_0 = arith.constant 0 : i32
    %c0_i32_1 = arith.constant 0 : i32
    return %c0_i32, %c0_i32_0 : i32, i32
  }
  func.func @transform_13(%arg0: i32) -> (i32, i32) {
    %c0_i32 = arith.constant 0 : i32
    %c0_i32_0 = arith.constant 0 : i32
    %c0_i32_1 = arith.constant 0 : i32
    return %c0_i32, %c0_i32_0 : i32, i32
  }
  func.func @transform_14(%arg0: i32) -> (i32, i32) {
    %c0_i32 = arith.constant 0 : i32
    %c0_i32_0 = arith.constant 0 : i32
    %c0_i32_1 = arith.constant 0 : i32
    return %c0_i32, %c0_i32_0 : i32, i32
  }
  func.func @transform_15(%arg0: i32) -> (i32, i32) {
    %c0_i32 = arith.constant 0 : i32
    %c0_i32_0 = arith.constant 0 : i32
    %c0_i32_1 = arith.constant 0 : i32
    return %c0_i32, %c0_i32_0 : i32, i32
  }
  func.func @transform_16(%arg0: i32) -> (i32, i32) {
    %c0_i32 = arith.constant 0 : i32
    %c0_i32_0 = arith.constant 0 : i32
    return %arg0, %c0_i32 : i32, i32
  }
}

</mosaic_0001>

<llo_original>
// kernel: tpu_custom_call.1
$region0: #{tpu_custom_call.1}
  #allocation0 [shape = 'u32[]', space=smem, size = 0x4, offset = 0x4, fixed_abs, tag = 'smem constant byte address 0x4 - core index']
  #allocation1 [shape = 'u32[144,128]{1,0:T(1,128)}', space=vmem, size = 0x12000, scoped, tag = 'internal scratch']
  %s0 = inlined_call_operand.hbm [shape: bf16[2048,128], index: 0, kind: input, shape index: {}]
  %s1 = inlined_call_operand.hbm [shape: bf16[128,128], index: 1, kind: input, shape index: {}]
  %s2 = inlined_call_operand.hbm [shape: f32[1,128], index: 2, kind: input, shape index: {}]
  %s3 = inlined_call_operand.hbm [shape: f32[1,128], index: 3, kind: input, shape index: {}]
  %s4 = inlined_call_operand.hbm [shape: bf16[128,128], index: 4, kind: input, shape index: {}]
  %s5 = inlined_call_operand.hbm [shape: f32[1,128], index: 5, kind: input, shape index: {}]
  %s6 = inlined_call_operand.hbm [shape: f32[1,128], index: 6, kind: input, shape index: {}]
  %s7 = inlined_call_operand.hbm [shape: bf16[128,128], index: 7, kind: input, shape index: {}]
  %s8 = inlined_call_operand.hbm [shape: f32[1,128], index: 8, kind: input, shape index: {}]
  %s9 = inlined_call_operand.hbm [shape: f32[1,128], index: 9, kind: input, shape index: {}]
  %s10 = inlined_call_operand.hbm [shape: bf16[128,128], index: 10, kind: input, shape index: {}]
  %s11 = inlined_call_operand.hbm [shape: f32[1,128], index: 11, kind: input, shape index: {}]
  %s12 = inlined_call_operand.hbm [shape: f32[1,128], index: 12, kind: input, shape index: {}]
  %s13 = inlined_call_operand.hbm [shape: bf16[128,128], index: 13, kind: input, shape index: {}]
  %s14 = inlined_call_operand.hbm [shape: f32[1,128], index: 14, kind: input, shape index: {}]
  %s15 = inlined_call_operand.hbm [shape: f32[1,128], index: 15, kind: input, shape index: {}]
  %s16 = inlined_call_operand.hbm [shape: bf16[2048,128], index: 16, kind: output, shape index: {}]
  %s17 = sld [smem:[#allocation0]]
  $region161: #{tpu_custom_call.1} parent=0
    _
  %s19 = ssub.s32 1, %s17
  %s20 = scalar_select 0, %s19, %s17
  $region1: #{tpu_custom_call.1} parent=0
    #allocation2 [shape = 'u8[524288]{0}', space=vmem, size = 0x80000, scoped, tag = 'input window, operand 0']
    #allocation3 [shape = 's32[2]{0}', space=sflag, size = 0x8, scoped, tag = 'scoped memory for tpu_custom_call.1']
    #allocation4 [shape = 's32[2]{0}', space=sflag, size = 0x8, scoped, tag = 'scoped memory for tpu_custom_call.1']
    #allocation5 [shape = 'u8[32768]{0}', space=vmem, size = 0x8000, scoped, tag = 'input window, operand 1, single buffered']
    #allocation6 [shape = 's32[1]{0}', space=sflag, size = 0x4, scoped, tag = 'scoped memory for tpu_custom_call.1']
    #allocation7 [shape = 'u8[512]{0}', space=vmem, size = 0x400, scoped, tag = 'input window, operand 2, single buffered']
    #allocation8 [shape = 'u8[512]{0}', space=vmem, size = 0x400, scoped, tag = 'input window, operand 3, single buffered']
    #allocation9 [shape = 's32[1]{0}', space=sflag, size = 0x4, scoped, tag = 'scoped memory for tpu_custom_call.1']
    #allocation10 [shape = 'u8[32768]{0}', space=vmem, size = 0x8000, scoped, tag = 'input window, operand 4, single buffered']
    #allocation11 [shape = 'u8[512]{0}', space=vmem, size = 0x400, scoped, tag = 'input window, operand 5, single buffered']
    #allocation12 [shape = 's32[1]{0}', space=sflag, size = 0x4, scoped, tag = 'scoped memory for tpu_custom_call.1']
    #allocation13 [shape = 'u8[512]{0}', space=vmem, size = 0x400, scoped, tag = 'input window, operand 6, single buffered']
    #allocation14 [shape = 'u8[32768]{0}', space=vmem, size = 0x8000, scoped, tag = 'input window, operand 7, single buffered']
    #allocation15 [shape = 's32[1]{0}', space=sflag, size = 0x4, scoped, tag = 'scoped memory for tpu_custom_call.1']
    #allocation16 [shape = 'u8[512]{0}', space=vmem, size = 0x400, scoped, tag = 'input window, operand 8, single buffered']
    #allocation17 [shape = 'u8[512]{0}', space=vmem, size = 0x400, scoped, tag = 'input window, operand 9, single buffered']
    #allocation18 [shape = 's32[1]{0}', space=sflag, size = 0x4, scoped, tag = 'scoped memory for tpu_custom_call.1']
    #allocation19 [shape = 'u8[32768]{0}', space=vmem, size = 0x8000, scoped, tag = 'input window, operand 10, single buffered']
    #allocation20 [shape = 'u8[512]{0}', space=vmem, size = 0x400, scoped, tag = 'input window, operand 11, single buffered']
    #allocation21 [shape = 's32[1]{0}', space=sflag, size = 0x4, scoped, tag = 'scoped memory for tpu_custom_call.1']
    #allocation22 [shape = 'u8[512]{0}', space=vmem, size = 0x400, scoped, tag = 'input window, operand 12, single buffered']
    #allocation23 [shape = 'u8[32768]{0}', space=vmem, size = 0x8000, scoped, tag = 'input window, operand 13, single buffered']
    #allocation24 [shape = 's32[1]{0}', space=sflag, size = 0x4, scoped, tag = 'scoped memory for tpu_custom_call.1']
    #allocation25 [shape = 'u8[512]{0}', space=vmem, size = 0x400, scoped, tag = 'input window, operand 14, single buffered']
    #allocation26 [shape = 'u8[512]{0}', space=vmem, size = 0x400, scoped, tag = 'input window, operand 15, single buffered']
    #allocation27 [shape = 's32[1]{0}', space=sflag, size = 0x4, scoped, tag = 'scoped memory for tpu_custom_call.1']
    #allocation28 [shape = 'u8[524288]{0}', space=vmem, size = 0x80000, scoped, tag = 'output window, operand 0']
    %21 = vsyncpa [#allocation3], 0
    %s22 = scalar_lea.sflag [#allocation3], 1
    %23 = vsyncpa %s22, 0
    %24 = vsyncpa [#allocation6], 0
    %25 = vsyncpa [#allocation9], 0
    %26 = vsyncpa [#allocation12], 0
    %27 = vsyncpa [#allocation15], 0
    %28 = vsyncpa [#allocation18], 0
    %29 = vsyncpa [#allocation21], 0
    %30 = vsyncpa [#allocation24], 0
    %31 = vsyncpa [#allocation27], 0
    %32 = vsyncpa [#allocation4], 0
    %s33 = scalar_lea.sflag [#allocation4], 1
    %34 = vsyncpa %s33, 0
    loop: start=0, step=1, limit=4
    $region2: #{tpu_custom_call.1} parent=1 // loop_pre_header
      _
    $region3: #{tpu_custom_call.1} parent=1 // loop_header
      %s36 = sphi 0, %s40
      %p37 = scmp.ge.s32.totalorder %s36, 4
      %s46 = sphi 0, %s48
      %s49 = sphi 0, %s46
      %s50 = sphi 0, %s49
      %s66 = sphi 0, %s50
      %s70 = sphi 0, %s70
      %s72 = sphi 0, %s70
      %s73 = sphi 0, %s72
      %s87 = sphi 0, %s73
      %s91 = sphi 0, %s91
      %s93 = sphi 0, %s91
      %s94 = sphi 0, %s93
      %s108 = sphi 0, %s94
      %s112 = sphi 0, %s112
      %s114 = sphi 0, %s112
      %s115 = sphi 0, %s114
      %s129 = sphi 0, %s115
      %s133 = sphi 0, %s133
      %s135 = sphi 0, %s133
      %s136 = sphi 0, %s135
      %s150 = sphi 0, %s136
      %s154 = sphi 0, %s154
      %s156 = sphi 0, %s154
      %s157 = sphi 0, %s156
      %s171 = sphi 0, %s157
      %s175 = sphi 0, %s175
      %s177 = sphi 0, %s175
      %s178 = sphi 0, %s177
      %s192 = sphi 0, %s178
      %s196 = sphi 0, %s196
      %s198 = sphi 0, %s196
      %s199 = sphi 0, %s198
      %s213 = sphi 0, %s199
      %s217 = sphi 0, %s217
      %s219 = sphi 0, %s217
      %s220 = sphi 0, %s219
      %s234 = sphi 0, %s220
      %s238 = sphi 0, %s238
      %s240 = sphi 0, %s238
      %s241 = sphi 0, %s240
      %s255 = sphi 0, %s241
      %s259 = sphi 0, %s259
      %s261 = sphi 0, %s259
      %s262 = sphi 0, %s261
      %s276 = sphi 0, %s262
      %s280 = sphi 0, %s280
      %s282 = sphi 0, %s280
      %s283 = sphi 0, %s282
      %s297 = sphi 0, %s283
      %s301 = sphi 0, %s301
      %s303 = sphi 0, %s301
      %s304 = sphi 0, %s303
      %s318 = sphi 0, %s304
      %s322 = sphi 0, %s322
      %s324 = sphi 0, %s322
      %s325 = sphi 0, %s324
      %s339 = sphi 0, %s325
      %s343 = sphi 0, %s343
      %s345 = sphi 0, %s343
      %s346 = sphi 0, %s345
      %s360 = sphi 0, %s346
      %s364 = sphi 0, %s364
      %s366 = sphi 0, %s364
      %s367 = sphi 0, %s366
      %s381 = sphi 0, %s367
      %s387 = sphi 0, %s389
      %s390 = sphi 0, %s387
      %s391 = sphi 0, %s390
      %s407 = sphi 0, %s391
    $region4: #{tpu_custom_call.1} parent=1 // loop_header_branch
      %39 = sbr.rel (%p37) target = $region8
    $region5: #{tpu_custom_call.1} parent=1 // loop_body
      %s41 = ssub.s32 %s36, 1
      %s42 = ssub.s32 %s36, 2
      %s43 = sadd.s32 %s36, 1
      %s44 = ssub.s32 %s36, %s43
      %p45 = scmp.eq.s32.totalorder %s44, 0
      %s47 = sadd.s32 %s46, 1
      %s48 = scalar_select %p45, %s46, %s47
      %p51 = pneg %p45
      %p52 = scmp.eq.s32.totalorder %s36, 1
      %p53 = por %p51, %p52
      %p54 = scmp.ne.s32.totalorder %s46, %s49
      %p55 = scmp.eq.s32.totalorder %s36, 0
      %p56 = por %p54, %p55
      %p57 = scmp.ne.s32.totalorder %s46, %s49
      %p58 = scmp.eq.s32.totalorder %s41, 1
      %p59 = por %p57, %p58
      %p60 = scmp.ne.s32.totalorder %s49, %s50
      %p61 = scmp.eq.s32.totalorder %s41, 0
      %p62 = por %p60, %p61
      %p63 = scmp.ne.s32.totalorder %s49, %s50
      %p64 = scmp.eq.s32.totalorder %s42, 1
      %p65 = por %p63, %p64
      %p67 = scmp.ne.s32.totalorder %s50, %s66
      %p68 = scmp.eq.s32.totalorder %s42, 0
      %p69 = por %p67, %p68
      %s71 = sadd.s32 %s70, 1
      %p74 = scmp.eq.s32.totalorder %s36, 1
      %p75 = scmp.ne.s32.totalorder %s70, %s72
      %p76 = scmp.eq.s32.totalorder %s36, 0
      %p77 = por %p75, %p76
      %p78 = scmp.ne.s32.totalorder %s70, %s72
      %p79 = scmp.eq.s32.totalorder %s41, 1
      %p80 = por %p78, %p79
      %p81 = scmp.ne.s32.totalorder %s72, %s73
      %p82 = scmp.eq.s32.totalorder %s41, 0
      %p83 = por %p81, %p82
      %p84 = scmp.ne.s32.totalorder %s72, %s73
      %p85 = scmp.eq.s32.totalorder %s42, 1
      %p86 = por %p84, %p85
      %p88 = scmp.ne.s32.totalorder %s73, %s87
      %p89 = scmp.eq.s32.totalorder %s42, 0
      %p90 = por %p88, %p89
      %s92 = sadd.s32 %s91, 1
      %p95 = scmp.eq.s32.totalorder %s36, 1
      %p96 = scmp.ne.s32.totalorder %s91, %s93
      %p97 = scmp.eq.s32.totalorder %s36, 0
      %p98 = por %p96, %p97
      %p99 = scmp.ne.s32.totalorder %s91, %s93
      %p100 = scmp.eq.s32.totalorder %s41, 1
      %p101 = por %p99, %p100
      %p102 = scmp.ne.s32.totalorder %s93, %s94
      %p103 = scmp.eq.s32.totalorder %s41, 0
      %p104 = por %p102, %p103
      %p105 = scmp.ne.s32.totalorder %s93, %s94
      %p106 = scmp.eq.s32.totalorder %s42, 1
      %p107 = por %p105, %p106
      %p109 = scmp.ne.s32.totalorder %s94, %s108
      %p110 = scmp.eq.s32.totalorder %s42, 0
      %p111 = por %p109, %p110
      %s113 = sadd.s32 %s112, 1
      %p116 = scmp.eq.s32.totalorder %s36, 1
      %p117 = scmp.ne.s32.totalorder %s112, %s114
      %p118 = scmp.eq.s32.totalorder %s36, 0
      %p119 = por %p117, %p118
      %p120 = scmp.ne.s32.totalorder %s112, %s114
      %p121 = scmp.eq.s32.totalorder %s41, 1
      %p122 = por %p120, %p121
      %p123 = scmp.ne.s32.totalorder %s114, %s115
      %p124 = scmp.eq.s32.totalorder %s41, 0
      %p125 = por %p123, %p124
      %p126 = scmp.ne.s32.totalorder %s114, %s115
      %p127 = scmp.eq.s32.totalorder %s42, 1
      %p128 = por %p126, %p127
      %p130 = scmp.ne.s32.totalorder %s115, %s129
      %p131 = scmp.eq.s32.totalorder %s42, 0
      %p132 = por %p130, %p131
      %s134 = sadd.s32 %s133, 1
      %p137 = scmp.eq.s32.totalorder %s36, 1
      %p138 = scmp.ne.s32.totalorder %s133, %s135
      %p139 = scmp.eq.s32.totalorder %s36, 0
      %p140 = por %p138, %p139
      %p141 = scmp.ne.s32.totalorder %s133, %s135
      %p142 = scmp.eq.s32.totalorder %s41, 1
      %p143 = por %p141, %p142
      %p144 = scmp.ne.s32.totalorder %s135, %s136
      %p145 = scmp.eq.s32.totalorder %s41, 0
      %p146 = por %p144, %p145
      %p147 = scmp.ne.s32.totalorder %s135, %s136
      %p148 = scmp.eq.s32.totalorder %s42, 1
      %p149 = por %p147, %p148
      %p151 = scmp.ne.s32.totalorder %s136, %s150
      %p152 = scmp.eq.s32.totalorder %s42, 0
      %p153 = por %p151, %p152
      %s155 = sadd.s32 %s154, 1
      %p158 = scmp.eq.s32.totalorder %s36, 1
      %p159 = scmp.ne.s32.totalorder %s154, %s156
      %p160 = scmp.eq.s32.totalorder %s36, 0
      %p161 = por %p159, %p160
      %p162 = scmp.ne.s32.totalorder %s154, %s156
      %p163 = scmp.eq.s32.totalorder %s41, 1
      %p164 = por %p162, %p163
      %p165 = scmp.ne.s32.totalorder %s156, %s157
      %p166 = scmp.eq.s32.totalorder %s41, 0
      %p167 = por %p165, %p166
      %p168 = scmp.ne.s32.totalorder %s156, %s157
      %p169 = scmp.eq.s32.totalorder %s42, 1
      %p170 = por %p168, %p169
      %p172 = scmp.ne.s32.totalorder %s157, %s171
      %p173 = scmp.eq.s32.totalorder %s42, 0
      %p174 = por %p172, %p173
      %s176 = sadd.s32 %s175, 1
      %p179 = scmp.eq.s32.totalorder %s36, 1
      %p180 = scmp.ne.s32.totalorder %s175, %s177
      %p181 = scmp.eq.s32.totalorder %s36, 0
      %p182 = por %p180, %p181
      %p183 = scmp.ne.s32.totalorder %s175, %s177
      %p184 = scmp.eq.s32.totalorder %s41, 1
      %p185 = por %p183, %p184
      %p186 = scmp.ne.s32.totalorder %s177, %s178
      %p187 = scmp.eq.s32.totalorder %s41, 0
      %p188 = por %p186, %p187
      %p189 = scmp.ne.s32.totalorder %s177, %s178
      %p190 = scmp.eq.s32.totalorder %s42, 1
      %p191 = por %p189, %p190
      %p193 = scmp.ne.s32.totalorder %s178, %s192
      %p194 = scmp.eq.s32.totalorder %s42, 0
      %p195 = por %p193, %p194
      %s197 = sadd.s32 %s196, 1
      %p200 = scmp.eq.s32.totalorder %s36, 1
      %p201 = scmp.ne.s32.totalorder %s196, %s198
      %p202 = scmp.eq.s32.totalorder %s36, 0
      %p203 = por %p201, %p202
      %p204 = scmp.ne.s32.totalorder %s196, %s198
      %p205 = scmp.eq.s32.totalorder %s41, 1
      %p206 = por %p204, %p205
      %p207 = scmp.ne.s32.totalorder %s198, %s199
      %p208 = scmp.eq.s32.totalorder %s41, 0
      %p209 = por %p207, %p208
      %p210 = scmp.ne.s32.totalorder %s198, %s199
      %p211 = scmp.eq.s32.totalorder %s42, 1
      %p212 = por %p210, %p211
      %p214 = scmp.ne.s32.totalorder %s199, %s213
      %p215 = scmp.eq.s32.totalorder %s42, 0
      %p216 = por %p214, %p215
      %s218 = sadd.s32 %s217, 1
      %p221 = scmp.eq.s32.totalorder %s36, 1
      %p222 = scmp.ne.s32.totalorder %s217, %s219
      %p223 = scmp.eq.s32.totalorder %s36, 0
      %p224 = por %p222, %p223
      %p225 = scmp.ne.s32.totalorder %s217, %s219
      %p226 = scmp.eq.s32.totalorder %s41, 1
      %p227 = por %p225, %p226
      %p228 = scmp.ne.s32.totalorder %s219, %s220
      %p229 = scmp.eq.s32.totalorder %s41, 0
      %p230 = por %p228, %p229
      %p231 = scmp.ne.s32.totalorder %s219, %s220
      %p232 = scmp.eq.s32.totalorder %s42, 1
      %p233 = por %p231, %p232
      %p235 = scmp.ne.s32.totalorder %s220, %s234
      %p236 = scmp.eq.s32.totalorder %s42, 0
      %p237 = por %p235, %p236
      %s239 = sadd.s32 %s238, 1
      %p242 = scmp.eq.s32.totalorder %s36, 1
      %p243 = scmp.ne.s32.totalorder %s238, %s240
      %p244 = scmp.eq.s32.totalorder %s36, 0
      %p245 = por %p243, %p244
      %p246 = scmp.ne.s32.totalorder %s238, %s240
      %p247 = scmp.eq.s32.totalorder %s41, 1
      %p248 = por %p246, %p247
      %p249 = scmp.ne.s32.totalorder %s240, %s241
      %p250 = scmp.eq.s32.totalorder %s41, 0
      %p251 = por %p249, %p250
      %p252 = scmp.ne.s32.totalorder %s240, %s241
      %p253 = scmp.eq.s32.totalorder %s42, 1
      %p254 = por %p252, %p253
      %p256 = scmp.ne.s32.totalorder %s241, %s255
      %p257 = scmp.eq.s32.totalorder %s42, 0
      %p258 = por %p256, %p257
      %s260 = sadd.s32 %s259, 1
      %p263 = scmp.eq.s32.totalorder %s36, 1
      %p264 = scmp.ne.s32.totalorder %s259, %s261
      %p265 = scmp.eq.s32.totalorder %s36, 0
      %p266 = por %p264, %p265
      %p267 = scmp.ne.s32.totalorder %s259, %s261
      %p268 = scmp.eq.s32.totalorder %s41, 1
      %p269 = por %p267, %p268
      %p270 = scmp.ne.s32.totalorder %s261, %s262
      %p271 = scmp.eq.s32.totalorder %s41, 0
      %p272 = por %p270, %p271
      %p273 = scmp.ne.s32.totalorder %s261, %s262
      %p274 = scmp.eq.s32.totalorder %s42, 1
      %p275 = por %p273, %p274
      %p277 = scmp.ne.s32.totalorder %s262, %s276
      %p278 = scmp.eq.s32.totalorder %s42, 0
      %p279 = por %p277, %p278
      %s281 = sadd.s32 %s280, 1
      %p284 = scmp.eq.s32.totalorder %s36, 1
      %p285 = scmp.ne.s32.totalorder %s280, %s282
      %p286 = scmp.eq.s32.totalorder %s36, 0
      %p287 = por %p285, %p286
      %p288 = scmp.ne.s32.totalorder %s280, %s282
      %p289 = scmp.eq.s32.totalorder %s41, 1
      %p290 = por %p288, %p289
      %p291 = scmp.ne.s32.totalorder %s282, %s283
      %p292 = scmp.eq.s32.totalorder %s41, 0
      %p293 = por %p291, %p292
      %p294 = scmp.ne.s32.totalorder %s282, %s283
      %p295 = scmp.eq.s32.totalorder %s42, 1
      %p296 = por %p294, %p295
      %p298 = scmp.ne.s32.totalorder %s283, %s297
      %p299 = scmp.eq.s32.totalorder %s42, 0
      %p300 = por %p298, %p299
      %s302 = sadd.s32 %s301, 1
      %p305 = scmp.eq.s32.totalorder %s36, 1
      %p306 = scmp.ne.s32.totalorder %s301, %s303
      %p307 = scmp.eq.s32.totalorder %s36, 0
      %p308 = por %p306, %p307
      %p309 = scmp.ne.s32.totalorder %s301, %s303
      %p310 = scmp.eq.s32.totalorder %s41, 1
      %p311 = por %p309, %p310
      %p312 = scmp.ne.s32.totalorder %s303, %s304
      %p313 = scmp.eq.s32.totalorder %s41, 0
      %p314 = por %p312, %p313
      %p315 = scmp.ne.s32.totalorder %s303, %s304
      %p316 = scmp.eq.s32.totalorder %s42, 1
      %p317 = por %p315, %p316
      %p319 = scmp.ne.s32.totalorder %s304, %s318
      %p320 = scmp.eq.s32.totalorder %s42, 0
      %p321 = por %p319, %p320
      %s323 = sadd.s32 %s322, 1
      %p326 = scmp.eq.s32.totalorder %s36, 1
      %p327 = scmp.ne.s32.totalorder %s322, %s324
      %p328 = scmp.eq.s32.totalorder %s36, 0
      %p329 = por %p327, %p328
      %p330 = scmp.ne.s32.totalorder %s322, %s324
      %p331 = scmp.eq.s32.totalorder %s41, 1
      %p332 = por %p330, %p331
      %p333 = scmp.ne.s32.totalorder %s324, %s325
      %p334 = scmp.eq.s32.totalorder %s41, 0
      %p335 = por %p333, %p334
      %p336 = scmp.ne.s32.totalorder %s324, %s325
      %p337 = scmp.eq.s32.totalorder %s42, 1
      %p338 = por %p336, %p337
      %p340 = scmp.ne.s32.totalorder %s325, %s339
      %p341 = scmp.eq.s32.totalorder %s42, 0
      %p342 = por %p340, %p341
      %s344 = sadd.s32 %s343, 1
      %p347 = scmp.eq.s32.totalorder %s36, 1
      %p348 = scmp.ne.s32.totalorder %s343, %s345
      %p349 = scmp.eq.s32.totalorder %s36, 0
      %p350 = por %p348, %p349
      %p351 = scmp.ne.s32.totalorder %s343, %s345
      %p352 = scmp.eq.s32.totalorder %s41, 1
      %p353 = por %p351, %p352
      %p354 = scmp.ne.s32.totalorder %s345, %s346
      %p355 = scmp.eq.s32.totalorder %s41, 0
      %p356 = por %p354, %p355
      %p357 = scmp.ne.s32.totalorder %s345, %s346
      %p358 = scmp.eq.s32.totalorder %s42, 1
      %p359 = por %p357, %p358
      %p361 = scmp.ne.s32.totalorder %s346, %s360
      %p362 = scmp.eq.s32.totalorder %s42, 0
      %p363 = por %p361, %p362
      %s365 = sadd.s32 %s364, 1
      %p368 = scmp.eq.s32.totalorder %s36, 1
      %p369 = scmp.ne.s32.totalorder %s364, %s366
      %p370 = scmp.eq.s32.totalorder %s36, 0
      %p371 = por %p369, %p370
      %p372 = scmp.ne.s32.totalorder %s364, %s366
      %p373 = scmp.eq.s32.totalorder %s41, 1
      %p374 = por %p372, %p373
      %p375 = scmp.ne.s32.totalorder %s366, %s367
      %p376 = scmp.eq.s32.totalorder %s41, 0
      %p377 = por %p375, %p376
      %p378 = scmp.ne.s32.totalorder %s366, %s367
      %p379 = scmp.eq.s32.totalorder %s42, 1
      %p380 = por %p378, %p379
      %p382 = scmp.ne.s32.totalorder %s367, %s381
      %p383 = scmp.eq.s32.totalorder %s42, 0
      %p384 = por %p382, %p383
      %s385 = ssub.s32 %s36, %s43
      %p386 = scmp.eq.s32.totalorder %s385, 0
      %s388 = sadd.s32 %s387, 1
      %s389 = scalar_select %p386, %s387, %s388
      %p392 = pneg %p386
      %p393 = scmp.eq.s32.totalorder %s36, 1
      %p394 = por %p392, %p393
      %p395 = scmp.ne.s32.totalorder %s387, %s390
      %p396 = scmp.eq.s32.totalorder %s36, 0
      %p397 = por %p395, %p396
      %p398 = scmp.ne.s32.totalorder %s387, %s390
      %p399 = scmp.eq.s32.totalorder %s41, 1
      %p400 = por %p398, %p399
      %p401 = scmp.ne.s32.totalorder %s390, %s391
      %p402 = scmp.eq.s32.totalorder %s41, 0
      %p403 = por %p401, %p402
      %p404 = scmp.ne.s32.totalorder %s390, %s391
      %p405 = scmp.eq.s32.totalorder %s42, 1
      %p406 = por %p404, %p405
      %p408 = scmp.ne.s32.totalorder %s391, %s407
      %p409 = scmp.eq.s32.totalorder %s42, 0
      %p410 = por %p408, %p409
      %p411 = scmp.le.s32.totalorder 1, %s36
      %p412 = scmp.lt.s32.totalorder %s36, 3
      %p413 = pnand %p411, %p412
      %p414 = pneg %p413
      // Predicated region
      $region9: #{tpu_custom_call.1} parent=5 // pred_check
        _
      $region10: #{tpu_custom_call.1} parent=5 // pred_check_branch
        %416 = sbr.rel (%p413) target = $region12
      $region11: #{tpu_custom_call.1} parent=5 // pred_region
        %s417 = ssub.s32 %s36, 1
        // Predicated region
        $region13: #{tpu_custom_call.1} parent=11 // pred_check
          %p418 = pneg %p83
        $region14: #{tpu_custom_call.1} parent=11 // pred_check_branch
          %420 = sbr.rel (%p418) target = $region16
        $region15: #{tpu_custom_call.1} parent=11 // pred_region
          %s422 = ssub.s32 1024, 1024
          %423 = vsyncadd [#allocation6], %s422
          %s424 = sshll.u32 [#allocation5], 4
          %s425 = int_to_ptr.vmem [resolvable:$true] %s424
          %430 = dma.hbm_to_vmem [thread:$0]  %s1, 1024, %s425, [#allocation6], 64, 64, 4
        $region16: #{tpu_custom_call.1} parent=11 // pred_fallthru
          _
        // Predicated region
        $region17: #{tpu_custom_call.1} parent=11 // pred_check
          %p431 = pneg %p104
        $region18: #{tpu_custom_call.1} parent=11 // pred_check_branch
          %433 = sbr.rel (%p431) target = $region20
        $region19: #{tpu_custom_call.1} parent=11 // pred_region
          %s435 = ssub.s32 16, 16
          %436 = vsyncadd [#allocation6], %s435
          %s438 = sshll.u32 [#allocation7], 4
          %s439 = int_to_ptr.vmem [resolvable:$true] %s438
          %441 = dma.hbm_to_vmem [thread:$0]  %s2, 16, %s439, [#allocation6]
        $region20: #{tpu_custom_call.1} parent=11 // pred_fallthru
          _
        // Predicated region
        $region21: #{tpu_custom_call.1} parent=11 // pred_check
          %p442 = pneg %p125
        $region22: #{tpu_custom_call.1} parent=11 // pred_check_branch
          %444 = sbr.rel (%p442) target = $region24
        $region23: #{tpu_custom_call.1} parent=11 // pred_region
          %s446 = ssub.s32 16, 16
          %447 = vsyncadd [#allocation9], %s446
          %s449 = sshll.u32 [#allocation8], 4
          %s450 = int_to_ptr.vmem [resolvable:$true] %s449
          %452 = dma.hbm_to_vmem [thread:$0]  %s3, 16, %s450, [#allocation9]
        $region24: #{tpu_custom_call.1} parent=11 // pred_fallthru
          _
        // Predicated region
        $region25: #{tpu_custom_call.1} parent=11 // pred_check
          %p453 = pneg %p146
        $region26: #{tpu_custom_call.1} parent=11 // pred_check_branch
          %455 = sbr.rel (%p453) target = $region28
        $region27: #{tpu_custom_call.1} parent=11 // pred_region
          %s457 = ssub.s32 1024, 1024
          %458 = vsyncadd [#allocation9], %s457
          %s459 = sshll.u32 [#allocation10], 4
          %s460 = int_to_ptr.vmem [resolvable:$true] %s459
          %465 = dma.hbm_to_vmem [thread:$0]  %s4, 1024, %s460, [#allocation9], 64, 64, 4
        $region28: #{tpu_custom_call.1} parent=11 // pred_fallthru
          _
        // Predicated region
        $region29: #{tpu_custom_call.1} parent=11 // pred_check
          %p466 = pneg %p167
        $region30: #{tpu_custom_call.1} parent=11 // pred_check_branch
          %468 = sbr.rel (%p466) target = $region32
        $region31: #{tpu_custom_call.1} parent=11 // pred_region
          %s470 = ssub.s32 16, 16
          %471 = vsyncadd [#allocation12], %s470
          %s473 = sshll.u32 [#allocation11], 4
          %s474 = int_to_ptr.vmem [resolvable:$true] %s473
          %476 = dma.hbm_to_vmem [thread:$0]  %s5, 16, %s474, [#allocation12]
        $region32: #{tpu_custom_call.1} parent=11 // pred_fallthru
          _
        // Predicated region
        $region33: #{tpu_custom_call.1} parent=11 // pred_check
          %p477 = pneg %p188
        $region34: #{tpu_custom_call.1} parent=11 // pred_check_branch
          %479 = sbr.rel (%p477) target = $region36
        $region35: #{tpu_custom_call.1} parent=11 // pred_region
          %s481 = ssub.s32 16, 16
          %482 = vsyncadd [#allocation12], %s481
          %s484 = sshll.u32 [#allocation13], 4
          %s485 = int_to_ptr.vmem [resolvable:$true] %s484
          %487 = dma.hbm_to_vmem [thread:$0]  %s6, 16, %s485, [#allocation12]
        $region36: #{tpu_custom_call.1} parent=11 // pred_fallthru
          _
        // Predicated region
        $region37: #{tpu_custom_call.1} parent=11 // pred_check
          %p488 = pneg %p209
        $region38: #{tpu_custom_call.1} parent=11 // pred_check_branch
          %490 = sbr.rel (%p488) target = $region40
        $region39: #{tpu_custom_call.1} parent=11 // pred_region
          %s492 = ssub.s32 1024, 1024
          %493 = vsyncadd [#allocation15], %s492
          %s494 = sshll.u32 [#allocation14], 4
          %s495 = int_to_ptr.vmem [resolvable:$true] %s494
          %500 = dma.hbm_to_vmem [thread:$0]  %s7, 1024, %s495, [#allocation15], 64, 64, 4
        $region40: #{tpu_custom_call.1} parent=11 // pred_fallthru
          _
        // Predicated region
        $region41: #{tpu_custom_call.1} parent=11 // pred_check
          %p501 = pneg %p230
        $region42: #{tpu_custom_call.1} parent=11 // pred_check_branch
          %503 = sbr.rel (%p501) target = $region44
        $region43: #{tpu_custom_call.1} parent=11 // pred_region
          %s505 = ssub.s32 16, 16
          %506 = vsyncadd [#allocation15], %s505
          %s508 = sshll.u32 [#allocation16], 4
          %s509 = int_to_ptr.vmem [resolvable:$true] %s508
          %511 = dma.hbm_to_vmem [thread:$0]  %s8, 16, %s509, [#allocation15]
        $region44: #{tpu_custom_call.1} parent=11 // pred_fallthru
          _
        // Predicated region
        $region45: #{tpu_custom_call.1} parent=11 // pred_check
          %p512 = pneg %p251
        $region46: #{tpu_custom_call.1} parent=11 // pred_check_branch
          %514 = sbr.rel (%p512) target = $region48
        $region47: #{tpu_custom_call.1} parent=11 // pred_region
          %s516 = ssub.s32 16, 16
          %517 = vsyncadd [#allocation18], %s516
          %s519 = sshll.u32 [#allocation17], 4
          %s520 = int_to_ptr.vmem [resolvable:$true] %s519
          %522 = dma.hbm_to_vmem [thread:$0]  %s9, 16, %s520, [#allocation18]
        $region48: #{tpu_custom_call.1} parent=11 // pred_fallthru
          _
        // Predicated region
        $region49: #{tpu_custom_call.1} parent=11 // pred_check
          %p523 = pneg %p272
        $region50: #{tpu_custom_call.1} parent=11 // pred_check_branch
          %525 = sbr.rel (%p523) target = $region52
        $region51: #{tpu_custom_call.1} parent=11 // pred_region
          %s527 = ssub.s32 1024, 1024
          %528 = vsyncadd [#allocation18], %s527
          %s529 = sshll.u32 [#allocation19], 4
          %s530 = int_to_ptr.vmem [resolvable:$true] %s529
          %535 = dma.hbm_to_vmem [thread:$0]  %s10, 1024, %s530, [#allocation18], 64, 64, 4
        $region52: #{tpu_custom_call.1} parent=11 // pred_fallthru
          _
        // Predicated region
        $region53: #{tpu_custom_call.1} parent=11 // pred_check
          %p536 = pneg %p293
        $region54: #{tpu_custom_call.1} parent=11 // pred_check_branch
          %538 = sbr.rel (%p536) target = $region56
        $region55: #{tpu_custom_call.1} parent=11 // pred_region
          %s540 = ssub.s32 16, 16
          %541 = vsyncadd [#allocation21], %s540
          %s543 = sshll.u32 [#allocation20], 4
          %s544 = int_to_ptr.vmem [resolvable:$true] %s543
          %546 = dma.hbm_to_vmem [thread:$0]  %s11, 16, %s544, [#allocation21]
        $region56: #{tpu_custom_call.1} parent=11 // pred_fallthru
          _
        // Predicated region
        $region57: #{tpu_custom_call.1} parent=11 // pred_check
          %p547 = pneg %p314
        $region58: #{tpu_custom_call.1} parent=11 // pred_check_branch
          %549 = sbr.rel (%p547) target = $region60
        $region59: #{tpu_custom_call.1} parent=11 // pred_region
          %s551 = ssub.s32 16, 16
          %552 = vsyncadd [#allocation21], %s551
          %s554 = sshll.u32 [#allocation22], 4
          %s555 = int_to_ptr.vmem [resolvable:$true] %s554
          %557 = dma.hbm_to_vmem [thread:$0]  %s12, 16, %s555, [#allocation21]
        $region60: #{tpu_custom_call.1} parent=11 // pred_fallthru
          _
        // Predicated region
        $region61: #{tpu_custom_call.1} parent=11 // pred_check
          %p558 = pneg %p335
        $region62: #{tpu_custom_call.1} parent=11 // pred_check_branch
          %560 = sbr.rel (%p558) target = $region64
        $region63: #{tpu_custom_call.1} parent=11 // pred_region
          %s562 = ssub.s32 1024, 1024
          %563 = vsyncadd [#allocation24], %s562
          %s564 = sshll.u32 [#allocation23], 4
          %s565 = int_to_ptr.vmem [resolvable:$true] %s564
          %570 = dma.hbm_to_vmem [thread:$0]  %s13, 1024, %s565, [#allocation24], 64, 64, 4
        $region64: #{tpu_custom_call.1} parent=11 // pred_fallthru
          _
        // Predicated region
        $region65: #{tpu_custom_call.1} parent=11 // pred_check
          %p571 = pneg %p356
        $region66: #{tpu_custom_call.1} parent=11 // pred_check_branch
          %573 = sbr.rel (%p571) target = $region68
        $region67: #{tpu_custom_call.1} parent=11 // pred_region
          %s575 = ssub.s32 16, 16
          %576 = vsyncadd [#allocation24], %s575
          %s578 = sshll.u32 [#allocation25], 4
          %s579 = int_to_ptr.vmem [resolvable:$true] %s578
          %581 = dma.hbm_to_vmem [thread:$0]  %s14, 16, %s579, [#allocation24]
        $region68: #{tpu_custom_call.1} parent=11 // pred_fallthru
          _
        // Predicated region
        $region69: #{tpu_custom_call.1} parent=11 // pred_check
          %p582 = pneg %p377
        $region70: #{tpu_custom_call.1} parent=11 // pred_check_branch
          %584 = sbr.rel (%p582) target = $region72
        $region71: #{tpu_custom_call.1} parent=11 // pred_region
          %s586 = ssub.s32 16, 16
          %587 = vsyncadd [#allocation27], %s586
          %s589 = sshll.u32 [#allocation26], 4
          %s590 = int_to_ptr.vmem [resolvable:$true] %s589
          %592 = dma.hbm_to_vmem [thread:$0]  %s15, 16, %s590, [#allocation27]
        $region72: #{tpu_custom_call.1} parent=11 // pred_fallthru
          _
      $region12: #{tpu_custom_call.1} parent=5 // pred_fallthru
        _
      %p593 = scmp.lt.s32.totalorder %s36, 2
      // Predicated region
      $region73: #{tpu_custom_call.1} parent=5 // pred_check
        %p594 = pneg %p593
      $region74: #{tpu_custom_call.1} parent=5 // pred_check_branch
        %596 = sbr.rel (%p594) target = $region76
      $region75: #{tpu_custom_call.1} parent=5 // pred_region
        // Predicated region
        $region77: #{tpu_custom_call.1} parent=75 // pred_check
          %p597 = pneg %p56
        $region78: #{tpu_custom_call.1} parent=75 // pred_check_branch
          %599 = sbr.rel (%p597) target = $region80
        $region79: #{tpu_custom_call.1} parent=75 // pred_region
          %s600 = sand.u32 %s46, 1
          %s601 = scalar_lea.sflag [#allocation3], %s600
          %s602 = sand.u32 %s46, 1
          %s603 = smul.addr %s602, 512
          %s604 = scalar_lea.vmem [#allocation2], %s603
          %s605 = smul.u32 128, %s36
          %s607 = ssub.s32 8192, 8192
          %608 = vsyncadd %s601, %s607
          %s609 = smul.addr %s605, 64
          %s610 = scalar_lea.hbm %s0, %s609
          %s611 = sshll.u32 %s604, 4
          %s612 = int_to_ptr.vmem [resolvable:$true] %s611
          %617 = dma.hbm_to_vmem [thread:$0]  %s610, 8192, %s612, %s601, 64, 64, 4
        $region80: #{tpu_custom_call.1} parent=75 // pred_fallthru
          _
      $region76: #{tpu_custom_call.1} parent=5 // pred_fallthru
        _
      %p618 = scmp.le.s32.totalorder 1, %s36
      %p619 = scmp.lt.s32.totalorder %s36, 3
      %p620 = pnand %p618, %p619
      %p621 = pneg %p620
      // Predicated region
      $region81: #{tpu_custom_call.1} parent=5 // pred_check
        _
      $region82: #{tpu_custom_call.1} parent=5 // pred_check_branch
        %623 = sbr.rel (%p620) target = $region84
      $region83: #{tpu_custom_call.1} parent=5 // pred_region
        %s624 = ssub.s32 %s36, 1
        %s625 = sand.u32 %s49, 1
        %s626 = scalar_lea.sflag [#allocation3], %s625
        %s627 = sand.u32 %s49, 1
        %s628 = smul.addr %s627, 512
        %s629 = scalar_lea.vmem [#allocation2], %s628
        // Predicated region
        $region85: #{tpu_custom_call.1} parent=83 // pred_check
          %p630 = pneg %p62
        $region86: #{tpu_custom_call.1} parent=83 // pred_check_branch
          %632 = sbr.rel (%p630) target = $region88
        $region87: #{tpu_custom_call.1} parent=83 // pred_region
          %633 = dma.done %s626, 8192
        $region88: #{tpu_custom_call.1} parent=83 // pred_fallthru
          _
        // Predicated region
        $region89: #{tpu_custom_call.1} parent=83 // pred_check
          %p634 = pneg %p83
        $region90: #{tpu_custom_call.1} parent=83 // pred_check_branch
          %636 = sbr.rel (%p634) target = $region92
        $region91: #{tpu_custom_call.1} parent=83 // pred_region
          %637 = dma.done [#allocation6], 1024
        $region92: #{tpu_custom_call.1} parent=83 // pred_fallthru
          _
        // Predicated region
        $region93: #{tpu_custom_call.1} parent=83 // pred_check
          %p638 = pneg %p104
        $region94: #{tpu_custom_call.1} parent=83 // pred_check_branch
          %640 = sbr.rel (%p638) target = $region96
        $region95: #{tpu_custom_call.1} parent=83 // pred_region
          %641 = dma.done [#allocation6], 16
        $region96: #{tpu_custom_call.1} parent=83 // pred_fallthru
          _
        // Predicated region
        $region97: #{tpu_custom_call.1} parent=83 // pred_check
          %p642 = pneg %p125
        $region98: #{tpu_custom_call.1} parent=83 // pred_check_branch
          %644 = sbr.rel (%p642) target = $region100
        $region99: #{tpu_custom_call.1} parent=83 // pred_region
          %645 = dma.done [#allocation9], 16
        $region100: #{tpu_custom_call.1} parent=83 // pred_fallthru
          _
        // Predicated region
        $region101: #{tpu_custom_call.1} parent=83 // pred_check
          %p646 = pneg %p146
        $region102: #{tpu_custom_call.1} parent=83 // pred_check_branch
          %648 = sbr.rel (%p646) target = $region104
        $region103: #{tpu_custom_call.1} parent=83 // pred_region
          %649 = dma.done [#allocation9], 1024
        $region104: #{tpu_custom_call.1} parent=83 // pred_fallthru
          _
        // Predicated region
        $region105: #{tpu_custom_call.1} parent=83 // pred_check
          %p650 = pneg %p167
        $region106: #{tpu_custom_call.1} parent=83 // pred_check_branch
          %652 = sbr.rel (%p650) target = $region108
        $region107: #{tpu_custom_call.1} parent=83 // pred_region
          %653 = dma.done [#allocation12], 16
        $region108: #{tpu_custom_call.1} parent=83 // pred_fallthru
          _
        // Predicated region
        $region109: #{tpu_custom_call.1} parent=83 // pred_check
          %p654 = pneg %p188
        $region110: #{tpu_custom_call.1} parent=83 // pred_check_branch
          %656 = sbr.rel (%p654) target = $region112
        $region111: #{tpu_custom_call.1} parent=83 // pred_region
          %657 = dma.done [#allocation12], 16
        $region112: #{tpu_custom_call.1} parent=83 // pred_fallthru
          _
        // Predicated region
        $region113: #{tpu_custom_call.1} parent=83 // pred_check
          %p658 = pneg %p209
        $region114: #{tpu_custom_call.1} parent=83 // pred_check_branch
          %660 = sbr.rel (%p658) target = $region116
        $region115: #{tpu_custom_call.1} parent=83 // pred_region
          %661 = dma.done [#allocation15], 1024
        $region116: #{tpu_custom_call.1} parent=83 // pred_fallthru
          _
        // Predicated region
        $region117: #{tpu_custom_call.1} parent=83 // pred_check
          %p662 = pneg %p230
        $region118: #{tpu_custom_call.1} parent=83 // pred_check_branch
          %664 = sbr.rel (%p662) target = $region120
        $region119: #{tpu_custom_call.1} parent=83 // pred_region
          %665 = dma.done [#allocation15], 16
        $region120: #{tpu_custom_call.1} parent=83 // pred_fallthru
          _
        // Predicated region
        $region121: #{tpu_custom_call.1} parent=83 // pred_check
          %p666 = pneg %p251
        $region122: #{tpu_custom_call.1} parent=83 // pred_check_branch
          %668 = sbr.rel (%p666) target = $region124
        $region123: #{tpu_custom_call.1} parent=83 // pred_region
          %669 = dma.done [#allocation18], 16
        $region124: #{tpu_custom_call.1} parent=83 // pred_fallthru
          _
        // Predicated region
        $region125: #{tpu_custom_call.1} parent=83 // pred_check
          %p670 = pneg %p272
        $region126: #{tpu_custom_call.1} parent=83 // pred_check_branch
          %672 = sbr.rel (%p670) target = $region128
        $region127: #{tpu_custom_call.1} parent=83 // pred_region
          %673 = dma.done [#allocation18], 1024
        $region128: #{tpu_custom_call.1} parent=83 // pred_fallthru
          _
        // Predicated region
        $region129: #{tpu_custom_call.1} parent=83 // pred_check
          %p674 = pneg %p293
        $region130: #{tpu_custom_call.1} parent=83 // pred_check_branch
          %676 = sbr.rel (%p674) target = $region132
        $region131: #{tpu_custom_call.1} parent=83 // pred_region
          %677 = dma.done [#allocation21], 16
        $region132: #{tpu_custom_call.1} parent=83 // pred_fallthru
          _
        // Predicated region
        $region133: #{tpu_custom_call.1} parent=83 // pred_check
          %p678 = pneg %p314
        $region134: #{tpu_custom_call.1} parent=83 // pred_check_branch
          %680 = sbr.rel (%p678) target = $region136
        $region135: #{tpu_custom_call.1} parent=83 // pred_region
          %681 = dma.done [#allocation21], 16
        $region136: #{tpu_custom_call.1} parent=83 // pred_fallthru
          _
        // Predicated region
        $region137: #{tpu_custom_call.1} parent=83 // pred_check
          %p682 = pneg %p335
        $region138: #{tpu_custom_call.1} parent=83 // pred_check_branch
          %684 = sbr.rel (%p682) target = $region140
        $region139: #{tpu_custom_call.1} parent=83 // pred_region
          %685 = dma.done [#allocation24], 1024
        $region140: #{tpu_custom_call.1} parent=83 // pred_fallthru
          _
        // Predicated region
        $region141: #{tpu_custom_call.1} parent=83 // pred_check
          %p686 = pneg %p356
        $region142: #{tpu_custom_call.1} parent=83 // pred_check_branch
          %688 = sbr.rel (%p686) target = $region144
        $region143: #{tpu_custom_call.1} parent=83 // pred_region
          %689 = dma.done [#allocation24], 16
        $region144: #{tpu_custom_call.1} parent=83 // pred_fallthru
          _
        // Predicated region
        $region145: #{tpu_custom_call.1} parent=83 // pred_check
          %p690 = pneg %p377
        $region146: #{tpu_custom_call.1} parent=83 // pred_check_branch
          %692 = sbr.rel (%p690) target = $region148
        $region147: #{tpu_custom_call.1} parent=83 // pred_region
          %693 = dma.done [#allocation27], 16
        $region148: #{tpu_custom_call.1} parent=83 // pred_fallthru
          _
        %s694 = sand.u32 %s49, 1
        %s695 = scalar_lea.sflag [#allocation3], %s694
        %s696 = sand.u32 %s49, 1
        %s697 = smul.addr %s696, 512
        %s698 = scalar_lea.vmem [#allocation2], %s697
        %p699 = pneg %p62
        %p700 = pneg %p59
        %p701 = pneg %p83
        %p702 = pneg %p80
        %p703 = pneg %p104
        %p704 = pneg %p101
        %p705 = pneg %p125
        %p706 = pneg %p122
        %p707 = pneg %p146
        %p708 = pneg %p143
        %p709 = pneg %p167
        %p710 = pneg %p164
        %p711 = pneg %p188
        %p712 = pneg %p185
        %p713 = pneg %p209
        %p714 = pneg %p206
        %p715 = pneg %p230
        %p716 = pneg %p227
        %p717 = pneg %p251
        %p718 = pneg %p248
        %p719 = pneg %p272
        %p720 = pneg %p269
        %p721 = pneg %p293
        %p722 = pneg %p290
        %p723 = pneg %p314
        %p724 = pneg %p311
        %p725 = pneg %p335
        %p726 = pneg %p332
        %p727 = pneg %p356
        %p728 = pneg %p353
        %p729 = pneg %p377
        %p730 = pneg %p374
        %p731 = pneg %p403
        %p732 = pneg %p400
        %s733 = sand.u32 %s390, 1
        %s734 = scalar_lea.sflag [#allocation4], %s733
        %s735 = sand.u32 %s390, 1
        %s736 = smul.addr %s735, 512
        %s737 = scalar_lea.vmem [#allocation28], %s736
        %s738 = smul.u32 128, %s41
        %s739 = smul.u32 128, %s41
        %v741 = vld [vmem:[%s629] sm:$0xf]
        %v742 = vld [vmem:[%s629 + $0x4] sm:$0xf]
        %v743 = vld [vmem:[%s629 + $0x8] sm:$0xf]
        %v744 = vld [vmem:[%s629 + $0xc] sm:$0xf]
        %v745 = vld [vmem:[%s629 + $0x10] sm:$0xf]
        %v746 = vld [vmem:[%s629 + $0x14] sm:$0xf]
        %v747 = vld [vmem:[%s629 + $0x18] sm:$0xf]
        %v748 = vld [vmem:[%s629 + $0x1c] sm:$0xf]
        %v749 = vld [vmem:[%s629 + $0x20] sm:$0xf]
        %v750 = vld [vmem:[%s629 + $0x24] sm:$0xf]
        %v751 = vld [vmem:[%s629 + $0x28] sm:$0xf]
        %v752 = vld [vmem:[%s629 + $0x2c] sm:$0xf]
        %v753 = vld [vmem:[%s629 + $0x30] sm:$0xf]
        %v754 = vld [vmem:[%s629 + $0x34] sm:$0xf]
        %v755 = vld [vmem:[%s629 + $0x38] sm:$0xf]
        %v756 = vld [vmem:[%s629 + $0x3c] sm:$0xf]
        %v757 = vld [vmem:[%s629 + $0x40] sm:$0xf]
        %v758 = vld [vmem:[%s629 + $0x44] sm:$0xf]
        %v759 = vld [vmem:[%s629 + $0x48] sm:$0xf]
        %v760 = vld [vmem:[%s629 + $0x4c] sm:$0xf]
        %v761 = vld [vmem:[%s629 + $0x50] sm:$0xf]
        %v762 = vld [vmem:[%s629 + $0x54] sm:$0xf]
        %v763 = vld [vmem:[%s629 + $0x58] sm:$0xf]
        %v764 = vld [vmem:[%s629 + $0x5c] sm:$0xf]
        %v765 = vld [vmem:[%s629 + $0x60] sm:$0xf]
        %v766 = vld [vmem:[%s629 + $0x64] sm:$0xf]
        %v767 = vld [vmem:[%s629 + $0x68] sm:$0xf]
        %v768 = vld [vmem:[%s629 + $0x6c] sm:$0xf]
        %v769 = vld [vmem:[%s629 + $0x70] sm:$0xf]
        %v770 = vld [vmem:[%s629 + $0x74] sm:$0xf]
        %v771 = vld [vmem:[%s629 + $0x78] sm:$0xf]
        %v772 = vld [vmem:[%s629 + $0x7c] sm:$0xf]
        %v773 = vld [vmem:[%s629 + $0x80] sm:$0xf]
        %v774 = vld [vmem:[%s629 + $0x84] sm:$0xf]
        %v775 = vld [vmem:[%s629 + $0x88] sm:$0xf]
        %v776 = vld [vmem:[%s629 + $0x8c] sm:$0xf]
        %v777 = vld [vmem:[%s629 + $0x90] sm:$0xf]
        %v778 = vld [vmem:[%s629 + $0x94] sm:$0xf]
        %v779 = vld [vmem:[%s629 + $0x98] sm:$0xf]
        %v780 = vld [vmem:[%s629 + $0x9c] sm:$0xf]
        %v781 = vld [vmem:[%s629 + $0xa0] sm:$0xf]
        %v782 = vld [vmem:[%s629 + $0xa4] sm:$0xf]
        %v783 = vld [vmem:[%s629 + $0xa8] sm:$0xf]
        %v784 = vld [vmem:[%s629 + $0xac] sm:$0xf]
        %v785 = vld [vmem:[%s629 + $0xb0] sm:$0xf]
        %v786 = vld [vmem:[%s629 + $0xb4] sm:$0xf]
        %v787 = vld [vmem:[%s629 + $0xb8] sm:$0xf]
        %v788 = vld [vmem:[%s629 + $0xbc] sm:$0xf]
        %v789 = vld [vmem:[%s629 + $0xc0] sm:$0xf]
        %v790 = vld [vmem:[%s629 + $0xc4] sm:$0xf]
        %v791 = vld [vmem:[%s629 + $0xc8] sm:$0xf]
        %v792 = vld [vmem:[%s629 + $0xcc] sm:$0xf]
        %v793 = vld [vmem:[%s629 + $0xd0] sm:$0xf]
        %v794 = vld [vmem:[%s629 + $0xd4] sm:$0xf]
        %v795 = vld [vmem:[%s629 + $0xd8] sm:$0xf]
        %v796 = vld [vmem:[%s629 + $0xdc] sm:$0xf]
        %v797 = vld [vmem:[%s629 + $0xe0] sm:$0xf]
        %v798 = vld [vmem:[%s629 + $0xe4] sm:$0xf]
        %v799 = vld [vmem:[%s629 + $0xe8] sm:$0xf]
        %v800 = vld [vmem:[%s629 + $0xec] sm:$0xf]
        %v801 = vld [vmem:[%s629 + $0xf0] sm:$0xf]
        %v802 = vld [vmem:[%s629 + $0xf4] sm:$0xf]
        %v803 = vld [vmem:[%s629 + $0xf8] sm:$0xf]
        %v804 = vld [vmem:[%s629 + $0xfc] sm:$0xf]
        %v805 = vld [vmem:[%s629 + $0x100] sm:$0xf]
        %v806 = vld [vmem:[%s629 + $0x104] sm:$0xf]
        %v807 = vld [vmem:[%s629 + $0x108] sm:$0xf]
        %v808 = vld [vmem:[%s629 + $0x10c] sm:$0xf]
        %v809 = vld [vmem:[%s629 + $0x110] sm:$0xf]
        %v810 = vld [vmem:[%s629 + $0x114] sm:$0xf]
        %v811 = vld [vmem:[%s629 + $0x118] sm:$0xf]
        %v812 = vld [vmem:[%s629 + $0x11c] sm:$0xf]
        %v813 = vld [vmem:[%s629 + $0x120] sm:$0xf]
        %v814 = vld [vmem:[%s629 + $0x124] sm:$0xf]
        %v815 = vld [vmem:[%s629 + $0x128] sm:$0xf]
        %v816 = vld [vmem:[%s629 + $0x12c] sm:$0xf]
        %v817 = vld [vmem:[%s629 + $0x130] sm:$0xf]
        %v818 = vld [vmem:[%s629 + $0x134] sm:$0xf]
        %v819 = vld [vmem:[%s629 + $0x138] sm:$0xf]
        %v820 = vld [vmem:[%s629 + $0x13c] sm:$0xf]
        %v821 = vld [vmem:[%s629 + $0x140] sm:$0xf]
        %v822 = vld [vmem:[%s629 + $0x144] sm:$0xf]
        %v823 = vld [vmem:[%s629 + $0x148] sm:$0xf]
        %v824 = vld [vmem:[%s629 + $0x14c] sm:$0xf]
        %v825 = vld [vmem:[%s629 + $0x150] sm:$0xf]
        %v826 = vld [vmem:[%s629 + $0x154] sm:$0xf]
        %v827 = vld [vmem:[%s629 + $0x158] sm:$0xf]
        %v828 = vld [vmem:[%s629 + $0x15c] sm:$0xf]
        %v829 = vld [vmem:[%s629 + $0x160] sm:$0xf]
        %v830 = vld [vmem:[%s629 + $0x164] sm:$0xf]
        %v831 = vld [vmem:[%s629 + $0x168] sm:$0xf]
        %v832 = vld [vmem:[%s629 + $0x16c] sm:$0xf]
        %v833 = vld [vmem:[%s629 + $0x170] sm:$0xf]
        %v834 = vld [vmem:[%s629 + $0x174] sm:$0xf]
        %v835 = vld [vmem:[%s629 + $0x178] sm:$0xf]
        %v836 = vld [vmem:[%s629 + $0x17c] sm:$0xf]
        %v837 = vld [vmem:[%s629 + $0x180] sm:$0xf]
        %v838 = vld [vmem:[%s629 + $0x184] sm:$0xf]
        %v839 = vld [vmem:[%s629 + $0x188] sm:$0xf]
        %v840 = vld [vmem:[%s629 + $0x18c] sm:$0xf]
        %v841 = vld [vmem:[%s629 + $0x190] sm:$0xf]
        %v842 = vld [vmem:[%s629 + $0x194] sm:$0xf]
        %v843 = vld [vmem:[%s629 + $0x198] sm:$0xf]
        %v844 = vld [vmem:[%s629 + $0x19c] sm:$0xf]
        %v845 = vld [vmem:[%s629 + $0x1a0] sm:$0xf]
        %v846 = vld [vmem:[%s629 + $0x1a4] sm:$0xf]
        %v847 = vld [vmem:[%s629 + $0x1a8] sm:$0xf]
        %v848 = vld [vmem:[%s629 + $0x1ac] sm:$0xf]
        %v849 = vld [vmem:[%s629 + $0x1b0] sm:$0xf]
        %v850 = vld [vmem:[%s629 + $0x1b4] sm:$0xf]
        %v851 = vld [vmem:[%s629 + $0x1b8] sm:$0xf]
        %v852 = vld [vmem:[%s629 + $0x1bc] sm:$0xf]
        %v853 = vld [vmem:[%s629 + $0x1c0] sm:$0xf]
        %v854 = vld [vmem:[%s629 + $0x1c4] sm:$0xf]
        %v855 = vld [vmem:[%s629 + $0x1c8] sm:$0xf]
        %v856 = vld [vmem:[%s629 + $0x1cc] sm:$0xf]
        %v857 = vld [vmem:[%s629 + $0x1d0] sm:$0xf]
        %v858 = vld [vmem:[%s629 + $0x1d4] sm:$0xf]
        %v859 = vld [vmem:[%s629 + $0x1d8] sm:$0xf]
        %v860 = vld [vmem:[%s629 + $0x1dc] sm:$0xf]
        %v861 = vld [vmem:[%s629 + $0x1e0] sm:$0xf]
        %v862 = vld [vmem:[%s629 + $0x1e4] sm:$0xf]
        %v863 = vld [vmem:[%s629 + $0x1e8] sm:$0xf]
        %v864 = vld [vmem:[%s629 + $0x1ec] sm:$0xf]
        %v865 = vld [vmem:[%s629 + $0x1f0] sm:$0xf]
        %v866 = vld [vmem:[%s629 + $0x1f4] sm:$0xf]
        %v867 = vld [vmem:[%s629 + $0x1f8] sm:$0xf]
        %v868 = vld [vmem:[%s629 + $0x1fc] sm:$0xf]
        %v869 = vld [vmem:[#allocation5] sm:$0xf]
        %v870 = vld [vmem:[#allocation5 + $0x4] sm:$0xf]
        %v871 = vld [vmem:[#allocation5 + $0x8] sm:$0xf]
        %v872 = vld [vmem:[#allocation5 + $0xc] sm:$0xf]
        %v873 = vld [vmem:[#allocation5 + $0x10] sm:$0xf]
        %v874 = vld [vmem:[#allocation5 + $0x14] sm:$0xf]
        %v875 = vld [vmem:[#allocation5 + $0x18] sm:$0xf]
        %v876 = vld [vmem:[#allocation5 + $0x1c] sm:$0xf]
        %v877 = vld [vmem:[#allocation5 + $0x20] sm:$0xf]
        %v878 = vld [vmem:[#allocation5 + $0x24] sm:$0xf]
        %v879 = vld [vmem:[#allocation5 + $0x28] sm:$0xf]
        %v880 = vld [vmem:[#allocation5 + $0x2c] sm:$0xf]
        %v881 = vld [vmem:[#allocation5 + $0x30] sm:$0xf]
        %v882 = vld [vmem:[#allocation5 + $0x34] sm:$0xf]
        %v883 = vld [vmem:[#allocation5 + $0x38] sm:$0xf]
        %v884 = vld [vmem:[#allocation5 + $0x3c] sm:$0xf]
        %v1013 = vunpack.c.l.b16 %v741
        %v1014 = vunpack.c.l.b16 %v742
        %v1015 = vunpack.c.l.b16 %v743
        %v1016 = vunpack.c.l.b16 %v744
        %v1017 = vunpack.c.l.b16 %v745
        %v1018 = vunpack.c.l.b16 %v746
        %v1019 = vunpack.c.l.b16 %v747
        %v1020 = vunpack.c.l.b16 %v748
        %v1021 = vunpack.c.l.b16 %v749
        %v1022 = vunpack.c.l.b16 %v750
        %v1023 = vunpack.c.l.b16 %v751
        %v1024 = vunpack.c.l.b16 %v752
        %v1025 = vunpack.c.l.b16 %v753
        %v1026 = vunpack.c.l.b16 %v754
        %v1027 = vunpack.c.l.b16 %v755
        %v1028 = vunpack.c.l.b16 %v756
        %v1029 = vunpack.c.l.b16 %v757
        %v1030 = vunpack.c.l.b16 %v758
        %v1031 = vunpack.c.l.b16 %v759
        %v1032 = vunpack.c.l.b16 %v760
        %v1033 = vunpack.c.l.b16 %v761
        %v1034 = vunpack.c.l.b16 %v762
        %v1035 = vunpack.c.l.b16 %v763
        %v1036 = vunpack.c.l.b16 %v764
        %v1037 = vunpack.c.l.b16 %v765
        %v1038 = vunpack.c.l.b16 %v766
        %v1039 = vunpack.c.l.b16 %v767
        %v1040 = vunpack.c.l.b16 %v768
        %v1041 = vunpack.c.l.b16 %v769
        %v1042 = vunpack.c.l.b16 %v770
        %v1043 = vunpack.c.l.b16 %v771
        %v1044 = vunpack.c.l.b16 %v772
        %v1045 = vunpack.c.l.b16 %v773
        %v1046 = vunpack.c.l.b16 %v774
        %v1047 = vunpack.c.l.b16 %v775
        %v1048 = vunpack.c.l.b16 %v776
        %v1049 = vunpack.c.l.b16 %v777
        %v1050 = vunpack.c.l.b16 %v778
        %v1051 = vunpack.c.l.b16 %v779
        %v1052 = vunpack.c.l.b16 %v780
        %v1053 = vunpack.c.l.b16 %v781
        %v1054 = vunpack.c.l.b16 %v782
        %v1055 = vunpack.c.l.b16 %v783
        %v1056 = vunpack.c.l.b16 %v784
        %v1057 = vunpack.c.l.b16 %v785
        %v1058 = vunpack.c.l.b16 %v786
        %v1059 = vunpack.c.l.b16 %v787
        %v1060 = vunpack.c.l.b16 %v788
        %v1061 = vunpack.c.l.b16 %v789
        %v1062 = vunpack.c.l.b16 %v790
        %v1063 = vunpack.c.l.b16 %v791
        %v1064 = vunpack.c.l.b16 %v792
        %v1065 = vunpack.c.l.b16 %v793
        %v1066 = vunpack.c.l.b16 %v794
        %v1067 = vunpack.c.l.b16 %v795
        %v1068 = vunpack.c.l.b16 %v796
        %v1069 = vunpack.c.l.b16 %v797
        %v1070 = vunpack.c.l.b16 %v798
        %v1071 = vunpack.c.l.b16 %v799
        %v1072 = vunpack.c.l.b16 %v800
        %v1073 = vunpack.c.l.b16 %v801
        %v1074 = vunpack.c.l.b16 %v802
        %v1075 = vunpack.c.l.b16 %v803
        %v1076 = vunpack.c.l.b16 %v804
        %v1077 = vunpack.c.l.b16 %v805
        %v1078 = vunpack.c.l.b16 %v806
        %v1079 = vunpack.c.l.b16 %v807
        %v1080 = vunpack.c.l.b16 %v808
        %v1081 = vunpack.c.l.b16 %v809
        %v1082 = vunpack.c.l.b16 %v810
        %v1083 = vunpack.c.l.b16 %v811
        %v1084 = vunpack.c.l.b16 %v812
        %v1085 = vunpack.c.l.b16 %v813
        %v1086 = vunpack.c.l.b16 %v814
        %v1087 = vunpack.c.l.b16 %v815
        %v1088 = vunpack.c.l.b16 %v816
        %v1089 = vunpack.c.l.b16 %v817
        %v1090 = vunpack.c.l.b16 %v818
        %v1091 = vunpack.c.l.b16 %v819
        %v1092 = vunpack.c.l.b16 %v820
        %v1093 = vunpack.c.l.b16 %v821
        %v1094 = vunpack.c.l.b16 %v822
        %v1095 = vunpack.c.l.b16 %v823
        %v1096 = vunpack.c.l.b16 %v824
        %v1097 = vunpack.c.l.b16 %v825
        %v1098 = vunpack.c.l.b16 %v826
        %v1099 = vunpack.c.l.b16 %v827
        %v1100 = vunpack.c.l.b16 %v828
        %v1101 = vunpack.c.l.b16 %v829
        %v1102 = vunpack.c.l.b16 %v830
        %v1103 = vunpack.c.l.b16 %v831
        %v1104 = vunpack.c.l.b16 %v832
        %v1105 = vunpack.c.l.b16 %v833
        %v1106 = vunpack.c.l.b16 %v834
        %v1107 = vunpack.c.l.b16 %v835
        %v1108 = vunpack.c.l.b16 %v836
        %v1109 = vunpack.c.l.b16 %v837
        %v1110 = vunpack.c.l.b16 %v838
        %v1111 = vunpack.c.l.b16 %v839
        %v1112 = vunpack.c.l.b16 %v840
        %v1113 = vunpack.c.l.b16 %v841
        %v1114 = vunpack.c.l.b16 %v842
        %v1115 = vunpack.c.l.b16 %v843
        %v1116 = vunpack.c.l.b16 %v844
        %v1117 = vunpack.c.l.b16 %v845
        %v1118 = vunpack.c.l.b16 %v846
        %v1119 = vunpack.c.l.b16 %v847
        %v1120 = vunpack.c.l.b16 %v848
        %v1121 = vunpack.c.l.b16 %v849
        %v1122 = vunpack.c.l.b16 %v850
        %v1123 = vunpack.c.l.b16 %v851
        %v1124 = vunpack.c.l.b16 %v852
        %v1125 = vunpack.c.l.b16 %v853
        %v1126 = vunpack.c.l.b16 %v854
        %v1127 = vunpack.c.l.b16 %v855
        %v1128 = vunpack.c.l.b16 %v856
        %v1129 = vunpack.c.l.b16 %v857
        %v1130 = vunpack.c.l.b16 %v858
        %v1131 = vunpack.c.l.b16 %v859
        %v1132 = vunpack.c.l.b16 %v860
        %v1133 = vunpack.c.l.b16 %v861
        %v1134 = vunpack.c.l.b16 %v862
        %v1135 = vunpack.c.l.b16 %v863
        %v1136 = vunpack.c.l.b16 %v864
        %v1137 = vunpack.c.l.b16 %v865
        %v1138 = vunpack.c.l.b16 %v866
        %v1139 = vunpack.c.l.b16 %v867
        %v1140 = vunpack.c.l.b16 %v868
        %v1141 = vpack.c.b16 %v1014, %v1013
        %v1142 = vpack.c.b16 %v1016, %v1015
        %v1143 = vpack.c.b16 %v1018, %v1017
        %v1144 = vpack.c.b16 %v1020, %v1019
        %v1145 = vpack.c.b16 %v1022, %v1021
        %v1146 = vpack.c.b16 %v1024, %v1023
        %v1147 = vpack.c.b16 %v1026, %v1025
        %v1148 = vpack.c.b16 %v1028, %v1027
        %v1149 = vpack.c.b16 %v1030, %v1029
        %v1150 = vpack.c.b16 %v1032, %v1031
        %v1151 = vpack.c.b16 %v1034, %v1033
        %v1152 = vpack.c.b16 %v1036, %v1035
        %v1153 = vpack.c.b16 %v1038, %v1037
        %v1154 = vpack.c.b16 %v1040, %v1039
        %v1155 = vpack.c.b16 %v1042, %v1041
        %v1156 = vpack.c.b16 %v1044, %v1043
        %v1157 = vpack.c.b16 %v1046, %v1045
        %v1158 = vpack.c.b16 %v1048, %v1047
        %v1159 = vpack.c.b16 %v1050, %v1049
        %v1160 = vpack.c.b16 %v1052, %v1051
        %v1161 = vpack.c.b16 %v1054, %v1053
        %v1162 = vpack.c.b16 %v1056, %v1055
        %v1163 = vpack.c.b16 %v1058, %v1057
        %v1164 = vpack.c.b16 %v1060, %v1059
        %v1165 = vpack.c.b16 %v1062, %v1061
        %v1166 = vpack.c.b16 %v1064, %v1063
        %v1167 = vpack.c.b16 %v1066, %v1065
        %v1168 = vpack.c.b16 %v1068, %v1067
        %v1169 = vpack.c.b16 %v1070, %v1069
        %v1170 = vpack.c.b16 %v1072, %v1071
        %v1171 = vpack.c.b16 %v1074, %v1073
        %v1172 = vpack.c.b16 %v1076, %v1075
        %v1173 = vpack.c.b16 %v1078, %v1077
        %v1174 = vpack.c.b16 %v1080, %v1079
        %v1175 = vpack.c.b16 %v1082, %v1081
        %v1176 = vpack.c.b16 %v1084, %v1083
        %v1177 = vpack.c.b16 %v1086, %v1085
        %v1178 = vpack.c.b16 %v1088, %v1087
        %v1179 = vpack.c.b16 %v1090, %v1089
        %v1180 = vpack.c.b16 %v1092, %v1091
        %v1181 = vpack.c.b16 %v1094, %v1093
        %v1182 = vpack.c.b16 %v1096, %v1095
        %v1183 = vpack.c.b16 %v1098, %v1097
        %v1184 = vpack.c.b16 %v1100, %v1099
        %v1185 = vpack.c.b16 %v1102, %v1101
        %v1186 = vpack.c.b16 %v1104, %v1103
        %v1187 = vpack.c.b16 %v1106, %v1105
        %v1188 = vpack.c.b16 %v1108, %v1107
        %v1189 = vpack.c.b16 %v1110, %v1109
        %v1190 = vpack.c.b16 %v1112, %v1111
        %v1191 = vpack.c.b16 %v1114, %v1113
        %v1192 = vpack.c.b16 %v1116, %v1115
        %v1193 = vpack.c.b16 %v1118, %v1117
        %v1194 = vpack.c.b16 %v1120, %v1119
        %v1195 = vpack.c.b16 %v1122, %v1121
        %v1196 = vpack.c.b16 %v1124, %v1123
        %v1197 = vpack.c.b16 %v1126, %v1125
        %v1198 = vpack.c.b16 %v1128, %v1127
        %v1199 = vpack.c.b16 %v1130, %v1129
        %v1200 = vpack.c.b16 %v1132, %v1131
        %v1201 = vpack.c.b16 %v1134, %v1133
        %v1202 = vpack.c.b16 %v1136, %v1135
        %v1203 = vpack.c.b16 %v1138, %v1137
        %v1204 = vpack.c.b16 %v1140, %v1139
        %v1285 = vunpack.c.l.b16 %v869
        %v1286 = vunpack.c.l.b16 %v870
        %v1287 = vunpack.c.l.b16 %v871
        %v1288 = vunpack.c.l.b16 %v872
        %v1289 = vunpack.c.l.b16 %v873
        %v1290 = vunpack.c.l.b16 %v874
        %v1291 = vunpack.c.l.b16 %v875
        %v1292 = vunpack.c.l.b16 %v876
        %v1293 = vunpack.c.l.b16 %v877
        %v1294 = vunpack.c.l.b16 %v878
        %v1295 = vunpack.c.l.b16 %v879
        %v1296 = vunpack.c.l.b16 %v880
        %v1297 = vunpack.c.l.b16 %v881
        %v1298 = vunpack.c.l.b16 %v882
        %v1299 = vunpack.c.l.b16 %v883
        %v1300 = vunpack.c.l.b16 %v884
        %v1301 = vpack.c.b16 %v1286, %v1285
        %v1302 = vpack.c.b16 %v1288, %v1287
        %v1303 = vpack.c.b16 %v1290, %v1289
        %v1304 = vpack.c.b16 %v1292, %v1291
        %v1305 = vpack.c.b16 %v1294, %v1293
        %v1306 = vpack.c.b16 %v1296, %v1295
        %v1307 = vpack.c.b16 %v1298, %v1297
        %v1308 = vpack.c.b16 %v1300, %v1299
        %1317 = vmatprep.subr.bf16.mxu0 0
        %1318 = vmatpush1.bf16.msra.mxu0 %v1301
        %1319 = vmatprep.subr.bf16.mxu0 0
        %1320 = vmatpush1.bf16.msra.mxu0 %v1302
        %1321 = vmatprep.subr.bf16.mxu0 0
        %1322 = vmatpush1.bf16.msra.mxu0 %v1303
        %1323 = vmatprep.subr.bf16.mxu0 0
        %1324 = vmatpush1.bf16.msra.mxu0 %v1304
        %1325 = vmatprep.subr.bf16.mxu0 0
        %1326 = vmatpush1.bf16.msra.mxu0 %v1305
        %1327 = vmatprep.subr.bf16.mxu0 0
        %1328 = vmatpush1.bf16.msra.mxu0 %v1306
        %1329 = vmatprep.subr.bf16.mxu0 0
        %1330 = vmatpush1.bf16.msra.mxu0 %v1307
        %1331 = vmatprep.subr.bf16.mxu0 0
        %1332 = vmatpush1.bf16.msra.mxu0 %v1308
        %1333 = vmatprep.subr.bf16.mxu0 0
        %1334 = vmatpush1.bf16.msra.mxu0 0
        %1335 = vmatprep.subr.bf16.mxu0 0
        %1336 = vmatpush1.bf16.msra.mxu0 0
        %1337 = vmatprep.subr.bf16.mxu0 0
        %1338 = vmatpush1.bf16.msra.mxu0 0
        %1339 = vmatprep.subr.bf16.mxu0 0
        %1340 = vmatpush1.bf16.msra.mxu0 0
        %1341 = vmatprep.subr.bf16.mxu0 0
        %1342 = vmatpush1.bf16.msra.mxu0 0
        %1343 = vmatprep.subr.bf16.mxu0 0
        %1344 = vmatpush1.bf16.msra.mxu0 0
        %1345 = vmatprep.subr.bf16.mxu0 0
        %1346 = vmatpush1.bf16.msra.mxu0 0
        %1347 = vmatprep.subr.bf16.mxu0 0
        %1348 = vmatpush1.bf16.msra.mxu0 0
        %1349 = vmatprep.mubr.bf16.mxu0 0
        %1350 = vmatmul.mubr.bf16.gmra.mrb[0].mxu0 %v1141
        %v1351 = vpop.f32.mrb[0].mxu0
        %v1352 = vadd.f32 0.0, %v1351
        %v1353 = vpop.f32.mrb[0].mxu0
        %v1354 = vpop.f32.mrb[0].mxu0
        %v1355 = vadd.f32 0.0, %v1354
        %v1356 = vpop.f32.mrb[0].mxu0
        %1357 = vmatprep.mubr.bf16.mxu0 0
        %1358 = vmatmul.mubr.bf16.gmra.mrb[0].mxu0 %v1142
        %v1359 = vpop.f32.mrb[0].mxu0
        %v1360 = vadd.f32 0.0, %v1359
        %v1361 = vpop.f32.mrb[0].mxu0
        %v1362 = vpop.f32.mrb[0].mxu0
        %v1363 = vadd.f32 0.0, %v1362
        %v1364 = vpop.f32.mrb[0].mxu0
        %1365 = vmatprep.mubr.bf16.mxu0 0
        %1366 = vmatmul.mubr.bf16.gmra.mrb[0].mxu0 %v1143
        %v1367 = vpop.f32.mrb[0].mxu0
        %v1368 = vadd.f32 0.0, %v1367
        %v1369 = vpop.f32.mrb[0].mxu0
        %v1370 = vpop.f32.mrb[0].mxu0
        %v1371 = vadd.f32 0.0, %v1370
        %v1372 = vpop.f32.mrb[0].mxu0
        %1373 = vmatprep.mubr.bf16.mxu0 0
        %1374 = vmatmul.mubr.bf16.gmra.mrb[0].mxu0 %v1144
        %v1375 = vpop.f32.mrb[0].mxu0
        %v1376 = vadd.f32 0.0, %v1375
        %v1377 = vpop.f32.mrb[0].mxu0
        %v1378 = vpop.f32.mrb[0].mxu0
        %v1379 = vadd.f32 0.0, %v1378
        %v1380 = vpop.f32.mrb[0].mxu0
        %1381 = vmatprep.mubr.bf16.mxu0 0
        %1382 = vmatmul.mubr.bf16.gmra.mrb[0].mxu0 %v1145
        %v1383 = vpop.f32.mrb[0].mxu0
        %v1384 = vadd.f32 0.0, %v1383
        %v1385 = vpop.f32.mrb[0].mxu0
        %v1386 = vpop.f32.mrb[0].mxu0
        %v1387 = vadd.f32 0.0, %v1386
        %v1388 = vpop.f32.mrb[0].mxu0
        %1389 = vmatprep.mubr.bf16.mxu0 0
        %1390 = vmatmul.mubr.bf16.gmra.mrb[0].mxu0 %v1146
        %v1391 = vpop.f32.mrb[0].mxu0
        %v1392 = vadd.f32 0.0, %v1391
        %v1393 = vpop.f32.mrb[0].mxu0
        %v1394 = vpop.f32.mrb[0].mxu0
        %v1395 = vadd.f32 0.0, %v1394
        %v1396 = vpop.f32.mrb[0].mxu0
        %1397 = vmatprep.mubr.bf16.mxu0 0
        %1398 = vmatmul.mubr.bf16.gmra.mrb[0].mxu0 %v1147
        %v1399 = vpop.f32.mrb[0].mxu0
        %v1400 = vadd.f32 0.0, %v1399
        %v1401 = vpop.f32.mrb[0].mxu0
        %v1402 = vpop.f32.mrb[0].mxu0
        %v1403 = vadd.f32 0.0, %v1402
        %v1404 = vpop.f32.mrb[0].mxu0
        %1405 = vmatprep.mubr.bf16.mxu0 0
        %1406 = vmatmul.mubr.bf16.gmra.mrb[0].mxu0 %v1148
        %v1407 = vpop.f32.mrb[0].mxu0
        %v1408 = vadd.f32 0.0, %v1407
        %v1409 = vpop.f32.mrb[0].mxu0
        %v1410 = vpop.f32.mrb[0].mxu0
        %v1411 = vadd.f32 0.0, %v1410
        %v1412 = vpop.f32.mrb[0].mxu0
        %1413 = vmatprep.mubr.bf16.mxu0 0
        %1414 = vmatmul.mubr.bf16.gmra.mrb[0].mxu0 %v1149
        %v1415 = vpop.f32.mrb[0].mxu0
        %v1416 = vadd.f32 0.0, %v1415
        %v1417 = vpop.f32.mrb[0].mxu0
        %v1418 = vpop.f32.mrb[0].mxu0
        %v1419 = vadd.f32 0.0, %v1418
        %v1420 = vpop.f32.mrb[0].mxu0
        %1421 = vmatprep.mubr.bf16.mxu0 0
        %1422 = vmatmul.mubr.bf16.gmra.mrb[0].mxu0 %v1150
        %v1423 = vpop.f32.mrb[0].mxu0
        %v1424 = vadd.f32 0.0, %v1423
        %v1425 = vpop.f32.mrb[0].mxu0
        %v1426 = vpop.f32.mrb[0].mxu0
        %v1427 = vadd.f32 0.0, %v1426
        %v1428 = vpop.f32.mrb[0].mxu0
        %1429 = vmatprep.mubr.bf16.mxu0 0
        %1430 = vmatmul.mubr.bf16.gmra.mrb[0].mxu0 %v1151
        %v1431 = vpop.f32.mrb[0].mxu0
        %v1432 = vadd.f32 0.0, %v1431
        %v1433 = vpop.f32.mrb[0].mxu0
        %v1434 = vpop.f32.mrb[0].mxu0
        %v1435 = vadd.f32 0.0, %v1434
        %v1436 = vpop.f32.mrb[0].mxu0
        %1437 = vmatprep.mubr.bf16.mxu0 0
        %1438 = vmatmul.mubr.bf16.gmra.mrb[0].mxu0 %v1152
        %v1439 = vpop.f32.mrb[0].mxu0
        %v1440 = vadd.f32 0.0, %v1439
        %v1441 = vpop.f32.mrb[0].mxu0
        %v1442 = vpop.f32.mrb[0].mxu0
        %v1443 = vadd.f32 0.0, %v1442
        %v1444 = vpop.f32.mrb[0].mxu0
        %1445 = vmatprep.mubr.bf16.mxu0 0
        %1446 = vmatmul.mubr.bf16.gmra.mrb[0].mxu0 %v1153
        %v1447 = vpop.f32.mrb[0].mxu0
        %v1448 = vadd.f32 0.0, %v1447
        %v1449 = vpop.f32.mrb[0].mxu0
        %v1450 = vpop.f32.mrb[0].mxu0
        %v1451 = vadd.f32 0.0, %v1450
        %v1452 = vpop.f32.mrb[0].mxu0
        %1453 = vmatprep.mubr.bf16.mxu0 0
        %1454 = vmatmul.mubr.bf16.gmra.mrb[0].mxu0 %v1154
        %v1455 = vpop.f32.mrb[0].mxu0
        %v1456 = vadd.f32 0.0, %v1455
        %v1457 = vpop.f32.mrb[0].mxu0
        %v1458 = vpop.f32.mrb[0].mxu0
        %v1459 = vadd.f32 0.0, %v1458
        %v1460 = vpop.f32.mrb[0].mxu0
        %1461 = vmatprep.mubr.bf16.mxu0 0
        %1462 = vmatmul.mubr.bf16.gmra.mrb[0].mxu0 %v1155
        %v1463 = vpop.f32.mrb[0].mxu0
        %v1464 = vadd.f32 0.0, %v1463
        %v1465 = vpop.f32.mrb[0].mxu0
        %v1466 = vpop.f32.mrb[0].mxu0
        %v1467 = vadd.f32 0.0, %v1466
        %v1468 = vpop.f32.mrb[0].mxu0
        %1469 = vmatprep.mubr.bf16.mxu0 0
        %1470 = vmatmul.mubr.bf16.gmra.mrb[0].mxu0 %v1156
        %v1471 = vpop.f32.mrb[0].mxu0
        %v1472 = vadd.f32 0.0, %v1471
        %v1473 = vpop.f32.mrb[0].mxu0
        %v1474 = vpop.f32.mrb[0].mxu0
        %v1475 = vadd.f32 0.0, %v1474
        %v1476 = vpop.f32.mrb[0].mxu0
        %1477 = vmatprep.mubr.bf16.mxu0 0
        %1478 = vmatmul.mubr.bf16.gmra.mrb[0].mxu0 %v1157
        %v1479 = vpop.f32.mrb[0].mxu0
        %v1480 = vadd.f32 0.0, %v1479
        %v1481 = vpop.f32.mrb[0].mxu0
        %v1482 = vpop.f32.mrb[0].mxu0
        %v1483 = vadd.f32 0.0, %v1482
        %v1484 = vpop.f32.mrb[0].mxu0
        %1485 = vmatprep.mubr.bf16.mxu0 0
        %1486 = vmatmul.mubr.bf16.gmra.mrb[0].mxu0 %v1158
        %v1487 = vpop.f32.mrb[0].mxu0
        %v1488 = vadd.f32 0.0, %v1487
        %v1489 = vpop.f32.mrb[0].mxu0
        %v1490 = vpop.f32.mrb[0].mxu0
        %v1491 = vadd.f32 0.0, %v1490
        %v1492 = vpop.f32.mrb[0].mxu0
        %1493 = vmatprep.mubr.bf16.mxu0 0
        %1494 = vmatmul.mubr.bf16.gmra.mrb[0].mxu0 %v1159
        %v1495 = vpop.f32.mrb[0].mxu0
        %v1496 = vadd.f32 0.0, %v1495
        %v1497 = vpop.f32.mrb[0].mxu0
        %v1498 = vpop.f32.mrb[0].mxu0
        %v1499 = vadd.f32 0.0, %v1498
        %v1500 = vpop.f32.mrb[0].mxu0
        %1501 = vmatprep.mubr.bf16.mxu0 0
        %1502 = vmatmul.mubr.bf16.gmra.mrb[0].mxu0 %v1160
        %v1503 = vpop.f32.mrb[0].mxu0
        %v1504 = vadd.f32 0.0, %v1503
        %v1505 = vpop.f32.mrb[0].mxu0
        %v1506 = vpop.f32.mrb[0].mxu0
        %v1507 = vadd.f32 0.0, %v1506
        %v1508 = vpop.f32.mrb[0].mxu0
        %1509 = vmatprep.mubr.bf16.mxu0 0
        %1510 = vmatmul.mubr.bf16.gmra.mrb[0].mxu0 %v1161
        %v1511 = vpop.f32.mrb[0].mxu0
        %v1512 = vadd.f32 0.0, %v1511
        %v1513 = vpop.f32.mrb[0].mxu0
        %v1514 = vpop.f32.mrb[0].mxu0
        %v1515 = vadd.f32 0.0, %v1514
        %v1516 = vpop.f32.mrb[0].mxu0
        %1517 = vmatprep.mubr.bf16.mxu0 0
        %1518 = vmatmul.mubr.bf16.gmra.mrb[0].mxu0 %v1162
        %v1519 = vpop.f32.mrb[0].mxu0
        %v1520 = vadd.f32 0.0, %v1519
        %v1521 = vpop.f32.mrb[0].mxu0
        %v1522 = vpop.f32.mrb[0].mxu0
        %v1523 = vadd.f32 0.0, %v1522
        %v1524 = vpop.f32.mrb[0].mxu0
        %1525 = vmatprep.mubr.bf16.mxu0 0
        %1526 = vmatmul.mubr.bf16.gmra.mrb[0].mxu0 %v1163
        %v1527 = vpop.f32.mrb[0].mxu0
        %v1528 = vadd.f32 0.0, %v1527
        %v1529 = vpop.f32.mrb[0].mxu0
        %v1530 = vpop.f32.mrb[0].mxu0
        %v1531 = vadd.f32 0.0, %v1530
        %v1532 = vpop.f32.mrb[0].mxu0
        %1533 = vmatprep.mubr.bf16.mxu0 0
        %1534 = vmatmul.mubr.bf16.gmra.mrb[0].mxu0 %v1164
        %v1535 = vpop.f32.mrb[0].mxu0
        %v1536 = vadd.f32 0.0, %v1535
        %v1537 = vpop.f32.mrb[0].mxu0
        %v1538 = vpop.f32.mrb[0].mxu0
        %v1539 = vadd.f32 0.0, %v1538
        %v1540 = vpop.f32.mrb[0].mxu0
        %1541 = vmatprep.mubr.bf16.mxu0 0
        %1542 = vmatmul.mubr.bf16.gmra.mrb[0].mxu0 %v1165
        %v1543 = vpop.f32.mrb[0].mxu0
        %v1544 = vadd.f32 0.0, %v1543
        %v1545 = vpop.f32.mrb[0].mxu0
        %v1546 = vpop.f32.mrb[0].mxu0
        %v1547 = vadd.f32 0.0, %v1546
        %v1548 = vpop.f32.mrb[0].mxu0
        %1549 = vmatprep.mubr.bf16.mxu0 0
        %1550 = vmatmul.mubr.bf16.gmra.mrb[0].mxu0 %v1166
        %v1551 = vpop.f32.mrb[0].mxu0
        %v1552 = vadd.f32 0.0, %v1551
        %v1553 = vpop.f32.mrb[0].mxu0
        %v1554 = vpop.f32.mrb[0].mxu0
        %v1555 = vadd.f32 0.0, %v1554
        %v1556 = vpop.f32.mrb[0].mxu0
        %1557 = vmatprep.mubr.bf16.mxu0 0
        %1558 = vmatmul.mubr.bf16.gmra.mrb[0].mxu0 %v1167
        %v1559 = vpop.f32.mrb[0].mxu0
        %v1560 = vadd.f32 0.0, %v1559
        %v1561 = vpop.f32.mrb[0].mxu0
        %v1562 = vpop.f32.mrb[0].mxu0
        %v1563 = vadd.f32 0.0, %v1562
        %v1564 = vpop.f32.mrb[0].mxu0
        %1565 = vmatprep.mubr.bf16.mxu0 0
        %1566 = vmatmul.mubr.bf16.gmra.mrb[0].mxu0 %v1168
        %v1567 = vpop.f32.mrb[0].mxu0
        %v1568 = vadd.f32 0.0, %v1567
        %v1569 = vpop.f32.mrb[0].mxu0
        %v1570 = vpop.f32.mrb[0].mxu0
        %v1571 = vadd.f32 0.0, %v1570
        %v1572 = vpop.f32.mrb[0].mxu0
        %1573 = vmatprep.mubr.bf16.mxu0 0
        %1574 = vmatmul.mubr.bf16.gmra.mrb[0].mxu0 %v1169
        %v1575 = vpop.f32.mrb[0].mxu0
        %v1576 = vadd.f32 0.0, %v1575
        %v1577 = vpop.f32.mrb[0].mxu0
        %v1578 = vpop.f32.mrb[0].mxu0
        %v1579 = vadd.f32 0.0, %v1578
        %v1580 = vpop.f32.mrb[0].mxu0
        %1581 = vmatprep.mubr.bf16.mxu0 0
        %1582 = vmatmul.mubr.bf16.gmra.mrb[0].mxu0 %v1170
        %v1583 = vpop.f32.mrb[0].mxu0
        %v1584 = vadd.f32 0.0, %v1583
        %v1585 = vpop.f32.mrb[0].mxu0
        %v1586 = vpop.f32.mrb[0].mxu0
        %v1587 = vadd.f32 0.0, %v1586
        %v1588 = vpop.f32.mrb[0].mxu0
        %1589 = vmatprep.mubr.bf16.mxu0 0
        %1590 = vmatmul.mubr.bf16.gmra.mrb[0].mxu0 %v1171
        %v1591 = vpop.f32.mrb[0].mxu0
        %v1592 = vadd.f32 0.0, %v1591
        %v1593 = vpop.f32.mrb[0].mxu0
        %v1594 = vpop.f32.mrb[0].mxu0
        %v1595 = vadd.f32 0.0, %v1594
        %v1596 = vpop.f32.mrb[0].mxu0
        %1597 = vmatprep.mubr.bf16.mxu0 0
        %1598 = vmatmul.mubr.bf16.gmra.mrb[0].mxu0 %v1172
        %v1599 = vpop.f32.mrb[0].mxu0
        %v1600 = vadd.f32 0.0, %v1599
        %v1601 = vpop.f32.mrb[0].mxu0
        %v1602 = vpop.f32.mrb[0].mxu0
        %v1603 = vadd.f32 0.0, %v1602
        %v1604 = vpop.f32.mrb[0].mxu0
        %1605 = vmatprep.mubr.bf16.mxu0 0
        %1606 = vmatmul.mubr.bf16.gmra.mrb[0].mxu0 %v1173
        %v1607 = vpop.f32.mrb[0].mxu0
        %v1608 = vadd.f32 0.0, %v1607
        %v1609 = vpop.f32.mrb[0].mxu0
        %v1610 = vpop.f32.mrb[0].mxu0
        %v1611 = vadd.f32 0.0, %v1610
        %v1612 = vpop.f32.mrb[0].mxu0
        %1613 = vmatprep.mubr.bf16.mxu0 0
        %1614 = vmatmul.mubr.bf16.gmra.mrb[0].mxu0 %v1174
        %v1615 = vpop.f32.mrb[0].mxu0
        %v1616 = vadd.f32 0.0, %v1615
        %v1617 = vpop.f32.mrb[0].mxu0
        %v1618 = vpop.f32.mrb[0].mxu0
        %v1619 = vadd.f32 0.0, %v1618
        %v1620 = vpop.f32.mrb[0].mxu0
        %1621 = vmatprep.mubr.bf16.mxu0 0
        %1622 = vmatmul.mubr.bf16.gmra.mrb[0].mxu0 %v1175
        %v1623 = vpop.f32.mrb[0].mxu0
        %v1624 = vadd.f32 0.0, %v1623
        %v1625 = vpop.f32.mrb[0].mxu0
        %v1626 = vpop.f32.mrb[0].mxu0
        %v1627 = vadd.f32 0.0, %v1626
        %v1628 = vpop.f32.mrb[0].mxu0
        %1629 = vmatprep.mubr.bf16.mxu0 0
        %1630 = vmatmul.mubr.bf16.gmra.mrb[0].mxu0 %v1176
        %v1631 = vpop.f32.mrb[0].mxu0
        %v1632 = vadd.f32 0.0, %v1631
        %v1633 = vpop.f32.mrb[0].mxu0
        %v1634 = vpop.f32.mrb[0].mxu0
        %v1635 = vadd.f32 0.0, %v1634
        %v1636 = vpop.f32.mrb[0].mxu0
        %1637 = vmatprep.mubr.bf16.mxu0 0
        %1638 = vmatmul.mubr.bf16.gmra.mrb[0].mxu0 %v1177
        %v1639 = vpop.f32.mrb[0].mxu0
        %v1640 = vadd.f32 0.0, %v1639
        %v1641 = vpop.f32.mrb[0].mxu0
        %v1642 = vpop.f32.mrb[0].mxu0
        %v1643 = vadd.f32 0.0, %v1642
        %v1644 = vpop.f32.mrb[0].mxu0
        %1645 = vmatprep.mubr.bf16.mxu0 0
        %1646 = vmatmul.mubr.bf16.gmra.mrb[0].mxu0 %v1178
        %v1647 = vpop.f32.mrb[0].mxu0
        %v1648 = vadd.f32 0.0, %v1647
        %v1649 = vpop.f32.mrb[0].mxu0
        %v1650 = vpop.f32.mrb[0].mxu0
        %v1651 = vadd.f32 0.0, %v1650
        %v1652 = vpop.f32.mrb[0].mxu0
        %1653 = vmatprep.mubr.bf16.mxu0 0
        %1654 = vmatmul.mubr.bf16.gmra.mrb[0].mxu0 %v1179
        %v1655 = vpop.f32.mrb[0].mxu0
        %v1656 = vadd.f32 0.0, %v1655
        %v1657 = vpop.f32.mrb[0].mxu0
        %v1658 = vpop.f32.mrb[0].mxu0
        %v1659 = vadd.f32 0.0, %v1658
        %v1660 = vpop.f32.mrb[0].mxu0
        %1661 = vmatprep.mubr.bf16.mxu0 0
        %1662 = vmatmul.mubr.bf16.gmra.mrb[0].mxu0 %v1180
        %v1663 = vpop.f32.mrb[0].mxu0
        %v1664 = vadd.f32 0.0, %v1663
        %v1665 = vpop.f32.mrb[0].mxu0
        %v1666 = vpop.f32.mrb[0].mxu0
        %v1667 = vadd.f32 0.0, %v1666
        %v1668 = vpop.f32.mrb[0].mxu0
        %1669 = vmatprep.mubr.bf16.mxu0 0
        %1670 = vmatmul.mubr.bf16.gmra.mrb[0].mxu0 %v1181
        %v1671 = vpop.f32.mrb[0].mxu0
        %v1672 = vadd.f32 0.0, %v1671
        %v1673 = vpop.f32.mrb[0].mxu0
        %v1674 = vpop.f32.mrb[0].mxu0
        %v1675 = vadd.f32 0.0, %v1674
        %v1676 = vpop.f32.mrb[0].mxu0
        %1677 = vmatprep.mubr.bf16.mxu0 0
        %1678 = vmatmul.mubr.bf16.gmra.mrb[0].mxu0 %v1182
        %v1679 = vpop.f32.mrb[0].mxu0
        %v1680 = vadd.f32 0.0, %v1679
        %v1681 = vpop.f32.mrb[0].mxu0
        %v1682 = vpop.f32.mrb[0].mxu0
        %v1683 = vadd.f32 0.0, %v1682
        %v1684 = vpop.f32.mrb[0].mxu0
        %1685 = vmatprep.mubr.bf16.mxu0 0
        %1686 = vmatmul.mubr.bf16.gmra.mrb[0].mxu0 %v1183
        %v1687 = vpop.f32.mrb[0].mxu0
        %v1688 = vadd.f32 0.0, %v1687
        %v1689 = vpop.f32.mrb[0].mxu0
        %v1690 = vpop.f32.mrb[0].mxu0
        %v1691 = vadd.f32 0.0, %v1690
        %v1692 = vpop.f32.mrb[0].mxu0
        %1693 = vmatprep.mubr.bf16.mxu0 0
        %1694 = vmatmul.mubr.bf16.gmra.mrb[0].mxu0 %v1184
        %v1695 = vpop.f32.mrb[0].mxu0
        %v1696 = vadd.f32 0.0, %v1695
        %v1697 = vpop.f32.mrb[0].mxu0
        %v1698 = vpop.f32.mrb[0].mxu0
        %v1699 = vadd.f32 0.0, %v1698
        %v1700 = vpop.f32.mrb[0].mxu0
        %1701 = vmatprep.mubr.bf16.mxu0 0
        %1702 = vmatmul.mubr.bf16.gmra.mrb[0].mxu0 %v1185
        %v1703 = vpop.f32.mrb[0].mxu0
        %v1704 = vadd.f32 0.0, %v1703
        %v1705 = vpop.f32.mrb[0].mxu0
        %v1706 = vpop.f32.mrb[0].mxu0
        %v1707 = vadd.f32 0.0, %v1706
        %v1708 = vpop.f32.mrb[0].mxu0
        %1709 = vmatprep.mubr.bf16.mxu0 0
        %1710 = vmatmul.mubr.bf16.gmra.mrb[0].mxu0 %v1186
        %v1711 = vpop.f32.mrb[0].mxu0
        %v1712 = vadd.f32 0.0, %v1711
        %v1713 = vpop.f32.mrb[0].mxu0
        %v1714 = vpop.f32.mrb[0].mxu0
        %v1715 = vadd.f32 0.0, %v1714
        %v1716 = vpop.f32.mrb[0].mxu0
        %1717 = vmatprep.mubr.bf16.mxu0 0
        %1718 = vmatmul.mubr.bf16.gmra.mrb[0].mxu0 %v1187
        %v1719 = vpop.f32.mrb[0].mxu0
        %v1720 = vadd.f32 0.0, %v1719
        %v1721 = vpop.f32.mrb[0].mxu0
        %v1722 = vpop.f32.mrb[0].mxu0
        %v1723 = vadd.f32 0.0, %v1722
        %v1724 = vpop.f32.mrb[0].mxu0
        %1725 = vmatprep.mubr.bf16.mxu0 0
        %1726 = vmatmul.mubr.bf16.gmra.mrb[0].mxu0 %v1188
        %v1727 = vpop.f32.mrb[0].mxu0
        %v1728 = vadd.f32 0.0, %v1727
        %v1729 = vpop.f32.mrb[0].mxu0
        %v1730 = vpop.f32.mrb[0].mxu0
        %v1731 = vadd.f32 0.0, %v1730
        %v1732 = vpop.f32.mrb[0].mxu0
        %1733 = vmatprep.mubr.bf16.mxu0 0
        %1734 = vmatmul.mubr.bf16.gmra.mrb[0].mxu0 %v1189
        %v1735 = vpop.f32.mrb[0].mxu0
        %v1736 = vadd.f32 0.0, %v1735
        %v1737 = vpop.f32.mrb[0].mxu0
        %v1738 = vpop.f32.mrb[0].mxu0
        %v1739 = vadd.f32 0.0, %v1738
        %v1740 = vpop.f32.mrb[0].mxu0
        %1741 = vmatprep.mubr.bf16.mxu0 0
        %1742 = vmatmul.mubr.bf16.gmra.mrb[0].mxu0 %v1190
        %v1743 = vpop.f32.mrb[0].mxu0
        %v1744 = vadd.f32 0.0, %v1743
        %v1745 = vpop.f32.mrb[0].mxu0
        %v1746 = vpop.f32.mrb[0].mxu0
        %v1747 = vadd.f32 0.0, %v1746
        %v1748 = vpop.f32.mrb[0].mxu0
        %1749 = vmatprep.mubr.bf16.mxu0 0
        %1750 = vmatmul.mubr.bf16.gmra.mrb[0].mxu0 %v1191
        %v1751 = vpop.f32.mrb[0].mxu0
        %v1752 = vadd.f32 0.0, %v1751
        %v1753 = vpop.f32.mrb[0].mxu0
        %v1754 = vpop.f32.mrb[0].mxu0
        %v1755 = vadd.f32 0.0, %v1754
        %v1756 = vpop.f32.mrb[0].mxu0
        %1757 = vmatprep.mubr.bf16.mxu0 0
        %1758 = vmatmul.mubr.bf16.gmra.mrb[0].mxu0 %v1192
        %v1759 = vpop.f32.mrb[0].mxu0
        %v1760 = vadd.f32 0.0, %v1759
        %v1761 = vpop.f32.mrb[0].mxu0
        %v1762 = vpop.f32.mrb[0].mxu0
        %v1763 = vadd.f32 0.0, %v1762
        %v1764 = vpop.f32.mrb[0].mxu0
        %1765 = vmatprep.mubr.bf16.mxu0 0
        %1766 = vmatmul.mubr.bf16.gmra.mrb[0].mxu0 %v1193
        %v1767 = vpop.f32.mrb[0].mxu0
        %v1768 = vadd.f32 0.0, %v1767
        %v1769 = vpop.f32.mrb[0].mxu0
        %v1770 = vpop.f32.mrb[0].mxu0
        %v1771 = vadd.f32 0.0, %v1770
        %v1772 = vpop.f32.mrb[0].mxu0
        %1773 = vmatprep.mubr.bf16.mxu0 0
        %1774 = vmatmul.mubr.bf16.gmra.mrb[0].mxu0 %v1194
        %v1775 = vpop.f32.mrb[0].mxu0
        %v1776 = vadd.f32 0.0, %v1775
        %v1777 = vpop.f32.mrb[0].mxu0
        %v1778 = vpop.f32.mrb[0].mxu0
        %v1779 = vadd.f32 0.0, %v1778
        %v1780 = vpop.f32.mrb[0].mxu0
        %1781 = vmatprep.mubr.bf16.mxu0 0
        %1782 = vmatmul.mubr.bf16.gmra.mrb[0].mxu0 %v1195
        %v1783 = vpop.f32.mrb[0].mxu0
        %v1784 = vadd.f32 0.0, %v1783
        %v1785 = vpop.f32.mrb[0].mxu0
        %v1786 = vpop.f32.mrb[0].mxu0
        %v1787 = vadd.f32 0.0, %v1786
        %v1788 = vpop.f32.mrb[0].mxu0
        %1789 = vmatprep.mubr.bf16.mxu0 0
        %1790 = vmatmul.mubr.bf16.gmra.mrb[0].mxu0 %v1196
        %v1791 = vpop.f32.mrb[0].mxu0
        %v1792 = vadd.f32 0.0, %v1791
        %v1793 = vpop.f32.mrb[0].mxu0
        %v1794 = vpop.f32.mrb[0].mxu0
        %v1795 = vadd.f32 0.0, %v1794
        %v1796 = vpop.f32.mrb[0].mxu0
        %1797 = vmatprep.mubr.bf16.mxu0 0
        %1798 = vmatmul.mubr.bf16.gmra.mrb[0].mxu0 %v1197
        %v1799 = vpop.f32.mrb[0].mxu0
        %v1800 = vadd.f32 0.0, %v1799
        %v1801 = vpop.f32.mrb[0].mxu0
        %v1802 = vpop.f32.mrb[0].mxu0
        %v1803 = vadd.f32 0.0, %v1802
        %v1804 = vpop.f32.mrb[0].mxu0
        %1805 = vmatprep.mubr.bf16.mxu0 0
        %1806 = vmatmul.mubr.bf16.gmra.mrb[0].mxu0 %v1198
        %v1807 = vpop.f32.mrb[0].mxu0
        %v1808 = vadd.f32 0.0, %v1807
        %v1809 = vpop.f32.mrb[0].mxu0
        %v1810 = vpop.f32.mrb[0].mxu0
        %v1811 = vadd.f32 0.0, %v1810
        %v1812 = vpop.f32.mrb[0].mxu0
        %1813 = vmatprep.mubr.bf16.mxu0 0
        %1814 = vmatmul.mubr.bf16.gmra.mrb[0].mxu0 %v1199
        %v1815 = vpop.f32.mrb[0].mxu0
        %v1816 = vadd.f32 0.0, %v1815
        %v1817 = vpop.f32.mrb[0].mxu0
        %v1818 = vpop.f32.mrb[0].mxu0
        %v1819 = vadd.f32 0.0, %v1818
        %v1820 = vpop.f32.mrb[0].mxu0
        %1821 = vmatprep.mubr.bf16.mxu0 0
        %1822 = vmatmul.mubr.bf16.gmra.mrb[0].mxu0 %v1200
        %v1823 = vpop.f32.mrb[0].mxu0
        %v1824 = vadd.f32 0.0, %v1823
        %v1825 = vpop.f32.mrb[0].mxu0
        %v1826 = vpop.f32.mrb[0].mxu0
        %v1827 = vadd.f32 0.0, %v1826
        %v1828 = vpop.f32.mrb[0].mxu0
        %1829 = vmatprep.mubr.bf16.mxu0 0
        %1830 = vmatmul.mubr.bf16.gmra.mrb[0].mxu0 %v1201
        %v1831 = vpop.f32.mrb[0].mxu0
        %v1832 = vadd.f32 0.0, %v1831
        %v1833 = vpop.f32.mrb[0].mxu0
        %v1834 = vpop.f32.mrb[0].mxu0
        %v1835 = vadd.f32 0.0, %v1834
        %v1836 = vpop.f32.mrb[0].mxu0
        %1837 = vmatprep.mubr.bf16.mxu0 0
        %1838 = vmatmul.mubr.bf16.gmra.mrb[0].mxu0 %v1202
        %v1839 = vpop.f32.mrb[0].mxu0
        %v1840 = vadd.f32 0.0, %v1839
        %v1841 = vpop.f32.mrb[0].mxu0
        %v1842 = vpop.f32.mrb[0].mxu0
        %v1843 = vadd.f32 0.0, %v1842
        %v1844 = vpop.f32.mrb[0].mxu0
        %1845 = vmatprep.mubr.bf16.mxu0 0
        %1846 = vmatmul.mubr.bf16.gmra.mrb[0].mxu0 %v1203
        %v1847 = vpop.f32.mrb[0].mxu0
        %v1848 = vadd.f32 0.0, %v1847
        %v1849 = vpop.f32.mrb[0].mxu0
        %v1850 = vpop.f32.mrb[0].mxu0
        %v1851 = vadd.f32 0.0, %v1850
        %v1852 = vpop.f32.mrb[0].mxu0
        %1853 = vmatprep.mubr.bf16.mxu0 0
        %1854 = vmatmul.mubr.bf16.gmra.mrb[0].mxu0 %v1204
        %v1855 = vpop.f32.mrb[0].mxu0
        %v1856 = vadd.f32 0.0, %v1855
        %v1857 = vpop.f32.mrb[0].mxu0
        %v1858 = vpop.f32.mrb[0].mxu0
        %v1859 = vadd.f32 0.0, %v1858
        %v1860 = vpop.f32.mrb[0].mxu0
        %1861 = vdwg.mxu0
        %v1862 = vld [vmem:[#allocation7] sm:$0x1]
        %v1864 = vlaneseq
        %v1865 = vshrl.u32 %v1864, 7
        %v1866 = vsub.s32 0, %v1865
        %v1867 = vrot.slane %v1862, %v1866
        %v1869 = vmul.f32 %v1352, %v1867
        %v1870 = vmul.f32 %v1355, %v1867
        %v1871 = vmul.f32 %v1360, %v1867
        %v1872 = vmul.f32 %v1363, %v1867
        %v1873 = vmul.f32 %v1368, %v1867
        %v1874 = vmul.f32 %v1371, %v1867
        %v1875 = vmul.f32 %v1376, %v1867
        %v1876 = vmul.f32 %v1379, %v1867
        %v1877 = vmul.f32 %v1384, %v1867
        %v1878 = vmul.f32 %v1387, %v1867
        %v1879 = vmul.f32 %v1392, %v1867
        %v1880 = vmul.f32 %v1395, %v1867
        %v1881 = vmul.f32 %v1400, %v1867
        %v1882 = vmul.f32 %v1403, %v1867
        %v1883 = vmul.f32 %v1408, %v1867
        %v1884 = vmul.f32 %v1411, %v1867
        %v1885 = vmul.f32 %v1416, %v1867
        %v1886 = vmul.f32 %v1419, %v1867
        %v1887 = vmul.f32 %v1424, %v1867
        %v1888 = vmul.f32 %v1427, %v1867
        %v1889 = vmul.f32 %v1432, %v1867
        %v1890 = vmul.f32 %v1435, %v1867
        %v1891 = vmul.f32 %v1440, %v1867
        %v1892 = vmul.f32 %v1443, %v1867
        %v1893 = vmul.f32 %v1448, %v1867
        %v1894 = vmul.f32 %v1451, %v1867
        %v1895 = vmul.f32 %v1456, %v1867
        %v1896 = vmul.f32 %v1459, %v1867
        %v1897 = vmul.f32 %v1464, %v1867
        %v1898 = vmul.f32 %v1467, %v1867
        %v1899 = vmul.f32 %v1472, %v1867
        %v1900 = vmul.f32 %v1475, %v1867
        %v1901 = vmul.f32 %v1480, %v1867
        %v1902 = vmul.f32 %v1483, %v1867
        %v1903 = vmul.f32 %v1488, %v1867
        %v1904 = vmul.f32 %v1491, %v1867
        %v1905 = vmul.f32 %v1496, %v1867
        %v1906 = vmul.f32 %v1499, %v1867
        %v1907 = vmul.f32 %v1504, %v1867
        %v1908 = vmul.f32 %v1507, %v1867
        %v1909 = vmul.f32 %v1512, %v1867
        %v1910 = vmul.f32 %v1515, %v1867
        %v1911 = vmul.f32 %v1520, %v1867
        %v1912 = vmul.f32 %v1523, %v1867
        %v1913 = vmul.f32 %v1528, %v1867
        %v1914 = vmul.f32 %v1531, %v1867
        %v1915 = vmul.f32 %v1536, %v1867
        %v1916 = vmul.f32 %v1539, %v1867
        %v1917 = vmul.f32 %v1544, %v1867
        %v1918 = vmul.f32 %v1547, %v1867
        %v1919 = vmul.f32 %v1552, %v1867
        %v1920 = vmul.f32 %v1555, %v1867
        %v1921 = vmul.f32 %v1560, %v1867
        %v1922 = vmul.f32 %v1563, %v1867
        %v1923 = vmul.f32 %v1568, %v1867
        %v1924 = vmul.f32 %v1571, %v1867
        %v1925 = vmul.f32 %v1576, %v1867
        %v1926 = vmul.f32 %v1579, %v1867
        %v1927 = vmul.f32 %v1584, %v1867
        %v1928 = vmul.f32 %v1587, %v1867
        %v1929 = vmul.f32 %v1592, %v1867
        %v1930 = vmul.f32 %v1595, %v1867
        %v1931 = vmul.f32 %v1600, %v1867
        %v1932 = vmul.f32 %v1603, %v1867
        %v1933 = vmul.f32 %v1608, %v1867
        %v1934 = vmul.f32 %v1611, %v1867
        %v1935 = vmul.f32 %v1616, %v1867
        %v1936 = vmul.f32 %v1619, %v1867
        %v1937 = vmul.f32 %v1624, %v1867
        %v1938 = vmul.f32 %v1627, %v1867
        %v1939 = vmul.f32 %v1632, %v1867
        %v1940 = vmul.f32 %v1635, %v1867
        %v1941 = vmul.f32 %v1640, %v1867
        %v1942 = vmul.f32 %v1643, %v1867
        %v1943 = vmul.f32 %v1648, %v1867
        %v1944 = vmul.f32 %v1651, %v1867
        %v1945 = vmul.f32 %v1656, %v1867
        %v1946 = vmul.f32 %v1659, %v1867
        %v1947 = vmul.f32 %v1664, %v1867
        %v1948 = vmul.f32 %v1667, %v1867
        %v1949 = vmul.f32 %v1672, %v1867
        %v1950 = vmul.f32 %v1675, %v1867
        %v1951 = vmul.f32 %v1680, %v1867
        %v1952 = vmul.f32 %v1683, %v1867
        %v1953 = vmul.f32 %v1688, %v1867
        %v1954 = vmul.f32 %v1691, %v1867
        %v1955 = vmul.f32 %v1696, %v1867
        %v1956 = vmul.f32 %v1699, %v1867
        %v1957 = vmul.f32 %v1704, %v1867
        %v1958 = vmul.f32 %v1707, %v1867
        %v1959 = vmul.f32 %v1712, %v1867
        %v1960 = vmul.f32 %v1715, %v1867
        %v1961 = vmul.f32 %v1720, %v1867
        %v1962 = vmul.f32 %v1723, %v1867
        %v1963 = vmul.f32 %v1728, %v1867
        %v1964 = vmul.f32 %v1731, %v1867
        %v1965 = vmul.f32 %v1736, %v1867
        %v1966 = vmul.f32 %v1739, %v1867
        %v1967 = vmul.f32 %v1744, %v1867
        %v1968 = vmul.f32 %v1747, %v1867
        %v1969 = vmul.f32 %v1752, %v1867
        %v1970 = vmul.f32 %v1755, %v1867
        %v1971 = vmul.f32 %v1760, %v1867
        %v1972 = vmul.f32 %v1763, %v1867
        %v1973 = vmul.f32 %v1768, %v1867
        %v1974 = vmul.f32 %v1771, %v1867
        %v1975 = vmul.f32 %v1776, %v1867
        %v1976 = vmul.f32 %v1779, %v1867
        %v1977 = vmul.f32 %v1784, %v1867
        %v1978 = vmul.f32 %v1787, %v1867
        %v1979 = vmul.f32 %v1792, %v1867
        %v1980 = vmul.f32 %v1795, %v1867
        %v1981 = vmul.f32 %v1800, %v1867
        %v1982 = vmul.f32 %v1803, %v1867
        %v1983 = vmul.f32 %v1808, %v1867
        %v1984 = vmul.f32 %v1811, %v1867
        %v1985 = vmul.f32 %v1816, %v1867
        %v1986 = vmul.f32 %v1819, %v1867
        %v1987 = vmul.f32 %v1824, %v1867
        %v1988 = vmul.f32 %v1827, %v1867
        %v1989 = vmul.f32 %v1832, %v1867
        %v1990 = vmul.f32 %v1835, %v1867
        %v1991 = vmul.f32 %v1840, %v1867
        %v1992 = vmul.f32 %v1843, %v1867
        %v1993 = vmul.f32 %v1848, %v1867
        %v1994 = vmul.f32 %v1851, %v1867
        %v1995 = vmul.f32 %v1856, %v1867
        %v1996 = vmul.f32 %v1859, %v1867
        %v1997 = vld [vmem:[#allocation8] sm:$0x1]
        %v1999 = vlaneseq
        %v2000 = vshrl.u32 %v1999, 7
        %v2001 = vsub.s32 0, %v2000
        %v2002 = vrot.slane %v1997, %v2001
        %v2004 = vadd.f32 %v1869, %v2002
        %v2005 = vadd.f32 %v1870, %v2002
        %v2006 = vadd.f32 %v1871, %v2002
        %v2007 = vadd.f32 %v1872, %v2002
        %v2008 = vadd.f32 %v1873, %v2002
        %v2009 = vadd.f32 %v1874, %v2002
        %v2010 = vadd.f32 %v1875, %v2002
        %v2011 = vadd.f32 %v1876, %v2002
        %v2012 = vadd.f32 %v1877, %v2002
        %v2013 = vadd.f32 %v1878, %v2002
        %v2014 = vadd.f32 %v1879, %v2002
        %v2015 = vadd.f32 %v1880, %v2002
        %v2016 = vadd.f32 %v1881, %v2002
        %v2017 = vadd.f32 %v1882, %v2002
        %v2018 = vadd.f32 %v1883, %v2002
        %v2019 = vadd.f32 %v1884, %v2002
        %v2020 = vadd.f32 %v1885, %v2002
        %v2021 = vadd.f32 %v1886, %v2002
        %v2022 = vadd.f32 %v1887, %v2002
        %v2023 = vadd.f32 %v1888, %v2002
        %v2024 = vadd.f32 %v1889, %v2002
        %v2025 = vadd.f32 %v1890, %v2002
        %v2026 = vadd.f32 %v1891, %v2002
        %v2027 = vadd.f32 %v1892, %v2002
        %v2028 = vadd.f32 %v1893, %v2002
        %v2029 = vadd.f32 %v1894, %v2002
        %v2030 = vadd.f32 %v1895, %v2002
        %v2031 = vadd.f32 %v1896, %v2002
        %v2032 = vadd.f32 %v1897, %v2002
        %v2033 = vadd.f32 %v1898, %v2002
        %v2034 = vadd.f32 %v1899, %v2002
        %v2035 = vadd.f32 %v1900, %v2002
        %v2036 = vadd.f32 %v1901, %v2002
        %v2037 = vadd.f32 %v1902, %v2002
        %v2038 = vadd.f32 %v1903, %v2002
        %v2039 = vadd.f32 %v1904, %v2002
        %v2040 = vadd.f32 %v1905, %v2002
        %v2041 = vadd.f32 %v1906, %v2002
        %v2042 = vadd.f32 %v1907, %v2002
        %v2043 = vadd.f32 %v1908, %v2002
        %v2044 = vadd.f32 %v1909, %v2002
        %v2045 = vadd.f32 %v1910, %v2002
        %v2046 = vadd.f32 %v1911, %v2002
        %v2047 = vadd.f32 %v1912, %v2002
        %v2048 = vadd.f32 %v1913, %v2002
        %v2049 = vadd.f32 %v1914, %v2002
        %v2050 = vadd.f32 %v1915, %v2002
        %v2051 = vadd.f32 %v1916, %v2002
        %v2052 = vadd.f32 %v1917, %v2002
        %v2053 = vadd.f32 %v1918, %v2002
        %v2054 = vadd.f32 %v1919, %v2002
        %v2055 = vadd.f32 %v1920, %v2002
        %v2056 = vadd.f32 %v1921, %v2002
        %v2057 = vadd.f32 %v1922, %v2002
        %v2058 = vadd.f32 %v1923, %v2002
        %v2059 = vadd.f32 %v1924, %v2002
        %v2060 = vadd.f32 %v1925, %v2002
        %v2061 = vadd.f32 %v1926, %v2002
        %v2062 = vadd.f32 %v1927, %v2002
        %v2063 = vadd.f32 %v1928, %v2002
        %v2064 = vadd.f32 %v1929, %v2002
        %v2065 = vadd.f32 %v1930, %v2002
        %v2066 = vadd.f32 %v1931, %v2002
        %v2067 = vadd.f32 %v1932, %v2002
        %v2068 = vadd.f32 %v1933, %v2002
        %v2069 = vadd.f32 %v1934, %v2002
        %v2070 = vadd.f32 %v1935, %v2002
        %v2071 = vadd.f32 %v1936, %v2002
        %v2072 = vadd.f32 %v1937, %v2002
        %v2073 = vadd.f32 %v1938, %v2002
        %v2074 = vadd.f32 %v1939, %v2002
        %v2075 = vadd.f32 %v1940, %v2002
        %v2076 = vadd.f32 %v1941, %v2002
        %v2077 = vadd.f32 %v1942, %v2002
        %v2078 = vadd.f32 %v1943, %v2002
        %v2079 = vadd.f32 %v1944, %v2002
        %v2080 = vadd.f32 %v1945, %v2002
        %v2081 = vadd.f32 %v1946, %v2002
        %v2082 = vadd.f32 %v1947, %v2002
        %v2083 = vadd.f32 %v1948, %v2002
        %v2084 = vadd.f32 %v1949, %v2002
        %v2085 = vadd.f32 %v1950, %v2002
        %v2086 = vadd.f32 %v1951, %v2002
        %v2087 = vadd.f32 %v1952, %v2002
        %v2088 = vadd.f32 %v1953, %v2002
        %v2089 = vadd.f32 %v1954, %v2002
        %v2090 = vadd.f32 %v1955, %v2002
        %v2091 = vadd.f32 %v1956, %v2002
        %v2092 = vadd.f32 %v1957, %v2002
        %v2093 = vadd.f32 %v1958, %v2002
        %v2094 = vadd.f32 %v1959, %v2002
        %v2095 = vadd.f32 %v1960, %v2002
        %v2096 = vadd.f32 %v1961, %v2002
        %v2097 = vadd.f32 %v1962, %v2002
        %v2098 = vadd.f32 %v1963, %v2002
        %v2099 = vadd.f32 %v1964, %v2002
        %v2100 = vadd.f32 %v1965, %v2002
        %v2101 = vadd.f32 %v1966, %v2002
        %v2102 = vadd.f32 %v1967, %v2002
        %v2103 = vadd.f32 %v1968, %v2002
        %v2104 = vadd.f32 %v1969, %v2002
        %v2105 = vadd.f32 %v1970, %v2002
        %v2106 = vadd.f32 %v1971, %v2002
        %v2107 = vadd.f32 %v1972, %v2002
        %v2108 = vadd.f32 %v1973, %v2002
        %v2109 = vadd.f32 %v1974, %v2002
        %v2110 = vadd.f32 %v1975, %v2002
        %v2111 = vadd.f32 %v1976, %v2002
        %v2112 = vadd.f32 %v1977, %v2002
        %v2113 = vadd.f32 %v1978, %v2002
        %v2114 = vadd.f32 %v1979, %v2002
        %v2115 = vadd.f32 %v1980, %v2002
        %v2116 = vadd.f32 %v1981, %v2002
        %v2117 = vadd.f32 %v1982, %v2002
        %v2118 = vadd.f32 %v1983, %v2002
        %v2119 = vadd.f32 %v1984, %v2002
        %v2120 = vadd.f32 %v1985, %v2002
        %v2121 = vadd.f32 %v1986, %v2002
        %v2122 = vadd.f32 %v1987, %v2002
        %v2123 = vadd.f32 %v1988, %v2002
        %v2124 = vadd.f32 %v1989, %v2002
        %v2125 = vadd.f32 %v1990, %v2002
        %v2126 = vadd.f32 %v1991, %v2002
        %v2127 = vadd.f32 %v1992, %v2002
        %v2128 = vadd.f32 %v1993, %v2002
        %v2129 = vadd.f32 %v1994, %v2002
        %v2130 = vadd.f32 %v1995, %v2002
        %v2131 = vadd.f32 %v1996, %v2002
        %v2132 = vsub.f32 0.0, %v2004
        %v2133 = vsub.f32 0.0, %v2005
        %v2134 = vsub.f32 0.0, %v2006
        %v2135 = vsub.f32 0.0, %v2007
        %v2136 = vsub.f32 0.0, %v2008
        %v2137 = vsub.f32 0.0, %v2009
        %v2138 = vsub.f32 0.0, %v2010
        %v2139 = vsub.f32 0.0, %v2011
        %v2140 = vsub.f32 0.0, %v2012
        %v2141 = vsub.f32 0.0, %v2013
        %v2142 = vsub.f32 0.0, %v2014
        %v2143 = vsub.f32 0.0, %v2015
        %v2144 = vsub.f32 0.0, %v2016
        %v2145 = vsub.f32 0.0, %v2017
        %v2146 = vsub.f32 0.0, %v2018
        %v2147 = vsub.f32 0.0, %v2019
        %v2148 = vsub.f32 0.0, %v2020
        %v2149 = vsub.f32 0.0, %v2021
        %v2150 = vsub.f32 0.0, %v2022
        %v2151 = vsub.f32 0.0, %v2023
        %v2152 = vsub.f32 0.0, %v2024
        %v2153 = vsub.f32 0.0, %v2025
        %v2154 = vsub.f32 0.0, %v2026
        %v2155 = vsub.f32 0.0, %v2027
        %v2156 = vsub.f32 0.0, %v2028
        %v2157 = vsub.f32 0.0, %v2029
        %v2158 = vsub.f32 0.0, %v2030
        %v2159 = vsub.f32 0.0, %v2031
        %v2160 = vsub.f32 0.0, %v2032
        %v2161 = vsub.f32 0.0, %v2033
        %v2162 = vsub.f32 0.0, %v2034
        %v2163 = vsub.f32 0.0, %v2035
        %v2164 = vsub.f32 0.0, %v2036
        %v2165 = vsub.f32 0.0, %v2037
        %v2166 = vsub.f32 0.0, %v2038
        %v2167 = vsub.f32 0.0, %v2039
        %v2168 = vsub.f32 0.0, %v2040
        %v2169 = vsub.f32 0.0, %v2041
        %v2170 = vsub.f32 0.0, %v2042
        %v2171 = vsub.f32 0.0, %v2043
        %v2172 = vsub.f32 0.0, %v2044
        %v2173 = vsub.f32 0.0, %v2045
        %v2174 = vsub.f32 0.0, %v2046
        %v2175 = vsub.f32 0.0, %v2047
        %v2176 = vsub.f32 0.0, %v2048
        %v2177 = vsub.f32 0.0, %v2049
        %v2178 = vsub.f32 0.0, %v2050
        %v2179 = vsub.f32 0.0, %v2051
        %v2180 = vsub.f32 0.0, %v2052
        %v2181 = vsub.f32 0.0, %v2053
        %v2182 = vsub.f32 0.0, %v2054
        %v2183 = vsub.f32 0.0, %v2055
        %v2184 = vsub.f32 0.0, %v2056
        %v2185 = vsub.f32 0.0, %v2057
        %v2186 = vsub.f32 0.0, %v2058
        %v2187 = vsub.f32 0.0, %v2059
        %v2188 = vsub.f32 0.0, %v2060
        %v2189 = vsub.f32 0.0, %v2061
        %v2190 = vsub.f32 0.0, %v2062
        %v2191 = vsub.f32 0.0, %v2063
        %v2192 = vsub.f32 0.0, %v2064
        %v2193 = vsub.f32 0.0, %v2065
        %v2194 = vsub.f32 0.0, %v2066
        %v2195 = vsub.f32 0.0, %v2067
        %v2196 = vsub.f32 0.0, %v2068
        %v2197 = vsub.f32 0.0, %v2069
        %v2198 = vsub.f32 0.0, %v2070
        %v2199 = vsub.f32 0.0, %v2071
        %v2200 = vsub.f32 0.0, %v2072
        %v2201 = vsub.f32 0.0, %v2073
        %v2202 = vsub.f32 0.0, %v2074
        %v2203 = vsub.f32 0.0, %v2075
        %v2204 = vsub.f32 0.0, %v2076
        %v2205 = vsub.f32 0.0, %v2077
        %v2206 = vsub.f32 0.0, %v2078
        %v2207 = vsub.f32 0.0, %v2079
        %v2208 = vsub.f32 0.0, %v2080
        %v2209 = vsub.f32 0.0, %v2081
        %v2210 = vsub.f32 0.0, %v2082
        %v2211 = vsub.f32 0.0, %v2083
        %v2212 = vsub.f32 0.0, %v2084
        %v2213 = vsub.f32 0.0, %v2085
        %v2214 = vsub.f32 0.0, %v2086
        %v2215 = vsub.f32 0.0, %v2087
        %v2216 = vsub.f32 0.0, %v2088
        %v2217 = vsub.f32 0.0, %v2089
        %v2218 = vsub.f32 0.0, %v2090
        %v2219 = vsub.f32 0.0, %v2091
        %v2220 = vsub.f32 0.0, %v2092
        %v2221 = vsub.f32 0.0, %v2093
        %v2222 = vsub.f32 0.0, %v2094
        %v2223 = vsub.f32 0.0, %v2095
        %v2224 = vsub.f32 0.0, %v2096
        %v2225 = vsub.f32 0.0, %v2097
        %v2226 = vsub.f32 0.0, %v2098
        %v2227 = vsub.f32 0.0, %v2099
        %v2228 = vsub.f32 0.0, %v2100
        %v2229 = vsub.f32 0.0, %v2101
        %v2230 = vsub.f32 0.0, %v2102
        %v2231 = vsub.f32 0.0, %v2103
        %v2232 = vsub.f32 0.0, %v2104
        %v2233 = vsub.f32 0.0, %v2105
        %v2234 = vsub.f32 0.0, %v2106
        %v2235 = vsub.f32 0.0, %v2107
        %v2236 = vsub.f32 0.0, %v2108
        %v2237 = vsub.f32 0.0, %v2109
        %v2238 = vsub.f32 0.0, %v2110
        %v2239 = vsub.f32 0.0, %v2111
        %v2240 = vsub.f32 0.0, %v2112
        %v2241 = vsub.f32 0.0, %v2113
        %v2242 = vsub.f32 0.0, %v2114
        %v2243 = vsub.f32 0.0, %v2115
        %v2244 = vsub.f32 0.0, %v2116
        %v2245 = vsub.f32 0.0, %v2117
        %v2246 = vsub.f32 0.0, %v2118
        %v2247 = vsub.f32 0.0, %v2119
        %v2248 = vsub.f32 0.0, %v2120
        %v2249 = vsub.f32 0.0, %v2121
        %v2250 = vsub.f32 0.0, %v2122
        %v2251 = vsub.f32 0.0, %v2123
        %v2252 = vsub.f32 0.0, %v2124
        %v2253 = vsub.f32 0.0, %v2125
        %v2254 = vsub.f32 0.0, %v2126
        %v2255 = vsub.f32 0.0, %v2127
        %v2256 = vsub.f32 0.0, %v2128
        %v2257 = vsub.f32 0.0, %v2129
        %v2258 = vsub.f32 0.0, %v2130
        %v2259 = vsub.f32 0.0, %v2131
        %v2260 = vmul.f32 %v2132, 1.442695
        %v2261 = vpow.pop %v2260
        %v2262 = vmul.f32 %v2133, 1.442695
        %v2263 = vpow.pop %v2262
        %v2264 = vmul.f32 %v2134, 1.442695
        %v2265 = vpow.pop %v2264
        %v2266 = vmul.f32 %v2135, 1.442695
        %v2267 = vpow.pop %v2266
        %v2268 = vmul.f32 %v2136, 1.442695
        %v2269 = vpow.pop %v2268
        %v2270 = vmul.f32 %v2137, 1.442695
        %v2271 = vpow.pop %v2270
        %v2272 = vmul.f32 %v2138, 1.442695
        %v2273 = vpow.pop %v2272
        %v2274 = vmul.f32 %v2139, 1.442695
        %v2275 = vpow.pop %v2274
        %v2276 = vmul.f32 %v2140, 1.442695
        %v2277 = vpow.pop %v2276
        %v2278 = vmul.f32 %v2141, 1.442695
        %v2279 = vpow.pop %v2278
        %v2280 = vmul.f32 %v2142, 1.442695
        %v2281 = vpow.pop %v2280
        %v2282 = vmul.f32 %v2143, 1.442695
        %v2283 = vpow.pop %v2282
        %v2284 = vmul.f32 %v2144, 1.442695
        %v2285 = vpow.pop %v2284
        %v2286 = vmul.f32 %v2145, 1.442695
        %v2287 = vpow.pop %v2286
        %v2288 = vmul.f32 %v2146, 1.442695
        %v2289 = vpow.pop %v2288
        %v2290 = vmul.f32 %v2147, 1.442695
        %v2291 = vpow.pop %v2290
        %v2292 = vmul.f32 %v2148, 1.442695
        %v2293 = vpow.pop %v2292
        %v2294 = vmul.f32 %v2149, 1.442695
        %v2295 = vpow.pop %v2294
        %v2296 = vmul.f32 %v2150, 1.442695
        %v2297 = vpow.pop %v2296
        %v2298 = vmul.f32 %v2151, 1.442695
        %v2299 = vpow.pop %v2298
        %v2300 = vmul.f32 %v2152, 1.442695
        %v2301 = vpow.pop %v2300
        %v2302 = vmul.f32 %v2153, 1.442695
        %v2303 = vpow.pop %v2302
        %v2304 = vmul.f32 %v2154, 1.442695
        %v2305 = vpow.pop %v2304
        %v2306 = vmul.f32 %v2155, 1.442695
        %v2307 = vpow.pop %v2306
        %v2308 = vmul.f32 %v2156, 1.442695
        %v2309 = vpow.pop %v2308
        %v2310 = vmul.f32 %v2157, 1.442695
        %v2311 = vpow.pop %v2310
        %v2312 = vmul.f32 %v2158, 1.442695
        %v2313 = vpow.pop %v2312
        %v2314 = vmul.f32 %v2159, 1.442695
        %v2315 = vpow.pop %v2314
        %v2316 = vmul.f32 %v2160, 1.442695
        %v2317 = vpow.pop %v2316
        %v2318 = vmul.f32 %v2161, 1.442695
        %v2319 = vpow.pop %v2318
        %v2320 = vmul.f32 %v2162, 1.442695
        %v2321 = vpow.pop %v2320
        %v2322 = vmul.f32 %v2163, 1.442695
        %v2323 = vpow.pop %v2322
        %v2324 = vmul.f32 %v2164, 1.442695
        %v2325 = vpow.pop %v2324
        %v2326 = vmul.f32 %v2165, 1.442695
        %v2327 = vpow.pop %v2326
        %v2328 = vmul.f32 %v2166, 1.442695
        %v2329 = vpow.pop %v2328
        %v2330 = vmul.f32 %v2167, 1.442695
        %v2331 = vpow.pop %v2330
        %v2332 = vmul.f32 %v2168, 1.442695
        %v2333 = vpow.pop %v2332
        %v2334 = vmul.f32 %v2169, 1.442695
        %v2335 = vpow.pop %v2334
        %v2336 = vmul.f32 %v2170, 1.442695
        %v2337 = vpow.pop %v2336
        %v2338 = vmul.f32 %v2171, 1.442695
        %v2339 = vpow.pop %v2338
        %v2340 = vmul.f32 %v2172, 1.442695
        %v2341 = vpow.pop %v2340
        %v2342 = vmul.f32 %v2173, 1.442695
        %v2343 = vpow.pop %v2342
        %v2344 = vmul.f32 %v2174, 1.442695
        %v2345 = vpow.pop %v2344
        %v2346 = vmul.f32 %v2175, 1.442695
        %v2347 = vpow.pop %v2346
        %v2348 = vmul.f32 %v2176, 1.442695
        %v2349 = vpow.pop %v2348
        %v2350 = vmul.f32 %v2177, 1.442695
        %v2351 = vpow.pop %v2350
        %v2352 = vmul.f32 %v2178, 1.442695
        %v2353 = vpow.pop %v2352
        %v2354 = vmul.f32 %v2179, 1.442695
        %v2355 = vpow.pop %v2354
        %v2356 = vmul.f32 %v2180, 1.442695
        %v2357 = vpow.pop %v2356
        %v2358 = vmul.f32 %v2181, 1.442695
        %v2359 = vpow.pop %v2358
        %v2360 = vmul.f32 %v2182, 1.442695
        %v2361 = vpow.pop %v2360
        %v2362 = vmul.f32 %v2183, 1.442695
        %v2363 = vpow.pop %v2362
        %v2364 = vmul.f32 %v2184, 1.442695
        %v2365 = vpow.pop %v2364
        %v2366 = vmul.f32 %v2185, 1.442695
        %v2367 = vpow.pop %v2366
        %v2368 = vmul.f32 %v2186, 1.442695
        %v2369 = vpow.pop %v2368
        %v2370 = vmul.f32 %v2187, 1.442695
        %v2371 = vpow.pop %v2370
        %v2372 = vmul.f32 %v2188, 1.442695
        %v2373 = vpow.pop %v2372
        %v2374 = vmul.f32 %v2189, 1.442695
        %v2375 = vpow.pop %v2374
        %v2376 = vmul.f32 %v2190, 1.442695
        %v2377 = vpow.pop %v2376
        %v2378 = vmul.f32 %v2191, 1.442695
        %v2379 = vpow.pop %v2378
        %v2380 = vmul.f32 %v2192, 1.442695
        %v2381 = vpow.pop %v2380
        %v2382 = vmul.f32 %v2193, 1.442695
        %v2383 = vpow.pop %v2382
        %v2384 = vmul.f32 %v2194, 1.442695
        %v2385 = vpow.pop %v2384
        %v2386 = vmul.f32 %v2195, 1.442695
        %v2387 = vpow.pop %v2386
        %v2388 = vmul.f32 %v2196, 1.442695
        %v2389 = vpow.pop %v2388
        %v2390 = vmul.f32 %v2197, 1.442695
        %v2391 = vpow.pop %v2390
        %v2392 = vmul.f32 %v2198, 1.442695
        %v2393 = vpow.pop %v2392
        %v2394 = vmul.f32 %v2199, 1.442695
        %v2395 = vpow.pop %v2394
        %v2396 = vmul.f32 %v2200, 1.442695
        %v2397 = vpow.pop %v2396
        %v2398 = vmul.f32 %v2201, 1.442695
        %v2399 = vpow.pop %v2398
        %v2400 = vmul.f32 %v2202, 1.442695
        %v2401 = vpow.pop %v2400
        %v2402 = vmul.f32 %v2203, 1.442695
        %v2403 = vpow.pop %v2402
        %v2404 = vmul.f32 %v2204, 1.442695
        %v2405 = vpow.pop %v2404
        %v2406 = vmul.f32 %v2205, 1.442695
        %v2407 = vpow.pop %v2406
        %v2408 = vmul.f32 %v2206, 1.442695
        %v2409 = vpow.pop %v2408
        %v2410 = vmul.f32 %v2207, 1.442695
        %v2411 = vpow.pop %v2410
        %v2412 = vmul.f32 %v2208, 1.442695
        %v2413 = vpow.pop %v2412
        %v2414 = vmul.f32 %v2209, 1.442695
        %v2415 = vpow.pop %v2414
        %v2416 = vmul.f32 %v2210, 1.442695
        %v2417 = vpow.pop %v2416
        %v2418 = vmul.f32 %v2211, 1.442695
        %v2419 = vpow.pop %v2418
        %v2420 = vmul.f32 %v2212, 1.442695
        %v2421 = vpow.pop %v2420
        %v2422 = vmul.f32 %v2213, 1.442695
        %v2423 = vpow.pop %v2422
        %v2424 = vmul.f32 %v2214, 1.442695
        %v2425 = vpow.pop %v2424
        %v2426 = vmul.f32 %v2215, 1.442695
        %v2427 = vpow.pop %v2426
        %v2428 = vmul.f32 %v2216, 1.442695
        %v2429 = vpow.pop %v2428
        %v2430 = vmul.f32 %v2217, 1.442695
        %v2431 = vpow.pop %v2430
        %v2432 = vmul.f32 %v2218, 1.442695
        %v2433 = vpow.pop %v2432
        %v2434 = vmul.f32 %v2219, 1.442695
        %v2435 = vpow.pop %v2434
        %v2436 = vmul.f32 %v2220, 1.442695
        %v2437 = vpow.pop %v2436
        %v2438 = vmul.f32 %v2221, 1.442695
        %v2439 = vpow.pop %v2438
        %v2440 = vmul.f32 %v2222, 1.442695
        %v2441 = vpow.pop %v2440
        %v2442 = vmul.f32 %v2223, 1.442695
        %v2443 = vpow.pop %v2442
        %v2444 = vmul.f32 %v2224, 1.442695
        %v2445 = vpow.pop %v2444
        %v2446 = vmul.f32 %v2225, 1.442695
        %v2447 = vpow.pop %v2446
        %v2448 = vmul.f32 %v2226, 1.442695
        %v2449 = vpow.pop %v2448
        %v2450 = vmul.f32 %v2227, 1.442695
        %v2451 = vpow.pop %v2450
        %v2452 = vmul.f32 %v2228, 1.442695
        %v2453 = vpow.pop %v2452
        %v2454 = vmul.f32 %v2229, 1.442695
        %v2455 = vpow.pop %v2454
        %v2456 = vmul.f32 %v2230, 1.442695
        %v2457 = vpow.pop %v2456
        %v2458 = vmul.f32 %v2231, 1.442695
        %v2459 = vpow.pop %v2458
        %v2460 = vmul.f32 %v2232, 1.442695
        %v2461 = vpow.pop %v2460
        %v2462 = vmul.f32 %v2233, 1.442695
        %v2463 = vpow.pop %v2462
        %v2464 = vmul.f32 %v2234, 1.442695
        %v2465 = vpow.pop %v2464
        %v2466 = vmul.f32 %v2235, 1.442695
        %v2467 = vpow.pop %v2466
        %v2468 = vmul.f32 %v2236, 1.442695
        %v2469 = vpow.pop %v2468
        %v2470 = vmul.f32 %v2237, 1.442695
        %v2471 = vpow.pop %v2470
        %v2472 = vmul.f32 %v2238, 1.442695
        %v2473 = vpow.pop %v2472
        %v2474 = vmul.f32 %v2239, 1.442695
        %v2475 = vpow.pop %v2474
        %v2476 = vmul.f32 %v2240, 1.442695
        %v2477 = vpow.pop %v2476
        %v2478 = vmul.f32 %v2241, 1.442695
        %v2479 = vpow.pop %v2478
        %v2480 = vmul.f32 %v2242, 1.442695
        %v2481 = vpow.pop %v2480
        %v2482 = vmul.f32 %v2243, 1.442695
        %v2483 = vpow.pop %v2482
        %v2484 = vmul.f32 %v2244, 1.442695
        %v2485 = vpow.pop %v2484
        %v2486 = vmul.f32 %v2245, 1.442695
        %v2487 = vpow.pop %v2486
        %v2488 = vmul.f32 %v2246, 1.442695
        %v2489 = vpow.pop %v2488
        %v2490 = vmul.f32 %v2247, 1.442695
        %v2491 = vpow.pop %v2490
        %v2492 = vmul.f32 %v2248, 1.442695
        %v2493 = vpow.pop %v2492
        %v2494 = vmul.f32 %v2249, 1.442695
        %v2495 = vpow.pop %v2494
        %v2496 = vmul.f32 %v2250, 1.442695
        %v2497 = vpow.pop %v2496
        %v2498 = vmul.f32 %v2251, 1.442695
        %v2499 = vpow.pop %v2498
        %v2500 = vmul.f32 %v2252, 1.442695
        %v2501 = vpow.pop %v2500
        %v2502 = vmul.f32 %v2253, 1.442695
        %v2503 = vpow.pop %v2502
        %v2504 = vmul.f32 %v2254, 1.442695
        %v2505 = vpow.pop %v2504
        %v2506 = vmul.f32 %v2255, 1.442695
        %v2507 = vpow.pop %v2506
        %v2508 = vmul.f32 %v2256, 1.442695
        %v2509 = vpow.pop %v2508
        %v2510 = vmul.f32 %v2257, 1.442695
        %v2511 = vpow.pop %v2510
        %v2512 = vmul.f32 %v2258, 1.442695
        %v2513 = vpow.pop %v2512
        %v2514 = vmul.f32 %v2259, 1.442695
        %v2515 = vpow.pop %v2514
        %v2516 = vadd.f32 %v2261, 1.0
        %v2517 = vadd.f32 %v2263, 1.0
        %v2518 = vadd.f32 %v2265, 1.0
        %v2519 = vadd.f32 %v2267, 1.0
        %v2520 = vadd.f32 %v2269, 1.0
        %v2521 = vadd.f32 %v2271, 1.0
        %v2522 = vadd.f32 %v2273, 1.0
        %v2523 = vadd.f32 %v2275, 1.0
        %v2524 = vadd.f32 %v2277, 1.0
        %v2525 = vadd.f32 %v2279, 1.0
        %v2526 = vadd.f32 %v2281, 1.0
        %v2527 = vadd.f32 %v2283, 1.0
        %v2528 = vadd.f32 %v2285, 1.0
        %v2529 = vadd.f32 %v2287, 1.0
        %v2530 = vadd.f32 %v2289, 1.0
        %v2531 = vadd.f32 %v2291, 1.0
        %v2532 = vadd.f32 %v2293, 1.0
        %v2533 = vadd.f32 %v2295, 1.0
        %v2534 = vadd.f32 %v2297, 1.0
        %v2535 = vadd.f32 %v2299, 1.0
        %v2536 = vadd.f32 %v2301, 1.0
        %v2537 = vadd.f32 %v2303, 1.0
        %v2538 = vadd.f32 %v2305, 1.0
        %v2539 = vadd.f32 %v2307, 1.0
        %v2540 = vadd.f32 %v2309, 1.0
        %v2541 = vadd.f32 %v2311, 1.0
        %v2542 = vadd.f32 %v2313, 1.0
        %v2543 = vadd.f32 %v2315, 1.0
        %v2544 = vadd.f32 %v2317, 1.0
        %v2545 = vadd.f32 %v2319, 1.0
        %v2546 = vadd.f32 %v2321, 1.0
        %v2547 = vadd.f32 %v2323, 1.0
        %v2548 = vadd.f32 %v2325, 1.0
        %v2549 = vadd.f32 %v2327, 1.0
        %v2550 = vadd.f32 %v2329, 1.0
        %v2551 = vadd.f32 %v2331, 1.0
        %v2552 = vadd.f32 %v2333, 1.0
        %v2553 = vadd.f32 %v2335, 1.0
        %v2554 = vadd.f32 %v2337, 1.0
        %v2555 = vadd.f32 %v2339, 1.0
        %v2556 = vadd.f32 %v2341, 1.0
        %v2557 = vadd.f32 %v2343, 1.0
        %v2558 = vadd.f32 %v2345, 1.0
        %v2559 = vadd.f32 %v2347, 1.0
        %v2560 = vadd.f32 %v2349, 1.0
        %v2561 = vadd.f32 %v2351, 1.0
        %v2562 = vadd.f32 %v2353, 1.0
        %v2563 = vadd.f32 %v2355, 1.0
        %v2564 = vadd.f32 %v2357, 1.0
        %v2565 = vadd.f32 %v2359, 1.0
        %v2566 = vadd.f32 %v2361, 1.0
        %v2567 = vadd.f32 %v2363, 1.0
        %v2568 = vadd.f32 %v2365, 1.0
        %v2569 = vadd.f32 %v2367, 1.0
        %v2570 = vadd.f32 %v2369, 1.0
        %v2571 = vadd.f32 %v2371, 1.0
        %v2572 = vadd.f32 %v2373, 1.0
        %v2573 = vadd.f32 %v2375, 1.0
        %v2574 = vadd.f32 %v2377, 1.0
        %v2575 = vadd.f32 %v2379, 1.0
        %v2576 = vadd.f32 %v2381, 1.0
        %v2577 = vadd.f32 %v2383, 1.0
        %v2578 = vadd.f32 %v2385, 1.0
        %v2579 = vadd.f32 %v2387, 1.0
        %v2580 = vadd.f32 %v2389, 1.0
        %v2581 = vadd.f32 %v2391, 1.0
        %v2582 = vadd.f32 %v2393, 1.0
        %v2583 = vadd.f32 %v2395, 1.0
        %v2584 = vadd.f32 %v2397, 1.0
        %v2585 = vadd.f32 %v2399, 1.0
        %v2586 = vadd.f32 %v2401, 1.0
        %v2587 = vadd.f32 %v2403, 1.0
        %v2588 = vadd.f32 %v2405, 1.0
        %v2589 = vadd.f32 %v2407, 1.0
        %v2590 = vadd.f32 %v2409, 1.0
        %v2591 = vadd.f32 %v2411, 1.0
        %v2592 = vadd.f32 %v2413, 1.0
        %v2593 = vadd.f32 %v2415, 1.0
        %v2594 = vadd.f32 %v2417, 1.0
        %v2595 = vadd.f32 %v2419, 1.0
        %v2596 = vadd.f32 %v2421, 1.0
        %v2597 = vadd.f32 %v2423, 1.0
        %v2598 = vadd.f32 %v2425, 1.0
        %v2599 = vadd.f32 %v2427, 1.0
        %v2600 = vadd.f32 %v2429, 1.0
        %v2601 = vadd.f32 %v2431, 1.0
        %v2602 = vadd.f32 %v2433, 1.0
        %v2603 = vadd.f32 %v2435, 1.0
        %v2604 = vadd.f32 %v2437, 1.0
        %v2605 = vadd.f32 %v2439, 1.0
        %v2606 = vadd.f32 %v2441, 1.0
        %v2607 = vadd.f32 %v2443, 1.0
        %v2608 = vadd.f32 %v2445, 1.0
        %v2609 = vadd.f32 %v2447, 1.0
        %v2610 = vadd.f32 %v2449, 1.0
        %v2611 = vadd.f32 %v2451, 1.0
        %v2612 = vadd.f32 %v2453, 1.0
        %v2613 = vadd.f32 %v2455, 1.0
        %v2614 = vadd.f32 %v2457, 1.0
        %v2615 = vadd.f32 %v2459, 1.0
        %v2616 = vadd.f32 %v2461, 1.0
        %v2617 = vadd.f32 %v2463, 1.0
        %v2618 = vadd.f32 %v2465, 1.0
        %v2619 = vadd.f32 %v2467, 1.0
        %v2620 = vadd.f32 %v2469, 1.0
        %v2621 = vadd.f32 %v2471, 1.0
        %v2622 = vadd.f32 %v2473, 1.0
        %v2623 = vadd.f32 %v2475, 1.0
        %v2624 = vadd.f32 %v2477, 1.0
        %v2625 = vadd.f32 %v2479, 1.0
        %v2626 = vadd.f32 %v2481, 1.0
        %v2627 = vadd.f32 %v2483, 1.0
        %v2628 = vadd.f32 %v2485, 1.0
        %v2629 = vadd.f32 %v2487, 1.0
        %v2630 = vadd.f32 %v2489, 1.0
        %v2631 = vadd.f32 %v2491, 1.0
        %v2632 = vadd.f32 %v2493, 1.0
        %v2633 = vadd.f32 %v2495, 1.0
        %v2634 = vadd.f32 %v2497, 1.0
        %v2635 = vadd.f32 %v2499, 1.0
        %v2636 = vadd.f32 %v2501, 1.0
        %v2637 = vadd.f32 %v2503, 1.0
        %v2638 = vadd.f32 %v2505, 1.0
        %v2639 = vadd.f32 %v2507, 1.0
        %v2640 = vadd.f32 %v2509, 1.0
        %v2641 = vadd.f32 %v2511, 1.0
        %v2642 = vadd.f32 %v2513, 1.0
        %v2643 = vadd.f32 %v2515, 1.0
        %v2644 = vrcp.pop %v2516
        %v2645 = vrcp.pop %v2517
        %v2646 = vrcp.pop %v2518
        %v2647 = vrcp.pop %v2519
        %v2648 = vrcp.pop %v2520
        %v2649 = vrcp.pop %v2521
        %v2650 = vrcp.pop %v2522
        %v2651 = vrcp.pop %v2523
        %v2652 = vrcp.pop %v2524
        %v2653 = vrcp.pop %v2525
        %v2654 = vrcp.pop %v2526
        %v2655 = vrcp.pop %v2527
        %v2656 = vrcp.pop %v2528
        %v2657 = vrcp.pop %v2529
        %v2658 = vrcp.pop %v2530
        %v2659 = vrcp.pop %v2531
        %v2660 = vrcp.pop %v2532
        %v2661 = vrcp.pop %v2533
        %v2662 = vrcp.pop %v2534
        %v2663 = vrcp.pop %v2535
        %v2664 = vrcp.pop %v2536
        %v2665 = vrcp.pop %v2537
        %v2666 = vrcp.pop %v2538
        %v2667 = vrcp.pop %v2539
        %v2668 = vrcp.pop %v2540
        %v2669 = vrcp.pop %v2541
        %v2670 = vrcp.pop %v2542
        %v2671 = vrcp.pop %v2543
        %v2672 = vrcp.pop %v2544
        %v2673 = vrcp.pop %v2545
        %v2674 = vrcp.pop %v2546
        %v2675 = vrcp.pop %v2547
        %v2676 = vrcp.pop %v2548
        %v2677 = vrcp.pop %v2549
        %v2678 = vrcp.pop %v2550
        %v2679 = vrcp.pop %v2551
        %v2680 = vrcp.pop %v2552
        %v2681 = vrcp.pop %v2553
        %v2682 = vrcp.pop %v2554
        %v2683 = vrcp.pop %v2555
        %v2684 = vrcp.pop %v2556
        %v2685 = vrcp.pop %v2557
        %v2686 = vrcp.pop %v2558
        %v2687 = vrcp.pop %v2559
        %v2688 = vrcp.pop %v2560
        %v2689 = vrcp.pop %v2561
        %v2690 = vrcp.pop %v2562
        %v2691 = vrcp.pop %v2563
        %v2692 = vrcp.pop %v2564
        %v2693 = vrcp.pop %v2565
        %v2694 = vrcp.pop %v2566
        %v2695 = vrcp.pop %v2567
        %v2696 = vrcp.pop %v2568
        %v2697 = vrcp.pop %v2569
        %v2698 = vrcp.pop %v2570
        %v2699 = vrcp.pop %v2571
        %v2700 = vrcp.pop %v2572
        %v2701 = vrcp.pop %v2573
        %v2702 = vrcp.pop %v2574
        %v2703 = vrcp.pop %v2575
        %v2704 = vrcp.pop %v2576
        %v2705 = vrcp.pop %v2577
        %v2706 = vrcp.pop %v2578
        %v2707 = vrcp.pop %v2579
        %v2708 = vrcp.pop %v2580
        %v2709 = vrcp.pop %v2581
        %v2710 = vrcp.pop %v2582
        %v2711 = vrcp.pop %v2583
        %v2712 = vrcp.pop %v2584
        %v2713 = vrcp.pop %v2585
        %v2714 = vrcp.pop %v2586
        %v2715 = vrcp.pop %v2587
        %v2716 = vrcp.pop %v2588
        %v2717 = vrcp.pop %v2589
        %v2718 = vrcp.pop %v2590
        %v2719 = vrcp.pop %v2591
        %v2720 = vrcp.pop %v2592
        %v2721 = vrcp.pop %v2593
        %v2722 = vrcp.pop %v2594
        %v2723 = vrcp.pop %v2595
        %v2724 = vrcp.pop %v2596
        %v2725 = vrcp.pop %v2597
        %v2726 = vrcp.pop %v2598
        %v2727 = vrcp.pop %v2599
        %v2728 = vrcp.pop %v2600
        %v2729 = vrcp.pop %v2601
        %v2730 = vrcp.pop %v2602
        %v2731 = vrcp.pop %v2603
        %v2732 = vrcp.pop %v2604
        %v2733 = vrcp.pop %v2605
        %v2734 = vrcp.pop %v2606
        %v2735 = vrcp.pop %v2607
        %v2736 = vrcp.pop %v2608
        %v2737 = vrcp.pop %v2609
        %v2738 = vrcp.pop %v2610
        %v2739 = vrcp.pop %v2611
        %v2740 = vrcp.pop %v2612
        %v2741 = vrcp.pop %v2613
        %v2742 = vrcp.pop %v2614
        %v2743 = vrcp.pop %v2615
        %v2744 = vrcp.pop %v2616
        %v2745 = vrcp.pop %v2617
        %v2746 = vrcp.pop %v2618
        %v2747 = vrcp.pop %v2619
        %v2748 = vrcp.pop %v2620
        %v2749 = vrcp.pop %v2621
        %v2750 = vrcp.pop %v2622
        %v2751 = vrcp.pop %v2623
        %v2752 = vrcp.pop %v2624
        %v2753 = vrcp.pop %v2625
        %v2754 = vrcp.pop %v2626
        %v2755 = vrcp.pop %v2627
        %v2756 = vrcp.pop %v2628
        %v2757 = vrcp.pop %v2629
        %v2758 = vrcp.pop %v2630
        %v2759 = vrcp.pop %v2631
        %v2760 = vrcp.pop %v2632
        %v2761 = vrcp.pop %v2633
        %v2762 = vrcp.pop %v2634
        %v2763 = vrcp.pop %v2635
        %v2764 = vrcp.pop %v2636
        %v2765 = vrcp.pop %v2637
        %v2766 = vrcp.pop %v2638
        %v2767 = vrcp.pop %v2639
        %v2768 = vrcp.pop %v2640
        %v2769 = vrcp.pop %v2641
        %v2770 = vrcp.pop %v2642
        %v2771 = vrcp.pop %v2643
        %v2772 = vmul.f32 %v2004, %v2644
        %v2773 = vmul.f32 %v2005, %v2645
        %v2774 = vmul.f32 %v2006, %v2646
        %v2775 = vmul.f32 %v2007, %v2647
        %v2776 = vmul.f32 %v2008, %v2648
        %v2777 = vmul.f32 %v2009, %v2649
        %v2778 = vmul.f32 %v2010, %v2650
        %v2779 = vmul.f32 %v2011, %v2651
        %v2780 = vmul.f32 %v2012, %v2652
        %v2781 = vmul.f32 %v2013, %v2653
        %v2782 = vmul.f32 %v2014, %v2654
        %v2783 = vmul.f32 %v2015, %v2655
        %v2784 = vmul.f32 %v2016, %v2656
        %v2785 = vmul.f32 %v2017, %v2657
        %v2786 = vmul.f32 %v2018, %v2658
        %v2787 = vmul.f32 %v2019, %v2659
        %v2788 = vmul.f32 %v2020, %v2660
        %v2789 = vmul.f32 %v2021, %v2661
        %v2790 = vmul.f32 %v2022, %v2662
        %v2791 = vmul.f32 %v2023, %v2663
        %v2792 = vmul.f32 %v2024, %v2664
        %v2793 = vmul.f32 %v2025, %v2665
        %v2794 = vmul.f32 %v2026, %v2666
        %v2795 = vmul.f32 %v2027, %v2667
        %v2796 = vmul.f32 %v2028, %v2668
        %v2797 = vmul.f32 %v2029, %v2669
        %v2798 = vmul.f32 %v2030, %v2670
        %v2799 = vmul.f32 %v2031, %v2671
        %v2800 = vmul.f32 %v2032, %v2672
        %v2801 = vmul.f32 %v2033, %v2673
        %v2802 = vmul.f32 %v2034, %v2674
        %v2803 = vmul.f32 %v2035, %v2675
        %v2804 = vmul.f32 %v2036, %v2676
        %v2805 = vmul.f32 %v2037, %v2677
        %v2806 = vmul.f32 %v2038, %v2678
        %v2807 = vmul.f32 %v2039, %v2679
        %v2808 = vmul.f32 %v2040, %v2680
        %v2809 = vmul.f32 %v2041, %v2681
        %v2810 = vmul.f32 %v2042, %v2682
        %v2811 = vmul.f32 %v2043, %v2683
        %v2812 = vmul.f32 %v2044, %v2684
        %v2813 = vmul.f32 %v2045, %v2685
        %v2814 = vmul.f32 %v2046, %v2686
        %v2815 = vmul.f32 %v2047, %v2687
        %v2816 = vmul.f32 %v2048, %v2688
        %v2817 = vmul.f32 %v2049, %v2689
        %v2818 = vmul.f32 %v2050, %v2690
        %v2819 = vmul.f32 %v2051, %v2691
        %v2820 = vmul.f32 %v2052, %v2692
        %v2821 = vmul.f32 %v2053, %v2693
        %v2822 = vmul.f32 %v2054, %v2694
        %v2823 = vmul.f32 %v2055, %v2695
        %v2824 = vmul.f32 %v2056, %v2696
        %v2825 = vmul.f32 %v2057, %v2697
        %v2826 = vmul.f32 %v2058, %v2698
        %v2827 = vmul.f32 %v2059, %v2699
        %v2828 = vmul.f32 %v2060, %v2700
        %v2829 = vmul.f32 %v2061, %v2701
        %v2830 = vmul.f32 %v2062, %v2702
        %v2831 = vmul.f32 %v2063, %v2703
        %v2832 = vmul.f32 %v2064, %v2704
        %v2833 = vmul.f32 %v2065, %v2705
        %v2834 = vmul.f32 %v2066, %v2706
        %v2835 = vmul.f32 %v2067, %v2707
        %v2836 = vmul.f32 %v2068, %v2708
        %v2837 = vmul.f32 %v2069, %v2709
        %v2838 = vmul.f32 %v2070, %v2710
        %v2839 = vmul.f32 %v2071, %v2711
        %v2840 = vmul.f32 %v2072, %v2712
        %v2841 = vmul.f32 %v2073, %v2713
        %v2842 = vmul.f32 %v2074, %v2714
        %v2843 = vmul.f32 %v2075, %v2715
        %v2844 = vmul.f32 %v2076, %v2716
        %v2845 = vmul.f32 %v2077, %v2717
        %v2846 = vmul.f32 %v2078, %v2718
        %v2847 = vmul.f32 %v2079, %v2719
        %v2848 = vmul.f32 %v2080, %v2720
        %v2849 = vmul.f32 %v2081, %v2721
        %v2850 = vmul.f32 %v2082, %v2722
        %v2851 = vmul.f32 %v2083, %v2723
        %v2852 = vmul.f32 %v2084, %v2724
        %v2853 = vmul.f32 %v2085, %v2725
        %v2854 = vmul.f32 %v2086, %v2726
        %v2855 = vmul.f32 %v2087, %v2727
        %v2856 = vmul.f32 %v2088, %v2728
        %v2857 = vmul.f32 %v2089, %v2729
        %v2858 = vmul.f32 %v2090, %v2730
        %v2859 = vmul.f32 %v2091, %v2731
        %v2860 = vmul.f32 %v2092, %v2732
        %v2861 = vmul.f32 %v2093, %v2733
        %v2862 = vmul.f32 %v2094, %v2734
        %v2863 = vmul.f32 %v2095, %v2735
        %v2864 = vmul.f32 %v2096, %v2736
        %v2865 = vmul.f32 %v2097, %v2737
        %v2866 = vmul.f32 %v2098, %v2738
        %v2867 = vmul.f32 %v2099, %v2739
        %v2868 = vmul.f32 %v2100, %v2740
        %v2869 = vmul.f32 %v2101, %v2741
        %v2870 = vmul.f32 %v2102, %v2742
        %v2871 = vmul.f32 %v2103, %v2743
        %v2872 = vmul.f32 %v2104, %v2744
        %v2873 = vmul.f32 %v2105, %v2745
        %v2874 = vmul.f32 %v2106, %v2746
        %v2875 = vmul.f32 %v2107, %v2747
        %v2876 = vmul.f32 %v2108, %v2748
        %v2877 = vmul.f32 %v2109, %v2749
        %v2878 = vmul.f32 %v2110, %v2750
        %v2879 = vmul.f32 %v2111, %v2751
        %v2880 = vmul.f32 %v2112, %v2752
        %v2881 = vmul.f32 %v2113, %v2753
        %v2882 = vmul.f32 %v2114, %v2754
        %v2883 = vmul.f32 %v2115, %v2755
        %v2884 = vmul.f32 %v2116, %v2756
        %v2885 = vmul.f32 %v2117, %v2757
        %v2886 = vmul.f32 %v2118, %v2758
        %v2887 = vmul.f32 %v2119, %v2759
        %v2888 = vmul.f32 %v2120, %v2760
        %v2889 = vmul.f32 %v2121, %v2761
        %v2890 = vmul.f32 %v2122, %v2762
        %v2891 = vmul.f32 %v2123, %v2763
        %v2892 = vmul.f32 %v2124, %v2764
        %v2893 = vmul.f32 %v2125, %v2765
        %v2894 = vmul.f32 %v2126, %v2766
        %v2895 = vmul.f32 %v2127, %v2767
        %v2896 = vmul.f32 %v2128, %v2768
        %v2897 = vmul.f32 %v2129, %v2769
        %v2898 = vmul.f32 %v2130, %v2770
        %v2899 = vmul.f32 %v2131, %v2771
        %v2900 = vpack.c.bf16 %v2773, %v2772
        %v2901 = vpack.c.bf16 %v2775, %v2774
        %v2902 = vpack.c.bf16 %v2777, %v2776
        %v2903 = vpack.c.bf16 %v2779, %v2778
        %v2904 = vpack.c.bf16 %v2781, %v2780
        %v2905 = vpack.c.bf16 %v2783, %v2782
        %v2906 = vpack.c.bf16 %v2785, %v2784
        %v2907 = vpack.c.bf16 %v2787, %v2786
        %v2908 = vpack.c.bf16 %v2789, %v2788
        %v2909 = vpack.c.bf16 %v2791, %v2790
        %v2910 = vpack.c.bf16 %v2793, %v2792
        %v2911 = vpack.c.bf16 %v2795, %v2794
        %v2912 = vpack.c.bf16 %v2797, %v2796
        %v2913 = vpack.c.bf16 %v2799, %v2798
        %v2914 = vpack.c.bf16 %v2801, %v2800
        %v2915 = vpack.c.bf16 %v2803, %v2802
        %v2916 = vpack.c.bf16 %v2805, %v2804
        %v2917 = vpack.c.bf16 %v2807, %v2806
        %v2918 = vpack.c.bf16 %v2809, %v2808
        %v2919 = vpack.c.bf16 %v2811, %v2810
        %v2920 = vpack.c.bf16 %v2813, %v2812
        %v2921 = vpack.c.bf16 %v2815, %v2814
        %v2922 = vpack.c.bf16 %v2817, %v2816
        %v2923 = vpack.c.bf16 %v2819, %v2818
        %v2924 = vpack.c.bf16 %v2821, %v2820
        %v2925 = vpack.c.bf16 %v2823, %v2822
        %v2926 = vpack.c.bf16 %v2825, %v2824
        %v2927 = vpack.c.bf16 %v2827, %v2826
        %v2928 = vpack.c.bf16 %v2829, %v2828
        %v2929 = vpack.c.bf16 %v2831, %v2830
        %v2930 = vpack.c.bf16 %v2833, %v2832
        %v2931 = vpack.c.bf16 %v2835, %v2834
        %v2932 = vpack.c.bf16 %v2837, %v2836
        %v2933 = vpack.c.bf16 %v2839, %v2838
        %v2934 = vpack.c.bf16 %v2841, %v2840
        %v2935 = vpack.c.bf16 %v2843, %v2842
        %v2936 = vpack.c.bf16 %v2845, %v2844
        %v2937 = vpack.c.bf16 %v2847, %v2846
        %v2938 = vpack.c.bf16 %v2849, %v2848
        %v2939 = vpack.c.bf16 %v2851, %v2850
        %v2940 = vpack.c.bf16 %v2853, %v2852
        %v2941 = vpack.c.bf16 %v2855, %v2854
        %v2942 = vpack.c.bf16 %v2857, %v2856
        %v2943 = vpack.c.bf16 %v2859, %v2858
        %v2944 = vpack.c.bf16 %v2861, %v2860
        %v2945 = vpack.c.bf16 %v2863, %v2862
        %v2946 = vpack.c.bf16 %v2865, %v2864
        %v2947 = vpack.c.bf16 %v2867, %v2866
        %v2948 = vpack.c.bf16 %v2869, %v2868
        %v2949 = vpack.c.bf16 %v2871, %v2870
        %v2950 = vpack.c.bf16 %v2873, %v2872
        %v2951 = vpack.c.bf16 %v2875, %v2874
        %v2952 = vpack.c.bf16 %v2877, %v2876
        %v2953 = vpack.c.bf16 %v2879, %v2878
        %v2954 = vpack.c.bf16 %v2881, %v2880
        %v2955 = vpack.c.bf16 %v2883, %v2882
        %v2956 = vpack.c.bf16 %v2885, %v2884
        %v2957 = vpack.c.bf16 %v2887, %v2886
        %v2958 = vpack.c.bf16 %v2889, %v2888
        %v2959 = vpack.c.bf16 %v2891, %v2890
        %v2960 = vpack.c.bf16 %v2893, %v2892
        %v2961 = vpack.c.bf16 %v2895, %v2894
        %v2962 = vpack.c.bf16 %v2897, %v2896
        %v2963 = vpack.c.bf16 %v2899, %v2898
        %v2964 = vld [vmem:[#allocation10] sm:$0xf]
        %v2965 = vld [vmem:[#allocation10 + $0x4] sm:$0xf]
        %v2966 = vld [vmem:[#allocation10 + $0x8] sm:$0xf]
        %v2967 = vld [vmem:[#allocation10 + $0xc] sm:$0xf]
        %v2968 = vld [vmem:[#allocation10 + $0x10] sm:$0xf]
        %v2969 = vld [vmem:[#allocation10 + $0x14] sm:$0xf]
        %v2970 = vld [vmem:[#allocation10 + $0x18] sm:$0xf]
        %v2971 = vld [vmem:[#allocation10 + $0x1c] sm:$0xf]
        %v2972 = vld [vmem:[#allocation10 + $0x20] sm:$0xf]
        %v2973 = vld [vmem:[#allocation10 + $0x24] sm:$0xf]
        %v2974 = vld [vmem:[#allocation10 + $0x28] sm:$0xf]
        %v2975 = vld [vmem:[#allocation10 + $0x2c] sm:$0xf]
        %v2976 = vld [vmem:[#allocation10 + $0x30] sm:$0xf]
        %v2977 = vld [vmem:[#allocation10 + $0x34] sm:$0xf]
        %v2978 = vld [vmem:[#allocation10 + $0x38] sm:$0xf]
        %v2979 = vld [vmem:[#allocation10 + $0x3c] sm:$0xf]
        %v2996 = vunpack.c.l.b16 %v2964
        %v2997 = vunpack.c.l.b16 %v2965
        %v2998 = vunpack.c.l.b16 %v2966
        %v2999 = vunpack.c.l.b16 %v2967
        %v3000 = vunpack.c.l.b16 %v2968
        %v3001 = vunpack.c.l.b16 %v2969
        %v3002 = vunpack.c.l.b16 %v2970
        %v3003 = vunpack.c.l.b16 %v2971
        %v3004 = vunpack.c.l.b16 %v2972
        %v3005 = vunpack.c.l.b16 %v2973
        %v3006 = vunpack.c.l.b16 %v2974
        %v3007 = vunpack.c.l.b16 %v2975
        %v3008 = vunpack.c.l.b16 %v2976
        %v3009 = vunpack.c.l.b16 %v2977
        %v3010 = vunpack.c.l.b16 %v2978
        %v3011 = vunpack.c.l.b16 %v2979
        %v3012 = vpack.c.b16 %v2997, %v2996
        %v3013 = vpack.c.b16 %v2999, %v2998
        %v3014 = vpack.c.b16 %v3001, %v3000
        %v3015 = vpack.c.b16 %v3003, %v3002
        %v3016 = vpack.c.b16 %v3005, %v3004
        %v3017 = vpack.c.b16 %v3007, %v3006
        %v3018 = vpack.c.b16 %v3009, %v3008
        %v3019 = vpack.c.b16 %v3011, %v3010
        %3028 = vmatprep.subr.bf16.mxu0 0
        %3029 = vmatpush1.bf16.msra.mxu0 %v3012
        %3030 = vmatprep.subr.bf16.mxu0 0
        %3031 = vmatpush1.bf16.msra.mxu0 %v3013
        %3032 = vmatprep.subr.bf16.mxu0 0
        %3033 = vmatpush1.bf16.msra.mxu0 %v3014
        %3034 = vmatprep.subr.bf16.mxu0 0
        %3035 = vmatpush1.bf16.msra.mxu0 %v3015
        %3036 = vmatprep.subr.bf16.mxu0 0
        %3037 = vmatpush1.bf16.msra.mxu0 %v3016
        %3038 = vmatprep.subr.bf16.mxu0 0
        %3039 = vmatpush1.bf16.msra.mxu0 %v3017
        %3040 = vmatprep.subr.bf16.mxu0 0
        %3041 = vmatpush1.bf16.msra.mxu0 %v3018
        %3042 = vmatprep.subr.bf16.mxu0 0
        %3043 = vmatpush1.bf16.msra.mxu0 %v3019
        %3044 = vmatprep.subr.bf16.mxu0 0
        %3045 = vmatpush1.bf16.msra.mxu0 0
        %3046 = vmatprep.subr.bf16.mxu0 0
        %3047 = vmatpush1.bf16.msra.mxu0 0
        %3048 = vmatprep.subr.bf16.mxu0 0
        %3049 = vmatpush1.bf16.msra.mxu0 0
        %3050 = vmatprep.subr.bf16.mxu0 0
        %3051 = vmatpush1.bf16.msra.mxu0 0
        %3052 = vmatprep.subr.bf16.mxu0 0
        %3053 = vmatpush1.bf16.msra.mxu0 0
        %3054 = vmatprep.subr.bf16.mxu0 0
        %3055 = vmatpush1.bf16.msra.mxu0 0
        %3056 = vmatprep.subr.bf16.mxu0 0
        %3057 = vmatpush1.bf16.msra.mxu0 0
        %3058 = vmatprep.subr.bf16.mxu0 0
        %3059 = vmatpush1.bf16.msra.mxu0 0
        %3060 = vmatprep.mubr.bf16.mxu0 0
        %3061 = vmatmul.mubr.bf16.gmra.mrb[0].mxu0 %v2900
        %v3062 = vpop.f32.mrb[0].mxu0
        %v3063 = vadd.f32 0.0, %v3062
        %v3064 = vpop.f32.mrb[0].mxu0
        %v3065 = vpop.f32.mrb[0].mxu0
        %v3066 = vadd.f32 0.0, %v3065
        %v3067 = vpop.f32.mrb[0].mxu0
        %3068 = vmatprep.mubr.bf16.mxu0 0
        %3069 = vmatmul.mubr.bf16.gmra.mrb[0].mxu0 %v2901
        %v3070 = vpop.f32.mrb[0].mxu0
        %v3071 = vadd.f32 0.0, %v3070
        %v3072 = vpop.f32.mrb[0].mxu0
        %v3073 = vpop.f32.mrb[0].mxu0
        %v3074 = vadd.f32 0.0, %v3073
        %v3075 = vpop.f32.mrb[0].mxu0
        %3076 = vmatprep.mubr.bf16.mxu0 0
        %3077 = vmatmul.mubr.bf16.gmra.mrb[0].mxu0 %v2902
        %v3078 = vpop.f32.mrb[0].mxu0
        %v3079 = vadd.f32 0.0, %v3078
        %v3080 = vpop.f32.mrb[0].mxu0
        %v3081 = vpop.f32.mrb[0].mxu0
        %v3082 = vadd.f32 0.0, %v3081
        %v3083 = vpop.f32.mrb[0].mxu0
        %3084 = vmatprep.mubr.bf16.mxu0 0
        %3085 = vmatmul.mubr.bf16.gmra.mrb[0].mxu0 %v2903
        %v3086 = vpop.f32.mrb[0].mxu0
        %v3087 = vadd.f32 0.0, %v3086
        %v3088 = vpop.f32.mrb[0].mxu0
        %v3089 = vpop.f32.mrb[0].mxu0
        %v3090 = vadd.f32 0.0, %v3089
        %v3091 = vpop.f32.mrb[0].mxu0
        %3092 = vmatprep.mubr.bf16.mxu0 0
        %3093 = vmatmul.mubr.bf16.gmra.mrb[0].mxu0 %v2904
        %v3094 = vpop.f32.mrb[0].mxu0
        %v3095 = vadd.f32 0.0, %v3094
        %v3096 = vpop.f32.mrb[0].mxu0
        %v3097 = vpop.f32.mrb[0].mxu0
        %v3098 = vadd.f32 0.0, %v3097
        %v3099 = vpop.f32.mrb[0].mxu0
        %3100 = vmatprep.mubr.bf16.mxu0 0
        %3101 = vmatmul.mubr.bf16.gmra.mrb[0].mxu0 %v2905
        %v3102 = vpop.f32.mrb[0].mxu0
        %v3103 = vadd.f32 0.0, %v3102
        %v3104 = vpop.f32.mrb[0].mxu0
        %v3105 = vpop.f32.mrb[0].mxu0
        %v3106 = vadd.f32 0.0, %v3105
        %v3107 = vpop.f32.mrb[0].mxu0
        %3108 = vmatprep.mubr.bf16.mxu0 0
        %3109 = vmatmul.mubr.bf16.gmra.mrb[0].mxu0 %v2906
        %v3110 = vpop.f32.mrb[0].mxu0
        %v3111 = vadd.f32 0.0, %v3110
        %v3112 = vpop.f32.mrb[0].mxu0
        %v3113 = vpop.f32.mrb[0].mxu0
        %v3114 = vadd.f32 0.0, %v3113
        %v3115 = vpop.f32.mrb[0].mxu0
        %3116 = vmatprep.mubr.bf16.mxu0 0
        %3117 = vmatmul.mubr.bf16.gmra.mrb[0].mxu0 %v2907
        %v3118 = vpop.f32.mrb[0].mxu0
        %v3119 = vadd.f32 0.0, %v3118
        %v3120 = vpop.f32.mrb[0].mxu0
        %v3121 = vpop.f32.mrb[0].mxu0
        %v3122 = vadd.f32 0.0, %v3121
        %v3123 = vpop.f32.mrb[0].mxu0
        %3124 = vmatprep.mubr.bf16.mxu0 0
        %3125 = vmatmul.mubr.bf16.gmra.mrb[0].mxu0 %v2908
        %v3126 = vpop.f32.mrb[0].mxu0
        %v3127 = vadd.f32 0.0, %v3126
        %v3128 = vpop.f32.mrb[0].mxu0
        %v3129 = vpop.f32.mrb[0].mxu0
        %v3130 = vadd.f32 0.0, %v3129
        %v3131 = vpop.f32.mrb[0].mxu0
        %3132 = vmatprep.mubr.bf16.mxu0 0
        %3133 = vmatmul.mubr.bf16.gmra.mrb[0].mxu0 %v2909
        %v3134 = vpop.f32.mrb[0].mxu0
        %v3135 = vadd.f32 0.0, %v3134
        %v3136 = vpop.f32.mrb[0].mxu0
        %v3137 = vpop.f32.mrb[0].mxu0
        %v3138 = vadd.f32 0.0, %v3137
        %v3139 = vpop.f32.mrb[0].mxu0
        %3140 = vmatprep.mubr.bf16.mxu0 0
        %3141 = vmatmul.mubr.bf16.gmra.mrb[0].mxu0 %v2910
        %v3142 = vpop.f32.mrb[0].mxu0
        %v3143 = vadd.f32 0.0, %v3142
        %v3144 = vpop.f32.mrb[0].mxu0
        %v3145 = vpop.f32.mrb[0].mxu0
        %v3146 = vadd.f32 0.0, %v3145
        %v3147 = vpop.f32.mrb[0].mxu0
        %3148 = vmatprep.mubr.bf16.mxu0 0
        %3149 = vmatmul.mubr.bf16.gmra.mrb[0].mxu0 %v2911
        %v3150 = vpop.f32.mrb[0].mxu0
        %v3151 = vadd.f32 0.0, %v3150
        %v3152 = vpop.f32.mrb[0].mxu0
        %v3153 = vpop.f32.mrb[0].mxu0
        %v3154 = vadd.f32 0.0, %v3153
        %v3155 = vpop.f32.mrb[0].mxu0
        %3156 = vmatprep.mubr.bf16.mxu0 0
        %3157 = vmatmul.mubr.bf16.gmra.mrb[0].mxu0 %v2912
        %v3158 = vpop.f32.mrb[0].mxu0
        %v3159 = vadd.f32 0.0, %v3158
        %v3160 = vpop.f32.mrb[0].mxu0
        %v3161 = vpop.f32.mrb[0].mxu0
        %v3162 = vadd.f32 0.0, %v3161
        %v3163 = vpop.f32.mrb[0].mxu0
        %3164 = vmatprep.mubr.bf16.mxu0 0
        %3165 = vmatmul.mubr.bf16.gmra.mrb[0].mxu0 %v2913
        %v3166 = vpop.f32.mrb[0].mxu0
        %v3167 = vadd.f32 0.0, %v3166
        %v3168 = vpop.f32.mrb[0].mxu0
        %v3169 = vpop.f32.mrb[0].mxu0
        %v3170 = vadd.f32 0.0, %v3169
        %v3171 = vpop.f32.mrb[0].mxu0
        %3172 = vmatprep.mubr.bf16.mxu0 0
        %3173 = vmatmul.mubr.bf16.gmra.mrb[0].mxu0 %v2914
        %v3174 = vpop.f32.mrb[0].mxu0
        %v3175 = vadd.f32 0.0, %v3174
        %v3176 = vpop.f32.mrb[0].mxu0
        %v3177 = vpop.f32.mrb[0].mxu0
        %v3178 = vadd.f32 0.0, %v3177
        %v3179 = vpop.f32.mrb[0].mxu0
        %3180 = vmatprep.mubr.bf16.mxu0 0
        %3181 = vmatmul.mubr.bf16.gmra.mrb[0].mxu0 %v2915
        %v3182 = vpop.f32.mrb[0].mxu0
        %v3183 = vadd.f32 0.0, %v3182
        %v3184 = vpop.f32.mrb[0].mxu0
        %v3185 = vpop.f32.mrb[0].mxu0
        %v3186 = vadd.f32 0.0, %v3185
        %v3187 = vpop.f32.mrb[0].mxu0
        %3188 = vmatprep.mubr.bf16.mxu0 0
        %3189 = vmatmul.mubr.bf16.gmra.mrb[0].mxu0 %v2916
        %v3190 = vpop.f32.mrb[0].mxu0
        %v3191 = vadd.f32 0.0, %v3190
        %v3192 = vpop.f32.mrb[0].mxu0
        %v3193 = vpop.f32.mrb[0].mxu0
        %v3194 = vadd.f32 0.0, %v3193
        %v3195 = vpop.f32.mrb[0].mxu0
        %3196 = vmatprep.mubr.bf16.mxu0 0
        %3197 = vmatmul.mubr.bf16.gmra.mrb[0].mxu0 %v2917
        %v3198 = vpop.f32.mrb[0].mxu0
        %v3199 = vadd.f32 0.0, %v3198
        %v3200 = vpop.f32.mrb[0].mxu0
        %v3201 = vpop.f32.mrb[0].mxu0
        %v3202 = vadd.f32 0.0, %v3201
        %v3203 = vpop.f32.mrb[0].mxu0
        %3204 = vmatprep.mubr.bf16.mxu0 0
        %3205 = vmatmul.mubr.bf16.gmra.mrb[0].mxu0 %v2918
        %v3206 = vpop.f32.mrb[0].mxu0
        %v3207 = vadd.f32 0.0, %v3206
        %v3208 = vpop.f32.mrb[0].mxu0
        %v3209 = vpop.f32.mrb[0].mxu0
        %v3210 = vadd.f32 0.0, %v3209
        %v3211 = vpop.f32.mrb[0].mxu0
        %3212 = vmatprep.mubr.bf16.mxu0 0
        %3213 = vmatmul.mubr.bf16.gmra.mrb[0].mxu0 %v2919
        %v3214 = vpop.f32.mrb[0].mxu0
        %v3215 = vadd.f32 0.0, %v3214
        %v3216 = vpop.f32.mrb[0].mxu0
        %v3217 = vpop.f32.mrb[0].mxu0
        %v3218 = vadd.f32 0.0, %v3217
        %v3219 = vpop.f32.mrb[0].mxu0
        %3220 = vmatprep.mubr.bf16.mxu0 0
        %3221 = vmatmul.mubr.bf16.gmra.mrb[0].mxu0 %v2920
        %v3222 = vpop.f32.mrb[0].mxu0
        %v3223 = vadd.f32 0.0, %v3222
        %v3224 = vpop.f32.mrb[0].mxu0
        %v3225 = vpop.f32.mrb[0].mxu0
        %v3226 = vadd.f32 0.0, %v3225
        %v3227 = vpop.f32.mrb[0].mxu0
        %3228 = vmatprep.mubr.bf16.mxu0 0
        %3229 = vmatmul.mubr.bf16.gmra.mrb[0].mxu0 %v2921
        %v3230 = vpop.f32.mrb[0].mxu0
        %v3231 = vadd.f32 0.0, %v3230
        %v3232 = vpop.f32.mrb[0].mxu0
        %v3233 = vpop.f32.mrb[0].mxu0
        %v3234 = vadd.f32 0.0, %v3233
        %v3235 = vpop.f32.mrb[0].mxu0
        %3236 = vmatprep.mubr.bf16.mxu0 0
        %3237 = vmatmul.mubr.bf16.gmra.mrb[0].mxu0 %v2922
        %v3238 = vpop.f32.mrb[0].mxu0
        %v3239 = vadd.f32 0.0, %v3238
        %v3240 = vpop.f32.mrb[0].mxu0
        %v3241 = vpop.f32.mrb[0].mxu0
        %v3242 = vadd.f32 0.0, %v3241
        %v3243 = vpop.f32.mrb[0].mxu0
        %3244 = vmatprep.mubr.bf16.mxu0 0
        %3245 = vmatmul.mubr.bf16.gmra.mrb[0].mxu0 %v2923
        %v3246 = vpop.f32.mrb[0].mxu0
        %v3247 = vadd.f32 0.0, %v3246
        %v3248 = vpop.f32.mrb[0].mxu0
        %v3249 = vpop.f32.mrb[0].mxu0
        %v3250 = vadd.f32 0.0, %v3249
        %v3251 = vpop.f32.mrb[0].mxu0
        %3252 = vmatprep.mubr.bf16.mxu0 0
        %3253 = vmatmul.mubr.bf16.gmra.mrb[0].mxu0 %v2924
        %v3254 = vpop.f32.mrb[0].mxu0
        %v3255 = vadd.f32 0.0, %v3254
        %v3256 = vpop.f32.mrb[0].mxu0
        %v3257 = vpop.f32.mrb[0].mxu0
        %v3258 = vadd.f32 0.0, %v3257
        %v3259 = vpop.f32.mrb[0].mxu0
        %3260 = vmatprep.mubr.bf16.mxu0 0
        %3261 = vmatmul.mubr.bf16.gmra.mrb[0].mxu0 %v2925
        %v3262 = vpop.f32.mrb[0].mxu0
        %v3263 = vadd.f32 0.0, %v3262
        %v3264 = vpop.f32.mrb[0].mxu0
        %v3265 = vpop.f32.mrb[0].mxu0
        %v3266 = vadd.f32 0.0, %v3265
        %v3267 = vpop.f32.mrb[0].mxu0
        %3268 = vmatprep.mubr.bf16.mxu0 0
        %3269 = vmatmul.mubr.bf16.gmra.mrb[0].mxu0 %v2926
        %v3270 = vpop.f32.mrb[0].mxu0
        %v3271 = vadd.f32 0.0, %v3270
        %v3272 = vpop.f32.mrb[0].mxu0
        %v3273 = vpop.f32.mrb[0].mxu0
        %v3274 = vadd.f32 0.0, %v3273
        %v3275 = vpop.f32.mrb[0].mxu0
        %3276 = vmatprep.mubr.bf16.mxu0 0
        %3277 = vmatmul.mubr.bf16.gmra.mrb[0].mxu0 %v2927
        %v3278 = vpop.f32.mrb[0].mxu0
        %v3279 = vadd.f32 0.0, %v3278
        %v3280 = vpop.f32.mrb[0].mxu0
        %v3281 = vpop.f32.mrb[0].mxu0
        %v3282 = vadd.f32 0.0, %v3281
        %v3283 = vpop.f32.mrb[0].mxu0
        %3284 = vmatprep.mubr.bf16.mxu0 0
        %3285 = vmatmul.mubr.bf16.gmra.mrb[0].mxu0 %v2928
        %v3286 = vpop.f32.mrb[0].mxu0
        %v3287 = vadd.f32 0.0, %v3286
        %v3288 = vpop.f32.mrb[0].mxu0
        %v3289 = vpop.f32.mrb[0].mxu0
        %v3290 = vadd.f32 0.0, %v3289
        %v3291 = vpop.f32.mrb[0].mxu0
        %3292 = vmatprep.mubr.bf16.mxu0 0
        %3293 = vmatmul.mubr.bf16.gmra.mrb[0].mxu0 %v2929
        %v3294 = vpop.f32.mrb[0].mxu0
        %v3295 = vadd.f32 0.0, %v3294
        %v3296 = vpop.f32.mrb[0].mxu0
        %v3297 = vpop.f32.mrb[0].mxu0
        %v3298 = vadd.f32 0.0, %v3297
        %v3299 = vpop.f32.mrb[0].mxu0
        %3300 = vmatprep.mubr.bf16.mxu0 0
        %3301 = vmatmul.mubr.bf16.gmra.mrb[0].mxu0 %v2930
        %v3302 = vpop.f32.mrb[0].mxu0
        %v3303 = vadd.f32 0.0, %v3302
        %v3304 = vpop.f32.mrb[0].mxu0
        %v3305 = vpop.f32.mrb[0].mxu0
        %v3306 = vadd.f32 0.0, %v3305
        %v3307 = vpop.f32.mrb[0].mxu0
        %3308 = vmatprep.mubr.bf16.mxu0 0
        %3309 = vmatmul.mubr.bf16.gmra.mrb[0].mxu0 %v2931
        %v3310 = vpop.f32.mrb[0].mxu0
        %v3311 = vadd.f32 0.0, %v3310
        %v3312 = vpop.f32.mrb[0].mxu0
        %v3313 = vpop.f32.mrb[0].mxu0
        %v3314 = vadd.f32 0.0, %v3313
        %v3315 = vpop.f32.mrb[0].mxu0
        %3316 = vmatprep.mubr.bf16.mxu0 0
        %3317 = vmatmul.mubr.bf16.gmra.mrb[0].mxu0 %v2932
        %v3318 = vpop.f32.mrb[0].mxu0
        %v3319 = vadd.f32 0.0, %v3318
        %v3320 = vpop.f32.mrb[0].mxu0
        %v3321 = vpop.f32.mrb[0].mxu0
        %v3322 = vadd.f32 0.0, %v3321
        %v3323 = vpop.f32.mrb[0].mxu0
        %3324 = vmatprep.mubr.bf16.mxu0 0
        %3325 = vmatmul.mubr.bf16.gmra.mrb[0].mxu0 %v2933
        %v3326 = vpop.f32.mrb[0].mxu0
        %v3327 = vadd.f32 0.0, %v3326
        %v3328 = vpop.f32.mrb[0].mxu0
        %v3329 = vpop.f32.mrb[0].mxu0
        %v3330 = vadd.f32 0.0, %v3329
        %v3331 = vpop.f32.mrb[0].mxu0
        %3332 = vmatprep.mubr.bf16.mxu0 0
        %3333 = vmatmul.mubr.bf16.gmra.mrb[0].mxu0 %v2934
        %v3334 = vpop.f32.mrb[0].mxu0
        %v3335 = vadd.f32 0.0, %v3334
        %v3336 = vpop.f32.mrb[0].mxu0
        %v3337 = vpop.f32.mrb[0].mxu0
        %v3338 = vadd.f32 0.0, %v3337
        %v3339 = vpop.f32.mrb[0].mxu0
        %3340 = vmatprep.mubr.bf16.mxu0 0
        %3341 = vmatmul.mubr.bf16.gmra.mrb[0].mxu0 %v2935
        %v3342 = vpop.f32.mrb[0].mxu0
        %v3343 = vadd.f32 0.0, %v3342
        %v3344 = vpop.f32.mrb[0].mxu0
        %v3345 = vpop.f32.mrb[0].mxu0
        %v3346 = vadd.f32 0.0, %v3345
        %v3347 = vpop.f32.mrb[0].mxu0
        %3348 = vmatprep.mubr.bf16.mxu0 0
        %3349 = vmatmul.mubr.bf16.gmra.mrb[0].mxu0 %v2936
        %v3350 = vpop.f32.mrb[0].mxu0
        %v3351 = vadd.f32 0.0, %v3350
        %v3352 = vpop.f32.mrb[0].mxu0
        %v3353 = vpop.f32.mrb[0].mxu0
        %v3354 = vadd.f32 0.0, %v3353
        %v3355 = vpop.f32.mrb[0].mxu0
        %3356 = vmatprep.mubr.bf16.mxu0 0
        %3357 = vmatmul.mubr.bf16.gmra.mrb[0].mxu0 %v2937
        %v3358 = vpop.f32.mrb[0].mxu0
        %v3359 = vadd.f32 0.0, %v3358
        %v3360 = vpop.f32.mrb[0].mxu0
        %v3361 = vpop.f32.mrb[0].mxu0
        %v3362 = vadd.f32 0.0, %v3361
        %v3363 = vpop.f32.mrb[0].mxu0
        %3364 = vmatprep.mubr.bf16.mxu0 0
        %3365 = vmatmul.mubr.bf16.gmra.mrb[0].mxu0 %v2938
        %v3366 = vpop.f32.mrb[0].mxu0
        %v3367 = vadd.f32 0.0, %v3366
        %v3368 = vpop.f32.mrb[0].mxu0
        %v3369 = vpop.f32.mrb[0].mxu0
        %v3370 = vadd.f32 0.0, %v3369
        %v3371 = vpop.f32.mrb[0].mxu0
        %3372 = vmatprep.mubr.bf16.mxu0 0
        %3373 = vmatmul.mubr.bf16.gmra.mrb[0].mxu0 %v2939
        %v3374 = vpop.f32.mrb[0].mxu0
        %v3375 = vadd.f32 0.0, %v3374
        %v3376 = vpop.f32.mrb[0].mxu0
        %v3377 = vpop.f32.mrb[0].mxu0
        %v3378 = vadd.f32 0.0, %v3377
        %v3379 = vpop.f32.mrb[0].mxu0
        %3380 = vmatprep.mubr.bf16.mxu0 0
        %3381 = vmatmul.mubr.bf16.gmra.mrb[0].mxu0 %v2940
        %v3382 = vpop.f32.mrb[0].mxu0
        %v3383 = vadd.f32 0.0, %v3382
        %v3384 = vpop.f32.mrb[0].mxu0
        %v3385 = vpop.f32.mrb[0].mxu0
        %v3386 = vadd.f32 0.0, %v3385
        %v3387 = vpop.f32.mrb[0].mxu0
        %3388 = vmatprep.mubr.bf16.mxu0 0
        %3389 = vmatmul.mubr.bf16.gmra.mrb[0].mxu0 %v2941
        %v3390 = vpop.f32.mrb[0].mxu0
        %v3391 = vadd.f32 0.0, %v3390
        %v3392 = vpop.f32.mrb[0].mxu0
        %v3393 = vpop.f32.mrb[0].mxu0
        %v3394 = vadd.f32 0.0, %v3393
        %v3395 = vpop.f32.mrb[0].mxu0
        %3396 = vmatprep.mubr.bf16.mxu0 0
        %3397 = vmatmul.mubr.bf16.gmra.mrb[0].mxu0 %v2942
        %v3398 = vpop.f32.mrb[0].mxu0
        %v3399 = vadd.f32 0.0, %v3398
        %v3400 = vpop.f32.mrb[0].mxu0
        %v3401 = vpop.f32.mrb[0].mxu0
        %v3402 = vadd.f32 0.0, %v3401
        %v3403 = vpop.f32.mrb[0].mxu0
        %3404 = vmatprep.mubr.bf16.mxu0 0
        %3405 = vmatmul.mubr.bf16.gmra.mrb[0].mxu0 %v2943
        %v3406 = vpop.f32.mrb[0].mxu0
        %v3407 = vadd.f32 0.0, %v3406
        %v3408 = vpop.f32.mrb[0].mxu0
        %v3409 = vpop.f32.mrb[0].mxu0
        %v3410 = vadd.f32 0.0, %v3409
        %v3411 = vpop.f32.mrb[0].mxu0
        %3412 = vmatprep.mubr.bf16.mxu0 0
        %3413 = vmatmul.mubr.bf16.gmra.mrb[0].mxu0 %v2944
        %v3414 = vpop.f32.mrb[0].mxu0
        %v3415 = vadd.f32 0.0, %v3414
        %v3416 = vpop.f32.mrb[0].mxu0
        %v3417 = vpop.f32.mrb[0].mxu0
        %v3418 = vadd.f32 0.0, %v3417
        %v3419 = vpop.f32.mrb[0].mxu0
        %3420 = vmatprep.mubr.bf16.mxu0 0
        %3421 = vmatmul.mubr.bf16.gmra.mrb[0].mxu0 %v2945
        %v3422 = vpop.f32.mrb[0].mxu0
        %v3423 = vadd.f32 0.0, %v3422
        %v3424 = vpop.f32.mrb[0].mxu0
        %v3425 = vpop.f32.mrb[0].mxu0
        %v3426 = vadd.f32 0.0, %v3425
        %v3427 = vpop.f32.mrb[0].mxu0
        %3428 = vmatprep.mubr.bf16.mxu0 0
        %3429 = vmatmul.mubr.bf16.gmra.mrb[0].mxu0 %v2946
        %v3430 = vpop.f32.mrb[0].mxu0
        %v3431 = vadd.f32 0.0, %v3430
        %v3432 = vpop.f32.mrb[0].mxu0
        %v3433 = vpop.f32.mrb[0].mxu0
        %v3434 = vadd.f32 0.0, %v3433
        %v3435 = vpop.f32.mrb[0].mxu0
        %3436 = vmatprep.mubr.bf16.mxu0 0
        %3437 = vmatmul.mubr.bf16.gmra.mrb[0].mxu0 %v2947
        %v3438 = vpop.f32.mrb[0].mxu0
        %v3439 = vadd.f32 0.0, %v3438
        %v3440 = vpop.f32.mrb[0].mxu0
        %v3441 = vpop.f32.mrb[0].mxu0
        %v3442 = vadd.f32 0.0, %v3441
        %v3443 = vpop.f32.mrb[0].mxu0
        %3444 = vmatprep.mubr.bf16.mxu0 0
        %3445 = vmatmul.mubr.bf16.gmra.mrb[0].mxu0 %v2948
        %v3446 = vpop.f32.mrb[0].mxu0
        %v3447 = vadd.f32 0.0, %v3446
        %v3448 = vpop.f32.mrb[0].mxu0
        %v3449 = vpop.f32.mrb[0].mxu0
        %v3450 = vadd.f32 0.0, %v3449
        %v3451 = vpop.f32.mrb[0].mxu0
        %3452 = vmatprep.mubr.bf16.mxu0 0
        %3453 = vmatmul.mubr.bf16.gmra.mrb[0].mxu0 %v2949
        %v3454 = vpop.f32.mrb[0].mxu0
        %v3455 = vadd.f32 0.0, %v3454
        %v3456 = vpop.f32.mrb[0].mxu0
        %v3457 = vpop.f32.mrb[0].mxu0
        %v3458 = vadd.f32 0.0, %v3457
        %v3459 = vpop.f32.mrb[0].mxu0
        %3460 = vmatprep.mubr.bf16.mxu0 0
        %3461 = vmatmul.mubr.bf16.gmra.mrb[0].mxu0 %v2950
        %v3462 = vpop.f32.mrb[0].mxu0
        %v3463 = vadd.f32 0.0, %v3462
        %v3464 = vpop.f32.mrb[0].mxu0
        %v3465 = vpop.f32.mrb[0].mxu0
        %v3466 = vadd.f32 0.0, %v3465
        %v3467 = vpop.f32.mrb[0].mxu0
        %3468 = vmatprep.mubr.bf16.mxu0 0
        %3469 = vmatmul.mubr.bf16.gmra.mrb[0].mxu0 %v2951
        %v3470 = vpop.f32.mrb[0].mxu0
        %v3471 = vadd.f32 0.0, %v3470
        %v3472 = vpop.f32.mrb[0].mxu0
        %v3473 = vpop.f32.mrb[0].mxu0
        %v3474 = vadd.f32 0.0, %v3473
        %v3475 = vpop.f32.mrb[0].mxu0
        %3476 = vmatprep.mubr.bf16.mxu0 0
        %3477 = vmatmul.mubr.bf16.gmra.mrb[0].mxu0 %v2952
        %v3478 = vpop.f32.mrb[0].mxu0
        %v3479 = vadd.f32 0.0, %v3478
        %v3480 = vpop.f32.mrb[0].mxu0
        %v3481 = vpop.f32.mrb[0].mxu0
        %v3482 = vadd.f32 0.0, %v3481
        %v3483 = vpop.f32.mrb[0].mxu0
        %3484 = vmatprep.mubr.bf16.mxu0 0
        %3485 = vmatmul.mubr.bf16.gmra.mrb[0].mxu0 %v2953
        %v3486 = vpop.f32.mrb[0].mxu0
        %v3487 = vadd.f32 0.0, %v3486
        %v3488 = vpop.f32.mrb[0].mxu0
        %v3489 = vpop.f32.mrb[0].mxu0
        %v3490 = vadd.f32 0.0, %v3489
        %v3491 = vpop.f32.mrb[0].mxu0
        %3492 = vmatprep.mubr.bf16.mxu0 0
        %3493 = vmatmul.mubr.bf16.gmra.mrb[0].mxu0 %v2954
        %v3494 = vpop.f32.mrb[0].mxu0
        %v3495 = vadd.f32 0.0, %v3494
        %v3496 = vpop.f32.mrb[0].mxu0
        %v3497 = vpop.f32.mrb[0].mxu0
        %v3498 = vadd.f32 0.0, %v3497
        %v3499 = vpop.f32.mrb[0].mxu0
        %3500 = vmatprep.mubr.bf16.mxu0 0
        %3501 = vmatmul.mubr.bf16.gmra.mrb[0].mxu0 %v2955
        %v3502 = vpop.f32.mrb[0].mxu0
        %v3503 = vadd.f32 0.0, %v3502
        %v3504 = vpop.f32.mrb[0].mxu0
        %v3505 = vpop.f32.mrb[0].mxu0
        %v3506 = vadd.f32 0.0, %v3505
        %v3507 = vpop.f32.mrb[0].mxu0
        %3508 = vmatprep.mubr.bf16.mxu0 0
        %3509 = vmatmul.mubr.bf16.gmra.mrb[0].mxu0 %v2956
        %v3510 = vpop.f32.mrb[0].mxu0
        %v3511 = vadd.f32 0.0, %v3510
        %v3512 = vpop.f32.mrb[0].mxu0
        %v3513 = vpop.f32.mrb[0].mxu0
        %v3514 = vadd.f32 0.0, %v3513
        %v3515 = vpop.f32.mrb[0].mxu0
        %3516 = vmatprep.mubr.bf16.mxu0 0
        %3517 = vmatmul.mubr.bf16.gmra.mrb[0].mxu0 %v2957
        %v3518 = vpop.f32.mrb[0].mxu0
        %v3519 = vadd.f32 0.0, %v3518
        %v3520 = vpop.f32.mrb[0].mxu0
        %v3521 = vpop.f32.mrb[0].mxu0
        %v3522 = vadd.f32 0.0, %v3521
        %v3523 = vpop.f32.mrb[0].mxu0
        %3524 = vmatprep.mubr.bf16.mxu0 0
        %3525 = vmatmul.mubr.bf16.gmra.mrb[0].mxu0 %v2958
        %v3526 = vpop.f32.mrb[0].mxu0
        %v3527 = vadd.f32 0.0, %v3526
        %v3528 = vpop.f32.mrb[0].mxu0
        %v3529 = vpop.f32.mrb[0].mxu0
        %v3530 = vadd.f32 0.0, %v3529
        %v3531 = vpop.f32.mrb[0].mxu0
        %3532 = vmatprep.mubr.bf16.mxu0 0
        %3533 = vmatmul.mubr.bf16.gmra.mrb[0].mxu0 %v2959
        %v3534 = vpop.f32.mrb[0].mxu0
        %v3535 = vadd.f32 0.0, %v3534
        %v3536 = vpop.f32.mrb[0].mxu0
        %v3537 = vpop.f32.mrb[0].mxu0
        %v3538 = vadd.f32 0.0, %v3537
        %v3539 = vpop.f32.mrb[0].mxu0
        %3540 = vmatprep.mubr.bf16.mxu0 0
        %3541 = vmatmul.mubr.bf16.gmra.mrb[0].mxu0 %v2960
        %v3542 = vpop.f32.mrb[0].mxu0
        %v3543 = vadd.f32 0.0, %v3542
        %v3544 = vpop.f32.mrb[0].mxu0
        %v3545 = vpop.f32.mrb[0].mxu0
        %v3546 = vadd.f32 0.0, %v3545
        %v3547 = vpop.f32.mrb[0].mxu0
        %3548 = vmatprep.mubr.bf16.mxu0 0
        %3549 = vmatmul.mubr.bf16.gmra.mrb[0].mxu0 %v2961
        %v3550 = vpop.f32.mrb[0].mxu0
        %v3551 = vadd.f32 0.0, %v3550
        %v3552 = vpop.f32.mrb[0].mxu0
        %v3553 = vpop.f32.mrb[0].mxu0
        %v3554 = vadd.f32 0.0, %v3553
        %v3555 = vpop.f32.mrb[0].mxu0
        %3556 = vmatprep.mubr.bf16.mxu0 0
        %3557 = vmatmul.mubr.bf16.gmra.mrb[0].mxu0 %v2962
        %v3558 = vpop.f32.mrb[0].mxu0
        %v3559 = vadd.f32 0.0, %v3558
        %v3560 = vpop.f32.mrb[0].mxu0
        %v3561 = vpop.f32.mrb[0].mxu0
        %v3562 = vadd.f32 0.0, %v3561
        %v3563 = vpop.f32.mrb[0].mxu0
        %3564 = vmatprep.mubr.bf16.mxu0 0
        %3565 = vmatmul.mubr.bf16.gmra.mrb[0].mxu0 %v2963
        %v3566 = vpop.f32.mrb[0].mxu0
        %v3567 = vadd.f32 0.0, %v3566
        %v3568 = vpop.f32.mrb[0].mxu0
        %v3569 = vpop.f32.mrb[0].mxu0
        %v3570 = vadd.f32 0.0, %v3569
        %v3571 = vpop.f32.mrb[0].mxu0
        %3572 = vdwg.mxu0
        %v3573 = vld [vmem:[#allocation11] sm:$0x1]
        %v3575 = vlaneseq
        %v3576 = vshrl.u32 %v3575, 7
        %v3577 = vsub.s32 0, %v3576
        %v3578 = vrot.slane %v3573, %v3577
        %v3580 = vmul.f32 %v3063, %v3578
        %v3581 = vmul.f32 %v3066, %v3578
        %v3582 = vmul.f32 %v3071, %v3578
        %v3583 = vmul.f32 %v3074, %v3578
        %v3584 = vmul.f32 %v3079, %v3578
        %v3585 = vmul.f32 %v3082, %v3578
        %v3586 = vmul.f32 %v3087, %v3578
        %v3587 = vmul.f32 %v3090, %v3578
        %v3588 = vmul.f32 %v3095, %v3578
        %v3589 = vmul.f32 %v3098, %v3578
        %v3590 = vmul.f32 %v3103, %v3578
        %v3591 = vmul.f32 %v3106, %v3578
        %v3592 = vmul.f32 %v3111, %v3578
        %v3593 = vmul.f32 %v3114, %v3578
        %v3594 = vmul.f32 %v3119, %v3578
        %v3595 = vmul.f32 %v3122, %v3578
        %v3596 = vmul.f32 %v3127, %v3578
        %v3597 = vmul.f32 %v3130, %v3578
        %v3598 = vmul.f32 %v3135, %v3578
        %v3599 = vmul.f32 %v3138, %v3578
        %v3600 = vmul.f32 %v3143, %v3578
        %v3601 = vmul.f32 %v3146, %v3578
        %v3602 = vmul.f32 %v3151, %v3578
        %v3603 = vmul.f32 %v3154, %v3578
        %v3604 = vmul.f32 %v3159, %v3578
        %v3605 = vmul.f32 %v3162, %v3578
        %v3606 = vmul.f32 %v3167, %v3578
        %v3607 = vmul.f32 %v3170, %v3578
        %v3608 = vmul.f32 %v3175, %v3578
        %v3609 = vmul.f32 %v3178, %v3578
        %v3610 = vmul.f32 %v3183, %v3578
        %v3611 = vmul.f32 %v3186, %v3578
        %v3612 = vmul.f32 %v3191, %v3578
        %v3613 = vmul.f32 %v3194, %v3578
        %v3614 = vmul.f32 %v3199, %v3578
        %v3615 = vmul.f32 %v3202, %v3578
        %v3616 = vmul.f32 %v3207, %v3578
        %v3617 = vmul.f32 %v3210, %v3578
        %v3618 = vmul.f32 %v3215, %v3578
        %v3619 = vmul.f32 %v3218, %v3578
        %v3620 = vmul.f32 %v3223, %v3578
        %v3621 = vmul.f32 %v3226, %v3578
        %v3622 = vmul.f32 %v3231, %v3578
        %v3623 = vmul.f32 %v3234, %v3578
        %v3624 = vmul.f32 %v3239, %v3578
        %v3625 = vmul.f32 %v3242, %v3578
        %v3626 = vmul.f32 %v3247, %v3578
        %v3627 = vmul.f32 %v3250, %v3578
        %v3628 = vmul.f32 %v3255, %v3578
        %v3629 = vmul.f32 %v3258, %v3578
        %v3630 = vmul.f32 %v3263, %v3578
        %v3631 = vmul.f32 %v3266, %v3578
        %v3632 = vmul.f32 %v3271, %v3578
        %v3633 = vmul.f32 %v3274, %v3578
        %v3634 = vmul.f32 %v3279, %v3578
        %v3635 = vmul.f32 %v3282, %v3578
        %v3636 = vmul.f32 %v3287, %v3578
        %v3637 = vmul.f32 %v3290, %v3578
        %v3638 = vmul.f32 %v3295, %v3578
        %v3639 = vmul.f32 %v3298, %v3578
        %v3640 = vmul.f32 %v3303, %v3578
        %v3641 = vmul.f32 %v3306, %v3578
        %v3642 = vmul.f32 %v3311, %v3578
        %v3643 = vmul.f32 %v3314, %v3578
        %v3644 = vmul.f32 %v3319, %v3578
        %v3645 = vmul.f32 %v3322, %v3578
        %v3646 = vmul.f32 %v3327, %v3578
        %v3647 = vmul.f32 %v3330, %v3578
        %v3648 = vmul.f32 %v3335, %v3578
        %v3649 = vmul.f32 %v3338, %v3578
        %v3650 = vmul.f32 %v3343, %v3578
        %v3651 = vmul.f32 %v3346, %v3578
        %v3652 = vmul.f32 %v3351, %v3578
        %v3653 = vmul.f32 %v3354, %v3578
        %v3654 = vmul.f32 %v3359, %v3578
        %v3655 = vmul.f32 %v3362, %v3578
        %v3656 = vmul.f32 %v3367, %v3578
        %v3657 = vmul.f32 %v3370, %v3578
        %v3658 = vmul.f32 %v3375, %v3578
        %v3659 = vmul.f32 %v3378, %v3578
        %v3660 = vmul.f32 %v3383, %v3578
        %v3661 = vmul.f32 %v3386, %v3578
        %v3662 = vmul.f32 %v3391, %v3578
        %v3663 = vmul.f32 %v3394, %v3578
        %v3664 = vmul.f32 %v3399, %v3578
        %v3665 = vmul.f32 %v3402, %v3578
        %v3666 = vmul.f32 %v3407, %v3578
        %v3667 = vmul.f32 %v3410, %v3578
        %v3668 = vmul.f32 %v3415, %v3578
        %v3669 = vmul.f32 %v3418, %v3578
        %v3670 = vmul.f32 %v3423, %v3578
        %v3671 = vmul.f32 %v3426, %v3578
        %v3672 = vmul.f32 %v3431, %v3578
        %v3673 = vmul.f32 %v3434, %v3578
        %v3674 = vmul.f32 %v3439, %v3578
        %v3675 = vmul.f32 %v3442, %v3578
        %v3676 = vmul.f32 %v3447, %v3578
        %v3677 = vmul.f32 %v3450, %v3578
        %v3678 = vmul.f32 %v3455, %v3578
        %v3679 = vmul.f32 %v3458, %v3578
        %v3680 = vmul.f32 %v3463, %v3578
        %v3681 = vmul.f32 %v3466, %v3578
        %v3682 = vmul.f32 %v3471, %v3578
        %v3683 = vmul.f32 %v3474, %v3578
        %v3684 = vmul.f32 %v3479, %v3578
        %v3685 = vmul.f32 %v3482, %v3578
        %v3686 = vmul.f32 %v3487, %v3578
        %v3687 = vmul.f32 %v3490, %v3578
        %v3688 = vmul.f32 %v3495, %v3578
        %v3689 = vmul.f32 %v3498, %v3578
        %v3690 = vmul.f32 %v3503, %v3578
        %v3691 = vmul.f32 %v3506, %v3578
        %v3692 = vmul.f32 %v3511, %v3578
        %v3693 = vmul.f32 %v3514, %v3578
        %v3694 = vmul.f32 %v3519, %v3578
        %v3695 = vmul.f32 %v3522, %v3578
        %v3696 = vmul.f32 %v3527, %v3578
        %v3697 = vmul.f32 %v3530, %v3578
        %v3698 = vmul.f32 %v3535, %v3578
        %v3699 = vmul.f32 %v3538, %v3578
        %v3700 = vmul.f32 %v3543, %v3578
        %v3701 = vmul.f32 %v3546, %v3578
        %v3702 = vmul.f32 %v3551, %v3578
        %v3703 = vmul.f32 %v3554, %v3578
        %v3704 = vmul.f32 %v3559, %v3578
        %v3705 = vmul.f32 %v3562, %v3578
        %v3706 = vmul.f32 %v3567, %v3578
        %v3707 = vmul.f32 %v3570, %v3578
        %v3708 = vld [vmem:[#allocation13] sm:$0x1]
        %v3710 = vlaneseq
        %v3711 = vshrl.u32 %v3710, 7
        %v3712 = vsub.s32 0, %v3711
        %v3713 = vrot.slane %v3708, %v3712
        %v3715 = vadd.f32 %v3580, %v3713
        %v3716 = vadd.f32 %v3581, %v3713
        %v3717 = vadd.f32 %v3582, %v3713
        %v3718 = vadd.f32 %v3583, %v3713
        %v3719 = vadd.f32 %v3584, %v3713
        %v3720 = vadd.f32 %v3585, %v3713
        %v3721 = vadd.f32 %v3586, %v3713
        %v3722 = vadd.f32 %v3587, %v3713
        %v3723 = vadd.f32 %v3588, %v3713
        %v3724 = vadd.f32 %v3589, %v3713
        %v3725 = vadd.f32 %v3590, %v3713
        %v3726 = vadd.f32 %v3591, %v3713
        %v3727 = vadd.f32 %v3592, %v3713
        %v3728 = vadd.f32 %v3593, %v3713
        %v3729 = vadd.f32 %v3594, %v3713
        %v3730 = vadd.f32 %v3595, %v3713
        %v3731 = vadd.f32 %v3596, %v3713
        %v3732 = vadd.f32 %v3597, %v3713
        %v3733 = vadd.f32 %v3598, %v3713
        %v3734 = vadd.f32 %v3599, %v3713
        %v3735 = vadd.f32 %v3600, %v3713
        %v3736 = vadd.f32 %v3601, %v3713
        %v3737 = vadd.f32 %v3602, %v3713
        %v3738 = vadd.f32 %v3603, %v3713
        %v3739 = vadd.f32 %v3604, %v3713
        %v3740 = vadd.f32 %v3605, %v3713
        %v3741 = vadd.f32 %v3606, %v3713
        %v3742 = vadd.f32 %v3607, %v3713
        %v3743 = vadd.f32 %v3608, %v3713
        %v3744 = vadd.f32 %v3609, %v3713
        %v3745 = vadd.f32 %v3610, %v3713
        %v3746 = vadd.f32 %v3611, %v3713
        %v3747 = vadd.f32 %v3612, %v3713
        %v3748 = vadd.f32 %v3613, %v3713
        %v3749 = vadd.f32 %v3614, %v3713
        %v3750 = vadd.f32 %v3615, %v3713
        %v3751 = vadd.f32 %v3616, %v3713
        %v3752 = vadd.f32 %v3617, %v3713
        %v3753 = vadd.f32 %v3618, %v3713
        %v3754 = vadd.f32 %v3619, %v3713
        %v3755 = vadd.f32 %v3620, %v3713
        %v3756 = vadd.f32 %v3621, %v3713
        %v3757 = vadd.f32 %v3622, %v3713
        %v3758 = vadd.f32 %v3623, %v3713
        %v3759 = vadd.f32 %v3624, %v3713
        %v3760 = vadd.f32 %v3625, %v3713
        %v3761 = vadd.f32 %v3626, %v3713
        %v3762 = vadd.f32 %v3627, %v3713
        %v3763 = vadd.f32 %v3628, %v3713
        %v3764 = vadd.f32 %v3629, %v3713
        %v3765 = vadd.f32 %v3630, %v3713
        %v3766 = vadd.f32 %v3631, %v3713
        %v3767 = vadd.f32 %v3632, %v3713
        %v3768 = vadd.f32 %v3633, %v3713
        %v3769 = vadd.f32 %v3634, %v3713
        %v3770 = vadd.f32 %v3635, %v3713
        %v3771 = vadd.f32 %v3636, %v3713
        %v3772 = vadd.f32 %v3637, %v3713
        %v3773 = vadd.f32 %v3638, %v3713
        %v3774 = vadd.f32 %v3639, %v3713
        %v3775 = vadd.f32 %v3640, %v3713
        %v3776 = vadd.f32 %v3641, %v3713
        %v3777 = vadd.f32 %v3642, %v3713
        %v3778 = vadd.f32 %v3643, %v3713
        %v3779 = vadd.f32 %v3644, %v3713
        %v3780 = vadd.f32 %v3645, %v3713
        %v3781 = vadd.f32 %v3646, %v3713
        %v3782 = vadd.f32 %v3647, %v3713
        %v3783 = vadd.f32 %v3648, %v3713
        %v3784 = vadd.f32 %v3649, %v3713
        %v3785 = vadd.f32 %v3650, %v3713
        %v3786 = vadd.f32 %v3651, %v3713
        %v3787 = vadd.f32 %v3652, %v3713
        %v3788 = vadd.f32 %v3653, %v3713
        %v3789 = vadd.f32 %v3654, %v3713
        %v3790 = vadd.f32 %v3655, %v3713
        %v3791 = vadd.f32 %v3656, %v3713
        %v3792 = vadd.f32 %v3657, %v3713
        %v3793 = vadd.f32 %v3658, %v3713
        %v3794 = vadd.f32 %v3659, %v3713
        %v3795 = vadd.f32 %v3660, %v3713
        %v3796 = vadd.f32 %v3661, %v3713
        %v3797 = vadd.f32 %v3662, %v3713
        %v3798 = vadd.f32 %v3663, %v3713
        %v3799 = vadd.f32 %v3664, %v3713
        %v3800 = vadd.f32 %v3665, %v3713
        %v3801 = vadd.f32 %v3666, %v3713
        %v3802 = vadd.f32 %v3667, %v3713
        %v3803 = vadd.f32 %v3668, %v3713
        %v3804 = vadd.f32 %v3669, %v3713
        %v3805 = vadd.f32 %v3670, %v3713
        %v3806 = vadd.f32 %v3671, %v3713
        %v3807 = vadd.f32 %v3672, %v3713
        %v3808 = vadd.f32 %v3673, %v3713
        %v3809 = vadd.f32 %v3674, %v3713
        %v3810 = vadd.f32 %v3675, %v3713
        %v3811 = vadd.f32 %v3676, %v3713
        %v3812 = vadd.f32 %v3677, %v3713
        %v3813 = vadd.f32 %v3678, %v3713
        %v3814 = vadd.f32 %v3679, %v3713
        %v3815 = vadd.f32 %v3680, %v3713
        %v3816 = vadd.f32 %v3681, %v3713
        %v3817 = vadd.f32 %v3682, %v3713
        %v3818 = vadd.f32 %v3683, %v3713
        %v3819 = vadd.f32 %v3684, %v3713
        %v3820 = vadd.f32 %v3685, %v3713
        %v3821 = vadd.f32 %v3686, %v3713
        %v3822 = vadd.f32 %v3687, %v3713
        %v3823 = vadd.f32 %v3688, %v3713
        %v3824 = vadd.f32 %v3689, %v3713
        %v3825 = vadd.f32 %v3690, %v3713
        %v3826 = vadd.f32 %v3691, %v3713
        %v3827 = vadd.f32 %v3692, %v3713
        %v3828 = vadd.f32 %v3693, %v3713
        %v3829 = vadd.f32 %v3694, %v3713
        %v3830 = vadd.f32 %v3695, %v3713
        %v3831 = vadd.f32 %v3696, %v3713
        %v3832 = vadd.f32 %v3697, %v3713
        %v3833 = vadd.f32 %v3698, %v3713
        %v3834 = vadd.f32 %v3699, %v3713
        %v3835 = vadd.f32 %v3700, %v3713
        %v3836 = vadd.f32 %v3701, %v3713
        %v3837 = vadd.f32 %v3702, %v3713
        %v3838 = vadd.f32 %v3703, %v3713
        %v3839 = vadd.f32 %v3704, %v3713
        %v3840 = vadd.f32 %v3705, %v3713
        %v3841 = vadd.f32 %v3706, %v3713
        %v3842 = vadd.f32 %v3707, %v3713
        %v3843 = vsub.f32 0.0, %v3715
        %v3844 = vsub.f32 0.0, %v3716
        %v3845 = vsub.f32 0.0, %v3717
        %v3846 = vsub.f32 0.0, %v3718
        %v3847 = vsub.f32 0.0, %v3719
        %v3848 = vsub.f32 0.0, %v3720
        %v3849 = vsub.f32 0.0, %v3721
        %v3850 = vsub.f32 0.0, %v3722
        %v3851 = vsub.f32 0.0, %v3723
        %v3852 = vsub.f32 0.0, %v3724
        %v3853 = vsub.f32 0.0, %v3725
        %v3854 = vsub.f32 0.0, %v3726
        %v3855 = vsub.f32 0.0, %v3727
        %v3856 = vsub.f32 0.0, %v3728
        %v3857 = vsub.f32 0.0, %v3729
        %v3858 = vsub.f32 0.0, %v3730
        %v3859 = vsub.f32 0.0, %v3731
        %v3860 = vsub.f32 0.0, %v3732
        %v3861 = vsub.f32 0.0, %v3733
        %v3862 = vsub.f32 0.0, %v3734
        %v3863 = vsub.f32 0.0, %v3735
        %v3864 = vsub.f32 0.0, %v3736
        %v3865 = vsub.f32 0.0, %v3737
        %v3866 = vsub.f32 0.0, %v3738
        %v3867 = vsub.f32 0.0, %v3739
        %v3868 = vsub.f32 0.0, %v3740
        %v3869 = vsub.f32 0.0, %v3741
        %v3870 = vsub.f32 0.0, %v3742
        %v3871 = vsub.f32 0.0, %v3743
        %v3872 = vsub.f32 0.0, %v3744
        %v3873 = vsub.f32 0.0, %v3745
        %v3874 = vsub.f32 0.0, %v3746
        %v3875 = vsub.f32 0.0, %v3747
        %v3876 = vsub.f32 0.0, %v3748
        %v3877 = vsub.f32 0.0, %v3749
        %v3878 = vsub.f32 0.0, %v3750
        %v3879 = vsub.f32 0.0, %v3751
        %v3880 = vsub.f32 0.0, %v3752
        %v3881 = vsub.f32 0.0, %v3753
        %v3882 = vsub.f32 0.0, %v3754
        %v3883 = vsub.f32 0.0, %v3755
        %v3884 = vsub.f32 0.0, %v3756
        %v3885 = vsub.f32 0.0, %v3757
        %v3886 = vsub.f32 0.0, %v3758
        %v3887 = vsub.f32 0.0, %v3759
        %v3888 = vsub.f32 0.0, %v3760
        %v3889 = vsub.f32 0.0, %v3761
        %v3890 = vsub.f32 0.0, %v3762
        %v3891 = vsub.f32 0.0, %v3763
        %v3892 = vsub.f32 0.0, %v3764
        %v3893 = vsub.f32 0.0, %v3765
        %v3894 = vsub.f32 0.0, %v3766
        %v3895 = vsub.f32 0.0, %v3767
        %v3896 = vsub.f32 0.0, %v3768
        %v3897 = vsub.f32 0.0, %v3769
        %v3898 = vsub.f32 0.0, %v3770
        %v3899 = vsub.f32 0.0, %v3771
        %v3900 = vsub.f32 0.0, %v3772
        %v3901 = vsub.f32 0.0, %v3773
        %v3902 = vsub.f32 0.0, %v3774
        %v3903 = vsub.f32 0.0, %v3775
        %v3904 = vsub.f32 0.0, %v3776
        %v3905 = vsub.f32 0.0, %v3777
        %v3906 = vsub.f32 0.0, %v3778
        %v3907 = vsub.f32 0.0, %v3779
        %v3908 = vsub.f32 0.0, %v3780
        %v3909 = vsub.f32 0.0, %v3781
        %v3910 = vsub.f32 0.0, %v3782
        %v3911 = vsub.f32 0.0, %v3783
        %v3912 = vsub.f32 0.0, %v3784
        %v3913 = vsub.f32 0.0, %v3785
        %v3914 = vsub.f32 0.0, %v3786
        %v3915 = vsub.f32 0.0, %v3787
        %v3916 = vsub.f32 0.0, %v3788
        %v3917 = vsub.f32 0.0, %v3789
        %v3918 = vsub.f32 0.0, %v3790
        %v3919 = vsub.f32 0.0, %v3791
        %v3920 = vsub.f32 0.0, %v3792
        %v3921 = vsub.f32 0.0, %v3793
        %v3922 = vsub.f32 0.0, %v3794
        %v3923 = vsub.f32 0.0, %v3795
        %v3924 = vsub.f32 0.0, %v3796
        %v3925 = vsub.f32 0.0, %v3797
        %v3926 = vsub.f32 0.0, %v3798
        %v3927 = vsub.f32 0.0, %v3799
        %v3928 = vsub.f32 0.0, %v3800
        %v3929 = vsub.f32 0.0, %v3801
        %v3930 = vsub.f32 0.0, %v3802
        %v3931 = vsub.f32 0.0, %v3803
        %v3932 = vsub.f32 0.0, %v3804
        %v3933 = vsub.f32 0.0, %v3805
        %v3934 = vsub.f32 0.0, %v3806
        %v3935 = vsub.f32 0.0, %v3807
        %v3936 = vsub.f32 0.0, %v3808
        %v3937 = vsub.f32 0.0, %v3809
        %v3938 = vsub.f32 0.0, %v3810
        %v3939 = vsub.f32 0.0, %v3811
        %v3940 = vsub.f32 0.0, %v3812
        %v3941 = vsub.f32 0.0, %v3813
        %v3942 = vsub.f32 0.0, %v3814
        %v3943 = vsub.f32 0.0, %v3815
        %v3944 = vsub.f32 0.0, %v3816
        %v3945 = vsub.f32 0.0, %v3817
        %v3946 = vsub.f32 0.0, %v3818
        %v3947 = vsub.f32 0.0, %v3819
        %v3948 = vsub.f32 0.0, %v3820
        %v3949 = vsub.f32 0.0, %v3821
        %v3950 = vsub.f32 0.0, %v3822
        %v3951 = vsub.f32 0.0, %v3823
        %v3952 = vsub.f32 0.0, %v3824
        %v3953 = vsub.f32 0.0, %v3825
        %v3954 = vsub.f32 0.0, %v3826
        %v3955 = vsub.f32 0.0, %v3827
        %v3956 = vsub.f32 0.0, %v3828
        %v3957 = vsub.f32 0.0, %v3829
        %v3958 = vsub.f32 0.0, %v3830
        %v3959 = vsub.f32 0.0, %v3831
        %v3960 = vsub.f32 0.0, %v3832
        %v3961 = vsub.f32 0.0, %v3833
        %v3962 = vsub.f32 0.0, %v3834
        %v3963 = vsub.f32 0.0, %v3835
        %v3964 = vsub.f32 0.0, %v3836
        %v3965 = vsub.f32 0.0, %v3837
        %v3966 = vsub.f32 0.0, %v3838
        %v3967 = vsub.f32 0.0, %v3839
        %v3968 = vsub.f32 0.0, %v3840
        %v3969 = vsub.f32 0.0, %v3841
        %v3970 = vsub.f32 0.0, %v3842
        %v3971 = vmul.f32 %v3843, 1.442695
        %v3972 = vpow.pop %v3971
        %v3973 = vmul.f32 %v3844, 1.442695
        %v3974 = vpow.pop %v3973
        %v3975 = vmul.f32 %v3845, 1.442695
        %v3976 = vpow.pop %v3975
        %v3977 = vmul.f32 %v3846, 1.442695
        %v3978 = vpow.pop %v3977
        %v3979 = vmul.f32 %v3847, 1.442695
        %v3980 = vpow.pop %v3979
        %v3981 = vmul.f32 %v3848, 1.442695
        %v3982 = vpow.pop %v3981
        %v3983 = vmul.f32 %v3849, 1.442695
        %v3984 = vpow.pop %v3983
        %v3985 = vmul.f32 %v3850, 1.442695
        %v3986 = vpow.pop %v3985
        %v3987 = vmul.f32 %v3851, 1.442695
        %v3988 = vpow.pop %v3987
        %v3989 = vmul.f32 %v3852, 1.442695
        %v3990 = vpow.pop %v3989
        %v3991 = vmul.f32 %v3853, 1.442695
        %v3992 = vpow.pop %v3991
        %v3993 = vmul.f32 %v3854, 1.442695
        %v3994 = vpow.pop %v3993
        %v3995 = vmul.f32 %v3855, 1.442695
        %v3996 = vpow.pop %v3995
        %v3997 = vmul.f32 %v3856, 1.442695
        %v3998 = vpow.pop %v3997
        %v3999 = vmul.f32 %v3857, 1.442695
        %v4000 = vpow.pop %v3999
        %v4001 = vmul.f32 %v3858, 1.442695
        %v4002 = vpow.pop %v4001
        %v4003 = vmul.f32 %v3859, 1.442695
        %v4004 = vpow.pop %v4003
        %v4005 = vmul.f32 %v3860, 1.442695
        %v4006 = vpow.pop %v4005
        %v4007 = vmul.f32 %v3861, 1.442695
        %v4008 = vpow.pop %v4007
        %v4009 = vmul.f32 %v3862, 1.442695
        %v4010 = vpow.pop %v4009
        %v4011 = vmul.f32 %v3863, 1.442695
        %v4012 = vpow.pop %v4011
        %v4013 = vmul.f32 %v3864, 1.442695
        %v4014 = vpow.pop %v4013
        %v4015 = vmul.f32 %v3865, 1.442695
        %v4016 = vpow.pop %v4015
        %v4017 = vmul.f32 %v3866, 1.442695
        %v4018 = vpow.pop %v4017
        %v4019 = vmul.f32 %v3867, 1.442695
        %v4020 = vpow.pop %v4019
        %v4021 = vmul.f32 %v3868, 1.442695
        %v4022 = vpow.pop %v4021
        %v4023 = vmul.f32 %v3869, 1.442695
        %v4024 = vpow.pop %v4023
        %v4025 = vmul.f32 %v3870, 1.442695
        %v4026 = vpow.pop %v4025
        %v4027 = vmul.f32 %v3871, 1.442695
        %v4028 = vpow.pop %v4027
        %v4029 = vmul.f32 %v3872, 1.442695
        %v4030 = vpow.pop %v4029
        %v4031 = vmul.f32 %v3873, 1.442695
        %v4032 = vpow.pop %v4031
        %v4033 = vmul.f32 %v3874, 1.442695
        %v4034 = vpow.pop %v4033
        %v4035 = vmul.f32 %v3875, 1.442695
        %v4036 = vpow.pop %v4035
        %v4037 = vmul.f32 %v3876, 1.442695
        %v4038 = vpow.pop %v4037
        %v4039 = vmul.f32 %v3877, 1.442695
        %v4040 = vpow.pop %v4039
        %v4041 = vmul.f32 %v3878, 1.442695
        %v4042 = vpow.pop %v4041
        %v4043 = vmul.f32 %v3879, 1.442695
        %v4044 = vpow.pop %v4043
        %v4045 = vmul.f32 %v3880, 1.442695
        %v4046 = vpow.pop %v4045
        %v4047 = vmul.f32 %v3881, 1.442695
        %v4048 = vpow.pop %v4047
        %v4049 = vmul.f32 %v3882, 1.442695
        %v4050 = vpow.pop %v4049
        %v4051 = vmul.f32 %v3883, 1.442695
        %v4052 = vpow.pop %v4051
        %v4053 = vmul.f32 %v3884, 1.442695
        %v4054 = vpow.pop %v4053
        %v4055 = vmul.f32 %v3885, 1.442695
        %v4056 = vpow.pop %v4055
        %v4057 = vmul.f32 %v3886, 1.442695
        %v4058 = vpow.pop %v4057
        %v4059 = vmul.f32 %v3887, 1.442695
        %v4060 = vpow.pop %v4059
        %v4061 = vmul.f32 %v3888, 1.442695
        %v4062 = vpow.pop %v4061
        %v4063 = vmul.f32 %v3889, 1.442695
        %v4064 = vpow.pop %v4063
        %v4065 = vmul.f32 %v3890, 1.442695
        %v4066 = vpow.pop %v4065
        %v4067 = vmul.f32 %v3891, 1.442695
        %v4068 = vpow.pop %v4067
        %v4069 = vmul.f32 %v3892, 1.442695
        %v4070 = vpow.pop %v4069
        %v4071 = vmul.f32 %v3893, 1.442695
        %v4072 = vpow.pop %v4071
        %v4073 = vmul.f32 %v3894, 1.442695
        %v4074 = vpow.pop %v4073
        %v4075 = vmul.f32 %v3895, 1.442695
        %v4076 = vpow.pop %v4075
        %v4077 = vmul.f32 %v3896, 1.442695
        %v4078 = vpow.pop %v4077
        %v4079 = vmul.f32 %v3897, 1.442695
        %v4080 = vpow.pop %v4079
        %v4081 = vmul.f32 %v3898, 1.442695
        %v4082 = vpow.pop %v4081
        %v4083 = vmul.f32 %v3899, 1.442695
        %v4084 = vpow.pop %v4083
        %v4085 = vmul.f32 %v3900, 1.442695
        %v4086 = vpow.pop %v4085
        %v4087 = vmul.f32 %v3901, 1.442695
        %v4088 = vpow.pop %v4087
        %v4089 = vmul.f32 %v3902, 1.442695
        %v4090 = vpow.pop %v4089
        %v4091 = vmul.f32 %v3903, 1.442695
        %v4092 = vpow.pop %v4091
        %v4093 = vmul.f32 %v3904, 1.442695
        %v4094 = vpow.pop %v4093
        %v4095 = vmul.f32 %v3905, 1.442695
        %v4096 = vpow.pop %v4095
        %v4097 = vmul.f32 %v3906, 1.442695
        %v4098 = vpow.pop %v4097
        %v4099 = vmul.f32 %v3907, 1.442695
        %v4100 = vpow.pop %v4099
        %v4101 = vmul.f32 %v3908, 1.442695
        %v4102 = vpow.pop %v4101
        %v4103 = vmul.f32 %v3909, 1.442695
        %v4104 = vpow.pop %v4103
        %v4105 = vmul.f32 %v3910, 1.442695
        %v4106 = vpow.pop %v4105
        %v4107 = vmul.f32 %v3911, 1.442695
        %v4108 = vpow.pop %v4107
        %v4109 = vmul.f32 %v3912, 1.442695
        %v4110 = vpow.pop %v4109
        %v4111 = vmul.f32 %v3913, 1.442695
        %v4112 = vpow.pop %v4111
        %v4113 = vmul.f32 %v3914, 1.442695
        %v4114 = vpow.pop %v4113
        %v4115 = vmul.f32 %v3915, 1.442695
        %v4116 = vpow.pop %v4115
        %v4117 = vmul.f32 %v3916, 1.442695
        %v4118 = vpow.pop %v4117
        %v4119 = vmul.f32 %v3917, 1.442695
        %v4120 = vpow.pop %v4119
        %v4121 = vmul.f32 %v3918, 1.442695
        %v4122 = vpow.pop %v4121
        %v4123 = vmul.f32 %v3919, 1.442695
        %v4124 = vpow.pop %v4123
        %v4125 = vmul.f32 %v3920, 1.442695
        %v4126 = vpow.pop %v4125
        %v4127 = vmul.f32 %v3921, 1.442695
        %v4128 = vpow.pop %v4127
        %v4129 = vmul.f32 %v3922, 1.442695
        %v4130 = vpow.pop %v4129
        %v4131 = vmul.f32 %v3923, 1.442695
        %v4132 = vpow.pop %v4131
        %v4133 = vmul.f32 %v3924, 1.442695
        %v4134 = vpow.pop %v4133
        %v4135 = vmul.f32 %v3925, 1.442695
        %v4136 = vpow.pop %v4135
        %v4137 = vmul.f32 %v3926, 1.442695
        %v4138 = vpow.pop %v4137
        %v4139 = vmul.f32 %v3927, 1.442695
        %v4140 = vpow.pop %v4139
        %v4141 = vmul.f32 %v3928, 1.442695
        %v4142 = vpow.pop %v4141
        %v4143 = vmul.f32 %v3929, 1.442695
        %v4144 = vpow.pop %v4143
        %v4145 = vmul.f32 %v3930, 1.442695
        %v4146 = vpow.pop %v4145
        %v4147 = vmul.f32 %v3931, 1.442695
        %v4148 = vpow.pop %v4147
        %v4149 = vmul.f32 %v3932, 1.442695
        %v4150 = vpow.pop %v4149
        %v4151 = vmul.f32 %v3933, 1.442695
        %v4152 = vpow.pop %v4151
        %v4153 = vmul.f32 %v3934, 1.442695
        %v4154 = vpow.pop %v4153
        %v4155 = vmul.f32 %v3935, 1.442695
        %v4156 = vpow.pop %v4155
        %v4157 = vmul.f32 %v3936, 1.442695
        %v4158 = vpow.pop %v4157
        %v4159 = vmul.f32 %v3937, 1.442695
        %v4160 = vpow.pop %v4159
        %v4161 = vmul.f32 %v3938, 1.442695
        %v4162 = vpow.pop %v4161
        %v4163 = vmul.f32 %v3939, 1.442695
        %v4164 = vpow.pop %v4163
        %v4165 = vmul.f32 %v3940, 1.442695
        %v4166 = vpow.pop %v4165
        %v4167 = vmul.f32 %v3941, 1.442695
        %v4168 = vpow.pop %v4167
        %v4169 = vmul.f32 %v3942, 1.442695
        %v4170 = vpow.pop %v4169
        %v4171 = vmul.f32 %v3943, 1.442695
        %v4172 = vpow.pop %v4171
        %v4173 = vmul.f32 %v3944, 1.442695
        %v4174 = vpow.pop %v4173
        %v4175 = vmul.f32 %v3945, 1.442695
        %v4176 = vpow.pop %v4175
        %v4177 = vmul.f32 %v3946, 1.442695
        %v4178 = vpow.pop %v4177
        %v4179 = vmul.f32 %v3947, 1.442695
        %v4180 = vpow.pop %v4179
        %v4181 = vmul.f32 %v3948, 1.442695
        %v4182 = vpow.pop %v4181
        %v4183 = vmul.f32 %v3949, 1.442695
        %v4184 = vpow.pop %v4183
        %v4185 = vmul.f32 %v3950, 1.442695
        %v4186 = vpow.pop %v4185
        %v4187 = vmul.f32 %v3951, 1.442695
        %v4188 = vpow.pop %v4187
        %v4189 = vmul.f32 %v3952, 1.442695
        %v4190 = vpow.pop %v4189
        %v4191 = vmul.f32 %v3953, 1.442695
        %v4192 = vpow.pop %v4191
        %v4193 = vmul.f32 %v3954, 1.442695
        %v4194 = vpow.pop %v4193
        %v4195 = vmul.f32 %v3955, 1.442695
        %v4196 = vpow.pop %v4195
        %v4197 = vmul.f32 %v3956, 1.442695
        %v4198 = vpow.pop %v4197
        %v4199 = vmul.f32 %v3957, 1.442695
        %v4200 = vpow.pop %v4199
        %v4201 = vmul.f32 %v3958, 1.442695
        %v4202 = vpow.pop %v4201
        %v4203 = vmul.f32 %v3959, 1.442695
        %v4204 = vpow.pop %v4203
        %v4205 = vmul.f32 %v3960, 1.442695
        %v4206 = vpow.pop %v4205
        %v4207 = vmul.f32 %v3961, 1.442695
        %v4208 = vpow.pop %v4207
        %v4209 = vmul.f32 %v3962, 1.442695
        %v4210 = vpow.pop %v4209
        %v4211 = vmul.f32 %v3963, 1.442695
        %v4212 = vpow.pop %v4211
        %v4213 = vmul.f32 %v3964, 1.442695
        %v4214 = vpow.pop %v4213
        %v4215 = vmul.f32 %v3965, 1.442695
        %v4216 = vpow.pop %v4215
        %v4217 = vmul.f32 %v3966, 1.442695
        %v4218 = vpow.pop %v4217
        %v4219 = vmul.f32 %v3967, 1.442695
        %v4220 = vpow.pop %v4219
        %v4221 = vmul.f32 %v3968, 1.442695
        %v4222 = vpow.pop %v4221
        %v4223 = vmul.f32 %v3969, 1.442695
        %v4224 = vpow.pop %v4223
        %v4225 = vmul.f32 %v3970, 1.442695
        %v4226 = vpow.pop %v4225
        %v4227 = vadd.f32 %v3972, 1.0
        %v4228 = vadd.f32 %v3974, 1.0
        %v4229 = vadd.f32 %v3976, 1.0
        %v4230 = vadd.f32 %v3978, 1.0
        %v4231 = vadd.f32 %v3980, 1.0
        %v4232 = vadd.f32 %v3982, 1.0
        %v4233 = vadd.f32 %v3984, 1.0
        %v4234 = vadd.f32 %v3986, 1.0
        %v4235 = vadd.f32 %v3988, 1.0
        %v4236 = vadd.f32 %v3990, 1.0
        %v4237 = vadd.f32 %v3992, 1.0
        %v4238 = vadd.f32 %v3994, 1.0
        %v4239 = vadd.f32 %v3996, 1.0
        %v4240 = vadd.f32 %v3998, 1.0
        %v4241 = vadd.f32 %v4000, 1.0
        %v4242 = vadd.f32 %v4002, 1.0
        %v4243 = vadd.f32 %v4004, 1.0
        %v4244 = vadd.f32 %v4006, 1.0
        %v4245 = vadd.f32 %v4008, 1.0
        %v4246 = vadd.f32 %v4010, 1.0
        %v4247 = vadd.f32 %v4012, 1.0
        %v4248 = vadd.f32 %v4014, 1.0
        %v4249 = vadd.f32 %v4016, 1.0
        %v4250 = vadd.f32 %v4018, 1.0
        %v4251 = vadd.f32 %v4020, 1.0
        %v4252 = vadd.f32 %v4022, 1.0
        %v4253 = vadd.f32 %v4024, 1.0
        %v4254 = vadd.f32 %v4026, 1.0
        %v4255 = vadd.f32 %v4028, 1.0
        %v4256 = vadd.f32 %v4030, 1.0
        %v4257 = vadd.f32 %v4032, 1.0
        %v4258 = vadd.f32 %v4034, 1.0
        %v4259 = vadd.f32 %v4036, 1.0
        %v4260 = vadd.f32 %v4038, 1.0
        %v4261 = vadd.f32 %v4040, 1.0
        %v4262 = vadd.f32 %v4042, 1.0
        %v4263 = vadd.f32 %v4044, 1.0
        %v4264 = vadd.f32 %v4046, 1.0
        %v4265 = vadd.f32 %v4048, 1.0
        %v4266 = vadd.f32 %v4050, 1.0
        %v4267 = vadd.f32 %v4052, 1.0
        %v4268 = vadd.f32 %v4054, 1.0
        %v4269 = vadd.f32 %v4056, 1.0
        %v4270 = vadd.f32 %v4058, 1.0
        %v4271 = vadd.f32 %v4060, 1.0
        %v4272 = vadd.f32 %v4062, 1.0
        %v4273 = vadd.f32 %v4064, 1.0
        %v4274 = vadd.f32 %v4066, 1.0
        %v4275 = vadd.f32 %v4068, 1.0
        %v4276 = vadd.f32 %v4070, 1.0
        %v4277 = vadd.f32 %v4072, 1.0
        %v4278 = vadd.f32 %v4074, 1.0
        %v4279 = vadd.f32 %v4076, 1.0
        %v4280 = vadd.f32 %v4078, 1.0
        %v4281 = vadd.f32 %v4080, 1.0
        %v4282 = vadd.f32 %v4082, 1.0
        %v4283 = vadd.f32 %v4084, 1.0
        %v4284 = vadd.f32 %v4086, 1.0
        %v4285 = vadd.f32 %v4088, 1.0
        %v4286 = vadd.f32 %v4090, 1.0
        %v4287 = vadd.f32 %v4092, 1.0
        %v4288 = vadd.f32 %v4094, 1.0
        %v4289 = vadd.f32 %v4096, 1.0
        %v4290 = vadd.f32 %v4098, 1.0
        %v4291 = vadd.f32 %v4100, 1.0
        %v4292 = vadd.f32 %v4102, 1.0
        %v4293 = vadd.f32 %v4104, 1.0
        %v4294 = vadd.f32 %v4106, 1.0
        %v4295 = vadd.f32 %v4108, 1.0
        %v4296 = vadd.f32 %v4110, 1.0
        %v4297 = vadd.f32 %v4112, 1.0
        %v4298 = vadd.f32 %v4114, 1.0
        %v4299 = vadd.f32 %v4116, 1.0
        %v4300 = vadd.f32 %v4118, 1.0
        %v4301 = vadd.f32 %v4120, 1.0
        %v4302 = vadd.f32 %v4122, 1.0
        %v4303 = vadd.f32 %v4124, 1.0
        %v4304 = vadd.f32 %v4126, 1.0
        %v4305 = vadd.f32 %v4128, 1.0
        %v4306 = vadd.f32 %v4130, 1.0
        %v4307 = vadd.f32 %v4132, 1.0
        %v4308 = vadd.f32 %v4134, 1.0
        %v4309 = vadd.f32 %v4136, 1.0
        %v4310 = vadd.f32 %v4138, 1.0
        %v4311 = vadd.f32 %v4140, 1.0
        %v4312 = vadd.f32 %v4142, 1.0
        %v4313 = vadd.f32 %v4144, 1.0
        %v4314 = vadd.f32 %v4146, 1.0
        %v4315 = vadd.f32 %v4148, 1.0
        %v4316 = vadd.f32 %v4150, 1.0
        %v4317 = vadd.f32 %v4152, 1.0
        %v4318 = vadd.f32 %v4154, 1.0
        %v4319 = vadd.f32 %v4156, 1.0
        %v4320 = vadd.f32 %v4158, 1.0
        %v4321 = vadd.f32 %v4160, 1.0
        %v4322 = vadd.f32 %v4162, 1.0
        %v4323 = vadd.f32 %v4164, 1.0
        %v4324 = vadd.f32 %v4166, 1.0
        %v4325 = vadd.f32 %v4168, 1.0
        %v4326 = vadd.f32 %v4170, 1.0
        %v4327 = vadd.f32 %v4172, 1.0
        %v4328 = vadd.f32 %v4174, 1.0
        %v4329 = vadd.f32 %v4176, 1.0
        %v4330 = vadd.f32 %v4178, 1.0
        %v4331 = vadd.f32 %v4180, 1.0
        %v4332 = vadd.f32 %v4182, 1.0
        %v4333 = vadd.f32 %v4184, 1.0
        %v4334 = vadd.f32 %v4186, 1.0
        %v4335 = vadd.f32 %v4188, 1.0
        %v4336 = vadd.f32 %v4190, 1.0
        %v4337 = vadd.f32 %v4192, 1.0
        %v4338 = vadd.f32 %v4194, 1.0
        %v4339 = vadd.f32 %v4196, 1.0
        %v4340 = vadd.f32 %v4198, 1.0
        %v4341 = vadd.f32 %v4200, 1.0
        %v4342 = vadd.f32 %v4202, 1.0
        %v4343 = vadd.f32 %v4204, 1.0
        %v4344 = vadd.f32 %v4206, 1.0
        %v4345 = vadd.f32 %v4208, 1.0
        %v4346 = vadd.f32 %v4210, 1.0
        %v4347 = vadd.f32 %v4212, 1.0
        %v4348 = vadd.f32 %v4214, 1.0
        %v4349 = vadd.f32 %v4216, 1.0
        %v4350 = vadd.f32 %v4218, 1.0
        %v4351 = vadd.f32 %v4220, 1.0
        %v4352 = vadd.f32 %v4222, 1.0
        %v4353 = vadd.f32 %v4224, 1.0
        %v4354 = vadd.f32 %v4226, 1.0
        %v4355 = vrcp.pop %v4227
        %v4356 = vrcp.pop %v4228
        %v4357 = vrcp.pop %v4229
        %v4358 = vrcp.pop %v4230
        %v4359 = vrcp.pop %v4231
        %v4360 = vrcp.pop %v4232
        %v4361 = vrcp.pop %v4233
        %v4362 = vrcp.pop %v4234
        %v4363 = vrcp.pop %v4235
        %v4364 = vrcp.pop %v4236
        %v4365 = vrcp.pop %v4237
        %v4366 = vrcp.pop %v4238
        %v4367 = vrcp.pop %v4239
        %v4368 = vrcp.pop %v4240
        %v4369 = vrcp.pop %v4241
        %v4370 = vrcp.pop %v4242
        %v4371 = vrcp.pop %v4243
        %v4372 = vrcp.pop %v4244
        %v4373 = vrcp.pop %v4245
        %v4374 = vrcp.pop %v4246
        %v4375 = vrcp.pop %v4247
        %v4376 = vrcp.pop %v4248
        %v4377 = vrcp.pop %v4249
        %v4378 = vrcp.pop %v4250
        %v4379 = vrcp.pop %v4251
        %v4380 = vrcp.pop %v4252
        %v4381 = vrcp.pop %v4253
        %v4382 = vrcp.pop %v4254
        %v4383 = vrcp.pop %v4255
        %v4384 = vrcp.pop %v4256
        %v4385 = vrcp.pop %v4257
        %v4386 = vrcp.pop %v4258
        %v4387 = vrcp.pop %v4259
        %v4388 = vrcp.pop %v4260
        %v4389 = vrcp.pop %v4261
        %v4390 = vrcp.pop %v4262
        %v4391 = vrcp.pop %v4263
        %v4392 = vrcp.pop %v4264
        %v4393 = vrcp.pop %v4265
        %v4394 = vrcp.pop %v4266
        %v4395 = vrcp.pop %v4267
        %v4396 = vrcp.pop %v4268
        %v4397 = vrcp.pop %v4269
        %v4398 = vrcp.pop %v4270
        %v4399 = vrcp.pop %v4271
        %v4400 = vrcp.pop %v4272
        %v4401 = vrcp.pop %v4273
        %v4402 = vrcp.pop %v4274
        %v4403 = vrcp.pop %v4275
        %v4404 = vrcp.pop %v4276
        %v4405 = vrcp.pop %v4277
        %v4406 = vrcp.pop %v4278
        %v4407 = vrcp.pop %v4279
        %v4408 = vrcp.pop %v4280
        %v4409 = vrcp.pop %v4281
        %v4410 = vrcp.pop %v4282
        %v4411 = vrcp.pop %v4283
        %v4412 = vrcp.pop %v4284
        %v4413 = vrcp.pop %v4285
        %v4414 = vrcp.pop %v4286
        %v4415 = vrcp.pop %v4287
        %v4416 = vrcp.pop %v4288
        %v4417 = vrcp.pop %v4289
        %v4418 = vrcp.pop %v4290
        %v4419 = vrcp.pop %v4291
        %v4420 = vrcp.pop %v4292
        %v4421 = vrcp.pop %v4293
        %v4422 = vrcp.pop %v4294
        %v4423 = vrcp.pop %v4295
        %v4424 = vrcp.pop %v4296
        %v4425 = vrcp.pop %v4297
        %v4426 = vrcp.pop %v4298
        %v4427 = vrcp.pop %v4299
        %v4428 = vrcp.pop %v4300
        %v4429 = vrcp.pop %v4301
        %v4430 = vrcp.pop %v4302
        %v4431 = vrcp.pop %v4303
        %v4432 = vrcp.pop %v4304
        %v4433 = vrcp.pop %v4305
        %v4434 = vrcp.pop %v4306
        %v4435 = vrcp.pop %v4307
        %v4436 = vrcp.pop %v4308
        %v4437 = vrcp.pop %v4309
        %v4438 = vrcp.pop %v4310
        %v4439 = vrcp.pop %v4311
        %v4440 = vrcp.pop %v4312
        %v4441 = vrcp.pop %v4313
        %v4442 = vrcp.pop %v4314
        %v4443 = vrcp.pop %v4315
        %v4444 = vrcp.pop %v4316
        %v4445 = vrcp.pop %v4317
        %v4446 = vrcp.pop %v4318
        %v4447 = vrcp.pop %v4319
        %v4448 = vrcp.pop %v4320
        %v4449 = vrcp.pop %v4321
        %v4450 = vrcp.pop %v4322
        %v4451 = vrcp.pop %v4323
        %v4452 = vrcp.pop %v4324
        %v4453 = vrcp.pop %v4325
        %v4454 = vrcp.pop %v4326
        %v4455 = vrcp.pop %v4327
        %v4456 = vrcp.pop %v4328
        %v4457 = vrcp.pop %v4329
        %v4458 = vrcp.pop %v4330
        %v4459 = vrcp.pop %v4331
        %v4460 = vrcp.pop %v4332
        %v4461 = vrcp.pop %v4333
        %v4462 = vrcp.pop %v4334
        %v4463 = vrcp.pop %v4335
        %v4464 = vrcp.pop %v4336
        %v4465 = vrcp.pop %v4337
        %v4466 = vrcp.pop %v4338
        %v4467 = vrcp.pop %v4339
        %v4468 = vrcp.pop %v4340
        %v4469 = vrcp.pop %v4341
        %v4470 = vrcp.pop %v4342
        %v4471 = vrcp.pop %v4343
        %v4472 = vrcp.pop %v4344
        %v4473 = vrcp.pop %v4345
        %v4474 = vrcp.pop %v4346
        %v4475 = vrcp.pop %v4347
        %v4476 = vrcp.pop %v4348
        %v4477 = vrcp.pop %v4349
        %v4478 = vrcp.pop %v4350
        %v4479 = vrcp.pop %v4351
        %v4480 = vrcp.pop %v4352
        %v4481 = vrcp.pop %v4353
        %v4482 = vrcp.pop %v4354
        %v4483 = vmul.f32 %v3715, %v4355
        %v4484 = vmul.f32 %v3716, %v4356
        %v4485 = vmul.f32 %v3717, %v4357
        %v4486 = vmul.f32 %v3718, %v4358
        %v4487 = vmul.f32 %v3719, %v4359
        %v4488 = vmul.f32 %v3720, %v4360
        %v4489 = vmul.f32 %v3721, %v4361
        %v4490 = vmul.f32 %v3722, %v4362
        %v4491 = vmul.f32 %v3723, %v4363
        %v4492 = vmul.f32 %v3724, %v4364
        %v4493 = vmul.f32 %v3725, %v4365
        %v4494 = vmul.f32 %v3726, %v4366
        %v4495 = vmul.f32 %v3727, %v4367
        %v4496 = vmul.f32 %v3728, %v4368
        %v4497 = vmul.f32 %v3729, %v4369
        %v4498 = vmul.f32 %v3730, %v4370
        %v4499 = vmul.f32 %v3731, %v4371
        %v4500 = vmul.f32 %v3732, %v4372
        %v4501 = vmul.f32 %v3733, %v4373
        %v4502 = vmul.f32 %v3734, %v4374
        %v4503 = vmul.f32 %v3735, %v4375
        %v4504 = vmul.f32 %v3736, %v4376
        %v4505 = vmul.f32 %v3737, %v4377
        %v4506 = vmul.f32 %v3738, %v4378
        %v4507 = vmul.f32 %v3739, %v4379
        %v4508 = vmul.f32 %v3740, %v4380
        %v4509 = vmul.f32 %v3741, %v4381
        %v4510 = vmul.f32 %v3742, %v4382
        %v4511 = vmul.f32 %v3743, %v4383
        %v4512 = vmul.f32 %v3744, %v4384
        %v4513 = vmul.f32 %v3745, %v4385
        %v4514 = vmul.f32 %v3746, %v4386
        %v4515 = vmul.f32 %v3747, %v4387
        %v4516 = vmul.f32 %v3748, %v4388
        %v4517 = vmul.f32 %v3749, %v4389
        %v4518 = vmul.f32 %v3750, %v4390
        %v4519 = vmul.f32 %v3751, %v4391
        %v4520 = vmul.f32 %v3752, %v4392
        %v4521 = vmul.f32 %v3753, %v4393
        %v4522 = vmul.f32 %v3754, %v4394
        %v4523 = vmul.f32 %v3755, %v4395
        %v4524 = vmul.f32 %v3756, %v4396
        %v4525 = vmul.f32 %v3757, %v4397
        %v4526 = vmul.f32 %v3758, %v4398
        %v4527 = vmul.f32 %v3759, %v4399
        %v4528 = vmul.f32 %v3760, %v4400
        %v4529 = vmul.f32 %v3761, %v4401
        %v4530 = vmul.f32 %v3762, %v4402
        %v4531 = vmul.f32 %v3763, %v4403
        %v4532 = vmul.f32 %v3764, %v4404
        %v4533 = vmul.f32 %v3765, %v4405
        %v4534 = vmul.f32 %v3766, %v4406
        %v4535 = vmul.f32 %v3767, %v4407
        %v4536 = vmul.f32 %v3768, %v4408
        %v4537 = vmul.f32 %v3769, %v4409
        %v4538 = vmul.f32 %v3770, %v4410
        %v4539 = vmul.f32 %v3771, %v4411
        %v4540 = vmul.f32 %v3772, %v4412
        %v4541 = vmul.f32 %v3773, %v4413
        %v4542 = vmul.f32 %v3774, %v4414
        %v4543 = vmul.f32 %v3775, %v4415
        %v4544 = vmul.f32 %v3776, %v4416
        %v4545 = vmul.f32 %v3777, %v4417
        %v4546 = vmul.f32 %v3778, %v4418
        %v4547 = vmul.f32 %v3779, %v4419
        %v4548 = vmul.f32 %v3780, %v4420
        %v4549 = vmul.f32 %v3781, %v4421
        %v4550 = vmul.f32 %v3782, %v4422
        %v4551 = vmul.f32 %v3783, %v4423
        %v4552 = vmul.f32 %v3784, %v4424
        %v4553 = vmul.f32 %v3785, %v4425
        %v4554 = vmul.f32 %v3786, %v4426
        %v4555 = vmul.f32 %v3787, %v4427
        %v4556 = vmul.f32 %v3788, %v4428
        %v4557 = vmul.f32 %v3789, %v4429
        %v4558 = vmul.f32 %v3790, %v4430
        %v4559 = vmul.f32 %v3791, %v4431
        %v4560 = vmul.f32 %v3792, %v4432
        %v4561 = vmul.f32 %v3793, %v4433
        %v4562 = vmul.f32 %v3794, %v4434
        %v4563 = vmul.f32 %v3795, %v4435
        %v4564 = vmul.f32 %v3796, %v4436
        %v4565 = vmul.f32 %v3797, %v4437
        %v4566 = vmul.f32 %v3798, %v4438
        %v4567 = vmul.f32 %v3799, %v4439
        %v4568 = vmul.f32 %v3800, %v4440
        %v4569 = vmul.f32 %v3801, %v4441
        %v4570 = vmul.f32 %v3802, %v4442
        %v4571 = vmul.f32 %v3803, %v4443
        %v4572 = vmul.f32 %v3804, %v4444
        %v4573 = vmul.f32 %v3805, %v4445
        %v4574 = vmul.f32 %v3806, %v4446
        %v4575 = vmul.f32 %v3807, %v4447
        %v4576 = vmul.f32 %v3808, %v4448
        %v4577 = vmul.f32 %v3809, %v4449
        %v4578 = vmul.f32 %v3810, %v4450
        %v4579 = vmul.f32 %v3811, %v4451
        %v4580 = vmul.f32 %v3812, %v4452
        %v4581 = vmul.f32 %v3813, %v4453
        %v4582 = vmul.f32 %v3814, %v4454
        %v4583 = vmul.f32 %v3815, %v4455
        %v4584 = vmul.f32 %v3816, %v4456
        %v4585 = vmul.f32 %v3817, %v4457
        %v4586 = vmul.f32 %v3818, %v4458
        %v4587 = vmul.f32 %v3819, %v4459
        %v4588 = vmul.f32 %v3820, %v4460
        %v4589 = vmul.f32 %v3821, %v4461
        %v4590 = vmul.f32 %v3822, %v4462
        %v4591 = vmul.f32 %v3823, %v4463
        %v4592 = vmul.f32 %v3824, %v4464
        %v4593 = vmul.f32 %v3825, %v4465
        %v4594 = vmul.f32 %v3826, %v4466
        %v4595 = vmul.f32 %v3827, %v4467
        %v4596 = vmul.f32 %v3828, %v4468
        %v4597 = vmul.f32 %v3829, %v4469
        %v4598 = vmul.f32 %v3830, %v4470
        %v4599 = vmul.f32 %v3831, %v4471
        %v4600 = vmul.f32 %v3832, %v4472
        %v4601 = vmul.f32 %v3833, %v4473
        %v4602 = vmul.f32 %v3834, %v4474
        %v4603 = vmul.f32 %v3835, %v4475
        %v4604 = vmul.f32 %v3836, %v4476
        %v4605 = vmul.f32 %v3837, %v4477
        %v4606 = vmul.f32 %v3838, %v4478
        %v4607 = vmul.f32 %v3839, %v4479
        %v4608 = vmul.f32 %v3840, %v4480
        %v4609 = vmul.f32 %v3841, %v4481
        %v4610 = vmul.f32 %v3842, %v4482
        %v4611 = vpack.c.bf16 %v4484, %v4483
        %v4612 = vpack.c.bf16 %v4486, %v4485
        %v4613 = vpack.c.bf16 %v4488, %v4487
        %v4614 = vpack.c.bf16 %v4490, %v4489
        %v4615 = vpack.c.bf16 %v4492, %v4491
        %v4616 = vpack.c.bf16 %v4494, %v4493
        %v4617 = vpack.c.bf16 %v4496, %v4495
        %v4618 = vpack.c.bf16 %v4498, %v4497
        %v4619 = vpack.c.bf16 %v4500, %v4499
        %v4620 = vpack.c.bf16 %v4502, %v4501
        %v4621 = vpack.c.bf16 %v4504, %v4503
        %v4622 = vpack.c.bf16 %v4506, %v4505
        %v4623 = vpack.c.bf16 %v4508, %v4507
        %v4624 = vpack.c.bf16 %v4510, %v4509
        %v4625 = vpack.c.bf16 %v4512, %v4511
        %v4626 = vpack.c.bf16 %v4514, %v4513
        %v4627 = vpack.c.bf16 %v4516, %v4515
        %v4628 = vpack.c.bf16 %v4518, %v4517
        %v4629 = vpack.c.bf16 %v4520, %v4519
        %v4630 = vpack.c.bf16 %v4522, %v4521
        %v4631 = vpack.c.bf16 %v4524, %v4523
        %v4632 = vpack.c.bf16 %v4526, %v4525
        %v4633 = vpack.c.bf16 %v4528, %v4527
        %v4634 = vpack.c.bf16 %v4530, %v4529
        %v4635 = vpack.c.bf16 %v4532, %v4531
        %v4636 = vpack.c.bf16 %v4534, %v4533
        %v4637 = vpack.c.bf16 %v4536, %v4535
        %v4638 = vpack.c.bf16 %v4538, %v4537
        %v4639 = vpack.c.bf16 %v4540, %v4539
        %v4640 = vpack.c.bf16 %v4542, %v4541
        %v4641 = vpack.c.bf16 %v4544, %v4543
        %v4642 = vpack.c.bf16 %v4546, %v4545
        %v4643 = vpack.c.bf16 %v4548, %v4547
        %v4644 = vpack.c.bf16 %v4550, %v4549
        %v4645 = vpack.c.bf16 %v4552, %v4551
        %v4646 = vpack.c.bf16 %v4554, %v4553
        %v4647 = vpack.c.bf16 %v4556, %v4555
        %v4648 = vpack.c.bf16 %v4558, %v4557
        %v4649 = vpack.c.bf16 %v4560, %v4559
        %v4650 = vpack.c.bf16 %v4562, %v4561
        %v4651 = vpack.c.bf16 %v4564, %v4563
        %v4652 = vpack.c.bf16 %v4566, %v4565
        %v4653 = vpack.c.bf16 %v4568, %v4567
        %v4654 = vpack.c.bf16 %v4570, %v4569
        %v4655 = vpack.c.bf16 %v4572, %v4571
        %v4656 = vpack.c.bf16 %v4574, %v4573
        %v4657 = vpack.c.bf16 %v4576, %v4575
        %v4658 = vpack.c.bf16 %v4578, %v4577
        %v4659 = vpack.c.bf16 %v4580, %v4579
        %v4660 = vpack.c.bf16 %v4582, %v4581
        %v4661 = vpack.c.bf16 %v4584, %v4583
        %v4662 = vpack.c.bf16 %v4586, %v4585
        %v4663 = vpack.c.bf16 %v4588, %v4587
        %v4664 = vpack.c.bf16 %v4590, %v4589
        %v4665 = vpack.c.bf16 %v4592, %v4591
        %v4666 = vpack.c.bf16 %v4594, %v4593
        %v4667 = vpack.c.bf16 %v4596, %v4595
        %v4668 = vpack.c.bf16 %v4598, %v4597
        %v4669 = vpack.c.bf16 %v4600, %v4599
        %v4670 = vpack.c.bf16 %v4602, %v4601
        %v4671 = vpack.c.bf16 %v4604, %v4603
        %v4672 = vpack.c.bf16 %v4606, %v4605
        %v4673 = vpack.c.bf16 %v4608, %v4607
        %v4674 = vpack.c.bf16 %v4610, %v4609
        %v4675 = vld [vmem:[#allocation14] sm:$0xf]
        %v4676 = vld [vmem:[#allocation14 + $0x4] sm:$0xf]
        %v4677 = vld [vmem:[#allocation14 + $0x8] sm:$0xf]
        %v4678 = vld [vmem:[#allocation14 + $0xc] sm:$0xf]
        %v4679 = vld [vmem:[#allocation14 + $0x10] sm:$0xf]
        %v4680 = vld [vmem:[#allocation14 + $0x14] sm:$0xf]
        %v4681 = vld [vmem:[#allocation14 + $0x18] sm:$0xf]
        %v4682 = vld [vmem:[#allocation14 + $0x1c] sm:$0xf]
        %v4683 = vld [vmem:[#allocation14 + $0x20] sm:$0xf]
        %v4684 = vld [vmem:[#allocation14 + $0x24] sm:$0xf]
        %v4685 = vld [vmem:[#allocation14 + $0x28] sm:$0xf]
        %v4686 = vld [vmem:[#allocation14 + $0x2c] sm:$0xf]
        %v4687 = vld [vmem:[#allocation14 + $0x30] sm:$0xf]
        %v4688 = vld [vmem:[#allocation14 + $0x34] sm:$0xf]
        %v4689 = vld [vmem:[#allocation14 + $0x38] sm:$0xf]
        %v4690 = vld [vmem:[#allocation14 + $0x3c] sm:$0xf]
        %v4707 = vunpack.c.l.b16 %v4675
        %v4708 = vunpack.c.l.b16 %v4676
        %v4709 = vunpack.c.l.b16 %v4677
        %v4710 = vunpack.c.l.b16 %v4678
        %v4711 = vunpack.c.l.b16 %v4679
        %v4712 = vunpack.c.l.b16 %v4680
        %v4713 = vunpack.c.l.b16 %v4681
        %v4714 = vunpack.c.l.b16 %v4682
        %v4715 = vunpack.c.l.b16 %v4683
        %v4716 = vunpack.c.l.b16 %v4684
        %v4717 = vunpack.c.l.b16 %v4685
        %v4718 = vunpack.c.l.b16 %v4686
        %v4719 = vunpack.c.l.b16 %v4687
        %v4720 = vunpack.c.l.b16 %v4688
        %v4721 = vunpack.c.l.b16 %v4689
        %v4722 = vunpack.c.l.b16 %v4690
        %v4723 = vpack.c.b16 %v4708, %v4707
        %v4724 = vpack.c.b16 %v4710, %v4709
        %v4725 = vpack.c.b16 %v4712, %v4711
        %v4726 = vpack.c.b16 %v4714, %v4713
        %v4727 = vpack.c.b16 %v4716, %v4715
        %v4728 = vpack.c.b16 %v4718, %v4717
        %v4729 = vpack.c.b16 %v4720, %v4719
        %v4730 = vpack.c.b16 %v4722, %v4721
        %4739 = vmatprep.subr.bf16.mxu0 0
        %4740 = vmatpush1.bf16.msra.mxu0 %v4723
        %4741 = vmatprep.subr.bf16.mxu0 0
        %4742 = vmatpush1.bf16.msra.mxu0 %v4724
        %4743 = vmatprep.subr.bf16.mxu0 0
        %4744 = vmatpush1.bf16.msra.mxu0 %v4725
        %4745 = vmatprep.subr.bf16.mxu0 0
        %4746 = vmatpush1.bf16.msra.mxu0 %v4726
        %4747 = vmatprep.subr.bf16.mxu0 0
        %4748 = vmatpush1.bf16.msra.mxu0 %v4727
        %4749 = vmatprep.subr.bf16.mxu0 0
        %4750 = vmatpush1.bf16.msra.mxu0 %v4728
        %4751 = vmatprep.subr.bf16.mxu0 0
        %4752 = vmatpush1.bf16.msra.mxu0 %v4729
        %4753 = vmatprep.subr.bf16.mxu0 0
        %4754 = vmatpush1.bf16.msra.mxu0 %v4730
        %4755 = vmatprep.subr.bf16.mxu0 0
        %4756 = vmatpush1.bf16.msra.mxu0 0
        %4757 = vmatprep.subr.bf16.mxu0 0
        %4758 = vmatpush1.bf16.msra.mxu0 0
        %4759 = vmatprep.subr.bf16.mxu0 0
        %4760 = vmatpush1.bf16.msra.mxu0 0
        %4761 = vmatprep.subr.bf16.mxu0 0
        %4762 = vmatpush1.bf16.msra.mxu0 0
        %4763 = vmatprep.subr.bf16.mxu0 0
        %4764 = vmatpush1.bf16.msra.mxu0 0
        %4765 = vmatprep.subr.bf16.mxu0 0
        %4766 = vmatpush1.bf16.msra.mxu0 0
        %4767 = vmatprep.subr.bf16.mxu0 0
        %4768 = vmatpush1.bf16.msra.mxu0 0
        %4769 = vmatprep.subr.bf16.mxu0 0
        %4770 = vmatpush1.bf16.msra.mxu0 0
        %4771 = vmatprep.mubr.bf16.mxu0 0
        %4772 = vmatmul.mubr.bf16.gmra.mrb[0].mxu0 %v4611
        %v4773 = vpop.f32.mrb[0].mxu0
        %v4774 = vadd.f32 0.0, %v4773
        %v4775 = vpop.f32.mrb[0].mxu0
        %v4776 = vpop.f32.mrb[0].mxu0
        %v4777 = vadd.f32 0.0, %v4776
        %v4778 = vpop.f32.mrb[0].mxu0
        %4779 = vmatprep.mubr.bf16.mxu0 0
        %4780 = vmatmul.mubr.bf16.gmra.mrb[0].mxu0 %v4612
        %v4781 = vpop.f32.mrb[0].mxu0
        %v4782 = vadd.f32 0.0, %v4781
        %v4783 = vpop.f32.mrb[0].mxu0
        %v4784 = vpop.f32.mrb[0].mxu0
        %v4785 = vadd.f32 0.0, %v4784
        %v4786 = vpop.f32.mrb[0].mxu0
        %4787 = vmatprep.mubr.bf16.mxu0 0
        %4788 = vmatmul.mubr.bf16.gmra.mrb[0].mxu0 %v4613
        %v4789 = vpop.f32.mrb[0].mxu0
        %v4790 = vadd.f32 0.0, %v4789
        %v4791 = vpop.f32.mrb[0].mxu0
        %v4792 = vpop.f32.mrb[0].mxu0
        %v4793 = vadd.f32 0.0, %v4792
        %v4794 = vpop.f32.mrb[0].mxu0
        %4795 = vmatprep.mubr.bf16.mxu0 0
        %4796 = vmatmul.mubr.bf16.gmra.mrb[0].mxu0 %v4614
        %v4797 = vpop.f32.mrb[0].mxu0
        %v4798 = vadd.f32 0.0, %v4797
        %v4799 = vpop.f32.mrb[0].mxu0
        %v4800 = vpop.f32.mrb[0].mxu0
        %v4801 = vadd.f32 0.0, %v4800
        %v4802 = vpop.f32.mrb[0].mxu0
        %4803 = vmatprep.mubr.bf16.mxu0 0
        %4804 = vmatmul.mubr.bf16.gmra.mrb[0].mxu0 %v4615
        %v4805 = vpop.f32.mrb[0].mxu0
        %v4806 = vadd.f32 0.0, %v4805
        %v4807 = vpop.f32.mrb[0].mxu0
        %v4808 = vpop.f32.mrb[0].mxu0
        %v4809 = vadd.f32 0.0, %v4808
        %v4810 = vpop.f32.mrb[0].mxu0
        %4811 = vmatprep.mubr.bf16.mxu0 0
        %4812 = vmatmul.mubr.bf16.gmra.mrb[0].mxu0 %v4616
        %v4813 = vpop.f32.mrb[0].mxu0
        %v4814 = vadd.f32 0.0, %v4813
        %v4815 = vpop.f32.mrb[0].mxu0
        %v4816 = vpop.f32.mrb[0].mxu0
        %v4817 = vadd.f32 0.0, %v4816
        %v4818 = vpop.f32.mrb[0].mxu0
        %4819 = vmatprep.mubr.bf16.mxu0 0
        %4820 = vmatmul.mubr.bf16.gmra.mrb[0].mxu0 %v4617
        %v4821 = vpop.f32.mrb[0].mxu0
        %v4822 = vadd.f32 0.0, %v4821
        %v4823 = vpop.f32.mrb[0].mxu0
        %v4824 = vpop.f32.mrb[0].mxu0
        %v4825 = vadd.f32 0.0, %v4824
        %v4826 = vpop.f32.mrb[0].mxu0
        %4827 = vmatprep.mubr.bf16.mxu0 0
        %4828 = vmatmul.mubr.bf16.gmra.mrb[0].mxu0 %v4618
        %v4829 = vpop.f32.mrb[0].mxu0
        %v4830 = vadd.f32 0.0, %v4829
        %v4831 = vpop.f32.mrb[0].mxu0
        %v4832 = vpop.f32.mrb[0].mxu0
        %v4833 = vadd.f32 0.0, %v4832
        %v4834 = vpop.f32.mrb[0].mxu0
        %4835 = vmatprep.mubr.bf16.mxu0 0
        %4836 = vmatmul.mubr.bf16.gmra.mrb[0].mxu0 %v4619
        %v4837 = vpop.f32.mrb[0].mxu0
        %v4838 = vadd.f32 0.0, %v4837
        %v4839 = vpop.f32.mrb[0].mxu0
        %v4840 = vpop.f32.mrb[0].mxu0
        %v4841 = vadd.f32 0.0, %v4840
        %v4842 = vpop.f32.mrb[0].mxu0
        %4843 = vmatprep.mubr.bf16.mxu0 0
        %4844 = vmatmul.mubr.bf16.gmra.mrb[0].mxu0 %v4620
        %v4845 = vpop.f32.mrb[0].mxu0
        %v4846 = vadd.f32 0.0, %v4845
        %v4847 = vpop.f32.mrb[0].mxu0
        %v4848 = vpop.f32.mrb[0].mxu0
        %v4849 = vadd.f32 0.0, %v4848
        %v4850 = vpop.f32.mrb[0].mxu0
        %4851 = vmatprep.mubr.bf16.mxu0 0
        %4852 = vmatmul.mubr.bf16.gmra.mrb[0].mxu0 %v4621
        %v4853 = vpop.f32.mrb[0].mxu0
        %v4854 = vadd.f32 0.0, %v4853
        %v4855 = vpop.f32.mrb[0].mxu0
        %v4856 = vpop.f32.mrb[0].mxu0
        %v4857 = vadd.f32 0.0, %v4856
        %v4858 = vpop.f32.mrb[0].mxu0
        %4859 = vmatprep.mubr.bf16.mxu0 0
        %4860 = vmatmul.mubr.bf16.gmra.mrb[0].mxu0 %v4622
        %v4861 = vpop.f32.mrb[0].mxu0
        %v4862 = vadd.f32 0.0, %v4861
        %v4863 = vpop.f32.mrb[0].mxu0
        %v4864 = vpop.f32.mrb[0].mxu0
        %v4865 = vadd.f32 0.0, %v4864
        %v4866 = vpop.f32.mrb[0].mxu0
        %4867 = vmatprep.mubr.bf16.mxu0 0
        %4868 = vmatmul.mubr.bf16.gmra.mrb[0].mxu0 %v4623
        %v4869 = vpop.f32.mrb[0].mxu0
        %v4870 = vadd.f32 0.0, %v4869
        %v4871 = vpop.f32.mrb[0].mxu0
        %v4872 = vpop.f32.mrb[0].mxu0
        %v4873 = vadd.f32 0.0, %v4872
        %v4874 = vpop.f32.mrb[0].mxu0
        %4875 = vmatprep.mubr.bf16.mxu0 0
        %4876 = vmatmul.mubr.bf16.gmra.mrb[0].mxu0 %v4624
        %v4877 = vpop.f32.mrb[0].mxu0
        %v4878 = vadd.f32 0.0, %v4877
        %v4879 = vpop.f32.mrb[0].mxu0
        %v4880 = vpop.f32.mrb[0].mxu0
        %v4881 = vadd.f32 0.0, %v4880
        %v4882 = vpop.f32.mrb[0].mxu0
        %4883 = vmatprep.mubr.bf16.mxu0 0
        %4884 = vmatmul.mubr.bf16.gmra.mrb[0].mxu0 %v4625
        %v4885 = vpop.f32.mrb[0].mxu0
        %v4886 = vadd.f32 0.0, %v4885
        %v4887 = vpop.f32.mrb[0].mxu0
        %v4888 = vpop.f32.mrb[0].mxu0
        %v4889 = vadd.f32 0.0, %v4888
        %v4890 = vpop.f32.mrb[0].mxu0
        %4891 = vmatprep.mubr.bf16.mxu0 0
        %4892 = vmatmul.mubr.bf16.gmra.mrb[0].mxu0 %v4626
        %v4893 = vpop.f32.mrb[0].mxu0
        %v4894 = vadd.f32 0.0, %v4893
        %v4895 = vpop.f32.mrb[0].mxu0
        %v4896 = vpop.f32.mrb[0].mxu0
        %v4897 = vadd.f32 0.0, %v4896
        %v4898 = vpop.f32.mrb[0].mxu0
        %4899 = vmatprep.mubr.bf16.mxu0 0
        %4900 = vmatmul.mubr.bf16.gmra.mrb[0].mxu0 %v4627
        %v4901 = vpop.f32.mrb[0].mxu0
        %v4902 = vadd.f32 0.0, %v4901
        %v4903 = vpop.f32.mrb[0].mxu0
        %v4904 = vpop.f32.mrb[0].mxu0
        %v4905 = vadd.f32 0.0, %v4904
        %v4906 = vpop.f32.mrb[0].mxu0
        %4907 = vmatprep.mubr.bf16.mxu0 0
        %4908 = vmatmul.mubr.bf16.gmra.mrb[0].mxu0 %v4628
        %v4909 = vpop.f32.mrb[0].mxu0
        %v4910 = vadd.f32 0.0, %v4909
        %v4911 = vpop.f32.mrb[0].mxu0
        %v4912 = vpop.f32.mrb[0].mxu0
        %v4913 = vadd.f32 0.0, %v4912
        %v4914 = vpop.f32.mrb[0].mxu0
        %4915 = vmatprep.mubr.bf16.mxu0 0
        %4916 = vmatmul.mubr.bf16.gmra.mrb[0].mxu0 %v4629
        %v4917 = vpop.f32.mrb[0].mxu0
        %v4918 = vadd.f32 0.0, %v4917
        %v4919 = vpop.f32.mrb[0].mxu0
        %v4920 = vpop.f32.mrb[0].mxu0
        %v4921 = vadd.f32 0.0, %v4920
        %v4922 = vpop.f32.mrb[0].mxu0
        %4923 = vmatprep.mubr.bf16.mxu0 0
        %4924 = vmatmul.mubr.bf16.gmra.mrb[0].mxu0 %v4630
        %v4925 = vpop.f32.mrb[0].mxu0
        %v4926 = vadd.f32 0.0, %v4925
        %v4927 = vpop.f32.mrb[0].mxu0
        %v4928 = vpop.f32.mrb[0].mxu0
        %v4929 = vadd.f32 0.0, %v4928
        %v4930 = vpop.f32.mrb[0].mxu0
        %4931 = vmatprep.mubr.bf16.mxu0 0
        %4932 = vmatmul.mubr.bf16.gmra.mrb[0].mxu0 %v4631
        %v4933 = vpop.f32.mrb[0].mxu0
        %v4934 = vadd.f32 0.0, %v4933
        %v4935 = vpop.f32.mrb[0].mxu0
        %v4936 = vpop.f32.mrb[0].mxu0
        %v4937 = vadd.f32 0.0, %v4936
        %v4938 = vpop.f32.mrb[0].mxu0
        %4939 = vmatprep.mubr.bf16.mxu0 0
        %4940 = vmatmul.mubr.bf16.gmra.mrb[0].mxu0 %v4632
        %v4941 = vpop.f32.mrb[0].mxu0
        %v4942 = vadd.f32 0.0, %v4941
        %v4943 = vpop.f32.mrb[0].mxu0
        %v4944 = vpop.f32.mrb[0].mxu0
        %v4945 = vadd.f32 0.0, %v4944
        %v4946 = vpop.f32.mrb[0].mxu0
        %4947 = vmatprep.mubr.bf16.mxu0 0
        %4948 = vmatmul.mubr.bf16.gmra.mrb[0].mxu0 %v4633
        %v4949 = vpop.f32.mrb[0].mxu0
        %v4950 = vadd.f32 0.0, %v4949
        %v4951 = vpop.f32.mrb[0].mxu0
        %v4952 = vpop.f32.mrb[0].mxu0
        %v4953 = vadd.f32 0.0, %v4952
        %v4954 = vpop.f32.mrb[0].mxu0
        %4955 = vmatprep.mubr.bf16.mxu0 0
        %4956 = vmatmul.mubr.bf16.gmra.mrb[0].mxu0 %v4634
        %v4957 = vpop.f32.mrb[0].mxu0
        %v4958 = vadd.f32 0.0, %v4957
        %v4959 = vpop.f32.mrb[0].mxu0
        %v4960 = vpop.f32.mrb[0].mxu0
        %v4961 = vadd.f32 0.0, %v4960
        %v4962 = vpop.f32.mrb[0].mxu0
        %4963 = vmatprep.mubr.bf16.mxu0 0
        %4964 = vmatmul.mubr.bf16.gmra.mrb[0].mxu0 %v4635
        %v4965 = vpop.f32.mrb[0].mxu0
        %v4966 = vadd.f32 0.0, %v4965
        %v4967 = vpop.f32.mrb[0].mxu0
        %v4968 = vpop.f32.mrb[0].mxu0
        %v4969 = vadd.f32 0.0, %v4968
        %v4970 = vpop.f32.mrb[0].mxu0
        %4971 = vmatprep.mubr.bf16.mxu0 0
        %4972 = vmatmul.mubr.bf16.gmra.mrb[0].mxu0 %v4636
        %v4973 = vpop.f32.mrb[0].mxu0
        %v4974 = vadd.f32 0.0, %v4973
        %v4975 = vpop.f32.mrb[0].mxu0
        %v4976 = vpop.f32.mrb[0].mxu0
        %v4977 = vadd.f32 0.0, %v4976
        %v4978 = vpop.f32.mrb[0].mxu0
        %4979 = vmatprep.mubr.bf16.mxu0 0
        %4980 = vmatmul.mubr.bf16.gmra.mrb[0].mxu0 %v4637
        %v4981 = vpop.f32.mrb[0].mxu0
        %v4982 = vadd.f32 0.0, %v4981
        %v4983 = vpop.f32.mrb[0].mxu0
        %v4984 = vpop.f32.mrb[0].mxu0
        %v4985 = vadd.f32 0.0, %v4984
        %v4986 = vpop.f32.mrb[0].mxu0
        %4987 = vmatprep.mubr.bf16.mxu0 0
        %4988 = vmatmul.mubr.bf16.gmra.mrb[0].mxu0 %v4638
        %v4989 = vpop.f32.mrb[0].mxu0
        %v4990 = vadd.f32 0.0, %v4989
        %v4991 = vpop.f32.mrb[0].mxu0
        %v4992 = vpop.f32.mrb[0].mxu0
        %v4993 = vadd.f32 0.0, %v4992
        %v4994 = vpop.f32.mrb[0].mxu0
        %4995 = vmatprep.mubr.bf16.mxu0 0
        %4996 = vmatmul.mubr.bf16.gmra.mrb[0].mxu0 %v4639
        %v4997 = vpop.f32.mrb[0].mxu0
        %v4998 = vadd.f32 0.0, %v4997
        %v4999 = vpop.f32.mrb[0].mxu0
        %v5000 = vpop.f32.mrb[0].mxu0
        %v5001 = vadd.f32 0.0, %v5000
        %v5002 = vpop.f32.mrb[0].mxu0
        %5003 = vmatprep.mubr.bf16.mxu0 0
        %5004 = vmatmul.mubr.bf16.gmra.mrb[0].mxu0 %v4640
        %v5005 = vpop.f32.mrb[0].mxu0
        %v5006 = vadd.f32 0.0, %v5005
        %v5007 = vpop.f32.mrb[0].mxu0
        %v5008 = vpop.f32.mrb[0].mxu0
        %v5009 = vadd.f32 0.0, %v5008
        %v5010 = vpop.f32.mrb[0].mxu0
        %5011 = vmatprep.mubr.bf16.mxu0 0
        %5012 = vmatmul.mubr.bf16.gmra.mrb[0].mxu0 %v4641
        %v5013 = vpop.f32.mrb[0].mxu0
        %v5014 = vadd.f32 0.0, %v5013
        %v5015 = vpop.f32.mrb[0].mxu0
        %v5016 = vpop.f32.mrb[0].mxu0
        %v5017 = vadd.f32 0.0, %v5016
        %v5018 = vpop.f32.mrb[0].mxu0
        %5019 = vmatprep.mubr.bf16.mxu0 0
        %5020 = vmatmul.mubr.bf16.gmra.mrb[0].mxu0 %v4642
        %v5021 = vpop.f32.mrb[0].mxu0
        %v5022 = vadd.f32 0.0, %v5021
        %v5023 = vpop.f32.mrb[0].mxu0
        %v5024 = vpop.f32.mrb[0].mxu0
        %v5025 = vadd.f32 0.0, %v5024
        %v5026 = vpop.f32.mrb[0].mxu0
        %5027 = vmatprep.mubr.bf16.mxu0 0
        %5028 = vmatmul.mubr.bf16.gmra.mrb[0].mxu0 %v4643
        %v5029 = vpop.f32.mrb[0].mxu0
        %v5030 = vadd.f32 0.0, %v5029
        %v5031 = vpop.f32.mrb[0].mxu0
        %v5032 = vpop.f32.mrb[0].mxu0
        %v5033 = vadd.f32 0.0, %v5032
        %v5034 = vpop.f32.mrb[0].mxu0
        %5035 = vmatprep.mubr.bf16.mxu0 0
        %5036 = vmatmul.mubr.bf16.gmra.mrb[0].mxu0 %v4644
        %v5037 = vpop.f32.mrb[0].mxu0
        %v5038 = vadd.f32 0.0, %v5037
        %v5039 = vpop.f32.mrb[0].mxu0
        %v5040 = vpop.f32.mrb[0].mxu0
        %v5041 = vadd.f32 0.0, %v5040
        %v5042 = vpop.f32.mrb[0].mxu0
        %5043 = vmatprep.mubr.bf16.mxu0 0
        %5044 = vmatmul.mubr.bf16.gmra.mrb[0].mxu0 %v4645
        %v5045 = vpop.f32.mrb[0].mxu0
        %v5046 = vadd.f32 0.0, %v5045
        %v5047 = vpop.f32.mrb[0].mxu0
        %v5048 = vpop.f32.mrb[0].mxu0
        %v5049 = vadd.f32 0.0, %v5048
        %v5050 = vpop.f32.mrb[0].mxu0
        %5051 = vmatprep.mubr.bf16.mxu0 0
        %5052 = vmatmul.mubr.bf16.gmra.mrb[0].mxu0 %v4646
        %v5053 = vpop.f32.mrb[0].mxu0
        %v5054 = vadd.f32 0.0, %v5053
        %v5055 = vpop.f32.mrb[0].mxu0
        %v5056 = vpop.f32.mrb[0].mxu0
        %v5057 = vadd.f32 0.0, %v5056
        %v5058 = vpop.f32.mrb[0].mxu0
        %5059 = vmatprep.mubr.bf16.mxu0 0
        %5060 = vmatmul.mubr.bf16.gmra.mrb[0].mxu0 %v4647
        %v5061 = vpop.f32.mrb[0].mxu0
        %v5062 = vadd.f32 0.0, %v5061
        %v5063 = vpop.f32.mrb[0].mxu0
        %v5064 = vpop.f32.mrb[0].mxu0
        %v5065 = vadd.f32 0.0, %v5064
        %v5066 = vpop.f32.mrb[0].mxu0
        %5067 = vmatprep.mubr.bf16.mxu0 0
        %5068 = vmatmul.mubr.bf16.gmra.mrb[0].mxu0 %v4648
        %v5069 = vpop.f32.mrb[0].mxu0
        %v5070 = vadd.f32 0.0, %v5069
        %v5071 = vpop.f32.mrb[0].mxu0
        %v5072 = vpop.f32.mrb[0].mxu0
        %v5073 = vadd.f32 0.0, %v5072
        %v5074 = vpop.f32.mrb[0].mxu0
        %5075 = vmatprep.mubr.bf16.mxu0 0
        %5076 = vmatmul.mubr.bf16.gmra.mrb[0].mxu0 %v4649
        %v5077 = vpop.f32.mrb[0].mxu0
        %v5078 = vadd.f32 0.0, %v5077
        %v5079 = vpop.f32.mrb[0].mxu0
        %v5080 = vpop.f32.mrb[0].mxu0
        %v5081 = vadd.f32 0.0, %v5080
        %v5082 = vpop.f32.mrb[0].mxu0
        %5083 = vmatprep.mubr.bf16.mxu0 0
        %5084 = vmatmul.mubr.bf16.gmra.mrb[0].mxu0 %v4650
        %v5085 = vpop.f32.mrb[0].mxu0
        %v5086 = vadd.f32 0.0, %v5085
        %v5087 = vpop.f32.mrb[0].mxu0
        %v5088 = vpop.f32.mrb[0].mxu0
        %v5089 = vadd.f32 0.0, %v5088
        %v5090 = vpop.f32.mrb[0].mxu0
        %5091 = vmatprep.mubr.bf16.mxu0 0
        %5092 = vmatmul.mubr.bf16.gmra.mrb[0].mxu0 %v4651
        %v5093 = vpop.f32.mrb[0].mxu0
        %v5094 = vadd.f32 0.0, %v5093
        %v5095 = vpop.f32.mrb[0].mxu0
        %v5096 = vpop.f32.mrb[0].mxu0
        %v5097 = vadd.f32 0.0, %v5096
        %v5098 = vpop.f32.mrb[0].mxu0
        %5099 = vmatprep.mubr.bf16.mxu0 0
        %5100 = vmatmul.mubr.bf16.gmra.mrb[0].mxu0 %v4652
        %v5101 = vpop.f32.mrb[0].mxu0
        %v5102 = vadd.f32 0.0, %v5101
        %v5103 = vpop.f32.mrb[0].mxu0
        %v5104 = vpop.f32.mrb[0].mxu0
        %v5105 = vadd.f32 0.0, %v5104
        %v5106 = vpop.f32.mrb[0].mxu0
        %5107 = vmatprep.mubr.bf16.mxu0 0
        %5108 = vmatmul.mubr.bf16.gmra.mrb[0].mxu0 %v4653
        %v5109 = vpop.f32.mrb[0].mxu0
        %v5110 = vadd.f32 0.0, %v5109
        %v5111 = vpop.f32.mrb[0].mxu0
        %v5112 = vpop.f32.mrb[0].mxu0
        %v5113 = vadd.f32 0.0, %v5112
        %v5114 = vpop.f32.mrb[0].mxu0
        %5115 = vmatprep.mubr.bf16.mxu0 0
        %5116 = vmatmul.mubr.bf16.gmra.mrb[0].mxu0 %v4654
        %v5117 = vpop.f32.mrb[0].mxu0
        %v5118 = vadd.f32 0.0, %v5117
        %v5119 = vpop.f32.mrb[0].mxu0
        %v5120 = vpop.f32.mrb[0].mxu0
        %v5121 = vadd.f32 0.0, %v5120
        %v5122 = vpop.f32.mrb[0].mxu0
        %5123 = vmatprep.mubr.bf16.mxu0 0
        %5124 = vmatmul.mubr.bf16.gmra.mrb[0].mxu0 %v4655
        %v5125 = vpop.f32.mrb[0].mxu0
        %v5126 = vadd.f32 0.0, %v5125
        %v5127 = vpop.f32.mrb[0].mxu0
        %v5128 = vpop.f32.mrb[0].mxu0
        %v5129 = vadd.f32 0.0, %v5128
        %v5130 = vpop.f32.mrb[0].mxu0
        %5131 = vmatprep.mubr.bf16.mxu0 0
        %5132 = vmatmul.mubr.bf16.gmra.mrb[0].mxu0 %v4656
        %v5133 = vpop.f32.mrb[0].mxu0
        %v5134 = vadd.f32 0.0, %v5133
        %v5135 = vpop.f32.mrb[0].mxu0
        %v5136 = vpop.f32.mrb[0].mxu0
        %v5137 = vadd.f32 0.0, %v5136
        %v5138 = vpop.f32.mrb[0].mxu0
        %5139 = vmatprep.mubr.bf16.mxu0 0
        %5140 = vmatmul.mubr.bf16.gmra.mrb[0].mxu0 %v4657
        %v5141 = vpop.f32.mrb[0].mxu0
        %v5142 = vadd.f32 0.0, %v5141
        %v5143 = vpop.f32.mrb[0].mxu0
        %v5144 = vpop.f32.mrb[0].mxu0
        %v5145 = vadd.f32 0.0, %v5144
        %v5146 = vpop.f32.mrb[0].mxu0
        %5147 = vmatprep.mubr.bf16.mxu0 0
        %5148 = vmatmul.mubr.bf16.gmra.mrb[0].mxu0 %v4658
        %v5149 = vpop.f32.mrb[0].mxu0
        %v5150 = vadd.f32 0.0, %v5149
        %v5151 = vpop.f32.mrb[0].mxu0
        %v5152 = vpop.f32.mrb[0].mxu0
        %v5153 = vadd.f32 0.0, %v5152
        %v5154 = vpop.f32.mrb[0].mxu0
        %5155 = vmatprep.mubr.bf16.mxu0 0
        %5156 = vmatmul.mubr.bf16.gmra.mrb[0].mxu0 %v4659
        %v5157 = vpop.f32.mrb[0].mxu0
        %v5158 = vadd.f32 0.0, %v5157
        %v5159 = vpop.f32.mrb[0].mxu0
        %v5160 = vpop.f32.mrb[0].mxu0
        %v5161 = vadd.f32 0.0, %v5160
        %v5162 = vpop.f32.mrb[0].mxu0
        %5163 = vmatprep.mubr.bf16.mxu0 0
        %5164 = vmatmul.mubr.bf16.gmra.mrb[0].mxu0 %v4660
        %v5165 = vpop.f32.mrb[0].mxu0
        %v5166 = vadd.f32 0.0, %v5165
        %v5167 = vpop.f32.mrb[0].mxu0
        %v5168 = vpop.f32.mrb[0].mxu0
        %v5169 = vadd.f32 0.0, %v5168
        %v5170 = vpop.f32.mrb[0].mxu0
        %5171 = vmatprep.mubr.bf16.mxu0 0
        %5172 = vmatmul.mubr.bf16.gmra.mrb[0].mxu0 %v4661
        %v5173 = vpop.f32.mrb[0].mxu0
        %v5174 = vadd.f32 0.0, %v5173
        %v5175 = vpop.f32.mrb[0].mxu0
        %v5176 = vpop.f32.mrb[0].mxu0
        %v5177 = vadd.f32 0.0, %v5176
        %v5178 = vpop.f32.mrb[0].mxu0
        %5179 = vmatprep.mubr.bf16.mxu0 0
        %5180 = vmatmul.mubr.bf16.gmra.mrb[0].mxu0 %v4662
        %v5181 = vpop.f32.mrb[0].mxu0
        %v5182 = vadd.f32 0.0, %v5181
        %v5183 = vpop.f32.mrb[0].mxu0
        %v5184 = vpop.f32.mrb[0].mxu0
        %v5185 = vadd.f32 0.0, %v5184
        %v5186 = vpop.f32.mrb[0].mxu0
        %5187 = vmatprep.mubr.bf16.mxu0 0
        %5188 = vmatmul.mubr.bf16.gmra.mrb[0].mxu0 %v4663
        %v5189 = vpop.f32.mrb[0].mxu0
        %v5190 = vadd.f32 0.0, %v5189
        %v5191 = vpop.f32.mrb[0].mxu0
        %v5192 = vpop.f32.mrb[0].mxu0
        %v5193 = vadd.f32 0.0, %v5192
        %v5194 = vpop.f32.mrb[0].mxu0
        %5195 = vmatprep.mubr.bf16.mxu0 0
        %5196 = vmatmul.mubr.bf16.gmra.mrb[0].mxu0 %v4664
        %v5197 = vpop.f32.mrb[0].mxu0
        %v5198 = vadd.f32 0.0, %v5197
        %v5199 = vpop.f32.mrb[0].mxu0
        %v5200 = vpop.f32.mrb[0].mxu0
        %v5201 = vadd.f32 0.0, %v5200
        %v5202 = vpop.f32.mrb[0].mxu0
        %5203 = vmatprep.mubr.bf16.mxu0 0
        %5204 = vmatmul.mubr.bf16.gmra.mrb[0].mxu0 %v4665
        %v5205 = vpop.f32.mrb[0].mxu0
        %v5206 = vadd.f32 0.0, %v5205
        %v5207 = vpop.f32.mrb[0].mxu0
        %v5208 = vpop.f32.mrb[0].mxu0
        %v5209 = vadd.f32 0.0, %v5208
        %v5210 = vpop.f32.mrb[0].mxu0
        %5211 = vmatprep.mubr.bf16.mxu0 0
        %5212 = vmatmul.mubr.bf16.gmra.mrb[0].mxu0 %v4666
        %v5213 = vpop.f32.mrb[0].mxu0
        %v5214 = vadd.f32 0.0, %v5213
        %v5215 = vpop.f32.mrb[0].mxu0
        %v5216 = vpop.f32.mrb[0].mxu0
        %v5217 = vadd.f32 0.0, %v5216
        %v5218 = vpop.f32.mrb[0].mxu0
        %5219 = vmatprep.mubr.bf16.mxu0 0
        %5220 = vmatmul.mubr.bf16.gmra.mrb[0].mxu0 %v4667
        %v5221 = vpop.f32.mrb[0].mxu0
        %v5222 = vadd.f32 0.0, %v5221
        %v5223 = vpop.f32.mrb[0].mxu0
        %v5224 = vpop.f32.mrb[0].mxu0
        %v5225 = vadd.f32 0.0, %v5224
        %v5226 = vpop.f32.mrb[0].mxu0
        %5227 = vmatprep.mubr.bf16.mxu0 0
        %5228 = vmatmul.mubr.bf16.gmra.mrb[0].mxu0 %v4668
        %v5229 = vpop.f32.mrb[0].mxu0
        %v5230 = vadd.f32 0.0, %v5229
        %v5231 = vpop.f32.mrb[0].mxu0
        %v5232 = vpop.f32.mrb[0].mxu0
        %v5233 = vadd.f32 0.0, %v5232
        %v5234 = vpop.f32.mrb[0].mxu0
        %5235 = vmatprep.mubr.bf16.mxu0 0
        %5236 = vmatmul.mubr.bf16.gmra.mrb[0].mxu0 %v4669
        %v5237 = vpop.f32.mrb[0].mxu0
        %v5238 = vadd.f32 0.0, %v5237
        %v5239 = vpop.f32.mrb[0].mxu0
        %v5240 = vpop.f32.mrb[0].mxu0
        %v5241 = vadd.f32 0.0, %v5240
        %v5242 = vpop.f32.mrb[0].mxu0
        %5243 = vmatprep.mubr.bf16.mxu0 0
        %5244 = vmatmul.mubr.bf16.gmra.mrb[0].mxu0 %v4670
        %v5245 = vpop.f32.mrb[0].mxu0
        %v5246 = vadd.f32 0.0, %v5245
        %v5247 = vpop.f32.mrb[0].mxu0
        %v5248 = vpop.f32.mrb[0].mxu0
        %v5249 = vadd.f32 0.0, %v5248
        %v5250 = vpop.f32.mrb[0].mxu0
        %5251 = vmatprep.mubr.bf16.mxu0 0
        %5252 = vmatmul.mubr.bf16.gmra.mrb[0].mxu0 %v4671
        %v5253 = vpop.f32.mrb[0].mxu0
        %v5254 = vadd.f32 0.0, %v5253
        %v5255 = vpop.f32.mrb[0].mxu0
        %v5256 = vpop.f32.mrb[0].mxu0
        %v5257 = vadd.f32 0.0, %v5256
        %v5258 = vpop.f32.mrb[0].mxu0
        %5259 = vmatprep.mubr.bf16.mxu0 0
        %5260 = vmatmul.mubr.bf16.gmra.mrb[0].mxu0 %v4672
        %v5261 = vpop.f32.mrb[0].mxu0
        %v5262 = vadd.f32 0.0, %v5261
        %v5263 = vpop.f32.mrb[0].mxu0
        %v5264 = vpop.f32.mrb[0].mxu0
        %v5265 = vadd.f32 0.0, %v5264
        %v5266 = vpop.f32.mrb[0].mxu0
        %5267 = vmatprep.mubr.bf16.mxu0 0
        %5268 = vmatmul.mubr.bf16.gmra.mrb[0].mxu0 %v4673
        %v5269 = vpop.f32.mrb[0].mxu0
        %v5270 = vadd.f32 0.0, %v5269
        %v5271 = vpop.f32.mrb[0].mxu0
        %v5272 = vpop.f32.mrb[0].mxu0
        %v5273 = vadd.f32 0.0, %v5272
        %v5274 = vpop.f32.mrb[0].mxu0
        %5275 = vmatprep.mubr.bf16.mxu0 0
        %5276 = vmatmul.mubr.bf16.gmra.mrb[0].mxu0 %v4674
        %v5277 = vpop.f32.mrb[0].mxu0
        %v5278 = vadd.f32 0.0, %v5277
        %v5279 = vpop.f32.mrb[0].mxu0
        %v5280 = vpop.f32.mrb[0].mxu0
        %v5281 = vadd.f32 0.0, %v5280
        %v5282 = vpop.f32.mrb[0].mxu0
        %5283 = vdwg.mxu0
        %v5284 = vld [vmem:[#allocation16] sm:$0x1]
        %v5286 = vlaneseq
        %v5287 = vshrl.u32 %v5286, 7
        %v5288 = vsub.s32 0, %v5287
        %v5289 = vrot.slane %v5284, %v5288
        %v5291 = vmul.f32 %v4774, %v5289
        %v5292 = vmul.f32 %v4777, %v5289
        %v5293 = vmul.f32 %v4782, %v5289
        %v5294 = vmul.f32 %v4785, %v5289
        %v5295 = vmul.f32 %v4790, %v5289
        %v5296 = vmul.f32 %v4793, %v5289
        %v5297 = vmul.f32 %v4798, %v5289
        %v5298 = vmul.f32 %v4801, %v5289
        %v5299 = vmul.f32 %v4806, %v5289
        %v5300 = vmul.f32 %v4809, %v5289
        %v5301 = vmul.f32 %v4814, %v5289
        %v5302 = vmul.f32 %v4817, %v5289
        %v5303 = vmul.f32 %v4822, %v5289
        %v5304 = vmul.f32 %v4825, %v5289
        %v5305 = vmul.f32 %v4830, %v5289
        %v5306 = vmul.f32 %v4833, %v5289
        %v5307 = vmul.f32 %v4838, %v5289
        %v5308 = vmul.f32 %v4841, %v5289
        %v5309 = vmul.f32 %v4846, %v5289
        %v5310 = vmul.f32 %v4849, %v5289
        %v5311 = vmul.f32 %v4854, %v5289
        %v5312 = vmul.f32 %v4857, %v5289
        %v5313 = vmul.f32 %v4862, %v5289
        %v5314 = vmul.f32 %v4865, %v5289
        %v5315 = vmul.f32 %v4870, %v5289
        %v5316 = vmul.f32 %v4873, %v5289
        %v5317 = vmul.f32 %v4878, %v5289
        %v5318 = vmul.f32 %v4881, %v5289
        %v5319 = vmul.f32 %v4886, %v5289
        %v5320 = vmul.f32 %v4889, %v5289
        %v5321 = vmul.f32 %v4894, %v5289
        %v5322 = vmul.f32 %v4897, %v5289
        %v5323 = vmul.f32 %v4902, %v5289
        %v5324 = vmul.f32 %v4905, %v5289
        %v5325 = vmul.f32 %v4910, %v5289
        %v5326 = vmul.f32 %v4913, %v5289
        %v5327 = vmul.f32 %v4918, %v5289
        %v5328 = vmul.f32 %v4921, %v5289
        %v5329 = vmul.f32 %v4926, %v5289
        %v5330 = vmul.f32 %v4929, %v5289
        %v5331 = vmul.f32 %v4934, %v5289
        %v5332 = vmul.f32 %v4937, %v5289
        %v5333 = vmul.f32 %v4942, %v5289
        %v5334 = vmul.f32 %v4945, %v5289
        %v5335 = vmul.f32 %v4950, %v5289
        %v5336 = vmul.f32 %v4953, %v5289
        %v5337 = vmul.f32 %v4958, %v5289
        %v5338 = vmul.f32 %v4961, %v5289
        %v5339 = vmul.f32 %v4966, %v5289
        %v5340 = vmul.f32 %v4969, %v5289
        %v5341 = vmul.f32 %v4974, %v5289
        %v5342 = vmul.f32 %v4977, %v5289
        %v5343 = vmul.f32 %v4982, %v5289
        %v5344 = vmul.f32 %v4985, %v5289
        %v5345 = vmul.f32 %v4990, %v5289
        %v5346 = vmul.f32 %v4993, %v5289
        %v5347 = vmul.f32 %v4998, %v5289
        %v5348 = vmul.f32 %v5001, %v5289
        %v5349 = vmul.f32 %v5006, %v5289
        %v5350 = vmul.f32 %v5009, %v5289
        %v5351 = vmul.f32 %v5014, %v5289
        %v5352 = vmul.f32 %v5017, %v5289
        %v5353 = vmul.f32 %v5022, %v5289
        %v5354 = vmul.f32 %v5025, %v5289
        %v5355 = vmul.f32 %v5030, %v5289
        %v5356 = vmul.f32 %v5033, %v5289
        %v5357 = vmul.f32 %v5038, %v5289
        %v5358 = vmul.f32 %v5041, %v5289
        %v5359 = vmul.f32 %v5046, %v5289
        %v5360 = vmul.f32 %v5049, %v5289
        %v5361 = vmul.f32 %v5054, %v5289
        %v5362 = vmul.f32 %v5057, %v5289
        %v5363 = vmul.f32 %v5062, %v5289
        %v5364 = vmul.f32 %v5065, %v5289
        %v5365 = vmul.f32 %v5070, %v5289
        %v5366 = vmul.f32 %v5073, %v5289
        %v5367 = vmul.f32 %v5078, %v5289
        %v5368 = vmul.f32 %v5081, %v5289
        %v5369 = vmul.f32 %v5086, %v5289
        %v5370 = vmul.f32 %v5089, %v5289
        %v5371 = vmul.f32 %v5094, %v5289
        %v5372 = vmul.f32 %v5097, %v5289
        %v5373 = vmul.f32 %v5102, %v5289
        %v5374 = vmul.f32 %v5105, %v5289
        %v5375 = vmul.f32 %v5110, %v5289
        %v5376 = vmul.f32 %v5113, %v5289
        %v5377 = vmul.f32 %v5118, %v5289
        %v5378 = vmul.f32 %v5121, %v5289
        %v5379 = vmul.f32 %v5126, %v5289
        %v5380 = vmul.f32 %v5129, %v5289
        %v5381 = vmul.f32 %v5134, %v5289
        %v5382 = vmul.f32 %v5137, %v5289
        %v5383 = vmul.f32 %v5142, %v5289
        %v5384 = vmul.f32 %v5145, %v5289
        %v5385 = vmul.f32 %v5150, %v5289
        %v5386 = vmul.f32 %v5153, %v5289
        %v5387 = vmul.f32 %v5158, %v5289
        %v5388 = vmul.f32 %v5161, %v5289
        %v5389 = vmul.f32 %v5166, %v5289
        %v5390 = vmul.f32 %v5169, %v5289
        %v5391 = vmul.f32 %v5174, %v5289
        %v5392 = vmul.f32 %v5177, %v5289
        %v5393 = vmul.f32 %v5182, %v5289
        %v5394 = vmul.f32 %v5185, %v5289
        %v5395 = vmul.f32 %v5190, %v5289
        %v5396 = vmul.f32 %v5193, %v5289
        %v5397 = vmul.f32 %v5198, %v5289
        %v5398 = vmul.f32 %v5201, %v5289
        %v5399 = vmul.f32 %v5206, %v5289
        %v5400 = vmul.f32 %v5209, %v5289
        %v5401 = vmul.f32 %v5214, %v5289
        %v5402 = vmul.f32 %v5217, %v5289
        %v5403 = vmul.f32 %v5222, %v5289
        %v5404 = vmul.f32 %v5225, %v5289
        %v5405 = vmul.f32 %v5230, %v5289
        %v5406 = vmul.f32 %v5233, %v5289
        %v5407 = vmul.f32 %v5238, %v5289
        %v5408 = vmul.f32 %v5241, %v5289
        %v5409 = vmul.f32 %v5246, %v5289
        %v5410 = vmul.f32 %v5249, %v5289
        %v5411 = vmul.f32 %v5254, %v5289
        %v5412 = vmul.f32 %v5257, %v5289
        %v5413 = vmul.f32 %v5262, %v5289
        %v5414 = vmul.f32 %v5265, %v5289
        %v5415 = vmul.f32 %v5270, %v5289
        %v5416 = vmul.f32 %v5273, %v5289
        %v5417 = vmul.f32 %v5278, %v5289
        %v5418 = vmul.f32 %v5281, %v5289
        %v5419 = vld [vmem:[#allocation17] sm:$0x1]
        %v5421 = vlaneseq
        %v5422 = vshrl.u32 %v5421, 7
        %v5423 = vsub.s32 0, %v5422
        %v5424 = vrot.slane %v5419, %v5423
        %v5426 = vadd.f32 %v5291, %v5424
        %v5427 = vadd.f32 %v5292, %v5424
        %v5428 = vadd.f32 %v5293, %v5424
        %v5429 = vadd.f32 %v5294, %v5424
        %v5430 = vadd.f32 %v5295, %v5424
        %v5431 = vadd.f32 %v5296, %v5424
        %v5432 = vadd.f32 %v5297, %v5424
        %v5433 = vadd.f32 %v5298, %v5424
        %v5434 = vadd.f32 %v5299, %v5424
        %v5435 = vadd.f32 %v5300, %v5424
        %v5436 = vadd.f32 %v5301, %v5424
        %v5437 = vadd.f32 %v5302, %v5424
        %v5438 = vadd.f32 %v5303, %v5424
        %v5439 = vadd.f32 %v5304, %v5424
        %v5440 = vadd.f32 %v5305, %v5424
        %v5441 = vadd.f32 %v5306, %v5424
        %v5442 = vadd.f32 %v5307, %v5424
        %v5443 = vadd.f32 %v5308, %v5424
        %v5444 = vadd.f32 %v5309, %v5424
        %v5445 = vadd.f32 %v5310, %v5424
        %v5446 = vadd.f32 %v5311, %v5424
        %v5447 = vadd.f32 %v5312, %v5424
        %v5448 = vadd.f32 %v5313, %v5424
        %v5449 = vadd.f32 %v5314, %v5424
        %v5450 = vadd.f32 %v5315, %v5424
        %v5451 = vadd.f32 %v5316, %v5424
        %v5452 = vadd.f32 %v5317, %v5424
        %v5453 = vadd.f32 %v5318, %v5424
        %v5454 = vadd.f32 %v5319, %v5424
        %v5455 = vadd.f32 %v5320, %v5424
        %v5456 = vadd.f32 %v5321, %v5424
        %v5457 = vadd.f32 %v5322, %v5424
        %v5458 = vadd.f32 %v5323, %v5424
        %v5459 = vadd.f32 %v5324, %v5424
        %v5460 = vadd.f32 %v5325, %v5424
        %v5461 = vadd.f32 %v5326, %v5424
        %v5462 = vadd.f32 %v5327, %v5424
        %v5463 = vadd.f32 %v5328, %v5424
        %v5464 = vadd.f32 %v5329, %v5424
        %v5465 = vadd.f32 %v5330, %v5424
        %v5466 = vadd.f32 %v5331, %v5424
        %v5467 = vadd.f32 %v5332, %v5424
        %v5468 = vadd.f32 %v5333, %v5424
        %v5469 = vadd.f32 %v5334, %v5424
        %v5470 = vadd.f32 %v5335, %v5424
        %v5471 = vadd.f32 %v5336, %v5424
        %v5472 = vadd.f32 %v5337, %v5424
        %v5473 = vadd.f32 %v5338, %v5424
        %v5474 = vadd.f32 %v5339, %v5424
        %v5475 = vadd.f32 %v5340, %v5424
        %v5476 = vadd.f32 %v5341, %v5424
        %v5477 = vadd.f32 %v5342, %v5424
        %v5478 = vadd.f32 %v5343, %v5424
        %v5479 = vadd.f32 %v5344, %v5424
        %v5480 = vadd.f32 %v5345, %v5424
        %v5481 = vadd.f32 %v5346, %v5424
        %v5482 = vadd.f32 %v5347, %v5424
        %v5483 = vadd.f32 %v5348, %v5424
        %v5484 = vadd.f32 %v5349, %v5424
        %v5485 = vadd.f32 %v5350, %v5424
        %v5486 = vadd.f32 %v5351, %v5424
        %v5487 = vadd.f32 %v5352, %v5424
        %v5488 = vadd.f32 %v5353, %v5424
        %v5489 = vadd.f32 %v5354, %v5424
        %v5490 = vadd.f32 %v5355, %v5424
        %v5491 = vadd.f32 %v5356, %v5424
        %v5492 = vadd.f32 %v5357, %v5424
        %v5493 = vadd.f32 %v5358, %v5424
        %v5494 = vadd.f32 %v5359, %v5424
        %v5495 = vadd.f32 %v5360, %v5424
        %v5496 = vadd.f32 %v5361, %v5424
        %v5497 = vadd.f32 %v5362, %v5424
        %v5498 = vadd.f32 %v5363, %v5424
        %v5499 = vadd.f32 %v5364, %v5424
        %v5500 = vadd.f32 %v5365, %v5424
        %v5501 = vadd.f32 %v5366, %v5424
        %v5502 = vadd.f32 %v5367, %v5424
        %v5503 = vadd.f32 %v5368, %v5424
        %v5504 = vadd.f32 %v5369, %v5424
        %v5505 = vadd.f32 %v5370, %v5424
        %v5506 = vadd.f32 %v5371, %v5424
        %v5507 = vadd.f32 %v5372, %v5424
        %v5508 = vadd.f32 %v5373, %v5424
        %v5509 = vadd.f32 %v5374, %v5424
        %v5510 = vadd.f32 %v5375, %v5424
        %v5511 = vadd.f32 %v5376, %v5424
        %v5512 = vadd.f32 %v5377, %v5424
        %v5513 = vadd.f32 %v5378, %v5424
        %v5514 = vadd.f32 %v5379, %v5424
        %v5515 = vadd.f32 %v5380, %v5424
        %v5516 = vadd.f32 %v5381, %v5424
        %v5517 = vadd.f32 %v5382, %v5424
        %v5518 = vadd.f32 %v5383, %v5424
        %v5519 = vadd.f32 %v5384, %v5424
        %v5520 = vadd.f32 %v5385, %v5424
        %v5521 = vadd.f32 %v5386, %v5424
        %v5522 = vadd.f32 %v5387, %v5424
        %v5523 = vadd.f32 %v5388, %v5424
        %v5524 = vadd.f32 %v5389, %v5424
        %v5525 = vadd.f32 %v5390, %v5424
        %v5526 = vadd.f32 %v5391, %v5424
        %v5527 = vadd.f32 %v5392, %v5424
        %v5528 = vadd.f32 %v5393, %v5424
        %v5529 = vadd.f32 %v5394, %v5424
        %v5530 = vadd.f32 %v5395, %v5424
        %v5531 = vadd.f32 %v5396, %v5424
        %v5532 = vadd.f32 %v5397, %v5424
        %v5533 = vadd.f32 %v5398, %v5424
        %v5534 = vadd.f32 %v5399, %v5424
        %v5535 = vadd.f32 %v5400, %v5424
        %v5536 = vadd.f32 %v5401, %v5424
        %v5537 = vadd.f32 %v5402, %v5424
        %v5538 = vadd.f32 %v5403, %v5424
        %v5539 = vadd.f32 %v5404, %v5424
        %v5540 = vadd.f32 %v5405, %v5424
        %v5541 = vadd.f32 %v5406, %v5424
        %v5542 = vadd.f32 %v5407, %v5424
        %v5543 = vadd.f32 %v5408, %v5424
        %v5544 = vadd.f32 %v5409, %v5424
        %v5545 = vadd.f32 %v5410, %v5424
        %v5546 = vadd.f32 %v5411, %v5424
        %v5547 = vadd.f32 %v5412, %v5424
        %v5548 = vadd.f32 %v5413, %v5424
        %v5549 = vadd.f32 %v5414, %v5424
        %v5550 = vadd.f32 %v5415, %v5424
        %v5551 = vadd.f32 %v5416, %v5424
        %v5552 = vadd.f32 %v5417, %v5424
        %v5553 = vadd.f32 %v5418, %v5424
        %v5554 = vsub.f32 0.0, %v5426
        %v5555 = vsub.f32 0.0, %v5427
        %v5556 = vsub.f32 0.0, %v5428
        %v5557 = vsub.f32 0.0, %v5429
        %v5558 = vsub.f32 0.0, %v5430
        %v5559 = vsub.f32 0.0, %v5431
        %v5560 = vsub.f32 0.0, %v5432
        %v5561 = vsub.f32 0.0, %v5433
        %v5562 = vsub.f32 0.0, %v5434
        %v5563 = vsub.f32 0.0, %v5435
        %v5564 = vsub.f32 0.0, %v5436
        %v5565 = vsub.f32 0.0, %v5437
        %v5566 = vsub.f32 0.0, %v5438
        %v5567 = vsub.f32 0.0, %v5439
        %v5568 = vsub.f32 0.0, %v5440
        %v5569 = vsub.f32 0.0, %v5441
        %v5570 = vsub.f32 0.0, %v5442
        %v5571 = vsub.f32 0.0, %v5443
        %v5572 = vsub.f32 0.0, %v5444
        %v5573 = vsub.f32 0.0, %v5445
        %v5574 = vsub.f32 0.0, %v5446
        %v5575 = vsub.f32 0.0, %v5447
        %v5576 = vsub.f32 0.0, %v5448
        %v5577 = vsub.f32 0.0, %v5449
        %v5578 = vsub.f32 0.0, %v5450
        %v5579 = vsub.f32 0.0, %v5451
        %v5580 = vsub.f32 0.0, %v5452
        %v5581 = vsub.f32 0.0, %v5453
        %v5582 = vsub.f32 0.0, %v5454
        %v5583 = vsub.f32 0.0, %v5455
        %v5584 = vsub.f32 0.0, %v5456
        %v5585 = vsub.f32 0.0, %v5457
        %v5586 = vsub.f32 0.0, %v5458
        %v5587 = vsub.f32 0.0, %v5459
        %v5588 = vsub.f32 0.0, %v5460
        %v5589 = vsub.f32 0.0, %v5461
        %v5590 = vsub.f32 0.0, %v5462
        %v5591 = vsub.f32 0.0, %v5463
        %v5592 = vsub.f32 0.0, %v5464
        %v5593 = vsub.f32 0.0, %v5465
        %v5594 = vsub.f32 0.0, %v5466
        %v5595 = vsub.f32 0.0, %v5467
        %v5596 = vsub.f32 0.0, %v5468
        %v5597 = vsub.f32 0.0, %v5469
        %v5598 = vsub.f32 0.0, %v5470
        %v5599 = vsub.f32 0.0, %v5471
        %v5600 = vsub.f32 0.0, %v5472
        %v5601 = vsub.f32 0.0, %v5473
        %v5602 = vsub.f32 0.0, %v5474
        %v5603 = vsub.f32 0.0, %v5475
        %v5604 = vsub.f32 0.0, %v5476
        %v5605 = vsub.f32 0.0, %v5477
        %v5606 = vsub.f32 0.0, %v5478
        %v5607 = vsub.f32 0.0, %v5479
        %v5608 = vsub.f32 0.0, %v5480
        %v5609 = vsub.f32 0.0, %v5481
        %v5610 = vsub.f32 0.0, %v5482
        %v5611 = vsub.f32 0.0, %v5483
        %v5612 = vsub.f32 0.0, %v5484
        %v5613 = vsub.f32 0.0, %v5485
        %v5614 = vsub.f32 0.0, %v5486
        %v5615 = vsub.f32 0.0, %v5487
        %v5616 = vsub.f32 0.0, %v5488
        %v5617 = vsub.f32 0.0, %v5489
        %v5618 = vsub.f32 0.0, %v5490
        %v5619 = vsub.f32 0.0, %v5491
        %v5620 = vsub.f32 0.0, %v5492
        %v5621 = vsub.f32 0.0, %v5493
        %v5622 = vsub.f32 0.0, %v5494
        %v5623 = vsub.f32 0.0, %v5495
        %v5624 = vsub.f32 0.0, %v5496
        %v5625 = vsub.f32 0.0, %v5497
        %v5626 = vsub.f32 0.0, %v5498
        %v5627 = vsub.f32 0.0, %v5499
        %v5628 = vsub.f32 0.0, %v5500
        %v5629 = vsub.f32 0.0, %v5501
        %v5630 = vsub.f32 0.0, %v5502
        %v5631 = vsub.f32 0.0, %v5503
        %v5632 = vsub.f32 0.0, %v5504
        %v5633 = vsub.f32 0.0, %v5505
        %v5634 = vsub.f32 0.0, %v5506
        %v5635 = vsub.f32 0.0, %v5507
        %v5636 = vsub.f32 0.0, %v5508
        %v5637 = vsub.f32 0.0, %v5509
        %v5638 = vsub.f32 0.0, %v5510
        %v5639 = vsub.f32 0.0, %v5511
        %v5640 = vsub.f32 0.0, %v5512
        %v5641 = vsub.f32 0.0, %v5513
        %v5642 = vsub.f32 0.0, %v5514
        %v5643 = vsub.f32 0.0, %v5515
        %v5644 = vsub.f32 0.0, %v5516
        %v5645 = vsub.f32 0.0, %v5517
        %v5646 = vsub.f32 0.0, %v5518
        %v5647 = vsub.f32 0.0, %v5519
        %v5648 = vsub.f32 0.0, %v5520
        %v5649 = vsub.f32 0.0, %v5521
        %v5650 = vsub.f32 0.0, %v5522
        %v5651 = vsub.f32 0.0, %v5523
        %v5652 = vsub.f32 0.0, %v5524
        %v5653 = vsub.f32 0.0, %v5525
        %v5654 = vsub.f32 0.0, %v5526
        %v5655 = vsub.f32 0.0, %v5527
        %v5656 = vsub.f32 0.0, %v5528
        %v5657 = vsub.f32 0.0, %v5529
        %v5658 = vsub.f32 0.0, %v5530
        %v5659 = vsub.f32 0.0, %v5531
        %v5660 = vsub.f32 0.0, %v5532
        %v5661 = vsub.f32 0.0, %v5533
        %v5662 = vsub.f32 0.0, %v5534
        %v5663 = vsub.f32 0.0, %v5535
        %v5664 = vsub.f32 0.0, %v5536
        %v5665 = vsub.f32 0.0, %v5537
        %v5666 = vsub.f32 0.0, %v5538
        %v5667 = vsub.f32 0.0, %v5539
        %v5668 = vsub.f32 0.0, %v5540
        %v5669 = vsub.f32 0.0, %v5541
        %v5670 = vsub.f32 0.0, %v5542
        %v5671 = vsub.f32 0.0, %v5543
        %v5672 = vsub.f32 0.0, %v5544
        %v5673 = vsub.f32 0.0, %v5545
        %v5674 = vsub.f32 0.0, %v5546
        %v5675 = vsub.f32 0.0, %v5547
        %v5676 = vsub.f32 0.0, %v5548
        %v5677 = vsub.f32 0.0, %v5549
        %v5678 = vsub.f32 0.0, %v5550
        %v5679 = vsub.f32 0.0, %v5551
        %v5680 = vsub.f32 0.0, %v5552
        %v5681 = vsub.f32 0.0, %v5553
        %v5682 = vmul.f32 %v5554, 1.442695
        %v5683 = vpow.pop %v5682
        %v5684 = vmul.f32 %v5555, 1.442695
        %v5685 = vpow.pop %v5684
        %v5686 = vmul.f32 %v5556, 1.442695
        %v5687 = vpow.pop %v5686
        %v5688 = vmul.f32 %v5557, 1.442695
        %v5689 = vpow.pop %v5688
        %v5690 = vmul.f32 %v5558, 1.442695
        %v5691 = vpow.pop %v5690
        %v5692 = vmul.f32 %v5559, 1.442695
        %v5693 = vpow.pop %v5692
        %v5694 = vmul.f32 %v5560, 1.442695
        %v5695 = vpow.pop %v5694
        %v5696 = vmul.f32 %v5561, 1.442695
        %v5697 = vpow.pop %v5696
        %v5698 = vmul.f32 %v5562, 1.442695
        %v5699 = vpow.pop %v5698
        %v5700 = vmul.f32 %v5563, 1.442695
        %v5701 = vpow.pop %v5700
        %v5702 = vmul.f32 %v5564, 1.442695
        %v5703 = vpow.pop %v5702
        %v5704 = vmul.f32 %v5565, 1.442695
        %v5705 = vpow.pop %v5704
        %v5706 = vmul.f32 %v5566, 1.442695
        %v5707 = vpow.pop %v5706
        %v5708 = vmul.f32 %v5567, 1.442695
        %v5709 = vpow.pop %v5708
        %v5710 = vmul.f32 %v5568, 1.442695
        %v5711 = vpow.pop %v5710
        %v5712 = vmul.f32 %v5569, 1.442695
        %v5713 = vpow.pop %v5712
        %v5714 = vmul.f32 %v5570, 1.442695
        %v5715 = vpow.pop %v5714
        %v5716 = vmul.f32 %v5571, 1.442695
        %v5717 = vpow.pop %v5716
        %v5718 = vmul.f32 %v5572, 1.442695
        %v5719 = vpow.pop %v5718
        %v5720 = vmul.f32 %v5573, 1.442695
        %v5721 = vpow.pop %v5720
        %v5722 = vmul.f32 %v5574, 1.442695
        %v5723 = vpow.pop %v5722
        %v5724 = vmul.f32 %v5575, 1.442695
        %v5725 = vpow.pop %v5724
        %v5726 = vmul.f32 %v5576, 1.442695
        %v5727 = vpow.pop %v5726
        %v5728 = vmul.f32 %v5577, 1.442695
        %v5729 = vpow.pop %v5728
        %v5730 = vmul.f32 %v5578, 1.442695
        %v5731 = vpow.pop %v5730
        %v5732 = vmul.f32 %v5579, 1.442695
        %v5733 = vpow.pop %v5732
        %v5734 = vmul.f32 %v5580, 1.442695
        %v5735 = vpow.pop %v5734
        %v5736 = vmul.f32 %v5581, 1.442695
        %v5737 = vpow.pop %v5736
        %v5738 = vmul.f32 %v5582, 1.442695
        %v5739 = vpow.pop %v5738
        %v5740 = vmul.f32 %v5583, 1.442695
        %v5741 = vpow.pop %v5740
        %v5742 = vmul.f32 %v5584, 1.442695
        %v5743 = vpow.pop %v5742
        %v5744 = vmul.f32 %v5585, 1.442695
        %v5745 = vpow.pop %v5744
        %v5746 = vmul.f32 %v5586, 1.442695
        %v5747 = vpow.pop %v5746
        %v5748 = vmul.f32 %v5587, 1.442695
        %v5749 = vpow.pop %v5748
        %v5750 = vmul.f32 %v5588, 1.442695
        %v5751 = vpow.pop %v5750
        %v5752 = vmul.f32 %v5589, 1.442695
        %v5753 = vpow.pop %v5752
        %v5754 = vmul.f32 %v5590, 1.442695
        %v5755 = vpow.pop %v5754
        %v5756 = vmul.f32 %v5591, 1.442695
        %v5757 = vpow.pop %v5756
        %v5758 = vmul.f32 %v5592, 1.442695
        %v5759 = vpow.pop %v5758
        %v5760 = vmul.f32 %v5593, 1.442695
        %v5761 = vpow.pop %v5760
        %v5762 = vmul.f32 %v5594, 1.442695
        %v5763 = vpow.pop %v5762
        %v5764 = vmul.f32 %v5595, 1.442695
        %v5765 = vpow.pop %v5764
        %v5766 = vmul.f32 %v5596, 1.442695
        %v5767 = vpow.pop %v5766
        %v5768 = vmul.f32 %v5597, 1.442695
        %v5769 = vpow.pop %v5768
        %v5770 = vmul.f32 %v5598, 1.442695
        %v5771 = vpow.pop %v5770
        %v5772 = vmul.f32 %v5599, 1.442695
        %v5773 = vpow.pop %v5772
        %v5774 = vmul.f32 %v5600, 1.442695
        %v5775 = vpow.pop %v5774
        %v5776 = vmul.f32 %v5601, 1.442695
        %v5777 = vpow.pop %v5776
        %v5778 = vmul.f32 %v5602, 1.442695
        %v5779 = vpow.pop %v5778
        %v5780 = vmul.f32 %v5603, 1.442695
        %v5781 = vpow.pop %v5780
        %v5782 = vmul.f32 %v5604, 1.442695
        %v5783 = vpow.pop %v5782
        %v5784 = vmul.f32 %v5605, 1.442695
        %v5785 = vpow.pop %v5784
        %v5786 = vmul.f32 %v5606, 1.442695
        %v5787 = vpow.pop %v5786
        %v5788 = vmul.f32 %v5607, 1.442695
        %v5789 = vpow.pop %v5788
        %v5790 = vmul.f32 %v5608, 1.442695
        %v5791 = vpow.pop %v5790
        %v5792 = vmul.f32 %v5609, 1.442695
        %v5793 = vpow.pop %v5792
        %v5794 = vmul.f32 %v5610, 1.442695
        %v5795 = vpow.pop %v5794
        %v5796 = vmul.f32 %v5611, 1.442695
        %v5797 = vpow.pop %v5796
        %v5798 = vmul.f32 %v5612, 1.442695
        %v5799 = vpow.pop %v5798
        %v5800 = vmul.f32 %v5613, 1.442695
        %v5801 = vpow.pop %v5800
        %v5802 = vmul.f32 %v5614, 1.442695
        %v5803 = vpow.pop %v5802
        %v5804 = vmul.f32 %v5615, 1.442695
        %v5805 = vpow.pop %v5804
        %v5806 = vmul.f32 %v5616, 1.442695
        %v5807 = vpow.pop %v5806
        %v5808 = vmul.f32 %v5617, 1.442695
        %v5809 = vpow.pop %v5808
        %v5810 = vmul.f32 %v5618, 1.442695
        %v5811 = vpow.pop %v5810
        %v5812 = vmul.f32 %v5619, 1.442695
        %v5813 = vpow.pop %v5812
        %v5814 = vmul.f32 %v5620, 1.442695
        %v5815 = vpow.pop %v5814
        %v5816 = vmul.f32 %v5621, 1.442695
        %v5817 = vpow.pop %v5816
        %v5818 = vmul.f32 %v5622, 1.442695
        %v5819 = vpow.pop %v5818
        %v5820 = vmul.f32 %v5623, 1.442695
        %v5821 = vpow.pop %v5820
        %v5822 = vmul.f32 %v5624, 1.442695
        %v5823 = vpow.pop %v5822
        %v5824 = vmul.f32 %v5625, 1.442695
        %v5825 = vpow.pop %v5824
        %v5826 = vmul.f32 %v5626, 1.442695
        %v5827 = vpow.pop %v5826
        %v5828 = vmul.f32 %v5627, 1.442695
        %v5829 = vpow.pop %v5828
        %v5830 = vmul.f32 %v5628, 1.442695
        %v5831 = vpow.pop %v5830
        %v5832 = vmul.f32 %v5629, 1.442695
        %v5833 = vpow.pop %v5832
        %v5834 = vmul.f32 %v5630, 1.442695
        %v5835 = vpow.pop %v5834
        %v5836 = vmul.f32 %v5631, 1.442695
        %v5837 = vpow.pop %v5836
        %v5838 = vmul.f32 %v5632, 1.442695
        %v5839 = vpow.pop %v5838
        %v5840 = vmul.f32 %v5633, 1.442695
        %v5841 = vpow.pop %v5840
        %v5842 = vmul.f32 %v5634, 1.442695
        %v5843 = vpow.pop %v5842
        %v5844 = vmul.f32 %v5635, 1.442695
        %v5845 = vpow.pop %v5844
        %v5846 = vmul.f32 %v5636, 1.442695
        %v5847 = vpow.pop %v5846
        %v5848 = vmul.f32 %v5637, 1.442695
        %v5849 = vpow.pop %v5848
        %v5850 = vmul.f32 %v5638, 1.442695
        %v5851 = vpow.pop %v5850
        %v5852 = vmul.f32 %v5639, 1.442695
        %v5853 = vpow.pop %v5852
        %v5854 = vmul.f32 %v5640, 1.442695
        %v5855 = vpow.pop %v5854
        %v5856 = vmul.f32 %v5641, 1.442695
        %v5857 = vpow.pop %v5856
        %v5858 = vmul.f32 %v5642, 1.442695
        %v5859 = vpow.pop %v5858
        %v5860 = vmul.f32 %v5643, 1.442695
        %v5861 = vpow.pop %v5860
        %v5862 = vmul.f32 %v5644, 1.442695
        %v5863 = vpow.pop %v5862
        %v5864 = vmul.f32 %v5645, 1.442695
        %v5865 = vpow.pop %v5864
        %v5866 = vmul.f32 %v5646, 1.442695
        %v5867 = vpow.pop %v5866
        %v5868 = vmul.f32 %v5647, 1.442695
        %v5869 = vpow.pop %v5868
        %v5870 = vmul.f32 %v5648, 1.442695
        %v5871 = vpow.pop %v5870
        %v5872 = vmul.f32 %v5649, 1.442695
        %v5873 = vpow.pop %v5872
        %v5874 = vmul.f32 %v5650, 1.442695
        %v5875 = vpow.pop %v5874
        %v5876 = vmul.f32 %v5651, 1.442695
        %v5877 = vpow.pop %v5876
        %v5878 = vmul.f32 %v5652, 1.442695
        %v5879 = vpow.pop %v5878
        %v5880 = vmul.f32 %v5653, 1.442695
        %v5881 = vpow.pop %v5880
        %v5882 = vmul.f32 %v5654, 1.442695
        %v5883 = vpow.pop %v5882
        %v5884 = vmul.f32 %v5655, 1.442695
        %v5885 = vpow.pop %v5884
        %v5886 = vmul.f32 %v5656, 1.442695
        %v5887 = vpow.pop %v5886
        %v5888 = vmul.f32 %v5657, 1.442695
        %v5889 = vpow.pop %v5888
        %v5890 = vmul.f32 %v5658, 1.442695
        %v5891 = vpow.pop %v5890
        %v5892 = vmul.f32 %v5659, 1.442695
        %v5893 = vpow.pop %v5892
        %v5894 = vmul.f32 %v5660, 1.442695
        %v5895 = vpow.pop %v5894
        %v5896 = vmul.f32 %v5661, 1.442695
        %v5897 = vpow.pop %v5896
        %v5898 = vmul.f32 %v5662, 1.442695
        %v5899 = vpow.pop %v5898
        %v5900 = vmul.f32 %v5663, 1.442695
        %v5901 = vpow.pop %v5900
        %v5902 = vmul.f32 %v5664, 1.442695
        %v5903 = vpow.pop %v5902
        %v5904 = vmul.f32 %v5665, 1.442695
        %v5905 = vpow.pop %v5904
        %v5906 = vmul.f32 %v5666, 1.442695
        %v5907 = vpow.pop %v5906
        %v5908 = vmul.f32 %v5667, 1.442695
        %v5909 = vpow.pop %v5908
        %v5910 = vmul.f32 %v5668, 1.442695
        %v5911 = vpow.pop %v5910
        %v5912 = vmul.f32 %v5669, 1.442695
        %v5913 = vpow.pop %v5912
        %v5914 = vmul.f32 %v5670, 1.442695
        %v5915 = vpow.pop %v5914
        %v5916 = vmul.f32 %v5671, 1.442695
        %v5917 = vpow.pop %v5916
        %v5918 = vmul.f32 %v5672, 1.442695
        %v5919 = vpow.pop %v5918
        %v5920 = vmul.f32 %v5673, 1.442695
        %v5921 = vpow.pop %v5920
        %v5922 = vmul.f32 %v5674, 1.442695
        %v5923 = vpow.pop %v5922
        %v5924 = vmul.f32 %v5675, 1.442695
        %v5925 = vpow.pop %v5924
        %v5926 = vmul.f32 %v5676, 1.442695
        %v5927 = vpow.pop %v5926
        %v5928 = vmul.f32 %v5677, 1.442695
        %v5929 = vpow.pop %v5928
        %v5930 = vmul.f32 %v5678, 1.442695
        %v5931 = vpow.pop %v5930
        %v5932 = vmul.f32 %v5679, 1.442695
        %v5933 = vpow.pop %v5932
        %v5934 = vmul.f32 %v5680, 1.442695
        %v5935 = vpow.pop %v5934
        %v5936 = vmul.f32 %v5681, 1.442695
        %v5937 = vpow.pop %v5936
        %v5938 = vadd.f32 %v5683, 1.0
        %v5939 = vadd.f32 %v5685, 1.0
        %v5940 = vadd.f32 %v5687, 1.0
        %v5941 = vadd.f32 %v5689, 1.0
        %v5942 = vadd.f32 %v5691, 1.0
        %v5943 = vadd.f32 %v5693, 1.0
        %v5944 = vadd.f32 %v5695, 1.0
        %v5945 = vadd.f32 %v5697, 1.0
        %v5946 = vadd.f32 %v5699, 1.0
        %v5947 = vadd.f32 %v5701, 1.0
        %v5948 = vadd.f32 %v5703, 1.0
        %v5949 = vadd.f32 %v5705, 1.0
        %v5950 = vadd.f32 %v5707, 1.0
        %v5951 = vadd.f32 %v5709, 1.0
        %v5952 = vadd.f32 %v5711, 1.0
        %v5953 = vadd.f32 %v5713, 1.0
        %v5954 = vadd.f32 %v5715, 1.0
        %v5955 = vadd.f32 %v5717, 1.0
        %v5956 = vadd.f32 %v5719, 1.0
        %v5957 = vadd.f32 %v5721, 1.0
        %v5958 = vadd.f32 %v5723, 1.0
        %v5959 = vadd.f32 %v5725, 1.0
        %v5960 = vadd.f32 %v5727, 1.0
        %v5961 = vadd.f32 %v5729, 1.0
        %v5962 = vadd.f32 %v5731, 1.0
        %v5963 = vadd.f32 %v5733, 1.0
        %v5964 = vadd.f32 %v5735, 1.0
        %v5965 = vadd.f32 %v5737, 1.0
        %v5966 = vadd.f32 %v5739, 1.0
        %v5967 = vadd.f32 %v5741, 1.0
        %v5968 = vadd.f32 %v5743, 1.0
        %v5969 = vadd.f32 %v5745, 1.0
        %v5970 = vadd.f32 %v5747, 1.0
        %v5971 = vadd.f32 %v5749, 1.0
        %v5972 = vadd.f32 %v5751, 1.0
        %v5973 = vadd.f32 %v5753, 1.0
        %v5974 = vadd.f32 %v5755, 1.0
        %v5975 = vadd.f32 %v5757, 1.0
        %v5976 = vadd.f32 %v5759, 1.0
        %v5977 = vadd.f32 %v5761, 1.0
        %v5978 = vadd.f32 %v5763, 1.0
        %v5979 = vadd.f32 %v5765, 1.0
        %v5980 = vadd.f32 %v5767, 1.0
        %v5981 = vadd.f32 %v5769, 1.0
        %v5982 = vadd.f32 %v5771, 1.0
        %v5983 = vadd.f32 %v5773, 1.0
        %v5984 = vadd.f32 %v5775, 1.0
        %v5985 = vadd.f32 %v5777, 1.0
        %v5986 = vadd.f32 %v5779, 1.0
        %v5987 = vadd.f32 %v5781, 1.0
        %v5988 = vadd.f32 %v5783, 1.0
        %v5989 = vadd.f32 %v5785, 1.0
        %v5990 = vadd.f32 %v5787, 1.0
        %v5991 = vadd.f32 %v5789, 1.0
        %v5992 = vadd.f32 %v5791, 1.0
        %v5993 = vadd.f32 %v5793, 1.0
        %v5994 = vadd.f32 %v5795, 1.0
        %v5995 = vadd.f32 %v5797, 1.0
        %v5996 = vadd.f32 %v5799, 1.0
        %v5997 = vadd.f32 %v5801, 1.0
        %v5998 = vadd.f32 %v5803, 1.0
        %v5999 = vadd.f32 %v5805, 1.0
        %v6000 = vadd.f32 %v5807, 1.0
        %v6001 = vadd.f32 %v5809, 1.0
        %v6002 = vadd.f32 %v5811, 1.0
        %v6003 = vadd.f32 %v5813, 1.0
        %v6004 = vadd.f32 %v5815, 1.0
        %v6005 = vadd.f32 %v5817, 1.0
        %v6006 = vadd.f32 %v5819, 1.0
        %v6007 = vadd.f32 %v5821, 1.0
        %v6008 = vadd.f32 %v5823, 1.0
        %v6009 = vadd.f32 %v5825, 1.0
        %v6010 = vadd.f32 %v5827, 1.0
        %v6011 = vadd.f32 %v5829, 1.0
        %v6012 = vadd.f32 %v5831, 1.0
        %v6013 = vadd.f32 %v5833, 1.0
        %v6014 = vadd.f32 %v5835, 1.0
        %v6015 = vadd.f32 %v5837, 1.0
        %v6016 = vadd.f32 %v5839, 1.0
        %v6017 = vadd.f32 %v5841, 1.0
        %v6018 = vadd.f32 %v5843, 1.0
        %v6019 = vadd.f32 %v5845, 1.0
        %v6020 = vadd.f32 %v5847, 1.0
        %v6021 = vadd.f32 %v5849, 1.0
        %v6022 = vadd.f32 %v5851, 1.0
        %v6023 = vadd.f32 %v5853, 1.0
        %v6024 = vadd.f32 %v5855, 1.0
        %v6025 = vadd.f32 %v5857, 1.0
        %v6026 = vadd.f32 %v5859, 1.0
        %v6027 = vadd.f32 %v5861, 1.0
        %v6028 = vadd.f32 %v5863, 1.0
        %v6029 = vadd.f32 %v5865, 1.0
        %v6030 = vadd.f32 %v5867, 1.0
        %v6031 = vadd.f32 %v5869, 1.0
        %v6032 = vadd.f32 %v5871, 1.0
        %v6033 = vadd.f32 %v5873, 1.0
        %v6034 = vadd.f32 %v5875, 1.0
        %v6035 = vadd.f32 %v5877, 1.0
        %v6036 = vadd.f32 %v5879, 1.0
        %v6037 = vadd.f32 %v5881, 1.0
        %v6038 = vadd.f32 %v5883, 1.0
        %v6039 = vadd.f32 %v5885, 1.0
        %v6040 = vadd.f32 %v5887, 1.0
        %v6041 = vadd.f32 %v5889, 1.0
        %v6042 = vadd.f32 %v5891, 1.0
        %v6043 = vadd.f32 %v5893, 1.0
        %v6044 = vadd.f32 %v5895, 1.0
        %v6045 = vadd.f32 %v5897, 1.0
        %v6046 = vadd.f32 %v5899, 1.0
        %v6047 = vadd.f32 %v5901, 1.0
        %v6048 = vadd.f32 %v5903, 1.0
        %v6049 = vadd.f32 %v5905, 1.0
        %v6050 = vadd.f32 %v5907, 1.0
        %v6051 = vadd.f32 %v5909, 1.0
        %v6052 = vadd.f32 %v5911, 1.0
        %v6053 = vadd.f32 %v5913, 1.0
        %v6054 = vadd.f32 %v5915, 1.0
        %v6055 = vadd.f32 %v5917, 1.0
        %v6056 = vadd.f32 %v5919, 1.0
        %v6057 = vadd.f32 %v5921, 1.0
        %v6058 = vadd.f32 %v5923, 1.0
        %v6059 = vadd.f32 %v5925, 1.0
        %v6060 = vadd.f32 %v5927, 1.0
        %v6061 = vadd.f32 %v5929, 1.0
        %v6062 = vadd.f32 %v5931, 1.0
        %v6063 = vadd.f32 %v5933, 1.0
        %v6064 = vadd.f32 %v5935, 1.0
        %v6065 = vadd.f32 %v5937, 1.0
        %v6066 = vrcp.pop %v5938
        %v6067 = vrcp.pop %v5939
        %v6068 = vrcp.pop %v5940
        %v6069 = vrcp.pop %v5941
        %v6070 = vrcp.pop %v5942
        %v6071 = vrcp.pop %v5943
        %v6072 = vrcp.pop %v5944
        %v6073 = vrcp.pop %v5945
        %v6074 = vrcp.pop %v5946
        %v6075 = vrcp.pop %v5947
        %v6076 = vrcp.pop %v5948
        %v6077 = vrcp.pop %v5949
        %v6078 = vrcp.pop %v5950
        %v6079 = vrcp.pop %v5951
        %v6080 = vrcp.pop %v5952
        %v6081 = vrcp.pop %v5953
        %v6082 = vrcp.pop %v5954
        %v6083 = vrcp.pop %v5955
        %v6084 = vrcp.pop %v5956
        %v6085 = vrcp.pop %v5957
        %v6086 = vrcp.pop %v5958
        %v6087 = vrcp.pop %v5959
        %v6088 = vrcp.pop %v5960
        %v6089 = vrcp.pop %v5961
        %v6090 = vrcp.pop %v5962
        %v6091 = vrcp.pop %v5963
        %v6092 = vrcp.pop %v5964
        %v6093 = vrcp.pop %v5965
        %v6094 = vrcp.pop %v5966
        %v6095 = vrcp.pop %v5967
        %v6096 = vrcp.pop %v5968
        %v6097 = vrcp.pop %v5969
        %v6098 = vrcp.pop %v5970
        %v6099 = vrcp.pop %v5971
        %v6100 = vrcp.pop %v5972
        %v6101 = vrcp.pop %v5973
        %v6102 = vrcp.pop %v5974
        %v6103 = vrcp.pop %v5975
        %v6104 = vrcp.pop %v5976
        %v6105 = vrcp.pop %v5977
        %v6106 = vrcp.pop %v5978
        %v6107 = vrcp.pop %v5979
        %v6108 = vrcp.pop %v5980
        %v6109 = vrcp.pop %v5981
        %v6110 = vrcp.pop %v5982
        %v6111 = vrcp.pop %v5983
        %v6112 = vrcp.pop %v5984
        %v6113 = vrcp.pop %v5985
        %v6114 = vrcp.pop %v5986
        %v6115 = vrcp.pop %v5987
        %v6116 = vrcp.pop %v5988
        %v6117 = vrcp.pop %v5989
        %v6118 = vrcp.pop %v5990
        %v6119 = vrcp.pop %v5991
        %v6120 = vrcp.pop %v5992
        %v6121 = vrcp.pop %v5993
        %v6122 = vrcp.pop %v5994
        %v6123 = vrcp.pop %v5995
        %v6124 = vrcp.pop %v5996
        %v6125 = vrcp.pop %v5997
        %v6126 = vrcp.pop %v5998
        %v6127 = vrcp.pop %v5999
        %v6128 = vrcp.pop %v6000
        %v6129 = vrcp.pop %v6001
        %v6130 = vrcp.pop %v6002
        %v6131 = vrcp.pop %v6003
        %v6132 = vrcp.pop %v6004
        %v6133 = vrcp.pop %v6005
        %v6134 = vrcp.pop %v6006
        %v6135 = vrcp.pop %v6007
        %v6136 = vrcp.pop %v6008
        %v6137 = vrcp.pop %v6009
        %v6138 = vrcp.pop %v6010
        %v6139 = vrcp.pop %v6011
        %v6140 = vrcp.pop %v6012
        %v6141 = vrcp.pop %v6013
        %v6142 = vrcp.pop %v6014
        %v6143 = vrcp.pop %v6015
        %v6144 = vrcp.pop %v6016
        %v6145 = vrcp.pop %v6017
        %v6146 = vrcp.pop %v6018
        %v6147 = vrcp.pop %v6019
        %v6148 = vrcp.pop %v6020
        %v6149 = vrcp.pop %v6021
        %v6150 = vrcp.pop %v6022
        %v6151 = vrcp.pop %v6023
        %v6152 = vrcp.pop %v6024
        %v6153 = vrcp.pop %v6025
        %v6154 = vrcp.pop %v6026
        %v6155 = vrcp.pop %v6027
        %v6156 = vrcp.pop %v6028
        %v6157 = vrcp.pop %v6029
        %v6158 = vrcp.pop %v6030
        %v6159 = vrcp.pop %v6031
        %v6160 = vrcp.pop %v6032
        %v6161 = vrcp.pop %v6033
        %v6162 = vrcp.pop %v6034
        %v6163 = vrcp.pop %v6035
        %v6164 = vrcp.pop %v6036
        %v6165 = vrcp.pop %v6037
        %v6166 = vrcp.pop %v6038
        %v6167 = vrcp.pop %v6039
        %v6168 = vrcp.pop %v6040
        %v6169 = vrcp.pop %v6041
        %v6170 = vrcp.pop %v6042
        %v6171 = vrcp.pop %v6043
        %v6172 = vrcp.pop %v6044
        %v6173 = vrcp.pop %v6045
        %v6174 = vrcp.pop %v6046
        %v6175 = vrcp.pop %v6047
        %v6176 = vrcp.pop %v6048
        %v6177 = vrcp.pop %v6049
        %v6178 = vrcp.pop %v6050
        %v6179 = vrcp.pop %v6051
        %v6180 = vrcp.pop %v6052
        %v6181 = vrcp.pop %v6053
        %v6182 = vrcp.pop %v6054
        %v6183 = vrcp.pop %v6055
        %v6184 = vrcp.pop %v6056
        %v6185 = vrcp.pop %v6057
        %v6186 = vrcp.pop %v6058
        %v6187 = vrcp.pop %v6059
        %v6188 = vrcp.pop %v6060
        %v6189 = vrcp.pop %v6061
        %v6190 = vrcp.pop %v6062
        %v6191 = vrcp.pop %v6063
        %v6192 = vrcp.pop %v6064
        %v6193 = vrcp.pop %v6065
        %v6194 = vmul.f32 %v5426, %v6066
        %v6195 = vmul.f32 %v5427, %v6067
        %v6196 = vmul.f32 %v5428, %v6068
        %v6197 = vmul.f32 %v5429, %v6069
        %v6198 = vmul.f32 %v5430, %v6070
        %v6199 = vmul.f32 %v5431, %v6071
        %v6200 = vmul.f32 %v5432, %v6072
        %v6201 = vmul.f32 %v5433, %v6073
        %v6202 = vmul.f32 %v5434, %v6074
        %v6203 = vmul.f32 %v5435, %v6075
        %v6204 = vmul.f32 %v5436, %v6076
        %v6205 = vmul.f32 %v5437, %v6077
        %v6206 = vmul.f32 %v5438, %v6078
        %v6207 = vmul.f32 %v5439, %v6079
        %v6208 = vmul.f32 %v5440, %v6080
        %v6209 = vmul.f32 %v5441, %v6081
        %v6210 = vmul.f32 %v5442, %v6082
        %v6211 = vmul.f32 %v5443, %v6083
        %v6212 = vmul.f32 %v5444, %v6084
        %v6213 = vmul.f32 %v5445, %v6085
        %v6214 = vmul.f32 %v5446, %v6086
        %v6215 = vmul.f32 %v5447, %v6087
        %v6216 = vmul.f32 %v5448, %v6088
        %v6217 = vmul.f32 %v5449, %v6089
        %v6218 = vmul.f32 %v5450, %v6090
        %v6219 = vmul.f32 %v5451, %v6091
        %v6220 = vmul.f32 %v5452, %v6092
        %v6221 = vmul.f32 %v5453, %v6093
        %v6222 = vmul.f32 %v5454, %v6094
        %v6223 = vmul.f32 %v5455, %v6095
        %v6224 = vmul.f32 %v5456, %v6096
        %v6225 = vmul.f32 %v5457, %v6097
        %v6226 = vmul.f32 %v5458, %v6098
        %v6227 = vmul.f32 %v5459, %v6099
        %v6228 = vmul.f32 %v5460, %v6100
        %v6229 = vmul.f32 %v5461, %v6101
        %v6230 = vmul.f32 %v5462, %v6102
        %v6231 = vmul.f32 %v5463, %v6103
        %v6232 = vmul.f32 %v5464, %v6104
        %v6233 = vmul.f32 %v5465, %v6105
        %v6234 = vmul.f32 %v5466, %v6106
        %v6235 = vmul.f32 %v5467, %v6107
        %v6236 = vmul.f32 %v5468, %v6108
        %v6237 = vmul.f32 %v5469, %v6109
        %v6238 = vmul.f32 %v5470, %v6110
        %v6239 = vmul.f32 %v5471, %v6111
        %v6240 = vmul.f32 %v5472, %v6112
        %v6241 = vmul.f32 %v5473, %v6113
        %v6242 = vmul.f32 %v5474, %v6114
        %v6243 = vmul.f32 %v5475, %v6115
        %v6244 = vmul.f32 %v5476, %v6116
        %v6245 = vmul.f32 %v5477, %v6117
        %v6246 = vmul.f32 %v5478, %v6118
        %v6247 = vmul.f32 %v5479, %v6119
        %v6248 = vmul.f32 %v5480, %v6120
        %v6249 = vmul.f32 %v5481, %v6121
        %v6250 = vmul.f32 %v5482, %v6122
        %v6251 = vmul.f32 %v5483, %v6123
        %v6252 = vmul.f32 %v5484, %v6124
        %v6253 = vmul.f32 %v5485, %v6125
        %v6254 = vmul.f32 %v5486, %v6126
        %v6255 = vmul.f32 %v5487, %v6127
        %v6256 = vmul.f32 %v5488, %v6128
        %v6257 = vmul.f32 %v5489, %v6129
        %v6258 = vmul.f32 %v5490, %v6130
        %v6259 = vmul.f32 %v5491, %v6131
        %v6260 = vmul.f32 %v5492, %v6132
        %v6261 = vmul.f32 %v5493, %v6133
        %v6262 = vmul.f32 %v5494, %v6134
        %v6263 = vmul.f32 %v5495, %v6135
        %v6264 = vmul.f32 %v5496, %v6136
        %v6265 = vmul.f32 %v5497, %v6137
        %v6266 = vmul.f32 %v5498, %v6138
        %v6267 = vmul.f32 %v5499, %v6139
        %v6268 = vmul.f32 %v5500, %v6140
        %v6269 = vmul.f32 %v5501, %v6141
        %v6270 = vmul.f32 %v5502, %v6142
        %v6271 = vmul.f32 %v5503, %v6143
        %v6272 = vmul.f32 %v5504, %v6144
        %v6273 = vmul.f32 %v5505, %v6145
        %v6274 = vmul.f32 %v5506, %v6146
        %v6275 = vmul.f32 %v5507, %v6147
        %v6276 = vmul.f32 %v5508, %v6148
        %v6277 = vmul.f32 %v5509, %v6149
        %v6278 = vmul.f32 %v5510, %v6150
        %v6279 = vmul.f32 %v5511, %v6151
        %v6280 = vmul.f32 %v5512, %v6152
        %v6281 = vmul.f32 %v5513, %v6153
        %v6282 = vmul.f32 %v5514, %v6154
        %v6283 = vmul.f32 %v5515, %v6155
        %v6284 = vmul.f32 %v5516, %v6156
        %v6285 = vmul.f32 %v5517, %v6157
        %v6286 = vmul.f32 %v5518, %v6158
        %v6287 = vmul.f32 %v5519, %v6159
        %v6288 = vmul.f32 %v5520, %v6160
        %v6289 = vmul.f32 %v5521, %v6161
        %v6290 = vmul.f32 %v5522, %v6162
        %v6291 = vmul.f32 %v5523, %v6163
        %v6292 = vmul.f32 %v5524, %v6164
        %v6293 = vmul.f32 %v5525, %v6165
        %v6294 = vmul.f32 %v5526, %v6166
        %v6295 = vmul.f32 %v5527, %v6167
        %v6296 = vmul.f32 %v5528, %v6168
        %v6297 = vmul.f32 %v5529, %v6169
        %v6298 = vmul.f32 %v5530, %v6170
        %v6299 = vmul.f32 %v5531, %v6171
        %v6300 = vmul.f32 %v5532, %v6172
        %v6301 = vmul.f32 %v5533, %v6173
        %v6302 = vmul.f32 %v5534, %v6174
        %v6303 = vmul.f32 %v5535, %v6175
        %v6304 = vmul.f32 %v5536, %v6176
        %v6305 = vmul.f32 %v5537, %v6177
        %v6306 = vmul.f32 %v5538, %v6178
        %v6307 = vmul.f32 %v5539, %v6179
        %v6308 = vmul.f32 %v5540, %v6180
        %v6309 = vmul.f32 %v5541, %v6181
        %v6310 = vmul.f32 %v5542, %v6182
        %v6311 = vmul.f32 %v5543, %v6183
        %v6312 = vmul.f32 %v5544, %v6184
        %v6313 = vmul.f32 %v5545, %v6185
        %v6314 = vmul.f32 %v5546, %v6186
        %v6315 = vmul.f32 %v5547, %v6187
        %v6316 = vmul.f32 %v5548, %v6188
        %v6317 = vmul.f32 %v5549, %v6189
        %v6318 = vmul.f32 %v5550, %v6190
        %v6319 = vmul.f32 %v5551, %v6191
        %v6320 = vmul.f32 %v5552, %v6192
        %v6321 = vmul.f32 %v5553, %v6193
        %v6322 = vpack.c.bf16 %v6195, %v6194
        %v6323 = vpack.c.bf16 %v6197, %v6196
        %v6324 = vpack.c.bf16 %v6199, %v6198
        %v6325 = vpack.c.bf16 %v6201, %v6200
        %v6326 = vpack.c.bf16 %v6203, %v6202
        %v6327 = vpack.c.bf16 %v6205, %v6204
        %v6328 = vpack.c.bf16 %v6207, %v6206
        %v6329 = vpack.c.bf16 %v6209, %v6208
        %v6330 = vpack.c.bf16 %v6211, %v6210
        %v6331 = vpack.c.bf16 %v6213, %v6212
        %v6332 = vpack.c.bf16 %v6215, %v6214
        %v6333 = vpack.c.bf16 %v6217, %v6216
        %v6334 = vpack.c.bf16 %v6219, %v6218
        %v6335 = vpack.c.bf16 %v6221, %v6220
        %v6336 = vpack.c.bf16 %v6223, %v6222
        %v6337 = vpack.c.bf16 %v6225, %v6224
        %v6338 = vpack.c.bf16 %v6227, %v6226
        %v6339 = vpack.c.bf16 %v6229, %v6228
        %v6340 = vpack.c.bf16 %v6231, %v6230
        %v6341 = vpack.c.bf16 %v6233, %v6232
        %v6342 = vpack.c.bf16 %v6235, %v6234
        %v6343 = vpack.c.bf16 %v6237, %v6236
        %v6344 = vpack.c.bf16 %v6239, %v6238
        %v6345 = vpack.c.bf16 %v6241, %v6240
        %v6346 = vpack.c.bf16 %v6243, %v6242
        %v6347 = vpack.c.bf16 %v6245, %v6244
        %v6348 = vpack.c.bf16 %v6247, %v6246
        %v6349 = vpack.c.bf16 %v6249, %v6248
        %v6350 = vpack.c.bf16 %v6251, %v6250
        %v6351 = vpack.c.bf16 %v6253, %v6252
        %v6352 = vpack.c.bf16 %v6255, %v6254
        %v6353 = vpack.c.bf16 %v6257, %v6256
        %v6354 = vpack.c.bf16 %v6259, %v6258
        %v6355 = vpack.c.bf16 %v6261, %v6260
        %v6356 = vpack.c.bf16 %v6263, %v6262
        %v6357 = vpack.c.bf16 %v6265, %v6264
        %v6358 = vpack.c.bf16 %v6267, %v6266
        %v6359 = vpack.c.bf16 %v6269, %v6268
        %v6360 = vpack.c.bf16 %v6271, %v6270
        %v6361 = vpack.c.bf16 %v6273, %v6272
        %v6362 = vpack.c.bf16 %v6275, %v6274
        %v6363 = vpack.c.bf16 %v6277, %v6276
        %v6364 = vpack.c.bf16 %v6279, %v6278
        %v6365 = vpack.c.bf16 %v6281, %v6280
        %v6366 = vpack.c.bf16 %v6283, %v6282
        %v6367 = vpack.c.bf16 %v6285, %v6284
        %v6368 = vpack.c.bf16 %v6287, %v6286
        %v6369 = vpack.c.bf16 %v6289, %v6288
        %v6370 = vpack.c.bf16 %v6291, %v6290
        %v6371 = vpack.c.bf16 %v6293, %v6292
        %v6372 = vpack.c.bf16 %v6295, %v6294
        %v6373 = vpack.c.bf16 %v6297, %v6296
        %v6374 = vpack.c.bf16 %v6299, %v6298
        %v6375 = vpack.c.bf16 %v6301, %v6300
        %v6376 = vpack.c.bf16 %v6303, %v6302
        %v6377 = vpack.c.bf16 %v6305, %v6304
        %v6378 = vpack.c.bf16 %v6307, %v6306
        %v6379 = vpack.c.bf16 %v6309, %v6308
        %v6380 = vpack.c.bf16 %v6311, %v6310
        %v6381 = vpack.c.bf16 %v6313, %v6312
        %v6382 = vpack.c.bf16 %v6315, %v6314
        %v6383 = vpack.c.bf16 %v6317, %v6316
        %v6384 = vpack.c.bf16 %v6319, %v6318
        %v6385 = vpack.c.bf16 %v6321, %v6320
        %v6386 = vld [vmem:[#allocation19] sm:$0xf]
        %v6387 = vld [vmem:[#allocation19 + $0x4] sm:$0xf]
        %v6388 = vld [vmem:[#allocation19 + $0x8] sm:$0xf]
        %v6389 = vld [vmem:[#allocation19 + $0xc] sm:$0xf]
        %v6390 = vld [vmem:[#allocation19 + $0x10] sm:$0xf]
        %v6391 = vld [vmem:[#allocation19 + $0x14] sm:$0xf]
        %v6392 = vld [vmem:[#allocation19 + $0x18] sm:$0xf]
        %v6393 = vld [vmem:[#allocation19 + $0x1c] sm:$0xf]
        %v6394 = vld [vmem:[#allocation19 + $0x20] sm:$0xf]
        %v6395 = vld [vmem:[#allocation19 + $0x24] sm:$0xf]
        %v6396 = vld [vmem:[#allocation19 + $0x28] sm:$0xf]
        %v6397 = vld [vmem:[#allocation19 + $0x2c] sm:$0xf]
        %v6398 = vld [vmem:[#allocation19 + $0x30] sm:$0xf]
        %v6399 = vld [vmem:[#allocation19 + $0x34] sm:$0xf]
        %v6400 = vld [vmem:[#allocation19 + $0x38] sm:$0xf]
        %v6401 = vld [vmem:[#allocation19 + $0x3c] sm:$0xf]
        %v6418 = vunpack.c.l.b16 %v6386
        %v6419 = vunpack.c.l.b16 %v6387
        %v6420 = vunpack.c.l.b16 %v6388
        %v6421 = vunpack.c.l.b16 %v6389
        %v6422 = vunpack.c.l.b16 %v6390
        %v6423 = vunpack.c.l.b16 %v6391
        %v6424 = vunpack.c.l.b16 %v6392
        %v6425 = vunpack.c.l.b16 %v6393
        %v6426 = vunpack.c.l.b16 %v6394
        %v6427 = vunpack.c.l.b16 %v6395
        %v6428 = vunpack.c.l.b16 %v6396
        %v6429 = vunpack.c.l.b16 %v6397
        %v6430 = vunpack.c.l.b16 %v6398
        %v6431 = vunpack.c.l.b16 %v6399
        %v6432 = vunpack.c.l.b16 %v6400
        %v6433 = vunpack.c.l.b16 %v6401
        %v6434 = vpack.c.b16 %v6419, %v6418
        %v6435 = vpack.c.b16 %v6421, %v6420
        %v6436 = vpack.c.b16 %v6423, %v6422
        %v6437 = vpack.c.b16 %v6425, %v6424
        %v6438 = vpack.c.b16 %v6427, %v6426
        %v6439 = vpack.c.b16 %v6429, %v6428
        %v6440 = vpack.c.b16 %v6431, %v6430
        %v6441 = vpack.c.b16 %v6433, %v6432
        %6450 = vmatprep.subr.bf16.mxu0 0
        %6451 = vmatpush1.bf16.msra.mxu0 %v6434
        %6452 = vmatprep.subr.bf16.mxu0 0
        %6453 = vmatpush1.bf16.msra.mxu0 %v6435
        %6454 = vmatprep.subr.bf16.mxu0 0
        %6455 = vmatpush1.bf16.msra.mxu0 %v6436
        %6456 = vmatprep.subr.bf16.mxu0 0
        %6457 = vmatpush1.bf16.msra.mxu0 %v6437
        %6458 = vmatprep.subr.bf16.mxu0 0
        %6459 = vmatpush1.bf16.msra.mxu0 %v6438
        %6460 = vmatprep.subr.bf16.mxu0 0
        %6461 = vmatpush1.bf16.msra.mxu0 %v6439
        %6462 = vmatprep.subr.bf16.mxu0 0
        %6463 = vmatpush1.bf16.msra.mxu0 %v6440
        %6464 = vmatprep.subr.bf16.mxu0 0
        %6465 = vmatpush1.bf16.msra.mxu0 %v6441
        %6466 = vmatprep.subr.bf16.mxu0 0
        %6467 = vmatpush1.bf16.msra.mxu0 0
        %6468 = vmatprep.subr.bf16.mxu0 0
        %6469 = vmatpush1.bf16.msra.mxu0 0
        %6470 = vmatprep.subr.bf16.mxu0 0
        %6471 = vmatpush1.bf16.msra.mxu0 0
        %6472 = vmatprep.subr.bf16.mxu0 0
        %6473 = vmatpush1.bf16.msra.mxu0 0
        %6474 = vmatprep.subr.bf16.mxu0 0
        %6475 = vmatpush1.bf16.msra.mxu0 0
        %6476 = vmatprep.subr.bf16.mxu0 0
        %6477 = vmatpush1.bf16.msra.mxu0 0
        %6478 = vmatprep.subr.bf16.mxu0 0
        %6479 = vmatpush1.bf16.msra.mxu0 0
        %6480 = vmatprep.subr.bf16.mxu0 0
        %6481 = vmatpush1.bf16.msra.mxu0 0
        %6482 = vmatprep.mubr.bf16.mxu0 0
        %6483 = vmatmul.mubr.bf16.gmra.mrb[0].mxu0 %v6322
        %v6484 = vpop.f32.mrb[0].mxu0
        %v6485 = vadd.f32 0.0, %v6484
        %v6486 = vpop.f32.mrb[0].mxu0
        %v6487 = vpop.f32.mrb[0].mxu0
        %v6488 = vadd.f32 0.0, %v6487
        %v6489 = vpop.f32.mrb[0].mxu0
        %6490 = vmatprep.mubr.bf16.mxu0 0
        %6491 = vmatmul.mubr.bf16.gmra.mrb[0].mxu0 %v6323
        %v6492 = vpop.f32.mrb[0].mxu0
        %v6493 = vadd.f32 0.0, %v6492
        %v6494 = vpop.f32.mrb[0].mxu0
        %v6495 = vpop.f32.mrb[0].mxu0
        %v6496 = vadd.f32 0.0, %v6495
        %v6497 = vpop.f32.mrb[0].mxu0
        %6498 = vmatprep.mubr.bf16.mxu0 0
        %6499 = vmatmul.mubr.bf16.gmra.mrb[0].mxu0 %v6324
        %v6500 = vpop.f32.mrb[0].mxu0
        %v6501 = vadd.f32 0.0, %v6500
        %v6502 = vpop.f32.mrb[0].mxu0
        %v6503 = vpop.f32.mrb[0].mxu0
        %v6504 = vadd.f32 0.0, %v6503
        %v6505 = vpop.f32.mrb[0].mxu0
        %6506 = vmatprep.mubr.bf16.mxu0 0
        %6507 = vmatmul.mubr.bf16.gmra.mrb[0].mxu0 %v6325
        %v6508 = vpop.f32.mrb[0].mxu0
        %v6509 = vadd.f32 0.0, %v6508
        %v6510 = vpop.f32.mrb[0].mxu0
        %v6511 = vpop.f32.mrb[0].mxu0
        %v6512 = vadd.f32 0.0, %v6511
        %v6513 = vpop.f32.mrb[0].mxu0
        %6514 = vmatprep.mubr.bf16.mxu0 0
        %6515 = vmatmul.mubr.bf16.gmra.mrb[0].mxu0 %v6326
        %v6516 = vpop.f32.mrb[0].mxu0
        %v6517 = vadd.f32 0.0, %v6516
        %v6518 = vpop.f32.mrb[0].mxu0
        %v6519 = vpop.f32.mrb[0].mxu0
        %v6520 = vadd.f32 0.0, %v6519
        %v6521 = vpop.f32.mrb[0].mxu0
        %6522 = vmatprep.mubr.bf16.mxu0 0
        %6523 = vmatmul.mubr.bf16.gmra.mrb[0].mxu0 %v6327
        %v6524 = vpop.f32.mrb[0].mxu0
        %v6525 = vadd.f32 0.0, %v6524
        %v6526 = vpop.f32.mrb[0].mxu0
        %v6527 = vpop.f32.mrb[0].mxu0
        %v6528 = vadd.f32 0.0, %v6527
        %v6529 = vpop.f32.mrb[0].mxu0
        %6530 = vmatprep.mubr.bf16.mxu0 0
        %6531 = vmatmul.mubr.bf16.gmra.mrb[0].mxu0 %v6328
        %v6532 = vpop.f32.mrb[0].mxu0
        %v6533 = vadd.f32 0.0, %v6532
        %v6534 = vpop.f32.mrb[0].mxu0
        %v6535 = vpop.f32.mrb[0].mxu0
        %v6536 = vadd.f32 0.0, %v6535
        %v6537 = vpop.f32.mrb[0].mxu0
        %6538 = vmatprep.mubr.bf16.mxu0 0
        %6539 = vmatmul.mubr.bf16.gmra.mrb[0].mxu0 %v6329
        %v6540 = vpop.f32.mrb[0].mxu0
        %v6541 = vadd.f32 0.0, %v6540
        %v6542 = vpop.f32.mrb[0].mxu0
        %v6543 = vpop.f32.mrb[0].mxu0
        %v6544 = vadd.f32 0.0, %v6543
        %v6545 = vpop.f32.mrb[0].mxu0
        %6546 = vmatprep.mubr.bf16.mxu0 0
        %6547 = vmatmul.mubr.bf16.gmra.mrb[0].mxu0 %v6330
        %v6548 = vpop.f32.mrb[0].mxu0
        %v6549 = vadd.f32 0.0, %v6548
        %v6550 = vpop.f32.mrb[0].mxu0
        %v6551 = vpop.f32.mrb[0].mxu0
        %v6552 = vadd.f32 0.0, %v6551
        %v6553 = vpop.f32.mrb[0].mxu0
        %6554 = vmatprep.mubr.bf16.mxu0 0
        %6555 = vmatmul.mubr.bf16.gmra.mrb[0].mxu0 %v6331
        %v6556 = vpop.f32.mrb[0].mxu0
        %v6557 = vadd.f32 0.0, %v6556
        %v6558 = vpop.f32.mrb[0].mxu0
        %v6559 = vpop.f32.mrb[0].mxu0
        %v6560 = vadd.f32 0.0, %v6559
        %v6561 = vpop.f32.mrb[0].mxu0
        %6562 = vmatprep.mubr.bf16.mxu0 0
        %6563 = vmatmul.mubr.bf16.gmra.mrb[0].mxu0 %v6332
        %v6564 = vpop.f32.mrb[0].mxu0
        %v6565 = vadd.f32 0.0, %v6564
        %v6566 = vpop.f32.mrb[0].mxu0
        %v6567 = vpop.f32.mrb[0].mxu0
        %v6568 = vadd.f32 0.0, %v6567
        %v6569 = vpop.f32.mrb[0].mxu0
        %6570 = vmatprep.mubr.bf16.mxu0 0
        %6571 = vmatmul.mubr.bf16.gmra.mrb[0].mxu0 %v6333
        %v6572 = vpop.f32.mrb[0].mxu0
        %v6573 = vadd.f32 0.0, %v6572
        %v6574 = vpop.f32.mrb[0].mxu0
        %v6575 = vpop.f32.mrb[0].mxu0
        %v6576 = vadd.f32 0.0, %v6575
        %v6577 = vpop.f32.mrb[0].mxu0
        %6578 = vmatprep.mubr.bf16.mxu0 0
        %6579 = vmatmul.mubr.bf16.gmra.mrb[0].mxu0 %v6334
        %v6580 = vpop.f32.mrb[0].mxu0
        %v6581 = vadd.f32 0.0, %v6580
        %v6582 = vpop.f32.mrb[0].mxu0
        %v6583 = vpop.f32.mrb[0].mxu0
        %v6584 = vadd.f32 0.0, %v6583
        %v6585 = vpop.f32.mrb[0].mxu0
        %6586 = vmatprep.mubr.bf16.mxu0 0
        %6587 = vmatmul.mubr.bf16.gmra.mrb[0].mxu0 %v6335
        %v6588 = vpop.f32.mrb[0].mxu0
        %v6589 = vadd.f32 0.0, %v6588
        %v6590 = vpop.f32.mrb[0].mxu0
        %v6591 = vpop.f32.mrb[0].mxu0
        %v6592 = vadd.f32 0.0, %v6591
        %v6593 = vpop.f32.mrb[0].mxu0
        %6594 = vmatprep.mubr.bf16.mxu0 0
        %6595 = vmatmul.mubr.bf16.gmra.mrb[0].mxu0 %v6336
        %v6596 = vpop.f32.mrb[0].mxu0
        %v6597 = vadd.f32 0.0, %v6596
        %v6598 = vpop.f32.mrb[0].mxu0
        %v6599 = vpop.f32.mrb[0].mxu0
        %v6600 = vadd.f32 0.0, %v6599
        %v6601 = vpop.f32.mrb[0].mxu0
        %6602 = vmatprep.mubr.bf16.mxu0 0
        %6603 = vmatmul.mubr.bf16.gmra.mrb[0].mxu0 %v6337
        %v6604 = vpop.f32.mrb[0].mxu0
        %v6605 = vadd.f32 0.0, %v6604
        %v6606 = vpop.f32.mrb[0].mxu0
        %v6607 = vpop.f32.mrb[0].mxu0
        %v6608 = vadd.f32 0.0, %v6607
        %v6609 = vpop.f32.mrb[0].mxu0
        %6610 = vmatprep.mubr.bf16.mxu0 0
        %6611 = vmatmul.mubr.bf16.gmra.mrb[0].mxu0 %v6338
        %v6612 = vpop.f32.mrb[0].mxu0
        %v6613 = vadd.f32 0.0, %v6612
        %v6614 = vpop.f32.mrb[0].mxu0
        %v6615 = vpop.f32.mrb[0].mxu0
        %v6616 = vadd.f32 0.0, %v6615
        %v6617 = vpop.f32.mrb[0].mxu0
        %6618 = vmatprep.mubr.bf16.mxu0 0
        %6619 = vmatmul.mubr.bf16.gmra.mrb[0].mxu0 %v6339
        %v6620 = vpop.f32.mrb[0].mxu0
        %v6621 = vadd.f32 0.0, %v6620
        %v6622 = vpop.f32.mrb[0].mxu0
        %v6623 = vpop.f32.mrb[0].mxu0
        %v6624 = vadd.f32 0.0, %v6623
        %v6625 = vpop.f32.mrb[0].mxu0
        %6626 = vmatprep.mubr.bf16.mxu0 0
        %6627 = vmatmul.mubr.bf16.gmra.mrb[0].mxu0 %v6340
        %v6628 = vpop.f32.mrb[0].mxu0
        %v6629 = vadd.f32 0.0, %v6628
        %v6630 = vpop.f32.mrb[0].mxu0
        %v6631 = vpop.f32.mrb[0].mxu0
        %v6632 = vadd.f32 0.0, %v6631
        %v6633 = vpop.f32.mrb[0].mxu0
        %6634 = vmatprep.mubr.bf16.mxu0 0
        %6635 = vmatmul.mubr.bf16.gmra.mrb[0].mxu0 %v6341
        %v6636 = vpop.f32.mrb[0].mxu0
        %v6637 = vadd.f32 0.0, %v6636
        %v6638 = vpop.f32.mrb[0].mxu0
        %v6639 = vpop.f32.mrb[0].mxu0
        %v6640 = vadd.f32 0.0, %v6639
        %v6641 = vpop.f32.mrb[0].mxu0
        %6642 = vmatprep.mubr.bf16.mxu0 0
        %6643 = vmatmul.mubr.bf16.gmra.mrb[0].mxu0 %v6342
        %v6644 = vpop.f32.mrb[0].mxu0
        %v6645 = vadd.f32 0.0, %v6644
        %v6646 = vpop.f32.mrb[0].mxu0
        %v6647 = vpop.f32.mrb[0].mxu0
        %v6648 = vadd.f32 0.0, %v6647
        %v6649 = vpop.f32.mrb[0].mxu0
        %6650 = vmatprep.mubr.bf16.mxu0 0
        %6651 = vmatmul.mubr.bf16.gmra.mrb[0].mxu0 %v6343
        %v6652 = vpop.f32.mrb[0].mxu0
        %v6653 = vadd.f32 0.0, %v6652
        %v6654 = vpop.f32.mrb[0].mxu0
        %v6655 = vpop.f32.mrb[0].mxu0
        %v6656 = vadd.f32 0.0, %v6655
        %v6657 = vpop.f32.mrb[0].mxu0
        %6658 = vmatprep.mubr.bf16.mxu0 0
        %6659 = vmatmul.mubr.bf16.gmra.mrb[0].mxu0 %v6344
        %v6660 = vpop.f32.mrb[0].mxu0
        %v6661 = vadd.f32 0.0, %v6660
        %v6662 = vpop.f32.mrb[0].mxu0
        %v6663 = vpop.f32.mrb[0].mxu0
        %v6664 = vadd.f32 0.0, %v6663
        %v6665 = vpop.f32.mrb[0].mxu0
        %6666 = vmatprep.mubr.bf16.mxu0 0
        %6667 = vmatmul.mubr.bf16.gmra.mrb[0].mxu0 %v6345
        %v6668 = vpop.f32.mrb[0].mxu0
        %v6669 = vadd.f32 0.0, %v6668
        %v6670 = vpop.f32.mrb[0].mxu0
        %v6671 = vpop.f32.mrb[0].mxu0
        %v6672 = vadd.f32 0.0, %v6671
        %v6673 = vpop.f32.mrb[0].mxu0
        %6674 = vmatprep.mubr.bf16.mxu0 0
        %6675 = vmatmul.mubr.bf16.gmra.mrb[0].mxu0 %v6346
        %v6676 = vpop.f32.mrb[0].mxu0
        %v6677 = vadd.f32 0.0, %v6676
        %v6678 = vpop.f32.mrb[0].mxu0
        %v6679 = vpop.f32.mrb[0].mxu0
        %v6680 = vadd.f32 0.0, %v6679
        %v6681 = vpop.f32.mrb[0].mxu0
        %6682 = vmatprep.mubr.bf16.mxu0 0
        %6683 = vmatmul.mubr.bf16.gmra.mrb[0].mxu0 %v6347
        %v6684 = vpop.f32.mrb[0].mxu0
        %v6685 = vadd.f32 0.0, %v6684
        %v6686 = vpop.f32.mrb[0].mxu0
        %v6687 = vpop.f32.mrb[0].mxu0
        %v6688 = vadd.f32 0.0, %v6687
        %v6689 = vpop.f32.mrb[0].mxu0
        %6690 = vmatprep.mubr.bf16.mxu0 0
        %6691 = vmatmul.mubr.bf16.gmra.mrb[0].mxu0 %v6348
        %v6692 = vpop.f32.mrb[0].mxu0
        %v6693 = vadd.f32 0.0, %v6692
        %v6694 = vpop.f32.mrb[0].mxu0
        %v6695 = vpop.f32.mrb[0].mxu0
        %v6696 = vadd.f32 0.0, %v6695
        %v6697 = vpop.f32.mrb[0].mxu0
        %6698 = vmatprep.mubr.bf16.mxu0 0
        %6699 = vmatmul.mubr.bf16.gmra.mrb[0].mxu0 %v6349
        %v6700 = vpop.f32.mrb[0].mxu0
        %v6701 = vadd.f32 0.0, %v6700
        %v6702 = vpop.f32.mrb[0].mxu0
        %v6703 = vpop.f32.mrb[0].mxu0
        %v6704 = vadd.f32 0.0, %v6703
        %v6705 = vpop.f32.mrb[0].mxu0
        %6706 = vmatprep.mubr.bf16.mxu0 0
        %6707 = vmatmul.mubr.bf16.gmra.mrb[0].mxu0 %v6350
        %v6708 = vpop.f32.mrb[0].mxu0
        %v6709 = vadd.f32 0.0, %v6708
        %v6710 = vpop.f32.mrb[0].mxu0
        %v6711 = vpop.f32.mrb[0].mxu0
        %v6712 = vadd.f32 0.0, %v6711
        %v6713 = vpop.f32.mrb[0].mxu0
        %6714 = vmatprep.mubr.bf16.mxu0 0
        %6715 = vmatmul.mubr.bf16.gmra.mrb[0].mxu0 %v6351
        %v6716 = vpop.f32.mrb[0].mxu0
        %v6717 = vadd.f32 0.0, %v6716
        %v6718 = vpop.f32.mrb[0].mxu0
        %v6719 = vpop.f32.mrb[0].mxu0
        %v6720 = vadd.f32 0.0, %v6719
        %v6721 = vpop.f32.mrb[0].mxu0
        %6722 = vmatprep.mubr.bf16.mxu0 0
        %6723 = vmatmul.mubr.bf16.gmra.mrb[0].mxu0 %v6352
        %v6724 = vpop.f32.mrb[0].mxu0
        %v6725 = vadd.f32 0.0, %v6724
        %v6726 = vpop.f32.mrb[0].mxu0
        %v6727 = vpop.f32.mrb[0].mxu0
        %v6728 = vadd.f32 0.0, %v6727
        %v6729 = vpop.f32.mrb[0].mxu0
        %6730 = vmatprep.mubr.bf16.mxu0 0
        %6731 = vmatmul.mubr.bf16.gmra.mrb[0].mxu0 %v6353
        %v6732 = vpop.f32.mrb[0].mxu0
        %v6733 = vadd.f32 0.0, %v6732
        %v6734 = vpop.f32.mrb[0].mxu0
        %v6735 = vpop.f32.mrb[0].mxu0
        %v6736 = vadd.f32 0.0, %v6735
        %v6737 = vpop.f32.mrb[0].mxu0
        %6738 = vmatprep.mubr.bf16.mxu0 0
        %6739 = vmatmul.mubr.bf16.gmra.mrb[0].mxu0 %v6354
        %v6740 = vpop.f32.mrb[0].mxu0
        %v6741 = vadd.f32 0.0, %v6740
        %v6742 = vpop.f32.mrb[0].mxu0
        %v6743 = vpop.f32.mrb[0].mxu0
        %v6744 = vadd.f32 0.0, %v6743
        %v6745 = vpop.f32.mrb[0].mxu0
        %6746 = vmatprep.mubr.bf16.mxu0 0
        %6747 = vmatmul.mubr.bf16.gmra.mrb[0].mxu0 %v6355
        %v6748 = vpop.f32.mrb[0].mxu0
        %v6749 = vadd.f32 0.0, %v6748
        %v6750 = vpop.f32.mrb[0].mxu0
        %v6751 = vpop.f32.mrb[0].mxu0
        %v6752 = vadd.f32 0.0, %v6751
        %v6753 = vpop.f32.mrb[0].mxu0
        %6754 = vmatprep.mubr.bf16.mxu0 0
        %6755 = vmatmul.mubr.bf16.gmra.mrb[0].mxu0 %v6356
        %v6756 = vpop.f32.mrb[0].mxu0
        %v6757 = vadd.f32 0.0, %v6756
        %v6758 = vpop.f32.mrb[0].mxu0
        %v6759 = vpop.f32.mrb[0].mxu0
        %v6760 = vadd.f32 0.0, %v6759
        %v6761 = vpop.f32.mrb[0].mxu0
        %6762 = vmatprep.mubr.bf16.mxu0 0
        %6763 = vmatmul.mubr.bf16.gmra.mrb[0].mxu0 %v6357
        %v6764 = vpop.f32.mrb[0].mxu0
        %v6765 = vadd.f32 0.0, %v6764
        %v6766 = vpop.f32.mrb[0].mxu0
        %v6767 = vpop.f32.mrb[0].mxu0
        %v6768 = vadd.f32 0.0, %v6767
        %v6769 = vpop.f32.mrb[0].mxu0
        %6770 = vmatprep.mubr.bf16.mxu0 0
        %6771 = vmatmul.mubr.bf16.gmra.mrb[0].mxu0 %v6358
        %v6772 = vpop.f32.mrb[0].mxu0
        %v6773 = vadd.f32 0.0, %v6772
        %v6774 = vpop.f32.mrb[0].mxu0
        %v6775 = vpop.f32.mrb[0].mxu0
        %v6776 = vadd.f32 0.0, %v6775
        %v6777 = vpop.f32.mrb[0].mxu0
        %6778 = vmatprep.mubr.bf16.mxu0 0
        %6779 = vmatmul.mubr.bf16.gmra.mrb[0].mxu0 %v6359
        %v6780 = vpop.f32.mrb[0].mxu0
        %v6781 = vadd.f32 0.0, %v6780
        %v6782 = vpop.f32.mrb[0].mxu0
        %v6783 = vpop.f32.mrb[0].mxu0
        %v6784 = vadd.f32 0.0, %v6783
        %v6785 = vpop.f32.mrb[0].mxu0
        %6786 = vmatprep.mubr.bf16.mxu0 0
        %6787 = vmatmul.mubr.bf16.gmra.mrb[0].mxu0 %v6360
        %v6788 = vpop.f32.mrb[0].mxu0
        %v6789 = vadd.f32 0.0, %v6788
        %v6790 = vpop.f32.mrb[0].mxu0
        %v6791 = vpop.f32.mrb[0].mxu0
        %v6792 = vadd.f32 0.0, %v6791
        %v6793 = vpop.f32.mrb[0].mxu0
        %6794 = vmatprep.mubr.bf16.mxu0 0
        %6795 = vmatmul.mubr.bf16.gmra.mrb[0].mxu0 %v6361
        %v6796 = vpop.f32.mrb[0].mxu0
        %v6797 = vadd.f32 0.0, %v6796
        %v6798 = vpop.f32.mrb[0].mxu0
        %v6799 = vpop.f32.mrb[0].mxu0
        %v6800 = vadd.f32 0.0, %v6799
        %v6801 = vpop.f32.mrb[0].mxu0
        %6802 = vmatprep.mubr.bf16.mxu0 0
        %6803 = vmatmul.mubr.bf16.gmra.mrb[0].mxu0 %v6362
        %v6804 = vpop.f32.mrb[0].mxu0
        %v6805 = vadd.f32 0.0, %v6804
        %v6806 = vpop.f32.mrb[0].mxu0
        %v6807 = vpop.f32.mrb[0].mxu0
        %v6808 = vadd.f32 0.0, %v6807
        %v6809 = vpop.f32.mrb[0].mxu0
        %6810 = vmatprep.mubr.bf16.mxu0 0
        %6811 = vmatmul.mubr.bf16.gmra.mrb[0].mxu0 %v6363
        %v6812 = vpop.f32.mrb[0].mxu0
        %v6813 = vadd.f32 0.0, %v6812
        %v6814 = vpop.f32.mrb[0].mxu0
        %v6815 = vpop.f32.mrb[0].mxu0
        %v6816 = vadd.f32 0.0, %v6815
        %v6817 = vpop.f32.mrb[0].mxu0
        %6818 = vmatprep.mubr.bf16.mxu0 0
        %6819 = vmatmul.mubr.bf16.gmra.mrb[0].mxu0 %v6364
        %v6820 = vpop.f32.mrb[0].mxu0
        %v6821 = vadd.f32 0.0, %v6820
        %v6822 = vpop.f32.mrb[0].mxu0
        %v6823 = vpop.f32.mrb[0].mxu0
        %v6824 = vadd.f32 0.0, %v6823
        %v6825 = vpop.f32.mrb[0].mxu0
        %6826 = vmatprep.mubr.bf16.mxu0 0
        %6827 = vmatmul.mubr.bf16.gmra.mrb[0].mxu0 %v6365
        %v6828 = vpop.f32.mrb[0].mxu0
        %v6829 = vadd.f32 0.0, %v6828
        %v6830 = vpop.f32.mrb[0].mxu0
        %v6831 = vpop.f32.mrb[0].mxu0
        %v6832 = vadd.f32 0.0, %v6831
        %v6833 = vpop.f32.mrb[0].mxu0
        %6834 = vmatprep.mubr.bf16.mxu0 0
        %6835 = vmatmul.mubr.bf16.gmra.mrb[0].mxu0 %v6366
        %v6836 = vpop.f32.mrb[0].mxu0
        %v6837 = vadd.f32 0.0, %v6836
        %v6838 = vpop.f32.mrb[0].mxu0
        %v6839 = vpop.f32.mrb[0].mxu0
        %v6840 = vadd.f32 0.0, %v6839
        %v6841 = vpop.f32.mrb[0].mxu0
        %6842 = vmatprep.mubr.bf16.mxu0 0
        %6843 = vmatmul.mubr.bf16.gmra.mrb[0].mxu0 %v6367
        %v6844 = vpop.f32.mrb[0].mxu0
        %v6845 = vadd.f32 0.0, %v6844
        %v6846 = vpop.f32.mrb[0].mxu0
        %v6847 = vpop.f32.mrb[0].mxu0
        %v6848 = vadd.f32 0.0, %v6847
        %v6849 = vpop.f32.mrb[0].mxu0
        %6850 = vmatprep.mubr.bf16.mxu0 0
        %6851 = vmatmul.mubr.bf16.gmra.mrb[0].mxu0 %v6368
        %v6852 = vpop.f32.mrb[0].mxu0
        %v6853 = vadd.f32 0.0, %v6852
        %v6854 = vpop.f32.mrb[0].mxu0
        %v6855 = vpop.f32.mrb[0].mxu0
        %v6856 = vadd.f32 0.0, %v6855
        %v6857 = vpop.f32.mrb[0].mxu0
        %6858 = vmatprep.mubr.bf16.mxu0 0
        %6859 = vmatmul.mubr.bf16.gmra.mrb[0].mxu0 %v6369
        %v6860 = vpop.f32.mrb[0].mxu0
        %v6861 = vadd.f32 0.0, %v6860
        %v6862 = vpop.f32.mrb[0].mxu0
        %v6863 = vpop.f32.mrb[0].mxu0
        %v6864 = vadd.f32 0.0, %v6863
        %v6865 = vpop.f32.mrb[0].mxu0
        %6866 = vmatprep.mubr.bf16.mxu0 0
        %6867 = vmatmul.mubr.bf16.gmra.mrb[0].mxu0 %v6370
        %v6868 = vpop.f32.mrb[0].mxu0
        %v6869 = vadd.f32 0.0, %v6868
        %v6870 = vpop.f32.mrb[0].mxu0
        %v6871 = vpop.f32.mrb[0].mxu0
        %v6872 = vadd.f32 0.0, %v6871
        %v6873 = vpop.f32.mrb[0].mxu0
        %6874 = vmatprep.mubr.bf16.mxu0 0
        %6875 = vmatmul.mubr.bf16.gmra.mrb[0].mxu0 %v6371
        %v6876 = vpop.f32.mrb[0].mxu0
        %v6877 = vadd.f32 0.0, %v6876
        %v6878 = vpop.f32.mrb[0].mxu0
        %v6879 = vpop.f32.mrb[0].mxu0
        %v6880 = vadd.f32 0.0, %v6879
        %v6881 = vpop.f32.mrb[0].mxu0
        %6882 = vmatprep.mubr.bf16.mxu0 0
        %6883 = vmatmul.mubr.bf16.gmra.mrb[0].mxu0 %v6372
        %v6884 = vpop.f32.mrb[0].mxu0
        %v6885 = vadd.f32 0.0, %v6884
        %v6886 = vpop.f32.mrb[0].mxu0
        %v6887 = vpop.f32.mrb[0].mxu0
        %v6888 = vadd.f32 0.0, %v6887
        %v6889 = vpop.f32.mrb[0].mxu0
        %6890 = vmatprep.mubr.bf16.mxu0 0
        %6891 = vmatmul.mubr.bf16.gmra.mrb[0].mxu0 %v6373
        %v6892 = vpop.f32.mrb[0].mxu0
        %v6893 = vadd.f32 0.0, %v6892
        %v6894 = vpop.f32.mrb[0].mxu0
        %v6895 = vpop.f32.mrb[0].mxu0
        %v6896 = vadd.f32 0.0, %v6895
        %v6897 = vpop.f32.mrb[0].mxu0
        %6898 = vmatprep.mubr.bf16.mxu0 0
        %6899 = vmatmul.mubr.bf16.gmra.mrb[0].mxu0 %v6374
        %v6900 = vpop.f32.mrb[0].mxu0
        %v6901 = vadd.f32 0.0, %v6900
        %v6902 = vpop.f32.mrb[0].mxu0
        %v6903 = vpop.f32.mrb[0].mxu0
        %v6904 = vadd.f32 0.0, %v6903
        %v6905 = vpop.f32.mrb[0].mxu0
        %6906 = vmatprep.mubr.bf16.mxu0 0
        %6907 = vmatmul.mubr.bf16.gmra.mrb[0].mxu0 %v6375
        %v6908 = vpop.f32.mrb[0].mxu0
        %v6909 = vadd.f32 0.0, %v6908
        %v6910 = vpop.f32.mrb[0].mxu0
        %v6911 = vpop.f32.mrb[0].mxu0
        %v6912 = vadd.f32 0.0, %v6911
        %v6913 = vpop.f32.mrb[0].mxu0
        %6914 = vmatprep.mubr.bf16.mxu0 0
        %6915 = vmatmul.mubr.bf16.gmra.mrb[0].mxu0 %v6376
        %v6916 = vpop.f32.mrb[0].mxu0
        %v6917 = vadd.f32 0.0, %v6916
        %v6918 = vpop.f32.mrb[0].mxu0
        %v6919 = vpop.f32.mrb[0].mxu0
        %v6920 = vadd.f32 0.0, %v6919
        %v6921 = vpop.f32.mrb[0].mxu0
        %6922 = vmatprep.mubr.bf16.mxu0 0
        %6923 = vmatmul.mubr.bf16.gmra.mrb[0].mxu0 %v6377
        %v6924 = vpop.f32.mrb[0].mxu0
        %v6925 = vadd.f32 0.0, %v6924
        %v6926 = vpop.f32.mrb[0].mxu0
        %v6927 = vpop.f32.mrb[0].mxu0
        %v6928 = vadd.f32 0.0, %v6927
        %v6929 = vpop.f32.mrb[0].mxu0
        %6930 = vmatprep.mubr.bf16.mxu0 0
        %6931 = vmatmul.mubr.bf16.gmra.mrb[0].mxu0 %v6378
        %v6932 = vpop.f32.mrb[0].mxu0
        %v6933 = vadd.f32 0.0, %v6932
        %v6934 = vpop.f32.mrb[0].mxu0
        %v6935 = vpop.f32.mrb[0].mxu0
        %v6936 = vadd.f32 0.0, %v6935
        %v6937 = vpop.f32.mrb[0].mxu0
        %6938 = vmatprep.mubr.bf16.mxu0 0
        %6939 = vmatmul.mubr.bf16.gmra.mrb[0].mxu0 %v6379
        %v6940 = vpop.f32.mrb[0].mxu0
        %v6941 = vadd.f32 0.0, %v6940
        %v6942 = vpop.f32.mrb[0].mxu0
        %v6943 = vpop.f32.mrb[0].mxu0
        %v6944 = vadd.f32 0.0, %v6943
        %v6945 = vpop.f32.mrb[0].mxu0
        %6946 = vmatprep.mubr.bf16.mxu0 0
        %6947 = vmatmul.mubr.bf16.gmra.mrb[0].mxu0 %v6380
        %v6948 = vpop.f32.mrb[0].mxu0
        %v6949 = vadd.f32 0.0, %v6948
        %v6950 = vpop.f32.mrb[0].mxu0
        %v6951 = vpop.f32.mrb[0].mxu0
        %v6952 = vadd.f32 0.0, %v6951
        %v6953 = vpop.f32.mrb[0].mxu0
        %6954 = vmatprep.mubr.bf16.mxu0 0
        %6955 = vmatmul.mubr.bf16.gmra.mrb[0].mxu0 %v6381
        %v6956 = vpop.f32.mrb[0].mxu0
        %v6957 = vadd.f32 0.0, %v6956
        %v6958 = vpop.f32.mrb[0].mxu0
        %v6959 = vpop.f32.mrb[0].mxu0
        %v6960 = vadd.f32 0.0, %v6959
        %v6961 = vpop.f32.mrb[0].mxu0
        %6962 = vmatprep.mubr.bf16.mxu0 0
        %6963 = vmatmul.mubr.bf16.gmra.mrb[0].mxu0 %v6382
        %v6964 = vpop.f32.mrb[0].mxu0
        %v6965 = vadd.f32 0.0, %v6964
        %v6966 = vpop.f32.mrb[0].mxu0
        %v6967 = vpop.f32.mrb[0].mxu0
        %v6968 = vadd.f32 0.0, %v6967
        %v6969 = vpop.f32.mrb[0].mxu0
        %6970 = vmatprep.mubr.bf16.mxu0 0
        %6971 = vmatmul.mubr.bf16.gmra.mrb[0].mxu0 %v6383
        %v6972 = vpop.f32.mrb[0].mxu0
        %v6973 = vadd.f32 0.0, %v6972
        %v6974 = vpop.f32.mrb[0].mxu0
        %v6975 = vpop.f32.mrb[0].mxu0
        %v6976 = vadd.f32 0.0, %v6975
        %v6977 = vpop.f32.mrb[0].mxu0
        %6978 = vmatprep.mubr.bf16.mxu0 0
        %6979 = vmatmul.mubr.bf16.gmra.mrb[0].mxu0 %v6384
        %v6980 = vpop.f32.mrb[0].mxu0
        %v6981 = vadd.f32 0.0, %v6980
        %v6982 = vpop.f32.mrb[0].mxu0
        %v6983 = vpop.f32.mrb[0].mxu0
        %v6984 = vadd.f32 0.0, %v6983
        %v6985 = vpop.f32.mrb[0].mxu0
        %6986 = vmatprep.mubr.bf16.mxu0 0
        %6987 = vmatmul.mubr.bf16.gmra.mrb[0].mxu0 %v6385
        %v6988 = vpop.f32.mrb[0].mxu0
        %v6989 = vadd.f32 0.0, %v6988
        %v6990 = vpop.f32.mrb[0].mxu0
        %v6991 = vpop.f32.mrb[0].mxu0
        %v6992 = vadd.f32 0.0, %v6991
        %v6993 = vpop.f32.mrb[0].mxu0
        %6994 = vdwg.mxu0
        %v6995 = vld [vmem:[#allocation20] sm:$0x1]
        %v6997 = vlaneseq
        %v6998 = vshrl.u32 %v6997, 7
        %v6999 = vsub.s32 0, %v6998
        %v7000 = vrot.slane %v6995, %v6999
        %v7002 = vmul.f32 %v6485, %v7000
        %v7003 = vmul.f32 %v6488, %v7000
        %v7004 = vmul.f32 %v6493, %v7000
        %v7005 = vmul.f32 %v6496, %v7000
        %v7006 = vmul.f32 %v6501, %v7000
        %v7007 = vmul.f32 %v6504, %v7000
        %v7008 = vmul.f32 %v6509, %v7000
        %v7009 = vmul.f32 %v6512, %v7000
        %v7010 = vmul.f32 %v6517, %v7000
        %v7011 = vmul.f32 %v6520, %v7000
        %v7012 = vmul.f32 %v6525, %v7000
        %v7013 = vmul.f32 %v6528, %v7000
        %v7014 = vmul.f32 %v6533, %v7000
        %v7015 = vmul.f32 %v6536, %v7000
        %v7016 = vmul.f32 %v6541, %v7000
        %v7017 = vmul.f32 %v6544, %v7000
        %v7018 = vmul.f32 %v6549, %v7000
        %v7019 = vmul.f32 %v6552, %v7000
        %v7020 = vmul.f32 %v6557, %v7000
        %v7021 = vmul.f32 %v6560, %v7000
        %v7022 = vmul.f32 %v6565, %v7000
        %v7023 = vmul.f32 %v6568, %v7000
        %v7024 = vmul.f32 %v6573, %v7000
        %v7025 = vmul.f32 %v6576, %v7000
        %v7026 = vmul.f32 %v6581, %v7000
        %v7027 = vmul.f32 %v6584, %v7000
        %v7028 = vmul.f32 %v6589, %v7000
        %v7029 = vmul.f32 %v6592, %v7000
        %v7030 = vmul.f32 %v6597, %v7000
        %v7031 = vmul.f32 %v6600, %v7000
        %v7032 = vmul.f32 %v6605, %v7000
        %v7033 = vmul.f32 %v6608, %v7000
        %v7034 = vmul.f32 %v6613, %v7000
        %v7035 = vmul.f32 %v6616, %v7000
        %v7036 = vmul.f32 %v6621, %v7000
        %v7037 = vmul.f32 %v6624, %v7000
        %v7038 = vmul.f32 %v6629, %v7000
        %v7039 = vmul.f32 %v6632, %v7000
        %v7040 = vmul.f32 %v6637, %v7000
        %v7041 = vmul.f32 %v6640, %v7000
        %v7042 = vmul.f32 %v6645, %v7000
        %v7043 = vmul.f32 %v6648, %v7000
        %v7044 = vmul.f32 %v6653, %v7000
        %v7045 = vmul.f32 %v6656, %v7000
        %v7046 = vmul.f32 %v6661, %v7000
        %v7047 = vmul.f32 %v6664, %v7000
        %v7048 = vmul.f32 %v6669, %v7000
        %v7049 = vmul.f32 %v6672, %v7000
        %v7050 = vmul.f32 %v6677, %v7000
        %v7051 = vmul.f32 %v6680, %v7000
        %v7052 = vmul.f32 %v6685, %v7000
        %v7053 = vmul.f32 %v6688, %v7000
        %v7054 = vmul.f32 %v6693, %v7000
        %v7055 = vmul.f32 %v6696, %v7000
        %v7056 = vmul.f32 %v6701, %v7000
        %v7057 = vmul.f32 %v6704, %v7000
        %v7058 = vmul.f32 %v6709, %v7000
        %v7059 = vmul.f32 %v6712, %v7000
        %v7060 = vmul.f32 %v6717, %v7000
        %v7061 = vmul.f32 %v6720, %v7000
        %v7062 = vmul.f32 %v6725, %v7000
        %v7063 = vmul.f32 %v6728, %v7000
        %v7064 = vmul.f32 %v6733, %v7000
        %v7065 = vmul.f32 %v6736, %v7000
        %v7066 = vmul.f32 %v6741, %v7000
        %v7067 = vmul.f32 %v6744, %v7000
        %v7068 = vmul.f32 %v6749, %v7000
        %v7069 = vmul.f32 %v6752, %v7000
        %v7070 = vmul.f32 %v6757, %v7000
        %v7071 = vmul.f32 %v6760, %v7000
        %v7072 = vmul.f32 %v6765, %v7000
        %v7073 = vmul.f32 %v6768, %v7000
        %v7074 = vmul.f32 %v6773, %v7000
        %v7075 = vmul.f32 %v6776, %v7000
        %v7076 = vmul.f32 %v6781, %v7000
        %v7077 = vmul.f32 %v6784, %v7000
        %v7078 = vmul.f32 %v6789, %v7000
        %v7079 = vmul.f32 %v6792, %v7000
        %v7080 = vmul.f32 %v6797, %v7000
        %v7081 = vmul.f32 %v6800, %v7000
        %v7082 = vmul.f32 %v6805, %v7000
        %v7083 = vmul.f32 %v6808, %v7000
        %v7084 = vmul.f32 %v6813, %v7000
        %v7085 = vmul.f32 %v6816, %v7000
        %v7086 = vmul.f32 %v6821, %v7000
        %v7087 = vmul.f32 %v6824, %v7000
        %v7088 = vmul.f32 %v6829, %v7000
        %v7089 = vmul.f32 %v6832, %v7000
        %v7090 = vmul.f32 %v6837, %v7000
        %v7091 = vmul.f32 %v6840, %v7000
        %v7092 = vmul.f32 %v6845, %v7000
        %v7093 = vmul.f32 %v6848, %v7000
        %v7094 = vmul.f32 %v6853, %v7000
        %v7095 = vmul.f32 %v6856, %v7000
        %v7096 = vmul.f32 %v6861, %v7000
        %v7097 = vmul.f32 %v6864, %v7000
        %v7098 = vmul.f32 %v6869, %v7000
        %v7099 = vmul.f32 %v6872, %v7000
        %v7100 = vmul.f32 %v6877, %v7000
        %v7101 = vmul.f32 %v6880, %v7000
        %v7102 = vmul.f32 %v6885, %v7000
        %v7103 = vmul.f32 %v6888, %v7000
        %v7104 = vmul.f32 %v6893, %v7000
        %v7105 = vmul.f32 %v6896, %v7000
        %v7106 = vmul.f32 %v6901, %v7000
        %v7107 = vmul.f32 %v6904, %v7000
        %v7108 = vmul.f32 %v6909, %v7000
        %v7109 = vmul.f32 %v6912, %v7000
        %v7110 = vmul.f32 %v6917, %v7000
        %v7111 = vmul.f32 %v6920, %v7000
        %v7112 = vmul.f32 %v6925, %v7000
        %v7113 = vmul.f32 %v6928, %v7000
        %v7114 = vmul.f32 %v6933, %v7000
        %v7115 = vmul.f32 %v6936, %v7000
        %v7116 = vmul.f32 %v6941, %v7000
        %v7117 = vmul.f32 %v6944, %v7000
        %v7118 = vmul.f32 %v6949, %v7000
        %v7119 = vmul.f32 %v6952, %v7000
        %v7120 = vmul.f32 %v6957, %v7000
        %v7121 = vmul.f32 %v6960, %v7000
        %v7122 = vmul.f32 %v6965, %v7000
        %v7123 = vmul.f32 %v6968, %v7000
        %v7124 = vmul.f32 %v6973, %v7000
        %v7125 = vmul.f32 %v6976, %v7000
        %v7126 = vmul.f32 %v6981, %v7000
        %v7127 = vmul.f32 %v6984, %v7000
        %v7128 = vmul.f32 %v6989, %v7000
        %v7129 = vmul.f32 %v6992, %v7000
        %v7130 = vld [vmem:[#allocation22] sm:$0x1]
        %v7132 = vlaneseq
        %v7133 = vshrl.u32 %v7132, 7
        %v7134 = vsub.s32 0, %v7133
        %v7135 = vrot.slane %v7130, %v7134
        %v7137 = vadd.f32 %v7002, %v7135
        %v7138 = vadd.f32 %v7003, %v7135
        %v7139 = vadd.f32 %v7004, %v7135
        %v7140 = vadd.f32 %v7005, %v7135
        %v7141 = vadd.f32 %v7006, %v7135
        %v7142 = vadd.f32 %v7007, %v7135
        %v7143 = vadd.f32 %v7008, %v7135
        %v7144 = vadd.f32 %v7009, %v7135
        %v7145 = vadd.f32 %v7010, %v7135
        %v7146 = vadd.f32 %v7011, %v7135
        %v7147 = vadd.f32 %v7012, %v7135
        %v7148 = vadd.f32 %v7013, %v7135
        %v7149 = vadd.f32 %v7014, %v7135
        %v7150 = vadd.f32 %v7015, %v7135
        %v7151 = vadd.f32 %v7016, %v7135
        %v7152 = vadd.f32 %v7017, %v7135
        %v7153 = vadd.f32 %v7018, %v7135
        %v7154 = vadd.f32 %v7019, %v7135
        %v7155 = vadd.f32 %v7020, %v7135
        %v7156 = vadd.f32 %v7021, %v7135
        %v7157 = vadd.f32 %v7022, %v7135
        %v7158 = vadd.f32 %v7023, %v7135
        %v7159 = vadd.f32 %v7024, %v7135
        %v7160 = vadd.f32 %v7025, %v7135
        %v7161 = vadd.f32 %v7026, %v7135
        %v7162 = vadd.f32 %v7027, %v7135
        %v7163 = vadd.f32 %v7028, %v7135
        %v7164 = vadd.f32 %v7029, %v7135
        %v7165 = vadd.f32 %v7030, %v7135
        %v7166 = vadd.f32 %v7031, %v7135
        %v7167 = vadd.f32 %v7032, %v7135
        %v7168 = vadd.f32 %v7033, %v7135
        %v7169 = vadd.f32 %v7034, %v7135
        %v7170 = vadd.f32 %v7035, %v7135
        %v7171 = vadd.f32 %v7036, %v7135
        %v7172 = vadd.f32 %v7037, %v7135
        %v7173 = vadd.f32 %v7038, %v7135
        %v7174 = vadd.f32 %v7039, %v7135
        %v7175 = vadd.f32 %v7040, %v7135
        %v7176 = vadd.f32 %v7041, %v7135
        %v7177 = vadd.f32 %v7042, %v7135
        %v7178 = vadd.f32 %v7043, %v7135
        %v7179 = vadd.f32 %v7044, %v7135
        %v7180 = vadd.f32 %v7045, %v7135
        %v7181 = vadd.f32 %v7046, %v7135
        %v7182 = vadd.f32 %v7047, %v7135
        %v7183 = vadd.f32 %v7048, %v7135
        %v7184 = vadd.f32 %v7049, %v7135
        %v7185 = vadd.f32 %v7050, %v7135
        %v7186 = vadd.f32 %v7051, %v7135
        %v7187 = vadd.f32 %v7052, %v7135
        %v7188 = vadd.f32 %v7053, %v7135
        %v7189 = vadd.f32 %v7054, %v7135
        %v7190 = vadd.f32 %v7055, %v7135
        %v7191 = vadd.f32 %v7056, %v7135
        %v7192 = vadd.f32 %v7057, %v7135
        %v7193 = vadd.f32 %v7058, %v7135
        %v7194 = vadd.f32 %v7059, %v7135
        %v7195 = vadd.f32 %v7060, %v7135
        %v7196 = vadd.f32 %v7061, %v7135
        %v7197 = vadd.f32 %v7062, %v7135
        %v7198 = vadd.f32 %v7063, %v7135
        %v7199 = vadd.f32 %v7064, %v7135
        %v7200 = vadd.f32 %v7065, %v7135
        %v7201 = vadd.f32 %v7066, %v7135
        %v7202 = vadd.f32 %v7067, %v7135
        %v7203 = vadd.f32 %v7068, %v7135
        %v7204 = vadd.f32 %v7069, %v7135
        %v7205 = vadd.f32 %v7070, %v7135
        %v7206 = vadd.f32 %v7071, %v7135
        %v7207 = vadd.f32 %v7072, %v7135
        %v7208 = vadd.f32 %v7073, %v7135
        %v7209 = vadd.f32 %v7074, %v7135
        %v7210 = vadd.f32 %v7075, %v7135
        %v7211 = vadd.f32 %v7076, %v7135
        %v7212 = vadd.f32 %v7077, %v7135
        %v7213 = vadd.f32 %v7078, %v7135
        %v7214 = vadd.f32 %v7079, %v7135
        %v7215 = vadd.f32 %v7080, %v7135
        %v7216 = vadd.f32 %v7081, %v7135
        %v7217 = vadd.f32 %v7082, %v7135
        %v7218 = vadd.f32 %v7083, %v7135
        %v7219 = vadd.f32 %v7084, %v7135
        %v7220 = vadd.f32 %v7085, %v7135
        %v7221 = vadd.f32 %v7086, %v7135
        %v7222 = vadd.f32 %v7087, %v7135
        %v7223 = vadd.f32 %v7088, %v7135
        %v7224 = vadd.f32 %v7089, %v7135
        %v7225 = vadd.f32 %v7090, %v7135
        %v7226 = vadd.f32 %v7091, %v7135
        %v7227 = vadd.f32 %v7092, %v7135
        %v7228 = vadd.f32 %v7093, %v7135
        %v7229 = vadd.f32 %v7094, %v7135
        %v7230 = vadd.f32 %v7095, %v7135
        %v7231 = vadd.f32 %v7096, %v7135
        %v7232 = vadd.f32 %v7097, %v7135
        %v7233 = vadd.f32 %v7098, %v7135
        %v7234 = vadd.f32 %v7099, %v7135
        %v7235 = vadd.f32 %v7100, %v7135
        %v7236 = vadd.f32 %v7101, %v7135
        %v7237 = vadd.f32 %v7102, %v7135
        %v7238 = vadd.f32 %v7103, %v7135
        %v7239 = vadd.f32 %v7104, %v7135
        %v7240 = vadd.f32 %v7105, %v7135
        %v7241 = vadd.f32 %v7106, %v7135
        %v7242 = vadd.f32 %v7107, %v7135
        %v7243 = vadd.f32 %v7108, %v7135
        %v7244 = vadd.f32 %v7109, %v7135
        %v7245 = vadd.f32 %v7110, %v7135
        %v7246 = vadd.f32 %v7111, %v7135
        %v7247 = vadd.f32 %v7112, %v7135
        %v7248 = vadd.f32 %v7113, %v7135
        %v7249 = vadd.f32 %v7114, %v7135
        %v7250 = vadd.f32 %v7115, %v7135
        %v7251 = vadd.f32 %v7116, %v7135
        %v7252 = vadd.f32 %v7117, %v7135
        %v7253 = vadd.f32 %v7118, %v7135
        %v7254 = vadd.f32 %v7119, %v7135
        %v7255 = vadd.f32 %v7120, %v7135
        %v7256 = vadd.f32 %v7121, %v7135
        %v7257 = vadd.f32 %v7122, %v7135
        %v7258 = vadd.f32 %v7123, %v7135
        %v7259 = vadd.f32 %v7124, %v7135
        %v7260 = vadd.f32 %v7125, %v7135
        %v7261 = vadd.f32 %v7126, %v7135
        %v7262 = vadd.f32 %v7127, %v7135
        %v7263 = vadd.f32 %v7128, %v7135
        %v7264 = vadd.f32 %v7129, %v7135
        %v7265 = vsub.f32 0.0, %v7137
        %v7266 = vsub.f32 0.0, %v7138
        %v7267 = vsub.f32 0.0, %v7139
        %v7268 = vsub.f32 0.0, %v7140
        %v7269 = vsub.f32 0.0, %v7141
        %v7270 = vsub.f32 0.0, %v7142
        %v7271 = vsub.f32 0.0, %v7143
        %v7272 = vsub.f32 0.0, %v7144
        %v7273 = vsub.f32 0.0, %v7145
        %v7274 = vsub.f32 0.0, %v7146
        %v7275 = vsub.f32 0.0, %v7147
        %v7276 = vsub.f32 0.0, %v7148
        %v7277 = vsub.f32 0.0, %v7149
        %v7278 = vsub.f32 0.0, %v7150
        %v7279 = vsub.f32 0.0, %v7151
        %v7280 = vsub.f32 0.0, %v7152
        %v7281 = vsub.f32 0.0, %v7153
        %v7282 = vsub.f32 0.0, %v7154
        %v7283 = vsub.f32 0.0, %v7155
        %v7284 = vsub.f32 0.0, %v7156
        %v7285 = vsub.f32 0.0, %v7157
        %v7286 = vsub.f32 0.0, %v7158
        %v7287 = vsub.f32 0.0, %v7159
        %v7288 = vsub.f32 0.0, %v7160
        %v7289 = vsub.f32 0.0, %v7161
        %v7290 = vsub.f32 0.0, %v7162
        %v7291 = vsub.f32 0.0, %v7163
        %v7292 = vsub.f32 0.0, %v7164
        %v7293 = vsub.f32 0.0, %v7165
        %v7294 = vsub.f32 0.0, %v7166
        %v7295 = vsub.f32 0.0, %v7167
        %v7296 = vsub.f32 0.0, %v7168
        %v7297 = vsub.f32 0.0, %v7169
        %v7298 = vsub.f32 0.0, %v7170
        %v7299 = vsub.f32 0.0, %v7171
        %v7300 = vsub.f32 0.0, %v7172
        %v7301 = vsub.f32 0.0, %v7173
        %v7302 = vsub.f32 0.0, %v7174
        %v7303 = vsub.f32 0.0, %v7175
        %v7304 = vsub.f32 0.0, %v7176
        %v7305 = vsub.f32 0.0, %v7177
        %v7306 = vsub.f32 0.0, %v7178
        %v7307 = vsub.f32 0.0, %v7179
        %v7308 = vsub.f32 0.0, %v7180
        %v7309 = vsub.f32 0.0, %v7181
        %v7310 = vsub.f32 0.0, %v7182
        %v7311 = vsub.f32 0.0, %v7183
        %v7312 = vsub.f32 0.0, %v7184
        %v7313 = vsub.f32 0.0, %v7185
        %v7314 = vsub.f32 0.0, %v7186
        %v7315 = vsub.f32 0.0, %v7187
        %v7316 = vsub.f32 0.0, %v7188
        %v7317 = vsub.f32 0.0, %v7189
        %v7318 = vsub.f32 0.0, %v7190
        %v7319 = vsub.f32 0.0, %v7191
        %v7320 = vsub.f32 0.0, %v7192
        %v7321 = vsub.f32 0.0, %v7193
        %v7322 = vsub.f32 0.0, %v7194
        %v7323 = vsub.f32 0.0, %v7195
        %v7324 = vsub.f32 0.0, %v7196
        %v7325 = vsub.f32 0.0, %v7197
        %v7326 = vsub.f32 0.0, %v7198
        %v7327 = vsub.f32 0.0, %v7199
        %v7328 = vsub.f32 0.0, %v7200
        %v7329 = vsub.f32 0.0, %v7201
        %v7330 = vsub.f32 0.0, %v7202
        %v7331 = vsub.f32 0.0, %v7203
        %v7332 = vsub.f32 0.0, %v7204
        %v7333 = vsub.f32 0.0, %v7205
        %v7334 = vsub.f32 0.0, %v7206
        %v7335 = vsub.f32 0.0, %v7207
        %v7336 = vsub.f32 0.0, %v7208
        %v7337 = vsub.f32 0.0, %v7209
        %v7338 = vsub.f32 0.0, %v7210
        %v7339 = vsub.f32 0.0, %v7211
        %v7340 = vsub.f32 0.0, %v7212
        %v7341 = vsub.f32 0.0, %v7213
        %v7342 = vsub.f32 0.0, %v7214
        %v7343 = vsub.f32 0.0, %v7215
        %v7344 = vsub.f32 0.0, %v7216
        %v7345 = vsub.f32 0.0, %v7217
        %v7346 = vsub.f32 0.0, %v7218
        %v7347 = vsub.f32 0.0, %v7219
        %v7348 = vsub.f32 0.0, %v7220
        %v7349 = vsub.f32 0.0, %v7221
        %v7350 = vsub.f32 0.0, %v7222
        %v7351 = vsub.f32 0.0, %v7223
        %v7352 = vsub.f32 0.0, %v7224
        %v7353 = vsub.f32 0.0, %v7225
        %v7354 = vsub.f32 0.0, %v7226
        %v7355 = vsub.f32 0.0, %v7227
        %v7356 = vsub.f32 0.0, %v7228
        %v7357 = vsub.f32 0.0, %v7229
        %v7358 = vsub.f32 0.0, %v7230
        %v7359 = vsub.f32 0.0, %v7231
        %v7360 = vsub.f32 0.0, %v7232
        %v7361 = vsub.f32 0.0, %v7233
        %v7362 = vsub.f32 0.0, %v7234
        %v7363 = vsub.f32 0.0, %v7235
        %v7364 = vsub.f32 0.0, %v7236
        %v7365 = vsub.f32 0.0, %v7237
        %v7366 = vsub.f32 0.0, %v7238
        %v7367 = vsub.f32 0.0, %v7239
        %v7368 = vsub.f32 0.0, %v7240
        %v7369 = vsub.f32 0.0, %v7241
        %v7370 = vsub.f32 0.0, %v7242
        %v7371 = vsub.f32 0.0, %v7243
        %v7372 = vsub.f32 0.0, %v7244
        %v7373 = vsub.f32 0.0, %v7245
        %v7374 = vsub.f32 0.0, %v7246
        %v7375 = vsub.f32 0.0, %v7247
        %v7376 = vsub.f32 0.0, %v7248
        %v7377 = vsub.f32 0.0, %v7249
        %v7378 = vsub.f32 0.0, %v7250
        %v7379 = vsub.f32 0.0, %v7251
        %v7380 = vsub.f32 0.0, %v7252
        %v7381 = vsub.f32 0.0, %v7253
        %v7382 = vsub.f32 0.0, %v7254
        %v7383 = vsub.f32 0.0, %v7255
        %v7384 = vsub.f32 0.0, %v7256
        %v7385 = vsub.f32 0.0, %v7257
        %v7386 = vsub.f32 0.0, %v7258
        %v7387 = vsub.f32 0.0, %v7259
        %v7388 = vsub.f32 0.0, %v7260
        %v7389 = vsub.f32 0.0, %v7261
        %v7390 = vsub.f32 0.0, %v7262
        %v7391 = vsub.f32 0.0, %v7263
        %v7392 = vsub.f32 0.0, %v7264
        %v7393 = vmul.f32 %v7265, 1.442695
        %v7394 = vpow.pop %v7393
        %v7395 = vmul.f32 %v7266, 1.442695
        %v7396 = vpow.pop %v7395
        %v7397 = vmul.f32 %v7267, 1.442695
        %v7398 = vpow.pop %v7397
        %v7399 = vmul.f32 %v7268, 1.442695
        %v7400 = vpow.pop %v7399
        %v7401 = vmul.f32 %v7269, 1.442695
        %v7402 = vpow.pop %v7401
        %v7403 = vmul.f32 %v7270, 1.442695
        %v7404 = vpow.pop %v7403
        %v7405 = vmul.f32 %v7271, 1.442695
        %v7406 = vpow.pop %v7405
        %v7407 = vmul.f32 %v7272, 1.442695
        %v7408 = vpow.pop %v7407
        %v7409 = vmul.f32 %v7273, 1.442695
        %v7410 = vpow.pop %v7409
        %v7411 = vmul.f32 %v7274, 1.442695
        %v7412 = vpow.pop %v7411
        %v7413 = vmul.f32 %v7275, 1.442695
        %v7414 = vpow.pop %v7413
        %v7415 = vmul.f32 %v7276, 1.442695
        %v7416 = vpow.pop %v7415
        %v7417 = vmul.f32 %v7277, 1.442695
        %v7418 = vpow.pop %v7417
        %v7419 = vmul.f32 %v7278, 1.442695
        %v7420 = vpow.pop %v7419
        %v7421 = vmul.f32 %v7279, 1.442695
        %v7422 = vpow.pop %v7421
        %v7423 = vmul.f32 %v7280, 1.442695
        %v7424 = vpow.pop %v7423
        %v7425 = vmul.f32 %v7281, 1.442695
        %v7426 = vpow.pop %v7425
        %v7427 = vmul.f32 %v7282, 1.442695
        %v7428 = vpow.pop %v7427
        %v7429 = vmul.f32 %v7283, 1.442695
        %v7430 = vpow.pop %v7429
        %v7431 = vmul.f32 %v7284, 1.442695
        %v7432 = vpow.pop %v7431
        %v7433 = vmul.f32 %v7285, 1.442695
        %v7434 = vpow.pop %v7433
        %v7435 = vmul.f32 %v7286, 1.442695
        %v7436 = vpow.pop %v7435
        %v7437 = vmul.f32 %v7287, 1.442695
        %v7438 = vpow.pop %v7437
        %v7439 = vmul.f32 %v7288, 1.442695
        %v7440 = vpow.pop %v7439
        %v7441 = vmul.f32 %v7289, 1.442695
        %v7442 = vpow.pop %v7441
        %v7443 = vmul.f32 %v7290, 1.442695
        %v7444 = vpow.pop %v7443
        %v7445 = vmul.f32 %v7291, 1.442695
        %v7446 = vpow.pop %v7445
        %v7447 = vmul.f32 %v7292, 1.442695
        %v7448 = vpow.pop %v7447
        %v7449 = vmul.f32 %v7293, 1.442695
        %v7450 = vpow.pop %v7449
        %v7451 = vmul.f32 %v7294, 1.442695
        %v7452 = vpow.pop %v7451
        %v7453 = vmul.f32 %v7295, 1.442695
        %v7454 = vpow.pop %v7453
        %v7455 = vmul.f32 %v7296, 1.442695
        %v7456 = vpow.pop %v7455
        %v7457 = vmul.f32 %v7297, 1.442695
        %v7458 = vpow.pop %v7457
        %v7459 = vmul.f32 %v7298, 1.442695
        %v7460 = vpow.pop %v7459
        %v7461 = vmul.f32 %v7299, 1.442695
        %v7462 = vpow.pop %v7461
        %v7463 = vmul.f32 %v7300, 1.442695
        %v7464 = vpow.pop %v7463
        %v7465 = vmul.f32 %v7301, 1.442695
        %v7466 = vpow.pop %v7465
        %v7467 = vmul.f32 %v7302, 1.442695
        %v7468 = vpow.pop %v7467
        %v7469 = vmul.f32 %v7303, 1.442695
        %v7470 = vpow.pop %v7469
        %v7471 = vmul.f32 %v7304, 1.442695
        %v7472 = vpow.pop %v7471
        %v7473 = vmul.f32 %v7305, 1.442695
        %v7474 = vpow.pop %v7473
        %v7475 = vmul.f32 %v7306, 1.442695
        %v7476 = vpow.pop %v7475
        %v7477 = vmul.f32 %v7307, 1.442695
        %v7478 = vpow.pop %v7477
        %v7479 = vmul.f32 %v7308, 1.442695
        %v7480 = vpow.pop %v7479
        %v7481 = vmul.f32 %v7309, 1.442695
        %v7482 = vpow.pop %v7481
        %v7483 = vmul.f32 %v7310, 1.442695
        %v7484 = vpow.pop %v7483
        %v7485 = vmul.f32 %v7311, 1.442695
        %v7486 = vpow.pop %v7485
        %v7487 = vmul.f32 %v7312, 1.442695
        %v7488 = vpow.pop %v7487
        %v7489 = vmul.f32 %v7313, 1.442695
        %v7490 = vpow.pop %v7489
        %v7491 = vmul.f32 %v7314, 1.442695
        %v7492 = vpow.pop %v7491
        %v7493 = vmul.f32 %v7315, 1.442695
        %v7494 = vpow.pop %v7493
        %v7495 = vmul.f32 %v7316, 1.442695
        %v7496 = vpow.pop %v7495
        %v7497 = vmul.f32 %v7317, 1.442695
        %v7498 = vpow.pop %v7497
        %v7499 = vmul.f32 %v7318, 1.442695
        %v7500 = vpow.pop %v7499
        %v7501 = vmul.f32 %v7319, 1.442695
        %v7502 = vpow.pop %v7501
        %v7503 = vmul.f32 %v7320, 1.442695
        %v7504 = vpow.pop %v7503
        %v7505 = vmul.f32 %v7321, 1.442695
        %v7506 = vpow.pop %v7505
        %v7507 = vmul.f32 %v7322, 1.442695
        %v7508 = vpow.pop %v7507
        %v7509 = vmul.f32 %v7323, 1.442695
        %v7510 = vpow.pop %v7509
        %v7511 = vmul.f32 %v7324, 1.442695
        %v7512 = vpow.pop %v7511
        %v7513 = vmul.f32 %v7325, 1.442695
        %v7514 = vpow.pop %v7513
        %v7515 = vmul.f32 %v7326, 1.442695
        %v7516 = vpow.pop %v7515
        %v7517 = vmul.f32 %v7327, 1.442695
        %v7518 = vpow.pop %v7517
        %v7519 = vmul.f32 %v7328, 1.442695
        %v7520 = vpow.pop %v7519
        %v7521 = vmul.f32 %v7329, 1.442695
        %v7522 = vpow.pop %v7521
        %v7523 = vmul.f32 %v7330, 1.442695
        %v7524 = vpow.pop %v7523
        %v7525 = vmul.f32 %v7331, 1.442695
        %v7526 = vpow.pop %v7525
        %v7527 = vmul.f32 %v7332, 1.442695
        %v7528 = vpow.pop %v7527
        %v7529 = vmul.f32 %v7333, 1.442695
        %v7530 = vpow.pop %v7529
        %v7531 = vmul.f32 %v7334, 1.442695
        %v7532 = vpow.pop %v7531
        %v7533 = vmul.f32 %v7335, 1.442695
        %v7534 = vpow.pop %v7533
        %v7535 = vmul.f32 %v7336, 1.442695
        %v7536 = vpow.pop %v7535
        %v7537 = vmul.f32 %v7337, 1.442695
        %v7538 = vpow.pop %v7537
        %v7539 = vmul.f32 %v7338, 1.442695
        %v7540 = vpow.pop %v7539
        %v7541 = vmul.f32 %v7339, 1.442695
        %v7542 = vpow.pop %v7541
        %v7543 = vmul.f32 %v7340, 1.442695
        %v7544 = vpow.pop %v7543
        %v7545 = vmul.f32 %v7341, 1.442695
        %v7546 = vpow.pop %v7545
        %v7547 = vmul.f32 %v7342, 1.442695
        %v7548 = vpow.pop %v7547
        %v7549 = vmul.f32 %v7343, 1.442695
        %v7550 = vpow.pop %v7549
        %v7551 = vmul.f32 %v7344, 1.442695
        %v7552 = vpow.pop %v7551
        %v7553 = vmul.f32 %v7345, 1.442695
        %v7554 = vpow.pop %v7553
        %v7555 = vmul.f32 %v7346, 1.442695
        %v7556 = vpow.pop %v7555
        %v7557 = vmul.f32 %v7347, 1.442695
        %v7558 = vpow.pop %v7557
        %v7559 = vmul.f32 %v7348, 1.442695
        %v7560 = vpow.pop %v7559
        %v7561 = vmul.f32 %v7349, 1.442695
        %v7562 = vpow.pop %v7561
        %v7563 = vmul.f32 %v7350, 1.442695
        %v7564 = vpow.pop %v7563
        %v7565 = vmul.f32 %v7351, 1.442695
        %v7566 = vpow.pop %v7565
        %v7567 = vmul.f32 %v7352, 1.442695
        %v7568 = vpow.pop %v7567
        %v7569 = vmul.f32 %v7353, 1.442695
        %v7570 = vpow.pop %v7569
        %v7571 = vmul.f32 %v7354, 1.442695
        %v7572 = vpow.pop %v7571
        %v7573 = vmul.f32 %v7355, 1.442695
        %v7574 = vpow.pop %v7573
        %v7575 = vmul.f32 %v7356, 1.442695
        %v7576 = vpow.pop %v7575
        %v7577 = vmul.f32 %v7357, 1.442695
        %v7578 = vpow.pop %v7577
        %v7579 = vmul.f32 %v7358, 1.442695
        %v7580 = vpow.pop %v7579
        %v7581 = vmul.f32 %v7359, 1.442695
        %v7582 = vpow.pop %v7581
        %v7583 = vmul.f32 %v7360, 1.442695
        %v7584 = vpow.pop %v7583
        %v7585 = vmul.f32 %v7361, 1.442695
        %v7586 = vpow.pop %v7585
        %v7587 = vmul.f32 %v7362, 1.442695
        %v7588 = vpow.pop %v7587
        %v7589 = vmul.f32 %v7363, 1.442695
        %v7590 = vpow.pop %v7589
        %v7591 = vmul.f32 %v7364, 1.442695
        %v7592 = vpow.pop %v7591
        %v7593 = vmul.f32 %v7365, 1.442695
        %v7594 = vpow.pop %v7593
        %v7595 = vmul.f32 %v7366, 1.442695
        %v7596 = vpow.pop %v7595
        %v7597 = vmul.f32 %v7367, 1.442695
        %v7598 = vpow.pop %v7597
        %v7599 = vmul.f32 %v7368, 1.442695
        %v7600 = vpow.pop %v7599
        %v7601 = vmul.f32 %v7369, 1.442695
        %v7602 = vpow.pop %v7601
        %v7603 = vmul.f32 %v7370, 1.442695
        %v7604 = vpow.pop %v7603
        %v7605 = vmul.f32 %v7371, 1.442695
        %v7606 = vpow.pop %v7605
        %v7607 = vmul.f32 %v7372, 1.442695
        %v7608 = vpow.pop %v7607
        %v7609 = vmul.f32 %v7373, 1.442695
        %v7610 = vpow.pop %v7609
        %v7611 = vmul.f32 %v7374, 1.442695
        %v7612 = vpow.pop %v7611
        %v7613 = vmul.f32 %v7375, 1.442695
        %v7614 = vpow.pop %v7613
        %v7615 = vmul.f32 %v7376, 1.442695
        %v7616 = vpow.pop %v7615
        %v7617 = vmul.f32 %v7377, 1.442695
        %v7618 = vpow.pop %v7617
        %v7619 = vmul.f32 %v7378, 1.442695
        %v7620 = vpow.pop %v7619
        %v7621 = vmul.f32 %v7379, 1.442695
        %v7622 = vpow.pop %v7621
        %v7623 = vmul.f32 %v7380, 1.442695
        %v7624 = vpow.pop %v7623
        %v7625 = vmul.f32 %v7381, 1.442695
        %v7626 = vpow.pop %v7625
        %v7627 = vmul.f32 %v7382, 1.442695
        %v7628 = vpow.pop %v7627
        %v7629 = vmul.f32 %v7383, 1.442695
        %v7630 = vpow.pop %v7629
        %v7631 = vmul.f32 %v7384, 1.442695
        %v7632 = vpow.pop %v7631
        %v7633 = vmul.f32 %v7385, 1.442695
        %v7634 = vpow.pop %v7633
        %v7635 = vmul.f32 %v7386, 1.442695
        %v7636 = vpow.pop %v7635
        %v7637 = vmul.f32 %v7387, 1.442695
        %v7638 = vpow.pop %v7637
        %v7639 = vmul.f32 %v7388, 1.442695
        %v7640 = vpow.pop %v7639
        %v7641 = vmul.f32 %v7389, 1.442695
        %v7642 = vpow.pop %v7641
        %v7643 = vmul.f32 %v7390, 1.442695
        %v7644 = vpow.pop %v7643
        %v7645 = vmul.f32 %v7391, 1.442695
        %v7646 = vpow.pop %v7645
        %v7647 = vmul.f32 %v7392, 1.442695
        %v7648 = vpow.pop %v7647
        %v7649 = vadd.f32 %v7394, 1.0
        %v7650 = vadd.f32 %v7396, 1.0
        %v7651 = vadd.f32 %v7398, 1.0
        %v7652 = vadd.f32 %v7400, 1.0
        %v7653 = vadd.f32 %v7402, 1.0
        %v7654 = vadd.f32 %v7404, 1.0
        %v7655 = vadd.f32 %v7406, 1.0
        %v7656 = vadd.f32 %v7408, 1.0
        %v7657 = vadd.f32 %v7410, 1.0
        %v7658 = vadd.f32 %v7412, 1.0
        %v7659 = vadd.f32 %v7414, 1.0
        %v7660 = vadd.f32 %v7416, 1.0
        %v7661 = vadd.f32 %v7418, 1.0
        %v7662 = vadd.f32 %v7420, 1.0
        %v7663 = vadd.f32 %v7422, 1.0
        %v7664 = vadd.f32 %v7424, 1.0
        %v7665 = vadd.f32 %v7426, 1.0
        %v7666 = vadd.f32 %v7428, 1.0
        %v7667 = vadd.f32 %v7430, 1.0
        %v7668 = vadd.f32 %v7432, 1.0
        %v7669 = vadd.f32 %v7434, 1.0
        %v7670 = vadd.f32 %v7436, 1.0
        %v7671 = vadd.f32 %v7438, 1.0
        %v7672 = vadd.f32 %v7440, 1.0
        %v7673 = vadd.f32 %v7442, 1.0
        %v7674 = vadd.f32 %v7444, 1.0
        %v7675 = vadd.f32 %v7446, 1.0
        %v7676 = vadd.f32 %v7448, 1.0
        %v7677 = vadd.f32 %v7450, 1.0
        %v7678 = vadd.f32 %v7452, 1.0
        %v7679 = vadd.f32 %v7454, 1.0
        %v7680 = vadd.f32 %v7456, 1.0
        %v7681 = vadd.f32 %v7458, 1.0
        %v7682 = vadd.f32 %v7460, 1.0
        %v7683 = vadd.f32 %v7462, 1.0
        %v7684 = vadd.f32 %v7464, 1.0
        %v7685 = vadd.f32 %v7466, 1.0
        %v7686 = vadd.f32 %v7468, 1.0
        %v7687 = vadd.f32 %v7470, 1.0
        %v7688 = vadd.f32 %v7472, 1.0
        %v7689 = vadd.f32 %v7474, 1.0
        %v7690 = vadd.f32 %v7476, 1.0
        %v7691 = vadd.f32 %v7478, 1.0
        %v7692 = vadd.f32 %v7480, 1.0
        %v7693 = vadd.f32 %v7482, 1.0
        %v7694 = vadd.f32 %v7484, 1.0
        %v7695 = vadd.f32 %v7486, 1.0
        %v7696 = vadd.f32 %v7488, 1.0
        %v7697 = vadd.f32 %v7490, 1.0
        %v7698 = vadd.f32 %v7492, 1.0
        %v7699 = vadd.f32 %v7494, 1.0
        %v7700 = vadd.f32 %v7496, 1.0
        %v7701 = vadd.f32 %v7498, 1.0
        %v7702 = vadd.f32 %v7500, 1.0
        %v7703 = vadd.f32 %v7502, 1.0
        %v7704 = vadd.f32 %v7504, 1.0
        %v7705 = vadd.f32 %v7506, 1.0
        %v7706 = vadd.f32 %v7508, 1.0
        %v7707 = vadd.f32 %v7510, 1.0
        %v7708 = vadd.f32 %v7512, 1.0
        %v7709 = vadd.f32 %v7514, 1.0
        %v7710 = vadd.f32 %v7516, 1.0
        %v7711 = vadd.f32 %v7518, 1.0
        %v7712 = vadd.f32 %v7520, 1.0
        %v7713 = vadd.f32 %v7522, 1.0
        %v7714 = vadd.f32 %v7524, 1.0
        %v7715 = vadd.f32 %v7526, 1.0
        %v7716 = vadd.f32 %v7528, 1.0
        %v7717 = vadd.f32 %v7530, 1.0
        %v7718 = vadd.f32 %v7532, 1.0
        %v7719 = vadd.f32 %v7534, 1.0
        %v7720 = vadd.f32 %v7536, 1.0
        %v7721 = vadd.f32 %v7538, 1.0
        %v7722 = vadd.f32 %v7540, 1.0
        %v7723 = vadd.f32 %v7542, 1.0
        %v7724 = vadd.f32 %v7544, 1.0
        %v7725 = vadd.f32 %v7546, 1.0
        %v7726 = vadd.f32 %v7548, 1.0
        %v7727 = vadd.f32 %v7550, 1.0
        %v7728 = vadd.f32 %v7552, 1.0
        %v7729 = vadd.f32 %v7554, 1.0
        %v7730 = vadd.f32 %v7556, 1.0
        %v7731 = vadd.f32 %v7558, 1.0
        %v7732 = vadd.f32 %v7560, 1.0
        %v7733 = vadd.f32 %v7562, 1.0
        %v7734 = vadd.f32 %v7564, 1.0
        %v7735 = vadd.f32 %v7566, 1.0
        %v7736 = vadd.f32 %v7568, 1.0
        %v7737 = vadd.f32 %v7570, 1.0
        %v7738 = vadd.f32 %v7572, 1.0
        %v7739 = vadd.f32 %v7574, 1.0
        %v7740 = vadd.f32 %v7576, 1.0
        %v7741 = vadd.f32 %v7578, 1.0
        %v7742 = vadd.f32 %v7580, 1.0
        %v7743 = vadd.f32 %v7582, 1.0
        %v7744 = vadd.f32 %v7584, 1.0
        %v7745 = vadd.f32 %v7586, 1.0
        %v7746 = vadd.f32 %v7588, 1.0
        %v7747 = vadd.f32 %v7590, 1.0
        %v7748 = vadd.f32 %v7592, 1.0
        %v7749 = vadd.f32 %v7594, 1.0
        %v7750 = vadd.f32 %v7596, 1.0
        %v7751 = vadd.f32 %v7598, 1.0
        %v7752 = vadd.f32 %v7600, 1.0
        %v7753 = vadd.f32 %v7602, 1.0
        %v7754 = vadd.f32 %v7604, 1.0
        %v7755 = vadd.f32 %v7606, 1.0
        %v7756 = vadd.f32 %v7608, 1.0
        %v7757 = vadd.f32 %v7610, 1.0
        %v7758 = vadd.f32 %v7612, 1.0
        %v7759 = vadd.f32 %v7614, 1.0
        %v7760 = vadd.f32 %v7616, 1.0
        %v7761 = vadd.f32 %v7618, 1.0
        %v7762 = vadd.f32 %v7620, 1.0
        %v7763 = vadd.f32 %v7622, 1.0
        %v7764 = vadd.f32 %v7624, 1.0
        %v7765 = vadd.f32 %v7626, 1.0
        %v7766 = vadd.f32 %v7628, 1.0
        %v7767 = vadd.f32 %v7630, 1.0
        %v7768 = vadd.f32 %v7632, 1.0
        %v7769 = vadd.f32 %v7634, 1.0
        %v7770 = vadd.f32 %v7636, 1.0
        %v7771 = vadd.f32 %v7638, 1.0
        %v7772 = vadd.f32 %v7640, 1.0
        %v7773 = vadd.f32 %v7642, 1.0
        %v7774 = vadd.f32 %v7644, 1.0
        %v7775 = vadd.f32 %v7646, 1.0
        %v7776 = vadd.f32 %v7648, 1.0
        %v7777 = vrcp.pop %v7649
        %v7778 = vrcp.pop %v7650
        %v7779 = vrcp.pop %v7651
        %v7780 = vrcp.pop %v7652
        %v7781 = vrcp.pop %v7653
        %v7782 = vrcp.pop %v7654
        %v7783 = vrcp.pop %v7655
        %v7784 = vrcp.pop %v7656
        %v7785 = vrcp.pop %v7657
        %v7786 = vrcp.pop %v7658
        %v7787 = vrcp.pop %v7659
        %v7788 = vrcp.pop %v7660
        %v7789 = vrcp.pop %v7661
        %v7790 = vrcp.pop %v7662
        %v7791 = vrcp.pop %v7663
        %v7792 = vrcp.pop %v7664
        %v7793 = vrcp.pop %v7665
        %v7794 = vrcp.pop %v7666
        %v7795 = vrcp.pop %v7667
        %v7796 = vrcp.pop %v7668
        %v7797 = vrcp.pop %v7669
        %v7798 = vrcp.pop %v7670
        %v7799 = vrcp.pop %v7671
        %v7800 = vrcp.pop %v7672
        %v7801 = vrcp.pop %v7673
        %v7802 = vrcp.pop %v7674
        %v7803 = vrcp.pop %v7675
        %v7804 = vrcp.pop %v7676
        %v7805 = vrcp.pop %v7677
        %v7806 = vrcp.pop %v7678
        %v7807 = vrcp.pop %v7679
        %v7808 = vrcp.pop %v7680
        %v7809 = vrcp.pop %v7681
        %v7810 = vrcp.pop %v7682
        %v7811 = vrcp.pop %v7683
        %v7812 = vrcp.pop %v7684
        %v7813 = vrcp.pop %v7685
        %v7814 = vrcp.pop %v7686
        %v7815 = vrcp.pop %v7687
        %v7816 = vrcp.pop %v7688
        %v7817 = vrcp.pop %v7689
        %v7818 = vrcp.pop %v7690
        %v7819 = vrcp.pop %v7691
        %v7820 = vrcp.pop %v7692
        %v7821 = vrcp.pop %v7693
        %v7822 = vrcp.pop %v7694
        %v7823 = vrcp.pop %v7695
        %v7824 = vrcp.pop %v7696
        %v7825 = vrcp.pop %v7697
        %v7826 = vrcp.pop %v7698
        %v7827 = vrcp.pop %v7699
        %v7828 = vrcp.pop %v7700
        %v7829 = vrcp.pop %v7701
        %v7830 = vrcp.pop %v7702
        %v7831 = vrcp.pop %v7703
        %v7832 = vrcp.pop %v7704
        %v7833 = vrcp.pop %v7705
        %v7834 = vrcp.pop %v7706
        %v7835 = vrcp.pop %v7707
        %v7836 = vrcp.pop %v7708
        %v7837 = vrcp.pop %v7709
        %v7838 = vrcp.pop %v7710
        %v7839 = vrcp.pop %v7711
        %v7840 = vrcp.pop %v7712
        %v7841 = vrcp.pop %v7713
        %v7842 = vrcp.pop %v7714
        %v7843 = vrcp.pop %v7715
        %v7844 = vrcp.pop %v7716
        %v7845 = vrcp.pop %v7717
        %v7846 = vrcp.pop %v7718
        %v7847 = vrcp.pop %v7719
        %v7848 = vrcp.pop %v7720
        %v7849 = vrcp.pop %v7721
        %v7850 = vrcp.pop %v7722
        %v7851 = vrcp.pop %v7723
        %v7852 = vrcp.pop %v7724
        %v7853 = vrcp.pop %v7725
        %v7854 = vrcp.pop %v7726
        %v7855 = vrcp.pop %v7727
        %v7856 = vrcp.pop %v7728
        %v7857 = vrcp.pop %v7729
        %v7858 = vrcp.pop %v7730
        %v7859 = vrcp.pop %v7731
        %v7860 = vrcp.pop %v7732
        %v7861 = vrcp.pop %v7733
        %v7862 = vrcp.pop %v7734
        %v7863 = vrcp.pop %v7735
        %v7864 = vrcp.pop %v7736
        %v7865 = vrcp.pop %v7737
        %v7866 = vrcp.pop %v7738
        %v7867 = vrcp.pop %v7739
        %v7868 = vrcp.pop %v7740
        %v7869 = vrcp.pop %v7741
        %v7870 = vrcp.pop %v7742
        %v7871 = vrcp.pop %v7743
        %v7872 = vrcp.pop %v7744
        %v7873 = vrcp.pop %v7745
        %v7874 = vrcp.pop %v7746
        %v7875 = vrcp.pop %v7747
        %v7876 = vrcp.pop %v7748
        %v7877 = vrcp.pop %v7749
        %v7878 = vrcp.pop %v7750
        %v7879 = vrcp.pop %v7751
        %v7880 = vrcp.pop %v7752
        %v7881 = vrcp.pop %v7753
        %v7882 = vrcp.pop %v7754
        %v7883 = vrcp.pop %v7755
        %v7884 = vrcp.pop %v7756
        %v7885 = vrcp.pop %v7757
        %v7886 = vrcp.pop %v7758
        %v7887 = vrcp.pop %v7759
        %v7888 = vrcp.pop %v7760
        %v7889 = vrcp.pop %v7761
        %v7890 = vrcp.pop %v7762
        %v7891 = vrcp.pop %v7763
        %v7892 = vrcp.pop %v7764
        %v7893 = vrcp.pop %v7765
        %v7894 = vrcp.pop %v7766
        %v7895 = vrcp.pop %v7767
        %v7896 = vrcp.pop %v7768
        %v7897 = vrcp.pop %v7769
        %v7898 = vrcp.pop %v7770
        %v7899 = vrcp.pop %v7771
        %v7900 = vrcp.pop %v7772
        %v7901 = vrcp.pop %v7773
        %v7902 = vrcp.pop %v7774
        %v7903 = vrcp.pop %v7775
        %v7904 = vrcp.pop %v7776
        %v7905 = vmul.f32 %v7137, %v7777
        %v7906 = vmul.f32 %v7138, %v7778
        %v7907 = vmul.f32 %v7139, %v7779
        %v7908 = vmul.f32 %v7140, %v7780
        %v7909 = vmul.f32 %v7141, %v7781
        %v7910 = vmul.f32 %v7142, %v7782
        %v7911 = vmul.f32 %v7143, %v7783
        %v7912 = vmul.f32 %v7144, %v7784
        %v7913 = vmul.f32 %v7145, %v7785
        %v7914 = vmul.f32 %v7146, %v7786
        %v7915 = vmul.f32 %v7147, %v7787
        %v7916 = vmul.f32 %v7148, %v7788
        %v7917 = vmul.f32 %v7149, %v7789
        %v7918 = vmul.f32 %v7150, %v7790
        %v7919 = vmul.f32 %v7151, %v7791
        %v7920 = vmul.f32 %v7152, %v7792
        %v7921 = vmul.f32 %v7153, %v7793
        %v7922 = vmul.f32 %v7154, %v7794
        %v7923 = vmul.f32 %v7155, %v7795
        %v7924 = vmul.f32 %v7156, %v7796
        %v7925 = vmul.f32 %v7157, %v7797
        %v7926 = vmul.f32 %v7158, %v7798
        %v7927 = vmul.f32 %v7159, %v7799
        %v7928 = vmul.f32 %v7160, %v7800
        %v7929 = vmul.f32 %v7161, %v7801
        %v7930 = vmul.f32 %v7162, %v7802
        %v7931 = vmul.f32 %v7163, %v7803
        %v7932 = vmul.f32 %v7164, %v7804
        %v7933 = vmul.f32 %v7165, %v7805
        %v7934 = vmul.f32 %v7166, %v7806
        %v7935 = vmul.f32 %v7167, %v7807
        %v7936 = vmul.f32 %v7168, %v7808
        %v7937 = vmul.f32 %v7169, %v7809
        %v7938 = vmul.f32 %v7170, %v7810
        %v7939 = vmul.f32 %v7171, %v7811
        %v7940 = vmul.f32 %v7172, %v7812
        %v7941 = vmul.f32 %v7173, %v7813
        %v7942 = vmul.f32 %v7174, %v7814
        %v7943 = vmul.f32 %v7175, %v7815
        %v7944 = vmul.f32 %v7176, %v7816
        %v7945 = vmul.f32 %v7177, %v7817
        %v7946 = vmul.f32 %v7178, %v7818
        %v7947 = vmul.f32 %v7179, %v7819
        %v7948 = vmul.f32 %v7180, %v7820
        %v7949 = vmul.f32 %v7181, %v7821
        %v7950 = vmul.f32 %v7182, %v7822
        %v7951 = vmul.f32 %v7183, %v7823
        %v7952 = vmul.f32 %v7184, %v7824
        %v7953 = vmul.f32 %v7185, %v7825
        %v7954 = vmul.f32 %v7186, %v7826
        %v7955 = vmul.f32 %v7187, %v7827
        %v7956 = vmul.f32 %v7188, %v7828
        %v7957 = vmul.f32 %v7189, %v7829
        %v7958 = vmul.f32 %v7190, %v7830
        %v7959 = vmul.f32 %v7191, %v7831
        %v7960 = vmul.f32 %v7192, %v7832
        %v7961 = vmul.f32 %v7193, %v7833
        %v7962 = vmul.f32 %v7194, %v7834
        %v7963 = vmul.f32 %v7195, %v7835
        %v7964 = vmul.f32 %v7196, %v7836
        %v7965 = vmul.f32 %v7197, %v7837
        %v7966 = vmul.f32 %v7198, %v7838
        %v7967 = vmul.f32 %v7199, %v7839
        %v7968 = vmul.f32 %v7200, %v7840
        %v7969 = vmul.f32 %v7201, %v7841
        %v7970 = vmul.f32 %v7202, %v7842
        %v7971 = vmul.f32 %v7203, %v7843
        %v7972 = vmul.f32 %v7204, %v7844
        %v7973 = vmul.f32 %v7205, %v7845
        %v7974 = vmul.f32 %v7206, %v7846
        %v7975 = vmul.f32 %v7207, %v7847
        %v7976 = vmul.f32 %v7208, %v7848
        %v7977 = vmul.f32 %v7209, %v7849
        %v7978 = vmul.f32 %v7210, %v7850
        %v7979 = vmul.f32 %v7211, %v7851
        %v7980 = vmul.f32 %v7212, %v7852
        %v7981 = vmul.f32 %v7213, %v7853
        %v7982 = vmul.f32 %v7214, %v7854
        %v7983 = vmul.f32 %v7215, %v7855
        %v7984 = vmul.f32 %v7216, %v7856
        %v7985 = vmul.f32 %v7217, %v7857
        %v7986 = vmul.f32 %v7218, %v7858
        %v7987 = vmul.f32 %v7219, %v7859
        %v7988 = vmul.f32 %v7220, %v7860
        %v7989 = vmul.f32 %v7221, %v7861
        %v7990 = vmul.f32 %v7222, %v7862
        %v7991 = vmul.f32 %v7223, %v7863
        %v7992 = vmul.f32 %v7224, %v7864
        %v7993 = vmul.f32 %v7225, %v7865
        %v7994 = vmul.f32 %v7226, %v7866
        %v7995 = vmul.f32 %v7227, %v7867
        %v7996 = vmul.f32 %v7228, %v7868
        %v7997 = vmul.f32 %v7229, %v7869
        %v7998 = vmul.f32 %v7230, %v7870
        %v7999 = vmul.f32 %v7231, %v7871
        %v8000 = vmul.f32 %v7232, %v7872
        %v8001 = vmul.f32 %v7233, %v7873
        %v8002 = vmul.f32 %v7234, %v7874
        %v8003 = vmul.f32 %v7235, %v7875
        %v8004 = vmul.f32 %v7236, %v7876
        %v8005 = vmul.f32 %v7237, %v7877
        %v8006 = vmul.f32 %v7238, %v7878
        %v8007 = vmul.f32 %v7239, %v7879
        %v8008 = vmul.f32 %v7240, %v7880
        %v8009 = vmul.f32 %v7241, %v7881
        %v8010 = vmul.f32 %v7242, %v7882
        %v8011 = vmul.f32 %v7243, %v7883
        %v8012 = vmul.f32 %v7244, %v7884
        %v8013 = vmul.f32 %v7245, %v7885
        %v8014 = vmul.f32 %v7246, %v7886
        %v8015 = vmul.f32 %v7247, %v7887
        %v8016 = vmul.f32 %v7248, %v7888
        %v8017 = vmul.f32 %v7249, %v7889
        %v8018 = vmul.f32 %v7250, %v7890
        %v8019 = vmul.f32 %v7251, %v7891
        %v8020 = vmul.f32 %v7252, %v7892
        %v8021 = vmul.f32 %v7253, %v7893
        %v8022 = vmul.f32 %v7254, %v7894
        %v8023 = vmul.f32 %v7255, %v7895
        %v8024 = vmul.f32 %v7256, %v7896
        %v8025 = vmul.f32 %v7257, %v7897
        %v8026 = vmul.f32 %v7258, %v7898
        %v8027 = vmul.f32 %v7259, %v7899
        %v8028 = vmul.f32 %v7260, %v7900
        %v8029 = vmul.f32 %v7261, %v7901
        %v8030 = vmul.f32 %v7262, %v7902
        %v8031 = vmul.f32 %v7263, %v7903
        %v8032 = vmul.f32 %v7264, %v7904
        %v8033 = vpack.c.bf16 %v7906, %v7905
        %v8034 = vpack.c.bf16 %v7908, %v7907
        %v8035 = vpack.c.bf16 %v7910, %v7909
        %v8036 = vpack.c.bf16 %v7912, %v7911
        %v8037 = vpack.c.bf16 %v7914, %v7913
        %v8038 = vpack.c.bf16 %v7916, %v7915
        %v8039 = vpack.c.bf16 %v7918, %v7917
        %v8040 = vpack.c.bf16 %v7920, %v7919
        %v8041 = vpack.c.bf16 %v7922, %v7921
        %v8042 = vpack.c.bf16 %v7924, %v7923
        %v8043 = vpack.c.bf16 %v7926, %v7925
        %v8044 = vpack.c.bf16 %v7928, %v7927
        %v8045 = vpack.c.bf16 %v7930, %v7929
        %v8046 = vpack.c.bf16 %v7932, %v7931
        %v8047 = vpack.c.bf16 %v7934, %v7933
        %v8048 = vpack.c.bf16 %v7936, %v7935
        %v8049 = vpack.c.bf16 %v7938, %v7937
        %v8050 = vpack.c.bf16 %v7940, %v7939
        %v8051 = vpack.c.bf16 %v7942, %v7941
        %v8052 = vpack.c.bf16 %v7944, %v7943
        %v8053 = vpack.c.bf16 %v7946, %v7945
        %v8054 = vpack.c.bf16 %v7948, %v7947
        %v8055 = vpack.c.bf16 %v7950, %v7949
        %v8056 = vpack.c.bf16 %v7952, %v7951
        %v8057 = vpack.c.bf16 %v7954, %v7953
        %v8058 = vpack.c.bf16 %v7956, %v7955
        %v8059 = vpack.c.bf16 %v7958, %v7957
        %v8060 = vpack.c.bf16 %v7960, %v7959
        %v8061 = vpack.c.bf16 %v7962, %v7961
        %v8062 = vpack.c.bf16 %v7964, %v7963
        %v8063 = vpack.c.bf16 %v7966, %v7965
        %v8064 = vpack.c.bf16 %v7968, %v7967
        %v8065 = vpack.c.bf16 %v7970, %v7969
        %v8066 = vpack.c.bf16 %v7972, %v7971
        %v8067 = vpack.c.bf16 %v7974, %v7973
        %v8068 = vpack.c.bf16 %v7976, %v7975
        %v8069 = vpack.c.bf16 %v7978, %v7977
        %v8070 = vpack.c.bf16 %v7980, %v7979
        %v8071 = vpack.c.bf16 %v7982, %v7981
        %v8072 = vpack.c.bf16 %v7984, %v7983
        %v8073 = vpack.c.bf16 %v7986, %v7985
        %v8074 = vpack.c.bf16 %v7988, %v7987
        %v8075 = vpack.c.bf16 %v7990, %v7989
        %v8076 = vpack.c.bf16 %v7992, %v7991
        %v8077 = vpack.c.bf16 %v7994, %v7993
        %v8078 = vpack.c.bf16 %v7996, %v7995
        %v8079 = vpack.c.bf16 %v7998, %v7997
        %v8080 = vpack.c.bf16 %v8000, %v7999
        %v8081 = vpack.c.bf16 %v8002, %v8001
        %v8082 = vpack.c.bf16 %v8004, %v8003
        %v8083 = vpack.c.bf16 %v8006, %v8005
        %v8084 = vpack.c.bf16 %v8008, %v8007
        %v8085 = vpack.c.bf16 %v8010, %v8009
        %v8086 = vpack.c.bf16 %v8012, %v8011
        %v8087 = vpack.c.bf16 %v8014, %v8013
        %v8088 = vpack.c.bf16 %v8016, %v8015
        %v8089 = vpack.c.bf16 %v8018, %v8017
        %v8090 = vpack.c.bf16 %v8020, %v8019
        %v8091 = vpack.c.bf16 %v8022, %v8021
        %v8092 = vpack.c.bf16 %v8024, %v8023
        %v8093 = vpack.c.bf16 %v8026, %v8025
        %v8094 = vpack.c.bf16 %v8028, %v8027
        %v8095 = vpack.c.bf16 %v8030, %v8029
        %v8096 = vpack.c.bf16 %v8032, %v8031
        %v8097 = vld [vmem:[#allocation23] sm:$0xf]
        %v8098 = vld [vmem:[#allocation23 + $0x4] sm:$0xf]
        %v8099 = vld [vmem:[#allocation23 + $0x8] sm:$0xf]
        %v8100 = vld [vmem:[#allocation23 + $0xc] sm:$0xf]
        %v8101 = vld [vmem:[#allocation23 + $0x10] sm:$0xf]
        %v8102 = vld [vmem:[#allocation23 + $0x14] sm:$0xf]
        %v8103 = vld [vmem:[#allocation23 + $0x18] sm:$0xf]
        %v8104 = vld [vmem:[#allocation23 + $0x1c] sm:$0xf]
        %v8105 = vld [vmem:[#allocation23 + $0x20] sm:$0xf]
        %v8106 = vld [vmem:[#allocation23 + $0x24] sm:$0xf]
        %v8107 = vld [vmem:[#allocation23 + $0x28] sm:$0xf]
        %v8108 = vld [vmem:[#allocation23 + $0x2c] sm:$0xf]
        %v8109 = vld [vmem:[#allocation23 + $0x30] sm:$0xf]
        %v8110 = vld [vmem:[#allocation23 + $0x34] sm:$0xf]
        %v8111 = vld [vmem:[#allocation23 + $0x38] sm:$0xf]
        %v8112 = vld [vmem:[#allocation23 + $0x3c] sm:$0xf]
        %v8129 = vunpack.c.l.b16 %v8097
        %v8130 = vunpack.c.l.b16 %v8098
        %v8131 = vunpack.c.l.b16 %v8099
        %v8132 = vunpack.c.l.b16 %v8100
        %v8133 = vunpack.c.l.b16 %v8101
        %v8134 = vunpack.c.l.b16 %v8102
        %v8135 = vunpack.c.l.b16 %v8103
        %v8136 = vunpack.c.l.b16 %v8104
        %v8137 = vunpack.c.l.b16 %v8105
        %v8138 = vunpack.c.l.b16 %v8106
        %v8139 = vunpack.c.l.b16 %v8107
        %v8140 = vunpack.c.l.b16 %v8108
        %v8141 = vunpack.c.l.b16 %v8109
        %v8142 = vunpack.c.l.b16 %v8110
        %v8143 = vunpack.c.l.b16 %v8111
        %v8144 = vunpack.c.l.b16 %v8112
        %v8145 = vpack.c.b16 %v8130, %v8129
        %v8146 = vpack.c.b16 %v8132, %v8131
        %v8147 = vpack.c.b16 %v8134, %v8133
        %v8148 = vpack.c.b16 %v8136, %v8135
        %v8149 = vpack.c.b16 %v8138, %v8137
        %v8150 = vpack.c.b16 %v8140, %v8139
        %v8151 = vpack.c.b16 %v8142, %v8141
        %v8152 = vpack.c.b16 %v8144, %v8143
        %8161 = vmatprep.subr.bf16.mxu0 0
        %8162 = vmatpush1.bf16.msra.mxu0 %v8145
        %8163 = vmatprep.subr.bf16.mxu0 0
        %8164 = vmatpush1.bf16.msra.mxu0 %v8146
        %8165 = vmatprep.subr.bf16.mxu0 0
        %8166 = vmatpush1.bf16.msra.mxu0 %v8147
        %8167 = vmatprep.subr.bf16.mxu0 0
        %8168 = vmatpush1.bf16.msra.mxu0 %v8148
        %8169 = vmatprep.subr.bf16.mxu0 0
        %8170 = vmatpush1.bf16.msra.mxu0 %v8149
        %8171 = vmatprep.subr.bf16.mxu0 0
        %8172 = vmatpush1.bf16.msra.mxu0 %v8150
        %8173 = vmatprep.subr.bf16.mxu0 0
        %8174 = vmatpush1.bf16.msra.mxu0 %v8151
        %8175 = vmatprep.subr.bf16.mxu0 0
        %8176 = vmatpush1.bf16.msra.mxu0 %v8152
        %8177 = vmatprep.subr.bf16.mxu0 0
        %8178 = vmatpush1.bf16.msra.mxu0 0
        %8179 = vmatprep.subr.bf16.mxu0 0
        %8180 = vmatpush1.bf16.msra.mxu0 0
        %8181 = vmatprep.subr.bf16.mxu0 0
        %8182 = vmatpush1.bf16.msra.mxu0 0
        %8183 = vmatprep.subr.bf16.mxu0 0
        %8184 = vmatpush1.bf16.msra.mxu0 0
        %8185 = vmatprep.subr.bf16.mxu0 0
        %8186 = vmatpush1.bf16.msra.mxu0 0
        %8187 = vmatprep.subr.bf16.mxu0 0
        %8188 = vmatpush1.bf16.msra.mxu0 0
        %8189 = vmatprep.subr.bf16.mxu0 0
        %8190 = vmatpush1.bf16.msra.mxu0 0
        %8191 = vmatprep.subr.bf16.mxu0 0
        %8192 = vmatpush1.bf16.msra.mxu0 0
        %8193 = vmatprep.mubr.bf16.mxu0 0
        %8194 = vmatmul.mubr.bf16.gmra.mrb[0].mxu0 %v8033
        %v8195 = vpop.f32.mrb[0].mxu0
        %v8196 = vadd.f32 0.0, %v8195
        %v8197 = vpop.f32.mrb[0].mxu0
        %v8198 = vpop.f32.mrb[0].mxu0
        %v8199 = vadd.f32 0.0, %v8198
        %v8200 = vpop.f32.mrb[0].mxu0
        %8201 = vmatprep.mubr.bf16.mxu0 0
        %8202 = vmatmul.mubr.bf16.gmra.mrb[0].mxu0 %v8034
        %v8203 = vpop.f32.mrb[0].mxu0
        %v8204 = vadd.f32 0.0, %v8203
        %v8205 = vpop.f32.mrb[0].mxu0
        %v8206 = vpop.f32.mrb[0].mxu0
        %v8207 = vadd.f32 0.0, %v8206
        %v8208 = vpop.f32.mrb[0].mxu0
        %8209 = vmatprep.mubr.bf16.mxu0 0
        %8210 = vmatmul.mubr.bf16.gmra.mrb[0].mxu0 %v8035
        %v8211 = vpop.f32.mrb[0].mxu0
        %v8212 = vadd.f32 0.0, %v8211
        %v8213 = vpop.f32.mrb[0].mxu0
        %v8214 = vpop.f32.mrb[0].mxu0
        %v8215 = vadd.f32 0.0, %v8214
        %v8216 = vpop.f32.mrb[0].mxu0
        %8217 = vmatprep.mubr.bf16.mxu0 0
        %8218 = vmatmul.mubr.bf16.gmra.mrb[0].mxu0 %v8036
        %v8219 = vpop.f32.mrb[0].mxu0
        %v8220 = vadd.f32 0.0, %v8219
        %v8221 = vpop.f32.mrb[0].mxu0
        %v8222 = vpop.f32.mrb[0].mxu0
        %v8223 = vadd.f32 0.0, %v8222
        %v8224 = vpop.f32.mrb[0].mxu0
        %8225 = vmatprep.mubr.bf16.mxu0 0
        %8226 = vmatmul.mubr.bf16.gmra.mrb[0].mxu0 %v8037
        %v8227 = vpop.f32.mrb[0].mxu0
        %v8228 = vadd.f32 0.0, %v8227
        %v8229 = vpop.f32.mrb[0].mxu0
        %v8230 = vpop.f32.mrb[0].mxu0
        %v8231 = vadd.f32 0.0, %v8230
        %v8232 = vpop.f32.mrb[0].mxu0
        %8233 = vmatprep.mubr.bf16.mxu0 0
        %8234 = vmatmul.mubr.bf16.gmra.mrb[0].mxu0 %v8038
        %v8235 = vpop.f32.mrb[0].mxu0
        %v8236 = vadd.f32 0.0, %v8235
        %v8237 = vpop.f32.mrb[0].mxu0
        %v8238 = vpop.f32.mrb[0].mxu0
        %v8239 = vadd.f32 0.0, %v8238
        %v8240 = vpop.f32.mrb[0].mxu0
        %8241 = vmatprep.mubr.bf16.mxu0 0
        %8242 = vmatmul.mubr.bf16.gmra.mrb[0].mxu0 %v8039
        %v8243 = vpop.f32.mrb[0].mxu0
        %v8244 = vadd.f32 0.0, %v8243
        %v8245 = vpop.f32.mrb[0].mxu0
        %v8246 = vpop.f32.mrb[0].mxu0
        %v8247 = vadd.f32 0.0, %v8246
        %v8248 = vpop.f32.mrb[0].mxu0
        %8249 = vmatprep.mubr.bf16.mxu0 0
        %8250 = vmatmul.mubr.bf16.gmra.mrb[0].mxu0 %v8040
        %v8251 = vpop.f32.mrb[0].mxu0
        %v8252 = vadd.f32 0.0, %v8251
        %v8253 = vpop.f32.mrb[0].mxu0
        %v8254 = vpop.f32.mrb[0].mxu0
        %v8255 = vadd.f32 0.0, %v8254
        %v8256 = vpop.f32.mrb[0].mxu0
        %8257 = vmatprep.mubr.bf16.mxu0 0
        %8258 = vmatmul.mubr.bf16.gmra.mrb[0].mxu0 %v8041
        %v8259 = vpop.f32.mrb[0].mxu0
        %v8260 = vadd.f32 0.0, %v8259
        %v8261 = vpop.f32.mrb[0].mxu0
        %v8262 = vpop.f32.mrb[0].mxu0
        %v8263 = vadd.f32 0.0, %v8262
        %v8264 = vpop.f32.mrb[0].mxu0
        %8265 = vmatprep.mubr.bf16.mxu0 0
        %8266 = vmatmul.mubr.bf16.gmra.mrb[0].mxu0 %v8042
        %v8267 = vpop.f32.mrb[0].mxu0
        %v8268 = vadd.f32 0.0, %v8267
        %v8269 = vpop.f32.mrb[0].mxu0
        %v8270 = vpop.f32.mrb[0].mxu0
        %v8271 = vadd.f32 0.0, %v8270
        %v8272 = vpop.f32.mrb[0].mxu0
        %8273 = vmatprep.mubr.bf16.mxu0 0
        %8274 = vmatmul.mubr.bf16.gmra.mrb[0].mxu0 %v8043
        %v8275 = vpop.f32.mrb[0].mxu0
        %v8276 = vadd.f32 0.0, %v8275
        %v8277 = vpop.f32.mrb[0].mxu0
        %v8278 = vpop.f32.mrb[0].mxu0
        %v8279 = vadd.f32 0.0, %v8278
        %v8280 = vpop.f32.mrb[0].mxu0
        %8281 = vmatprep.mubr.bf16.mxu0 0
        %8282 = vmatmul.mubr.bf16.gmra.mrb[0].mxu0 %v8044
        %v8283 = vpop.f32.mrb[0].mxu0
        %v8284 = vadd.f32 0.0, %v8283
        %v8285 = vpop.f32.mrb[0].mxu0
        %v8286 = vpop.f32.mrb[0].mxu0
        %v8287 = vadd.f32 0.0, %v8286
        %v8288 = vpop.f32.mrb[0].mxu0
        %8289 = vmatprep.mubr.bf16.mxu0 0
        %8290 = vmatmul.mubr.bf16.gmra.mrb[0].mxu0 %v8045
        %v8291 = vpop.f32.mrb[0].mxu0
        %v8292 = vadd.f32 0.0, %v8291
        %v8293 = vpop.f32.mrb[0].mxu0
        %v8294 = vpop.f32.mrb[0].mxu0
        %v8295 = vadd.f32 0.0, %v8294
        %v8296 = vpop.f32.mrb[0].mxu0
        %8297 = vmatprep.mubr.bf16.mxu0 0
        %8298 = vmatmul.mubr.bf16.gmra.mrb[0].mxu0 %v8046
        %v8299 = vpop.f32.mrb[0].mxu0
        %v8300 = vadd.f32 0.0, %v8299
        %v8301 = vpop.f32.mrb[0].mxu0
        %v8302 = vpop.f32.mrb[0].mxu0
        %v8303 = vadd.f32 0.0, %v8302
        %v8304 = vpop.f32.mrb[0].mxu0
        %8305 = vmatprep.mubr.bf16.mxu0 0
        %8306 = vmatmul.mubr.bf16.gmra.mrb[0].mxu0 %v8047
        %v8307 = vpop.f32.mrb[0].mxu0
        %v8308 = vadd.f32 0.0, %v8307
        %v8309 = vpop.f32.mrb[0].mxu0
        %v8310 = vpop.f32.mrb[0].mxu0
        %v8311 = vadd.f32 0.0, %v8310
        %v8312 = vpop.f32.mrb[0].mxu0
        %8313 = vmatprep.mubr.bf16.mxu0 0
        %8314 = vmatmul.mubr.bf16.gmra.mrb[0].mxu0 %v8048
        %v8315 = vpop.f32.mrb[0].mxu0
        %v8316 = vadd.f32 0.0, %v8315
        %v8317 = vpop.f32.mrb[0].mxu0
        %v8318 = vpop.f32.mrb[0].mxu0
        %v8319 = vadd.f32 0.0, %v8318
        %v8320 = vpop.f32.mrb[0].mxu0
        %8321 = vmatprep.mubr.bf16.mxu0 0
        %8322 = vmatmul.mubr.bf16.gmra.mrb[0].mxu0 %v8049
        %v8323 = vpop.f32.mrb[0].mxu0
        %v8324 = vadd.f32 0.0, %v8323
        %v8325 = vpop.f32.mrb[0].mxu0
        %v8326 = vpop.f32.mrb[0].mxu0
        %v8327 = vadd.f32 0.0, %v8326
        %v8328 = vpop.f32.mrb[0].mxu0
        %8329 = vmatprep.mubr.bf16.mxu0 0
        %8330 = vmatmul.mubr.bf16.gmra.mrb[0].mxu0 %v8050
        %v8331 = vpop.f32.mrb[0].mxu0
        %v8332 = vadd.f32 0.0, %v8331
        %v8333 = vpop.f32.mrb[0].mxu0
        %v8334 = vpop.f32.mrb[0].mxu0
        %v8335 = vadd.f32 0.0, %v8334
        %v8336 = vpop.f32.mrb[0].mxu0
        %8337 = vmatprep.mubr.bf16.mxu0 0
        %8338 = vmatmul.mubr.bf16.gmra.mrb[0].mxu0 %v8051
        %v8339 = vpop.f32.mrb[0].mxu0
        %v8340 = vadd.f32 0.0, %v8339
        %v8341 = vpop.f32.mrb[0].mxu0
        %v8342 = vpop.f32.mrb[0].mxu0
        %v8343 = vadd.f32 0.0, %v8342
        %v8344 = vpop.f32.mrb[0].mxu0
        %8345 = vmatprep.mubr.bf16.mxu0 0
        %8346 = vmatmul.mubr.bf16.gmra.mrb[0].mxu0 %v8052
        %v8347 = vpop.f32.mrb[0].mxu0
        %v8348 = vadd.f32 0.0, %v8347
        %v8349 = vpop.f32.mrb[0].mxu0
        %v8350 = vpop.f32.mrb[0].mxu0
        %v8351 = vadd.f32 0.0, %v8350
        %v8352 = vpop.f32.mrb[0].mxu0
        %8353 = vmatprep.mubr.bf16.mxu0 0
        %8354 = vmatmul.mubr.bf16.gmra.mrb[0].mxu0 %v8053
        %v8355 = vpop.f32.mrb[0].mxu0
        %v8356 = vadd.f32 0.0, %v8355
        %v8357 = vpop.f32.mrb[0].mxu0
        %v8358 = vpop.f32.mrb[0].mxu0
        %v8359 = vadd.f32 0.0, %v8358
        %v8360 = vpop.f32.mrb[0].mxu0
        %8361 = vmatprep.mubr.bf16.mxu0 0
        %8362 = vmatmul.mubr.bf16.gmra.mrb[0].mxu0 %v8054
        %v8363 = vpop.f32.mrb[0].mxu0
        %v8364 = vadd.f32 0.0, %v8363
        %v8365 = vpop.f32.mrb[0].mxu0
        %v8366 = vpop.f32.mrb[0].mxu0
        %v8367 = vadd.f32 0.0, %v8366
        %v8368 = vpop.f32.mrb[0].mxu0
        %8369 = vmatprep.mubr.bf16.mxu0 0
        %8370 = vmatmul.mubr.bf16.gmra.mrb[0].mxu0 %v8055
        %v8371 = vpop.f32.mrb[0].mxu0
        %v8372 = vadd.f32 0.0, %v8371
        %v8373 = vpop.f32.mrb[0].mxu0
        %v8374 = vpop.f32.mrb[0].mxu0
        %v8375 = vadd.f32 0.0, %v8374
        %v8376 = vpop.f32.mrb[0].mxu0
        %8377 = vmatprep.mubr.bf16.mxu0 0
        %8378 = vmatmul.mubr.bf16.gmra.mrb[0].mxu0 %v8056
        %v8379 = vpop.f32.mrb[0].mxu0
        %v8380 = vadd.f32 0.0, %v8379
        %v8381 = vpop.f32.mrb[0].mxu0
        %v8382 = vpop.f32.mrb[0].mxu0
        %v8383 = vadd.f32 0.0, %v8382
        %v8384 = vpop.f32.mrb[0].mxu0
        %8385 = vmatprep.mubr.bf16.mxu0 0
        %8386 = vmatmul.mubr.bf16.gmra.mrb[0].mxu0 %v8057
        %v8387 = vpop.f32.mrb[0].mxu0
        %v8388 = vadd.f32 0.0, %v8387
        %v8389 = vpop.f32.mrb[0].mxu0
        %v8390 = vpop.f32.mrb[0].mxu0
        %v8391 = vadd.f32 0.0, %v8390
        %v8392 = vpop.f32.mrb[0].mxu0
        %8393 = vmatprep.mubr.bf16.mxu0 0
        %8394 = vmatmul.mubr.bf16.gmra.mrb[0].mxu0 %v8058
        %v8395 = vpop.f32.mrb[0].mxu0
        %v8396 = vadd.f32 0.0, %v8395
        %v8397 = vpop.f32.mrb[0].mxu0
        %v8398 = vpop.f32.mrb[0].mxu0
        %v8399 = vadd.f32 0.0, %v8398
        %v8400 = vpop.f32.mrb[0].mxu0
        %8401 = vmatprep.mubr.bf16.mxu0 0
        %8402 = vmatmul.mubr.bf16.gmra.mrb[0].mxu0 %v8059
        %v8403 = vpop.f32.mrb[0].mxu0
        %v8404 = vadd.f32 0.0, %v8403
        %v8405 = vpop.f32.mrb[0].mxu0
        %v8406 = vpop.f32.mrb[0].mxu0
        %v8407 = vadd.f32 0.0, %v8406
        %v8408 = vpop.f32.mrb[0].mxu0
        %8409 = vmatprep.mubr.bf16.mxu0 0
        %8410 = vmatmul.mubr.bf16.gmra.mrb[0].mxu0 %v8060
        %v8411 = vpop.f32.mrb[0].mxu0
        %v8412 = vadd.f32 0.0, %v8411
        %v8413 = vpop.f32.mrb[0].mxu0
        %v8414 = vpop.f32.mrb[0].mxu0
        %v8415 = vadd.f32 0.0, %v8414
        %v8416 = vpop.f32.mrb[0].mxu0
        %8417 = vmatprep.mubr.bf16.mxu0 0
        %8418 = vmatmul.mubr.bf16.gmra.mrb[0].mxu0 %v8061
        %v8419 = vpop.f32.mrb[0].mxu0
        %v8420 = vadd.f32 0.0, %v8419
        %v8421 = vpop.f32.mrb[0].mxu0
        %v8422 = vpop.f32.mrb[0].mxu0
        %v8423 = vadd.f32 0.0, %v8422
        %v8424 = vpop.f32.mrb[0].mxu0
        %8425 = vmatprep.mubr.bf16.mxu0 0
        %8426 = vmatmul.mubr.bf16.gmra.mrb[0].mxu0 %v8062
        %v8427 = vpop.f32.mrb[0].mxu0
        %v8428 = vadd.f32 0.0, %v8427
        %v8429 = vpop.f32.mrb[0].mxu0
        %v8430 = vpop.f32.mrb[0].mxu0
        %v8431 = vadd.f32 0.0, %v8430
        %v8432 = vpop.f32.mrb[0].mxu0
        %8433 = vmatprep.mubr.bf16.mxu0 0
        %8434 = vmatmul.mubr.bf16.gmra.mrb[0].mxu0 %v8063
        %v8435 = vpop.f32.mrb[0].mxu0
        %v8436 = vadd.f32 0.0, %v8435
        %v8437 = vpop.f32.mrb[0].mxu0
        %v8438 = vpop.f32.mrb[0].mxu0
        %v8439 = vadd.f32 0.0, %v8438
        %v8440 = vpop.f32.mrb[0].mxu0
        %8441 = vmatprep.mubr.bf16.mxu0 0
        %8442 = vmatmul.mubr.bf16.gmra.mrb[0].mxu0 %v8064
        %v8443 = vpop.f32.mrb[0].mxu0
        %v8444 = vadd.f32 0.0, %v8443
        %v8445 = vpop.f32.mrb[0].mxu0
        %v8446 = vpop.f32.mrb[0].mxu0
        %v8447 = vadd.f32 0.0, %v8446
        %v8448 = vpop.f32.mrb[0].mxu0
        %8449 = vmatprep.mubr.bf16.mxu0 0
        %8450 = vmatmul.mubr.bf16.gmra.mrb[0].mxu0 %v8065
        %v8451 = vpop.f32.mrb[0].mxu0
        %v8452 = vadd.f32 0.0, %v8451
        %v8453 = vpop.f32.mrb[0].mxu0
        %v8454 = vpop.f32.mrb[0].mxu0
        %v8455 = vadd.f32 0.0, %v8454
        %v8456 = vpop.f32.mrb[0].mxu0
        %8457 = vmatprep.mubr.bf16.mxu0 0
        %8458 = vmatmul.mubr.bf16.gmra.mrb[0].mxu0 %v8066
        %v8459 = vpop.f32.mrb[0].mxu0
        %v8460 = vadd.f32 0.0, %v8459
        %v8461 = vpop.f32.mrb[0].mxu0
        %v8462 = vpop.f32.mrb[0].mxu0
        %v8463 = vadd.f32 0.0, %v8462
        %v8464 = vpop.f32.mrb[0].mxu0
        %8465 = vmatprep.mubr.bf16.mxu0 0
        %8466 = vmatmul.mubr.bf16.gmra.mrb[0].mxu0 %v8067
        %v8467 = vpop.f32.mrb[0].mxu0
        %v8468 = vadd.f32 0.0, %v8467
        %v8469 = vpop.f32.mrb[0].mxu0
        %v8470 = vpop.f32.mrb[0].mxu0
        %v8471 = vadd.f32 0.0, %v8470
        %v8472 = vpop.f32.mrb[0].mxu0
        %8473 = vmatprep.mubr.bf16.mxu0 0
        %8474 = vmatmul.mubr.bf16.gmra.mrb[0].mxu0 %v8068
        %v8475 = vpop.f32.mrb[0].mxu0
        %v8476 = vadd.f32 0.0, %v8475
        %v8477 = vpop.f32.mrb[0].mxu0
        %v8478 = vpop.f32.mrb[0].mxu0
        %v8479 = vadd.f32 0.0, %v8478
        %v8480 = vpop.f32.mrb[0].mxu0
        %8481 = vmatprep.mubr.bf16.mxu0 0
        %8482 = vmatmul.mubr.bf16.gmra.mrb[0].mxu0 %v8069
        %v8483 = vpop.f32.mrb[0].mxu0
        %v8484 = vadd.f32 0.0, %v8483
        %v8485 = vpop.f32.mrb[0].mxu0
        %v8486 = vpop.f32.mrb[0].mxu0
        %v8487 = vadd.f32 0.0, %v8486
        %v8488 = vpop.f32.mrb[0].mxu0
        %8489 = vmatprep.mubr.bf16.mxu0 0
        %8490 = vmatmul.mubr.bf16.gmra.mrb[0].mxu0 %v8070
        %v8491 = vpop.f32.mrb[0].mxu0
        %v8492 = vadd.f32 0.0, %v8491
        %v8493 = vpop.f32.mrb[0].mxu0
        %v8494 = vpop.f32.mrb[0].mxu0
        %v8495 = vadd.f32 0.0, %v8494
        %v8496 = vpop.f32.mrb[0].mxu0
        %8497 = vmatprep.mubr.bf16.mxu0 0
        %8498 = vmatmul.mubr.bf16.gmra.mrb[0].mxu0 %v8071
        %v8499 = vpop.f32.mrb[0].mxu0
        %v8500 = vadd.f32 0.0, %v8499
        %v8501 = vpop.f32.mrb[0].mxu0
        %v8502 = vpop.f32.mrb[0].mxu0
        %v8503 = vadd.f32 0.0, %v8502
        %v8504 = vpop.f32.mrb[0].mxu0
        %8505 = vmatprep.mubr.bf16.mxu0 0
        %8506 = vmatmul.mubr.bf16.gmra.mrb[0].mxu0 %v8072
        %v8507 = vpop.f32.mrb[0].mxu0
        %v8508 = vadd.f32 0.0, %v8507
        %v8509 = vpop.f32.mrb[0].mxu0
        %v8510 = vpop.f32.mrb[0].mxu0
        %v8511 = vadd.f32 0.0, %v8510
        %v8512 = vpop.f32.mrb[0].mxu0
        %8513 = vmatprep.mubr.bf16.mxu0 0
        %8514 = vmatmul.mubr.bf16.gmra.mrb[0].mxu0 %v8073
        %v8515 = vpop.f32.mrb[0].mxu0
        %v8516 = vadd.f32 0.0, %v8515
        %v8517 = vpop.f32.mrb[0].mxu0
        %v8518 = vpop.f32.mrb[0].mxu0
        %v8519 = vadd.f32 0.0, %v8518
        %v8520 = vpop.f32.mrb[0].mxu0
        %8521 = vmatprep.mubr.bf16.mxu0 0
        %8522 = vmatmul.mubr.bf16.gmra.mrb[0].mxu0 %v8074
        %v8523 = vpop.f32.mrb[0].mxu0
        %v8524 = vadd.f32 0.0, %v8523
        %v8525 = vpop.f32.mrb[0].mxu0
        %v8526 = vpop.f32.mrb[0].mxu0
        %v8527 = vadd.f32 0.0, %v8526
        %v8528 = vpop.f32.mrb[0].mxu0
        %8529 = vmatprep.mubr.bf16.mxu0 0
        %8530 = vmatmul.mubr.bf16.gmra.mrb[0].mxu0 %v8075
        %v8531 = vpop.f32.mrb[0].mxu0
        %v8532 = vadd.f32 0.0, %v8531
        %v8533 = vpop.f32.mrb[0].mxu0
        %v8534 = vpop.f32.mrb[0].mxu0
        %v8535 = vadd.f32 0.0, %v8534
        %v8536 = vpop.f32.mrb[0].mxu0
        %8537 = vmatprep.mubr.bf16.mxu0 0
        %8538 = vmatmul.mubr.bf16.gmra.mrb[0].mxu0 %v8076
        %v8539 = vpop.f32.mrb[0].mxu0
        %v8540 = vadd.f32 0.0, %v8539
        %v8541 = vpop.f32.mrb[0].mxu0
        %v8542 = vpop.f32.mrb[0].mxu0
        %v8543 = vadd.f32 0.0, %v8542
        %v8544 = vpop.f32.mrb[0].mxu0
        %8545 = vmatprep.mubr.bf16.mxu0 0
        %8546 = vmatmul.mubr.bf16.gmra.mrb[0].mxu0 %v8077
        %v8547 = vpop.f32.mrb[0].mxu0
        %v8548 = vadd.f32 0.0, %v8547
        %v8549 = vpop.f32.mrb[0].mxu0
        %v8550 = vpop.f32.mrb[0].mxu0
        %v8551 = vadd.f32 0.0, %v8550
        %v8552 = vpop.f32.mrb[0].mxu0
        %8553 = vmatprep.mubr.bf16.mxu0 0
        %8554 = vmatmul.mubr.bf16.gmra.mrb[0].mxu0 %v8078
        %v8555 = vpop.f32.mrb[0].mxu0
        %v8556 = vadd.f32 0.0, %v8555
        %v8557 = vpop.f32.mrb[0].mxu0
        %v8558 = vpop.f32.mrb[0].mxu0
        %v8559 = vadd.f32 0.0, %v8558
        %v8560 = vpop.f32.mrb[0].mxu0
        %8561 = vmatprep.mubr.bf16.mxu0 0
        %8562 = vmatmul.mubr.bf16.gmra.mrb[0].mxu0 %v8079
        %v8563 = vpop.f32.mrb[0].mxu0
        %v8564 = vadd.f32 0.0, %v8563
        %v8565 = vpop.f32.mrb[0].mxu0
        %v8566 = vpop.f32.mrb[0].mxu0
        %v8567 = vadd.f32 0.0, %v8566
        %v8568 = vpop.f32.mrb[0].mxu0
        %8569 = vmatprep.mubr.bf16.mxu0 0
        %8570 = vmatmul.mubr.bf16.gmra.mrb[0].mxu0 %v8080
        %v8571 = vpop.f32.mrb[0].mxu0
        %v8572 = vadd.f32 0.0, %v8571
        %v8573 = vpop.f32.mrb[0].mxu0
        %v8574 = vpop.f32.mrb[0].mxu0
        %v8575 = vadd.f32 0.0, %v8574
        %v8576 = vpop.f32.mrb[0].mxu0
        %8577 = vmatprep.mubr.bf16.mxu0 0
        %8578 = vmatmul.mubr.bf16.gmra.mrb[0].mxu0 %v8081
        %v8579 = vpop.f32.mrb[0].mxu0
        %v8580 = vadd.f32 0.0, %v8579
        %v8581 = vpop.f32.mrb[0].mxu0
        %v8582 = vpop.f32.mrb[0].mxu0
        %v8583 = vadd.f32 0.0, %v8582
        %v8584 = vpop.f32.mrb[0].mxu0
        %8585 = vmatprep.mubr.bf16.mxu0 0
        %8586 = vmatmul.mubr.bf16.gmra.mrb[0].mxu0 %v8082
        %v8587 = vpop.f32.mrb[0].mxu0
        %v8588 = vadd.f32 0.0, %v8587
        %v8589 = vpop.f32.mrb[0].mxu0
        %v8590 = vpop.f32.mrb[0].mxu0
        %v8591 = vadd.f32 0.0, %v8590
        %v8592 = vpop.f32.mrb[0].mxu0
        %8593 = vmatprep.mubr.bf16.mxu0 0
        %8594 = vmatmul.mubr.bf16.gmra.mrb[0].mxu0 %v8083
        %v8595 = vpop.f32.mrb[0].mxu0
        %v8596 = vadd.f32 0.0, %v8595
        %v8597 = vpop.f32.mrb[0].mxu0
        %v8598 = vpop.f32.mrb[0].mxu0
        %v8599 = vadd.f32 0.0, %v8598
        %v8600 = vpop.f32.mrb[0].mxu0
        %8601 = vmatprep.mubr.bf16.mxu0 0
        %8602 = vmatmul.mubr.bf16.gmra.mrb[0].mxu0 %v8084
        %v8603 = vpop.f32.mrb[0].mxu0
        %v8604 = vadd.f32 0.0, %v8603
        %v8605 = vpop.f32.mrb[0].mxu0
        %v8606 = vpop.f32.mrb[0].mxu0
        %v8607 = vadd.f32 0.0, %v8606
        %v8608 = vpop.f32.mrb[0].mxu0
        %8609 = vmatprep.mubr.bf16.mxu0 0
        %8610 = vmatmul.mubr.bf16.gmra.mrb[0].mxu0 %v8085
        %v8611 = vpop.f32.mrb[0].mxu0
        %v8612 = vadd.f32 0.0, %v8611
        %v8613 = vpop.f32.mrb[0].mxu0
        %v8614 = vpop.f32.mrb[0].mxu0
        %v8615 = vadd.f32 0.0, %v8614
        %v8616 = vpop.f32.mrb[0].mxu0
        %8617 = vmatprep.mubr.bf16.mxu0 0
        %8618 = vmatmul.mubr.bf16.gmra.mrb[0].mxu0 %v8086
        %v8619 = vpop.f32.mrb[0].mxu0
        %v8620 = vadd.f32 0.0, %v8619
        %v8621 = vpop.f32.mrb[0].mxu0
        %v8622 = vpop.f32.mrb[0].mxu0
        %v8623 = vadd.f32 0.0, %v8622
        %v8624 = vpop.f32.mrb[0].mxu0
        %8625 = vmatprep.mubr.bf16.mxu0 0
        %8626 = vmatmul.mubr.bf16.gmra.mrb[0].mxu0 %v8087
        %v8627 = vpop.f32.mrb[0].mxu0
        %v8628 = vadd.f32 0.0, %v8627
        %v8629 = vpop.f32.mrb[0].mxu0
        %v8630 = vpop.f32.mrb[0].mxu0
        %v8631 = vadd.f32 0.0, %v8630
        %v8632 = vpop.f32.mrb[0].mxu0
        %8633 = vmatprep.mubr.bf16.mxu0 0
        %8634 = vmatmul.mubr.bf16.gmra.mrb[0].mxu0 %v8088
        %v8635 = vpop.f32.mrb[0].mxu0
        %v8636 = vadd.f32 0.0, %v8635
        %v8637 = vpop.f32.mrb[0].mxu0
        %v8638 = vpop.f32.mrb[0].mxu0
        %v8639 = vadd.f32 0.0, %v8638
        %v8640 = vpop.f32.mrb[0].mxu0
        %8641 = vmatprep.mubr.bf16.mxu0 0
        %8642 = vmatmul.mubr.bf16.gmra.mrb[0].mxu0 %v8089
        %v8643 = vpop.f32.mrb[0].mxu0
        %v8644 = vadd.f32 0.0, %v8643
        %v8645 = vpop.f32.mrb[0].mxu0
        %v8646 = vpop.f32.mrb[0].mxu0
        %v8647 = vadd.f32 0.0, %v8646
        %v8648 = vpop.f32.mrb[0].mxu0
        %8649 = vmatprep.mubr.bf16.mxu0 0
        %8650 = vmatmul.mubr.bf16.gmra.mrb[0].mxu0 %v8090
        %v8651 = vpop.f32.mrb[0].mxu0
        %v8652 = vadd.f32 0.0, %v8651
        %v8653 = vpop.f32.mrb[0].mxu0
        %v8654 = vpop.f32.mrb[0].mxu0
        %v8655 = vadd.f32 0.0, %v8654
        %v8656 = vpop.f32.mrb[0].mxu0
        %8657 = vmatprep.mubr.bf16.mxu0 0
        %8658 = vmatmul.mubr.bf16.gmra.mrb[0].mxu0 %v8091
        %v8659 = vpop.f32.mrb[0].mxu0
        %v8660 = vadd.f32 0.0, %v8659
        %v8661 = vpop.f32.mrb[0].mxu0
        %v8662 = vpop.f32.mrb[0].mxu0
        %v8663 = vadd.f32 0.0, %v8662
        %v8664 = vpop.f32.mrb[0].mxu0
        %8665 = vmatprep.mubr.bf16.mxu0 0
        %8666 = vmatmul.mubr.bf16.gmra.mrb[0].mxu0 %v8092
        %v8667 = vpop.f32.mrb[0].mxu0
        %v8668 = vadd.f32 0.0, %v8667
        %v8669 = vpop.f32.mrb[0].mxu0
        %v8670 = vpop.f32.mrb[0].mxu0
        %v8671 = vadd.f32 0.0, %v8670
        %v8672 = vpop.f32.mrb[0].mxu0
        %8673 = vmatprep.mubr.bf16.mxu0 0
        %8674 = vmatmul.mubr.bf16.gmra.mrb[0].mxu0 %v8093
        %v8675 = vpop.f32.mrb[0].mxu0
        %v8676 = vadd.f32 0.0, %v8675
        %v8677 = vpop.f32.mrb[0].mxu0
        %v8678 = vpop.f32.mrb[0].mxu0
        %v8679 = vadd.f32 0.0, %v8678
        %v8680 = vpop.f32.mrb[0].mxu0
        %8681 = vmatprep.mubr.bf16.mxu0 0
        %8682 = vmatmul.mubr.bf16.gmra.mrb[0].mxu0 %v8094
        %v8683 = vpop.f32.mrb[0].mxu0
        %v8684 = vadd.f32 0.0, %v8683
        %v8685 = vpop.f32.mrb[0].mxu0
        %v8686 = vpop.f32.mrb[0].mxu0
        %v8687 = vadd.f32 0.0, %v8686
        %v8688 = vpop.f32.mrb[0].mxu0
        %8689 = vmatprep.mubr.bf16.mxu0 0
        %8690 = vmatmul.mubr.bf16.gmra.mrb[0].mxu0 %v8095
        %v8691 = vpop.f32.mrb[0].mxu0
        %v8692 = vadd.f32 0.0, %v8691
        %v8693 = vpop.f32.mrb[0].mxu0
        %v8694 = vpop.f32.mrb[0].mxu0
        %v8695 = vadd.f32 0.0, %v8694
        %v8696 = vpop.f32.mrb[0].mxu0
        %8697 = vmatprep.mubr.bf16.mxu0 0
        %8698 = vmatmul.mubr.bf16.gmra.mrb[0].mxu0 %v8096
        %v8699 = vpop.f32.mrb[0].mxu0
        %v8700 = vadd.f32 0.0, %v8699
        %v8701 = vpop.f32.mrb[0].mxu0
        %v8702 = vpop.f32.mrb[0].mxu0
        %v8703 = vadd.f32 0.0, %v8702
        %v8704 = vpop.f32.mrb[0].mxu0
        %8705 = vdwg.mxu0
        %v8706 = vld [vmem:[#allocation25] sm:$0x1]
        %v8708 = vlaneseq
        %v8709 = vshrl.u32 %v8708, 7
        %v8710 = vsub.s32 0, %v8709
        %v8711 = vrot.slane %v8706, %v8710
        %v8713 = vmul.f32 %v8196, %v8711
        %v8714 = vmul.f32 %v8199, %v8711
        %v8715 = vmul.f32 %v8204, %v8711
        %v8716 = vmul.f32 %v8207, %v8711
        %v8717 = vmul.f32 %v8212, %v8711
        %v8718 = vmul.f32 %v8215, %v8711
        %v8719 = vmul.f32 %v8220, %v8711
        %v8720 = vmul.f32 %v8223, %v8711
        %v8721 = vmul.f32 %v8228, %v8711
        %v8722 = vmul.f32 %v8231, %v8711
        %v8723 = vmul.f32 %v8236, %v8711
        %v8724 = vmul.f32 %v8239, %v8711
        %v8725 = vmul.f32 %v8244, %v8711
        %v8726 = vmul.f32 %v8247, %v8711
        %v8727 = vmul.f32 %v8252, %v8711
        %v8728 = vmul.f32 %v8255, %v8711
        %v8729 = vmul.f32 %v8260, %v8711
        %v8730 = vmul.f32 %v8263, %v8711
        %v8731 = vmul.f32 %v8268, %v8711
        %v8732 = vmul.f32 %v8271, %v8711
        %v8733 = vmul.f32 %v8276, %v8711
        %v8734 = vmul.f32 %v8279, %v8711
        %v8735 = vmul.f32 %v8284, %v8711
        %v8736 = vmul.f32 %v8287, %v8711
        %v8737 = vmul.f32 %v8292, %v8711
        %v8738 = vmul.f32 %v8295, %v8711
        %v8739 = vmul.f32 %v8300, %v8711
        %v8740 = vmul.f32 %v8303, %v8711
        %v8741 = vmul.f32 %v8308, %v8711
        %v8742 = vmul.f32 %v8311, %v8711
        %v8743 = vmul.f32 %v8316, %v8711
        %v8744 = vmul.f32 %v8319, %v8711
        %v8745 = vmul.f32 %v8324, %v8711
        %v8746 = vmul.f32 %v8327, %v8711
        %v8747 = vmul.f32 %v8332, %v8711
        %v8748 = vmul.f32 %v8335, %v8711
        %v8749 = vmul.f32 %v8340, %v8711
        %v8750 = vmul.f32 %v8343, %v8711
        %v8751 = vmul.f32 %v8348, %v8711
        %v8752 = vmul.f32 %v8351, %v8711
        %v8753 = vmul.f32 %v8356, %v8711
        %v8754 = vmul.f32 %v8359, %v8711
        %v8755 = vmul.f32 %v8364, %v8711
        %v8756 = vmul.f32 %v8367, %v8711
        %v8757 = vmul.f32 %v8372, %v8711
        %v8758 = vmul.f32 %v8375, %v8711
        %v8759 = vmul.f32 %v8380, %v8711
        %v8760 = vmul.f32 %v8383, %v8711
        %v8761 = vmul.f32 %v8388, %v8711
        %v8762 = vmul.f32 %v8391, %v8711
        %v8763 = vmul.f32 %v8396, %v8711
        %v8764 = vmul.f32 %v8399, %v8711
        %v8765 = vmul.f32 %v8404, %v8711
        %v8766 = vmul.f32 %v8407, %v8711
        %v8767 = vmul.f32 %v8412, %v8711
        %v8768 = vmul.f32 %v8415, %v8711
        %v8769 = vmul.f32 %v8420, %v8711
        %v8770 = vmul.f32 %v8423, %v8711
        %v8771 = vmul.f32 %v8428, %v8711
        %v8772 = vmul.f32 %v8431, %v8711
        %v8773 = vmul.f32 %v8436, %v8711
        %v8774 = vmul.f32 %v8439, %v8711
        %v8775 = vmul.f32 %v8444, %v8711
        %v8776 = vmul.f32 %v8447, %v8711
        %v8777 = vmul.f32 %v8452, %v8711
        %v8778 = vmul.f32 %v8455, %v8711
        %v8779 = vmul.f32 %v8460, %v8711
        %v8780 = vmul.f32 %v8463, %v8711
        %v8781 = vmul.f32 %v8468, %v8711
        %v8782 = vmul.f32 %v8471, %v8711
        %v8783 = vmul.f32 %v8476, %v8711
        %v8784 = vmul.f32 %v8479, %v8711
        %v8785 = vmul.f32 %v8484, %v8711
        %v8786 = vmul.f32 %v8487, %v8711
        %v8787 = vmul.f32 %v8492, %v8711
        %v8788 = vmul.f32 %v8495, %v8711
        %v8789 = vmul.f32 %v8500, %v8711
        %v8790 = vmul.f32 %v8503, %v8711
        %v8791 = vmul.f32 %v8508, %v8711
        %v8792 = vmul.f32 %v8511, %v8711
        %v8793 = vmul.f32 %v8516, %v8711
        %v8794 = vmul.f32 %v8519, %v8711
        %v8795 = vmul.f32 %v8524, %v8711
        %v8796 = vmul.f32 %v8527, %v8711
        %v8797 = vmul.f32 %v8532, %v8711
        %v8798 = vmul.f32 %v8535, %v8711
        %v8799 = vmul.f32 %v8540, %v8711
        %v8800 = vmul.f32 %v8543, %v8711
        %v8801 = vmul.f32 %v8548, %v8711
        %v8802 = vmul.f32 %v8551, %v8711
        %v8803 = vmul.f32 %v8556, %v8711
        %v8804 = vmul.f32 %v8559, %v8711
        %v8805 = vmul.f32 %v8564, %v8711
        %v8806 = vmul.f32 %v8567, %v8711
        %v8807 = vmul.f32 %v8572, %v8711
        %v8808 = vmul.f32 %v8575, %v8711
        %v8809 = vmul.f32 %v8580, %v8711
        %v8810 = vmul.f32 %v8583, %v8711
        %v8811 = vmul.f32 %v8588, %v8711
        %v8812 = vmul.f32 %v8591, %v8711
        %v8813 = vmul.f32 %v8596, %v8711
        %v8814 = vmul.f32 %v8599, %v8711
        %v8815 = vmul.f32 %v8604, %v8711
        %v8816 = vmul.f32 %v8607, %v8711
        %v8817 = vmul.f32 %v8612, %v8711
        %v8818 = vmul.f32 %v8615, %v8711
        %v8819 = vmul.f32 %v8620, %v8711
        %v8820 = vmul.f32 %v8623, %v8711
        %v8821 = vmul.f32 %v8628, %v8711
        %v8822 = vmul.f32 %v8631, %v8711
        %v8823 = vmul.f32 %v8636, %v8711
        %v8824 = vmul.f32 %v8639, %v8711
        %v8825 = vmul.f32 %v8644, %v8711
        %v8826 = vmul.f32 %v8647, %v8711
        %v8827 = vmul.f32 %v8652, %v8711
        %v8828 = vmul.f32 %v8655, %v8711
        %v8829 = vmul.f32 %v8660, %v8711
        %v8830 = vmul.f32 %v8663, %v8711
        %v8831 = vmul.f32 %v8668, %v8711
        %v8832 = vmul.f32 %v8671, %v8711
        %v8833 = vmul.f32 %v8676, %v8711
        %v8834 = vmul.f32 %v8679, %v8711
        %v8835 = vmul.f32 %v8684, %v8711
        %v8836 = vmul.f32 %v8687, %v8711
        %v8837 = vmul.f32 %v8692, %v8711
        %v8838 = vmul.f32 %v8695, %v8711
        %v8839 = vmul.f32 %v8700, %v8711
        %v8840 = vmul.f32 %v8703, %v8711
        %v8841 = vld [vmem:[#allocation26] sm:$0x1]
        %v8843 = vlaneseq
        %v8844 = vshrl.u32 %v8843, 7
        %v8845 = vsub.s32 0, %v8844
        %v8846 = vrot.slane %v8841, %v8845
        %v8848 = vadd.f32 %v8713, %v8846
        %v8849 = vadd.f32 %v8714, %v8846
        %v8850 = vadd.f32 %v8715, %v8846
        %v8851 = vadd.f32 %v8716, %v8846
        %v8852 = vadd.f32 %v8717, %v8846
        %v8853 = vadd.f32 %v8718, %v8846
        %v8854 = vadd.f32 %v8719, %v8846
        %v8855 = vadd.f32 %v8720, %v8846
        %v8856 = vadd.f32 %v8721, %v8846
        %v8857 = vadd.f32 %v8722, %v8846
        %v8858 = vadd.f32 %v8723, %v8846
        %v8859 = vadd.f32 %v8724, %v8846
        %v8860 = vadd.f32 %v8725, %v8846
        %v8861 = vadd.f32 %v8726, %v8846
        %v8862 = vadd.f32 %v8727, %v8846
        %v8863 = vadd.f32 %v8728, %v8846
        %v8864 = vadd.f32 %v8729, %v8846
        %v8865 = vadd.f32 %v8730, %v8846
        %v8866 = vadd.f32 %v8731, %v8846
        %v8867 = vadd.f32 %v8732, %v8846
        %v8868 = vadd.f32 %v8733, %v8846
        %v8869 = vadd.f32 %v8734, %v8846
        %v8870 = vadd.f32 %v8735, %v8846
        %v8871 = vadd.f32 %v8736, %v8846
        %v8872 = vadd.f32 %v8737, %v8846
        %v8873 = vadd.f32 %v8738, %v8846
        %v8874 = vadd.f32 %v8739, %v8846
        %v8875 = vadd.f32 %v8740, %v8846
        %v8876 = vadd.f32 %v8741, %v8846
        %v8877 = vadd.f32 %v8742, %v8846
        %v8878 = vadd.f32 %v8743, %v8846
        %v8879 = vadd.f32 %v8744, %v8846
        %v8880 = vadd.f32 %v8745, %v8846
        %v8881 = vadd.f32 %v8746, %v8846
        %v8882 = vadd.f32 %v8747, %v8846
        %v8883 = vadd.f32 %v8748, %v8846
        %v8884 = vadd.f32 %v8749, %v8846
        %v8885 = vadd.f32 %v8750, %v8846
        %v8886 = vadd.f32 %v8751, %v8846
        %v8887 = vadd.f32 %v8752, %v8846
        %v8888 = vadd.f32 %v8753, %v8846
        %v8889 = vadd.f32 %v8754, %v8846
        %v8890 = vadd.f32 %v8755, %v8846
        %v8891 = vadd.f32 %v8756, %v8846
        %v8892 = vadd.f32 %v8757, %v8846
        %v8893 = vadd.f32 %v8758, %v8846
        %v8894 = vadd.f32 %v8759, %v8846
        %v8895 = vadd.f32 %v8760, %v8846
        %v8896 = vadd.f32 %v8761, %v8846
        %v8897 = vadd.f32 %v8762, %v8846
        %v8898 = vadd.f32 %v8763, %v8846
        %v8899 = vadd.f32 %v8764, %v8846
        %v8900 = vadd.f32 %v8765, %v8846
        %v8901 = vadd.f32 %v8766, %v8846
        %v8902 = vadd.f32 %v8767, %v8846
        %v8903 = vadd.f32 %v8768, %v8846
        %v8904 = vadd.f32 %v8769, %v8846
        %v8905 = vadd.f32 %v8770, %v8846
        %v8906 = vadd.f32 %v8771, %v8846
        %v8907 = vadd.f32 %v8772, %v8846
        %v8908 = vadd.f32 %v8773, %v8846
        %v8909 = vadd.f32 %v8774, %v8846
        %v8910 = vadd.f32 %v8775, %v8846
        %v8911 = vadd.f32 %v8776, %v8846
        %v8912 = vadd.f32 %v8777, %v8846
        %v8913 = vadd.f32 %v8778, %v8846
        %v8914 = vadd.f32 %v8779, %v8846
        %v8915 = vadd.f32 %v8780, %v8846
        %v8916 = vadd.f32 %v8781, %v8846
        %v8917 = vadd.f32 %v8782, %v8846
        %v8918 = vadd.f32 %v8783, %v8846
        %v8919 = vadd.f32 %v8784, %v8846
        %v8920 = vadd.f32 %v8785, %v8846
        %v8921 = vadd.f32 %v8786, %v8846
        %v8922 = vadd.f32 %v8787, %v8846
        %v8923 = vadd.f32 %v8788, %v8846
        %v8924 = vadd.f32 %v8789, %v8846
        %v8925 = vadd.f32 %v8790, %v8846
        %v8926 = vadd.f32 %v8791, %v8846
        %v8927 = vadd.f32 %v8792, %v8846
        %v8928 = vadd.f32 %v8793, %v8846
        %v8929 = vadd.f32 %v8794, %v8846
        %v8930 = vadd.f32 %v8795, %v8846
        %v8931 = vadd.f32 %v8796, %v8846
        %v8932 = vadd.f32 %v8797, %v8846
        %v8933 = vadd.f32 %v8798, %v8846
        %v8934 = vadd.f32 %v8799, %v8846
        %v8935 = vadd.f32 %v8800, %v8846
        %v8936 = vadd.f32 %v8801, %v8846
        %v8937 = vadd.f32 %v8802, %v8846
        %v8938 = vadd.f32 %v8803, %v8846
        %v8939 = vadd.f32 %v8804, %v8846
        %v8940 = vadd.f32 %v8805, %v8846
        %v8941 = vadd.f32 %v8806, %v8846
        %v8942 = vadd.f32 %v8807, %v8846
        %v8943 = vadd.f32 %v8808, %v8846
        %v8944 = vadd.f32 %v8809, %v8846
        %v8945 = vadd.f32 %v8810, %v8846
        %v8946 = vadd.f32 %v8811, %v8846
        %v8947 = vadd.f32 %v8812, %v8846
        %v8948 = vadd.f32 %v8813, %v8846
        %v8949 = vadd.f32 %v8814, %v8846
        %v8950 = vadd.f32 %v8815, %v8846
        %v8951 = vadd.f32 %v8816, %v8846
        %v8952 = vadd.f32 %v8817, %v8846
        %v8953 = vadd.f32 %v8818, %v8846
        %v8954 = vadd.f32 %v8819, %v8846
        %v8955 = vadd.f32 %v8820, %v8846
        %v8956 = vadd.f32 %v8821, %v8846
        %v8957 = vadd.f32 %v8822, %v8846
        %v8958 = vadd.f32 %v8823, %v8846
        %v8959 = vadd.f32 %v8824, %v8846
        %v8960 = vadd.f32 %v8825, %v8846
        %v8961 = vadd.f32 %v8826, %v8846
        %v8962 = vadd.f32 %v8827, %v8846
        %v8963 = vadd.f32 %v8828, %v8846
        %v8964 = vadd.f32 %v8829, %v8846
        %v8965 = vadd.f32 %v8830, %v8846
        %v8966 = vadd.f32 %v8831, %v8846
        %v8967 = vadd.f32 %v8832, %v8846
        %v8968 = vadd.f32 %v8833, %v8846
        %v8969 = vadd.f32 %v8834, %v8846
        %v8970 = vadd.f32 %v8835, %v8846
        %v8971 = vadd.f32 %v8836, %v8846
        %v8972 = vadd.f32 %v8837, %v8846
        %v8973 = vadd.f32 %v8838, %v8846
        %v8974 = vadd.f32 %v8839, %v8846
        %v8975 = vadd.f32 %v8840, %v8846
        %v8976 = vsub.f32 0.0, %v8848
        %v8977 = vsub.f32 0.0, %v8849
        %v8978 = vsub.f32 0.0, %v8850
        %v8979 = vsub.f32 0.0, %v8851
        %v8980 = vsub.f32 0.0, %v8852
        %v8981 = vsub.f32 0.0, %v8853
        %v8982 = vsub.f32 0.0, %v8854
        %v8983 = vsub.f32 0.0, %v8855
        %v8984 = vsub.f32 0.0, %v8856
        %v8985 = vsub.f32 0.0, %v8857
        %v8986 = vsub.f32 0.0, %v8858
        %v8987 = vsub.f32 0.0, %v8859
        %v8988 = vsub.f32 0.0, %v8860
        %v8989 = vsub.f32 0.0, %v8861
        %v8990 = vsub.f32 0.0, %v8862
        %v8991 = vsub.f32 0.0, %v8863
        %v8992 = vsub.f32 0.0, %v8864
        %v8993 = vsub.f32 0.0, %v8865
        %v8994 = vsub.f32 0.0, %v8866
        %v8995 = vsub.f32 0.0, %v8867
        %v8996 = vsub.f32 0.0, %v8868
        %v8997 = vsub.f32 0.0, %v8869
        %v8998 = vsub.f32 0.0, %v8870
        %v8999 = vsub.f32 0.0, %v8871
        %v9000 = vsub.f32 0.0, %v8872
        %v9001 = vsub.f32 0.0, %v8873
        %v9002 = vsub.f32 0.0, %v8874
        %v9003 = vsub.f32 0.0, %v8875
        %v9004 = vsub.f32 0.0, %v8876
        %v9005 = vsub.f32 0.0, %v8877
        %v9006 = vsub.f32 0.0, %v8878
        %v9007 = vsub.f32 0.0, %v8879
        %v9008 = vsub.f32 0.0, %v8880
        %v9009 = vsub.f32 0.0, %v8881
        %v9010 = vsub.f32 0.0, %v8882
        %v9011 = vsub.f32 0.0, %v8883
        %v9012 = vsub.f32 0.0, %v8884
        %v9013 = vsub.f32 0.0, %v8885
        %v9014 = vsub.f32 0.0, %v8886
        %v9015 = vsub.f32 0.0, %v8887
        %v9016 = vsub.f32 0.0, %v8888
        %v9017 = vsub.f32 0.0, %v8889
        %v9018 = vsub.f32 0.0, %v8890
        %v9019 = vsub.f32 0.0, %v8891
        %v9020 = vsub.f32 0.0, %v8892
        %v9021 = vsub.f32 0.0, %v8893
        %v9022 = vsub.f32 0.0, %v8894
        %v9023 = vsub.f32 0.0, %v8895
        %v9024 = vsub.f32 0.0, %v8896
        %v9025 = vsub.f32 0.0, %v8897
        %v9026 = vsub.f32 0.0, %v8898
        %v9027 = vsub.f32 0.0, %v8899
        %v9028 = vsub.f32 0.0, %v8900
        %v9029 = vsub.f32 0.0, %v8901
        %v9030 = vsub.f32 0.0, %v8902
        %v9031 = vsub.f32 0.0, %v8903
        %v9032 = vsub.f32 0.0, %v8904
        %v9033 = vsub.f32 0.0, %v8905
        %v9034 = vsub.f32 0.0, %v8906
        %v9035 = vsub.f32 0.0, %v8907
        %v9036 = vsub.f32 0.0, %v8908
        %v9037 = vsub.f32 0.0, %v8909
        %v9038 = vsub.f32 0.0, %v8910
        %v9039 = vsub.f32 0.0, %v8911
        %v9040 = vsub.f32 0.0, %v8912
        %v9041 = vsub.f32 0.0, %v8913
        %v9042 = vsub.f32 0.0, %v8914
        %v9043 = vsub.f32 0.0, %v8915
        %v9044 = vsub.f32 0.0, %v8916
        %v9045 = vsub.f32 0.0, %v8917
        %v9046 = vsub.f32 0.0, %v8918
        %v9047 = vsub.f32 0.0, %v8919
        %v9048 = vsub.f32 0.0, %v8920
        %v9049 = vsub.f32 0.0, %v8921
        %v9050 = vsub.f32 0.0, %v8922
        %v9051 = vsub.f32 0.0, %v8923
        %v9052 = vsub.f32 0.0, %v8924
        %v9053 = vsub.f32 0.0, %v8925
        %v9054 = vsub.f32 0.0, %v8926
        %v9055 = vsub.f32 0.0, %v8927
        %v9056 = vsub.f32 0.0, %v8928
        %v9057 = vsub.f32 0.0, %v8929
        %v9058 = vsub.f32 0.0, %v8930
        %v9059 = vsub.f32 0.0, %v8931
        %v9060 = vsub.f32 0.0, %v8932
        %v9061 = vsub.f32 0.0, %v8933
        %v9062 = vsub.f32 0.0, %v8934
        %v9063 = vsub.f32 0.0, %v8935
        %v9064 = vsub.f32 0.0, %v8936
        %v9065 = vsub.f32 0.0, %v8937
        %v9066 = vsub.f32 0.0, %v8938
        %v9067 = vsub.f32 0.0, %v8939
        %v9068 = vsub.f32 0.0, %v8940
        %v9069 = vsub.f32 0.0, %v8941
        %v9070 = vsub.f32 0.0, %v8942
        %v9071 = vsub.f32 0.0, %v8943
        %v9072 = vsub.f32 0.0, %v8944
        %v9073 = vsub.f32 0.0, %v8945
        %v9074 = vsub.f32 0.0, %v8946
        %v9075 = vsub.f32 0.0, %v8947
        %v9076 = vsub.f32 0.0, %v8948
        %v9077 = vsub.f32 0.0, %v8949
        %v9078 = vsub.f32 0.0, %v8950
        %v9079 = vsub.f32 0.0, %v8951
        %v9080 = vsub.f32 0.0, %v8952
        %v9081 = vsub.f32 0.0, %v8953
        %v9082 = vsub.f32 0.0, %v8954
        %v9083 = vsub.f32 0.0, %v8955
        %v9084 = vsub.f32 0.0, %v8956
        %v9085 = vsub.f32 0.0, %v8957
        %v9086 = vsub.f32 0.0, %v8958
        %v9087 = vsub.f32 0.0, %v8959
        %v9088 = vsub.f32 0.0, %v8960
        %v9089 = vsub.f32 0.0, %v8961
        %v9090 = vsub.f32 0.0, %v8962
        %v9091 = vsub.f32 0.0, %v8963
        %v9092 = vsub.f32 0.0, %v8964
        %v9093 = vsub.f32 0.0, %v8965
        %v9094 = vsub.f32 0.0, %v8966
        %v9095 = vsub.f32 0.0, %v8967
        %v9096 = vsub.f32 0.0, %v8968
        %v9097 = vsub.f32 0.0, %v8969
        %v9098 = vsub.f32 0.0, %v8970
        %v9099 = vsub.f32 0.0, %v8971
        %v9100 = vsub.f32 0.0, %v8972
        %v9101 = vsub.f32 0.0, %v8973
        %v9102 = vsub.f32 0.0, %v8974
        %v9103 = vsub.f32 0.0, %v8975
        %v9104 = vmul.f32 %v8976, 1.442695
        %v9105 = vpow.pop %v9104
        %v9106 = vmul.f32 %v8977, 1.442695
        %v9107 = vpow.pop %v9106
        %v9108 = vmul.f32 %v8978, 1.442695
        %v9109 = vpow.pop %v9108
        %v9110 = vmul.f32 %v8979, 1.442695
        %v9111 = vpow.pop %v9110
        %v9112 = vmul.f32 %v8980, 1.442695
        %v9113 = vpow.pop %v9112
        %v9114 = vmul.f32 %v8981, 1.442695
        %v9115 = vpow.pop %v9114
        %v9116 = vmul.f32 %v8982, 1.442695
        %v9117 = vpow.pop %v9116
        %v9118 = vmul.f32 %v8983, 1.442695
        %v9119 = vpow.pop %v9118
        %v9120 = vmul.f32 %v8984, 1.442695
        %v9121 = vpow.pop %v9120
        %v9122 = vmul.f32 %v8985, 1.442695
        %v9123 = vpow.pop %v9122
        %v9124 = vmul.f32 %v8986, 1.442695
        %v9125 = vpow.pop %v9124
        %v9126 = vmul.f32 %v8987, 1.442695
        %v9127 = vpow.pop %v9126
        %v9128 = vmul.f32 %v8988, 1.442695
        %v9129 = vpow.pop %v9128
        %v9130 = vmul.f32 %v8989, 1.442695
        %v9131 = vpow.pop %v9130
        %v9132 = vmul.f32 %v8990, 1.442695
        %v9133 = vpow.pop %v9132
        %v9134 = vmul.f32 %v8991, 1.442695
        %v9135 = vpow.pop %v9134
        %v9136 = vmul.f32 %v8992, 1.442695
        %v9137 = vpow.pop %v9136
        %v9138 = vmul.f32 %v8993, 1.442695
        %v9139 = vpow.pop %v9138
        %v9140 = vmul.f32 %v8994, 1.442695
        %v9141 = vpow.pop %v9140
        %v9142 = vmul.f32 %v8995, 1.442695
        %v9143 = vpow.pop %v9142
        %v9144 = vmul.f32 %v8996, 1.442695
        %v9145 = vpow.pop %v9144
        %v9146 = vmul.f32 %v8997, 1.442695
        %v9147 = vpow.pop %v9146
        %v9148 = vmul.f32 %v8998, 1.442695
        %v9149 = vpow.pop %v9148
        %v9150 = vmul.f32 %v8999, 1.442695
        %v9151 = vpow.pop %v9150
        %v9152 = vmul.f32 %v9000, 1.442695
        %v9153 = vpow.pop %v9152
        %v9154 = vmul.f32 %v9001, 1.442695
        %v9155 = vpow.pop %v9154
        %v9156 = vmul.f32 %v9002, 1.442695
        %v9157 = vpow.pop %v9156
        %v9158 = vmul.f32 %v9003, 1.442695
        %v9159 = vpow.pop %v9158
        %v9160 = vmul.f32 %v9004, 1.442695
        %v9161 = vpow.pop %v9160
        %v9162 = vmul.f32 %v9005, 1.442695
        %v9163 = vpow.pop %v9162
        %v9164 = vmul.f32 %v9006, 1.442695
        %v9165 = vpow.pop %v9164
        %v9166 = vmul.f32 %v9007, 1.442695
        %v9167 = vpow.pop %v9166
        %v9168 = vmul.f32 %v9008, 1.442695
        %v9169 = vpow.pop %v9168
        %v9170 = vmul.f32 %v9009, 1.442695
        %v9171 = vpow.pop %v9170
        %v9172 = vmul.f32 %v9010, 1.442695
        %v9173 = vpow.pop %v9172
        %v9174 = vmul.f32 %v9011, 1.442695
        %v9175 = vpow.pop %v9174
        %v9176 = vmul.f32 %v9012, 1.442695
        %v9177 = vpow.pop %v9176
        %v9178 = vmul.f32 %v9013, 1.442695
        %v9179 = vpow.pop %v9178
        %v9180 = vmul.f32 %v9014, 1.442695
        %v9181 = vpow.pop %v9180
        %v9182 = vmul.f32 %v9015, 1.442695
        %v9183 = vpow.pop %v9182
        %v9184 = vmul.f32 %v9016, 1.442695
        %v9185 = vpow.pop %v9184
        %v9186 = vmul.f32 %v9017, 1.442695
        %v9187 = vpow.pop %v9186
        %v9188 = vmul.f32 %v9018, 1.442695
        %v9189 = vpow.pop %v9188
        %v9190 = vmul.f32 %v9019, 1.442695
        %v9191 = vpow.pop %v9190
        %v9192 = vmul.f32 %v9020, 1.442695
        %v9193 = vpow.pop %v9192
        %v9194 = vmul.f32 %v9021, 1.442695
        %v9195 = vpow.pop %v9194
        %v9196 = vmul.f32 %v9022, 1.442695
        %v9197 = vpow.pop %v9196
        %v9198 = vmul.f32 %v9023, 1.442695
        %v9199 = vpow.pop %v9198
        %v9200 = vmul.f32 %v9024, 1.442695
        %v9201 = vpow.pop %v9200
        %v9202 = vmul.f32 %v9025, 1.442695
        %v9203 = vpow.pop %v9202
        %v9204 = vmul.f32 %v9026, 1.442695
        %v9205 = vpow.pop %v9204
        %v9206 = vmul.f32 %v9027, 1.442695
        %v9207 = vpow.pop %v9206
        %v9208 = vmul.f32 %v9028, 1.442695
        %v9209 = vpow.pop %v9208
        %v9210 = vmul.f32 %v9029, 1.442695
        %v9211 = vpow.pop %v9210
        %v9212 = vmul.f32 %v9030, 1.442695
        %v9213 = vpow.pop %v9212
        %v9214 = vmul.f32 %v9031, 1.442695
        %v9215 = vpow.pop %v9214
        %v9216 = vmul.f32 %v9032, 1.442695
        %v9217 = vpow.pop %v9216
        %v9218 = vmul.f32 %v9033, 1.442695
        %v9219 = vpow.pop %v9218
        %v9220 = vmul.f32 %v9034, 1.442695
        %v9221 = vpow.pop %v9220
        %v9222 = vmul.f32 %v9035, 1.442695
        %v9223 = vpow.pop %v9222
        %v9224 = vmul.f32 %v9036, 1.442695
        %v9225 = vpow.pop %v9224
        %v9226 = vmul.f32 %v9037, 1.442695
        %v9227 = vpow.pop %v9226
        %v9228 = vmul.f32 %v9038, 1.442695
        %v9229 = vpow.pop %v9228
        %v9230 = vmul.f32 %v9039, 1.442695
        %v9231 = vpow.pop %v9230
        %v9232 = vmul.f32 %v9040, 1.442695
        %v9233 = vpow.pop %v9232
        %v9234 = vmul.f32 %v9041, 1.442695
        %v9235 = vpow.pop %v9234
        %v9236 = vmul.f32 %v9042, 1.442695
        %v9237 = vpow.pop %v9236
        %v9238 = vmul.f32 %v9043, 1.442695
        %v9239 = vpow.pop %v9238
        %v9240 = vmul.f32 %v9044, 1.442695
        %v9241 = vpow.pop %v9240
        %v9242 = vmul.f32 %v9045, 1.442695
        %v9243 = vpow.pop %v9242
        %v9244 = vmul.f32 %v9046, 1.442695
        %v9245 = vpow.pop %v9244
        %v9246 = vmul.f32 %v9047, 1.442695
        %v9247 = vpow.pop %v9246
        %v9248 = vmul.f32 %v9048, 1.442695
        %v9249 = vpow.pop %v9248
        %v9250 = vmul.f32 %v9049, 1.442695
        %v9251 = vpow.pop %v9250
        %v9252 = vmul.f32 %v9050, 1.442695
        %v9253 = vpow.pop %v9252
        %v9254 = vmul.f32 %v9051, 1.442695
        %v9255 = vpow.pop %v9254
        %v9256 = vmul.f32 %v9052, 1.442695
        %v9257 = vpow.pop %v9256
        %v9258 = vmul.f32 %v9053, 1.442695
        %v9259 = vpow.pop %v9258
        %v9260 = vmul.f32 %v9054, 1.442695
        %v9261 = vpow.pop %v9260
        %v9262 = vmul.f32 %v9055, 1.442695
        %v9263 = vpow.pop %v9262
        %v9264 = vmul.f32 %v9056, 1.442695
        %v9265 = vpow.pop %v9264
        %v9266 = vmul.f32 %v9057, 1.442695
        %v9267 = vpow.pop %v9266
        %v9268 = vmul.f32 %v9058, 1.442695
        %v9269 = vpow.pop %v9268
        %v9270 = vmul.f32 %v9059, 1.442695
        %v9271 = vpow.pop %v9270
        %v9272 = vmul.f32 %v9060, 1.442695
        %v9273 = vpow.pop %v9272
        %v9274 = vmul.f32 %v9061, 1.442695
        %v9275 = vpow.pop %v9274
        %v9276 = vmul.f32 %v9062, 1.442695
        %v9277 = vpow.pop %v9276
        %v9278 = vmul.f32 %v9063, 1.442695
        %v9279 = vpow.pop %v9278
        %v9280 = vmul.f32 %v9064, 1.442695
        %v9281 = vpow.pop %v9280
        %v9282 = vmul.f32 %v9065, 1.442695
        %v9283 = vpow.pop %v9282
        %v9284 = vmul.f32 %v9066, 1.442695
        %v9285 = vpow.pop %v9284
        %v9286 = vmul.f32 %v9067, 1.442695
        %v9287 = vpow.pop %v9286
        %v9288 = vmul.f32 %v9068, 1.442695
        %v9289 = vpow.pop %v9288
        %v9290 = vmul.f32 %v9069, 1.442695
        %v9291 = vpow.pop %v9290
        %v9292 = vmul.f32 %v9070, 1.442695
        %v9293 = vpow.pop %v9292
        %v9294 = vmul.f32 %v9071, 1.442695
        %v9295 = vpow.pop %v9294
        %v9296 = vmul.f32 %v9072, 1.442695
        %v9297 = vpow.pop %v9296
        %v9298 = vmul.f32 %v9073, 1.442695
        %v9299 = vpow.pop %v9298
        %v9300 = vmul.f32 %v9074, 1.442695
        %v9301 = vpow.pop %v9300
        %v9302 = vmul.f32 %v9075, 1.442695
        %v9303 = vpow.pop %v9302
        %v9304 = vmul.f32 %v9076, 1.442695
        %v9305 = vpow.pop %v9304
        %v9306 = vmul.f32 %v9077, 1.442695
        %v9307 = vpow.pop %v9306
        %v9308 = vmul.f32 %v9078, 1.442695
        %v9309 = vpow.pop %v9308
        %v9310 = vmul.f32 %v9079, 1.442695
        %v9311 = vpow.pop %v9310
        %v9312 = vmul.f32 %v9080, 1.442695
        %v9313 = vpow.pop %v9312
        %v9314 = vmul.f32 %v9081, 1.442695
        %v9315 = vpow.pop %v9314
        %v9316 = vmul.f32 %v9082, 1.442695
        %v9317 = vpow.pop %v9316
        %v9318 = vmul.f32 %v9083, 1.442695
        %v9319 = vpow.pop %v9318
        %v9320 = vmul.f32 %v9084, 1.442695
        %v9321 = vpow.pop %v9320
        %v9322 = vmul.f32 %v9085, 1.442695
        %v9323 = vpow.pop %v9322
        %v9324 = vmul.f32 %v9086, 1.442695
        %v9325 = vpow.pop %v9324
        %v9326 = vmul.f32 %v9087, 1.442695
        %v9327 = vpow.pop %v9326
        %v9328 = vmul.f32 %v9088, 1.442695
        %v9329 = vpow.pop %v9328
        %v9330 = vmul.f32 %v9089, 1.442695
        %v9331 = vpow.pop %v9330
        %v9332 = vmul.f32 %v9090, 1.442695
        %v9333 = vpow.pop %v9332
        %v9334 = vmul.f32 %v9091, 1.442695
        %v9335 = vpow.pop %v9334
        %v9336 = vmul.f32 %v9092, 1.442695
        %v9337 = vpow.pop %v9336
        %v9338 = vmul.f32 %v9093, 1.442695
        %v9339 = vpow.pop %v9338
        %v9340 = vmul.f32 %v9094, 1.442695
        %v9341 = vpow.pop %v9340
        %v9342 = vmul.f32 %v9095, 1.442695
        %v9343 = vpow.pop %v9342
        %v9344 = vmul.f32 %v9096, 1.442695
        %v9345 = vpow.pop %v9344
        %v9346 = vmul.f32 %v9097, 1.442695
        %v9347 = vpow.pop %v9346
        %v9348 = vmul.f32 %v9098, 1.442695
        %v9349 = vpow.pop %v9348
        %v9350 = vmul.f32 %v9099, 1.442695
        %v9351 = vpow.pop %v9350
        %v9352 = vmul.f32 %v9100, 1.442695
        %v9353 = vpow.pop %v9352
        %v9354 = vmul.f32 %v9101, 1.442695
        %v9355 = vpow.pop %v9354
        %v9356 = vmul.f32 %v9102, 1.442695
        %v9357 = vpow.pop %v9356
        %v9358 = vmul.f32 %v9103, 1.442695
        %v9359 = vpow.pop %v9358
        %v9360 = vadd.f32 %v9105, 1.0
        %v9361 = vadd.f32 %v9107, 1.0
        %v9362 = vadd.f32 %v9109, 1.0
        %v9363 = vadd.f32 %v9111, 1.0
        %v9364 = vadd.f32 %v9113, 1.0
        %v9365 = vadd.f32 %v9115, 1.0
        %v9366 = vadd.f32 %v9117, 1.0
        %v9367 = vadd.f32 %v9119, 1.0
        %v9368 = vadd.f32 %v9121, 1.0
        %v9369 = vadd.f32 %v9123, 1.0
        %v9370 = vadd.f32 %v9125, 1.0
        %v9371 = vadd.f32 %v9127, 1.0
        %v9372 = vadd.f32 %v9129, 1.0
        %v9373 = vadd.f32 %v9131, 1.0
        %v9374 = vadd.f32 %v9133, 1.0
        %v9375 = vadd.f32 %v9135, 1.0
        %v9376 = vadd.f32 %v9137, 1.0
        %v9377 = vadd.f32 %v9139, 1.0
        %v9378 = vadd.f32 %v9141, 1.0
        %v9379 = vadd.f32 %v9143, 1.0
        %v9380 = vadd.f32 %v9145, 1.0
        %v9381 = vadd.f32 %v9147, 1.0
        %v9382 = vadd.f32 %v9149, 1.0
        %v9383 = vadd.f32 %v9151, 1.0
        %v9384 = vadd.f32 %v9153, 1.0
        %v9385 = vadd.f32 %v9155, 1.0
        %v9386 = vadd.f32 %v9157, 1.0
        %v9387 = vadd.f32 %v9159, 1.0
        %v9388 = vadd.f32 %v9161, 1.0
        %v9389 = vadd.f32 %v9163, 1.0
        %v9390 = vadd.f32 %v9165, 1.0
        %v9391 = vadd.f32 %v9167, 1.0
        %v9392 = vadd.f32 %v9169, 1.0
        %v9393 = vadd.f32 %v9171, 1.0
        %v9394 = vadd.f32 %v9173, 1.0
        %v9395 = vadd.f32 %v9175, 1.0
        %v9396 = vadd.f32 %v9177, 1.0
        %v9397 = vadd.f32 %v9179, 1.0
        %v9398 = vadd.f32 %v9181, 1.0
        %v9399 = vadd.f32 %v9183, 1.0
        %v9400 = vadd.f32 %v9185, 1.0
        %v9401 = vadd.f32 %v9187, 1.0
        %v9402 = vadd.f32 %v9189, 1.0
        %v9403 = vadd.f32 %v9191, 1.0
        %v9404 = vadd.f32 %v9193, 1.0
        %v9405 = vadd.f32 %v9195, 1.0
        %v9406 = vadd.f32 %v9197, 1.0
        %v9407 = vadd.f32 %v9199, 1.0
        %v9408 = vadd.f32 %v9201, 1.0
        %v9409 = vadd.f32 %v9203, 1.0
        %v9410 = vadd.f32 %v9205, 1.0
        %v9411 = vadd.f32 %v9207, 1.0
        %v9412 = vadd.f32 %v9209, 1.0
        %v9413 = vadd.f32 %v9211, 1.0
        %v9414 = vadd.f32 %v9213, 1.0
        %v9415 = vadd.f32 %v9215, 1.0
        %v9416 = vadd.f32 %v9217, 1.0
        %v9417 = vadd.f32 %v9219, 1.0
        %v9418 = vadd.f32 %v9221, 1.0
        %v9419 = vadd.f32 %v9223, 1.0
        %v9420 = vadd.f32 %v9225, 1.0
        %v9421 = vadd.f32 %v9227, 1.0
        %v9422 = vadd.f32 %v9229, 1.0
        %v9423 = vadd.f32 %v9231, 1.0
        %v9424 = vadd.f32 %v9233, 1.0
        %v9425 = vadd.f32 %v9235, 1.0
        %v9426 = vadd.f32 %v9237, 1.0
        %v9427 = vadd.f32 %v9239, 1.0
        %v9428 = vadd.f32 %v9241, 1.0
        %v9429 = vadd.f32 %v9243, 1.0
        %v9430 = vadd.f32 %v9245, 1.0
        %v9431 = vadd.f32 %v9247, 1.0
        %v9432 = vadd.f32 %v9249, 1.0
        %v9433 = vadd.f32 %v9251, 1.0
        %v9434 = vadd.f32 %v9253, 1.0
        %v9435 = vadd.f32 %v9255, 1.0
        %v9436 = vadd.f32 %v9257, 1.0
        %v9437 = vadd.f32 %v9259, 1.0
        %v9438 = vadd.f32 %v9261, 1.0
        %v9439 = vadd.f32 %v9263, 1.0
        %v9440 = vadd.f32 %v9265, 1.0
        %v9441 = vadd.f32 %v9267, 1.0
        %v9442 = vadd.f32 %v9269, 1.0
        %v9443 = vadd.f32 %v9271, 1.0
        %v9444 = vadd.f32 %v9273, 1.0
        %v9445 = vadd.f32 %v9275, 1.0
        %v9446 = vadd.f32 %v9277, 1.0
        %v9447 = vadd.f32 %v9279, 1.0
        %v9448 = vadd.f32 %v9281, 1.0
        %v9449 = vadd.f32 %v9283, 1.0
        %v9450 = vadd.f32 %v9285, 1.0
        %v9451 = vadd.f32 %v9287, 1.0
        %v9452 = vadd.f32 %v9289, 1.0
        %v9453 = vadd.f32 %v9291, 1.0
        %v9454 = vadd.f32 %v9293, 1.0
        %v9455 = vadd.f32 %v9295, 1.0
        %v9456 = vadd.f32 %v9297, 1.0
        %v9457 = vadd.f32 %v9299, 1.0
        %v9458 = vadd.f32 %v9301, 1.0
        %v9459 = vadd.f32 %v9303, 1.0
        %v9460 = vadd.f32 %v9305, 1.0
        %v9461 = vadd.f32 %v9307, 1.0
        %v9462 = vadd.f32 %v9309, 1.0
        %v9463 = vadd.f32 %v9311, 1.0
        %v9464 = vadd.f32 %v9313, 1.0
        %v9465 = vadd.f32 %v9315, 1.0
        %v9466 = vadd.f32 %v9317, 1.0
        %v9467 = vadd.f32 %v9319, 1.0
        %v9468 = vadd.f32 %v9321, 1.0
        %v9469 = vadd.f32 %v9323, 1.0
        %v9470 = vadd.f32 %v9325, 1.0
        %v9471 = vadd.f32 %v9327, 1.0
        %v9472 = vadd.f32 %v9329, 1.0
        %v9473 = vadd.f32 %v9331, 1.0
        %v9474 = vadd.f32 %v9333, 1.0
        %v9475 = vadd.f32 %v9335, 1.0
        %v9476 = vadd.f32 %v9337, 1.0
        %v9477 = vadd.f32 %v9339, 1.0
        %v9478 = vadd.f32 %v9341, 1.0
        %v9479 = vadd.f32 %v9343, 1.0
        %v9480 = vadd.f32 %v9345, 1.0
        %v9481 = vadd.f32 %v9347, 1.0
        %v9482 = vadd.f32 %v9349, 1.0
        %v9483 = vadd.f32 %v9351, 1.0
        %v9484 = vadd.f32 %v9353, 1.0
        %v9485 = vadd.f32 %v9355, 1.0
        %v9486 = vadd.f32 %v9357, 1.0
        %v9487 = vadd.f32 %v9359, 1.0
        %v9488 = vrcp.pop %v9360
        %v9489 = vrcp.pop %v9361
        %v9490 = vrcp.pop %v9362
        %v9491 = vrcp.pop %v9363
        %v9492 = vrcp.pop %v9364
        %v9493 = vrcp.pop %v9365
        %v9494 = vrcp.pop %v9366
        %v9495 = vrcp.pop %v9367
        %v9496 = vrcp.pop %v9368
        %v9497 = vrcp.pop %v9369
        %v9498 = vrcp.pop %v9370
        %v9499 = vrcp.pop %v9371
        %v9500 = vrcp.pop %v9372
        %v9501 = vrcp.pop %v9373
        %v9502 = vrcp.pop %v9374
        %v9503 = vrcp.pop %v9375
        %v9504 = vrcp.pop %v9376
        %v9505 = vrcp.pop %v9377
        %v9506 = vrcp.pop %v9378
        %v9507 = vrcp.pop %v9379
        %v9508 = vrcp.pop %v9380
        %v9509 = vrcp.pop %v9381
        %v9510 = vrcp.pop %v9382
        %v9511 = vrcp.pop %v9383
        %v9512 = vrcp.pop %v9384
        %v9513 = vrcp.pop %v9385
        %v9514 = vrcp.pop %v9386
        %v9515 = vrcp.pop %v9387
        %v9516 = vrcp.pop %v9388
        %v9517 = vrcp.pop %v9389
        %v9518 = vrcp.pop %v9390
        %v9519 = vrcp.pop %v9391
        %v9520 = vrcp.pop %v9392
        %v9521 = vrcp.pop %v9393
        %v9522 = vrcp.pop %v9394
        %v9523 = vrcp.pop %v9395
        %v9524 = vrcp.pop %v9396
        %v9525 = vrcp.pop %v9397
        %v9526 = vrcp.pop %v9398
        %v9527 = vrcp.pop %v9399
        %v9528 = vrcp.pop %v9400
        %v9529 = vrcp.pop %v9401
        %v9530 = vrcp.pop %v9402
        %v9531 = vrcp.pop %v9403
        %v9532 = vrcp.pop %v9404
        %v9533 = vrcp.pop %v9405
        %v9534 = vrcp.pop %v9406
        %v9535 = vrcp.pop %v9407
        %v9536 = vrcp.pop %v9408
        %v9537 = vrcp.pop %v9409
        %v9538 = vrcp.pop %v9410
        %v9539 = vrcp.pop %v9411
        %v9540 = vrcp.pop %v9412
        %v9541 = vrcp.pop %v9413
        %v9542 = vrcp.pop %v9414
        %v9543 = vrcp.pop %v9415
        %v9544 = vrcp.pop %v9416
        %v9545 = vrcp.pop %v9417
        %v9546 = vrcp.pop %v9418
        %v9547 = vrcp.pop %v9419
        %v9548 = vrcp.pop %v9420
        %v9549 = vrcp.pop %v9421
        %v9550 = vrcp.pop %v9422
        %v9551 = vrcp.pop %v9423
        %v9552 = vrcp.pop %v9424
        %v9553 = vrcp.pop %v9425
        %v9554 = vrcp.pop %v9426
        %v9555 = vrcp.pop %v9427
        %v9556 = vrcp.pop %v9428
        %v9557 = vrcp.pop %v9429
        %v9558 = vrcp.pop %v9430
        %v9559 = vrcp.pop %v9431
        %v9560 = vrcp.pop %v9432
        %v9561 = vrcp.pop %v9433
        %v9562 = vrcp.pop %v9434
        %v9563 = vrcp.pop %v9435
        %v9564 = vrcp.pop %v9436
        %v9565 = vrcp.pop %v9437
        %v9566 = vrcp.pop %v9438
        %v9567 = vrcp.pop %v9439
        %v9568 = vrcp.pop %v9440
        %v9569 = vrcp.pop %v9441
        %v9570 = vrcp.pop %v9442
        %v9571 = vrcp.pop %v9443
        %v9572 = vrcp.pop %v9444
        %v9573 = vrcp.pop %v9445
        %v9574 = vrcp.pop %v9446
        %v9575 = vrcp.pop %v9447
        %v9576 = vrcp.pop %v9448
        %v9577 = vrcp.pop %v9449
        %v9578 = vrcp.pop %v9450
        %v9579 = vrcp.pop %v9451
        %v9580 = vrcp.pop %v9452
        %v9581 = vrcp.pop %v9453
        %v9582 = vrcp.pop %v9454
        %v9583 = vrcp.pop %v9455
        %v9584 = vrcp.pop %v9456
        %v9585 = vrcp.pop %v9457
        %v9586 = vrcp.pop %v9458
        %v9587 = vrcp.pop %v9459
        %v9588 = vrcp.pop %v9460
        %v9589 = vrcp.pop %v9461
        %v9590 = vrcp.pop %v9462
        %v9591 = vrcp.pop %v9463
        %v9592 = vrcp.pop %v9464
        %v9593 = vrcp.pop %v9465
        %v9594 = vrcp.pop %v9466
        %v9595 = vrcp.pop %v9467
        %v9596 = vrcp.pop %v9468
        %v9597 = vrcp.pop %v9469
        %v9598 = vrcp.pop %v9470
        %v9599 = vrcp.pop %v9471
        %v9600 = vrcp.pop %v9472
        %v9601 = vrcp.pop %v9473
        %v9602 = vrcp.pop %v9474
        %v9603 = vrcp.pop %v9475
        %v9604 = vrcp.pop %v9476
        %v9605 = vrcp.pop %v9477
        %v9606 = vrcp.pop %v9478
        %v9607 = vrcp.pop %v9479
        %v9608 = vrcp.pop %v9480
        %v9609 = vrcp.pop %v9481
        %v9610 = vrcp.pop %v9482
        %v9611 = vrcp.pop %v9483
        %v9612 = vrcp.pop %v9484
        %v9613 = vrcp.pop %v9485
        %v9614 = vrcp.pop %v9486
        %v9615 = vrcp.pop %v9487
        %v9616 = vmul.f32 %v8848, %v9488
        %v9617 = vmul.f32 %v8849, %v9489
        %v9618 = vmul.f32 %v8850, %v9490
        %v9619 = vmul.f32 %v8851, %v9491
        %v9620 = vmul.f32 %v8852, %v9492
        %v9621 = vmul.f32 %v8853, %v9493
        %v9622 = vmul.f32 %v8854, %v9494
        %v9623 = vmul.f32 %v8855, %v9495
        %v9624 = vmul.f32 %v8856, %v9496
        %v9625 = vmul.f32 %v8857, %v9497
        %v9626 = vmul.f32 %v8858, %v9498
        %v9627 = vmul.f32 %v8859, %v9499
        %v9628 = vmul.f32 %v8860, %v9500
        %v9629 = vmul.f32 %v8861, %v9501
        %v9630 = vmul.f32 %v8862, %v9502
        %v9631 = vmul.f32 %v8863, %v9503
        %v9632 = vmul.f32 %v8864, %v9504
        %v9633 = vmul.f32 %v8865, %v9505
        %v9634 = vmul.f32 %v8866, %v9506
        %v9635 = vmul.f32 %v8867, %v9507
        %v9636 = vmul.f32 %v8868, %v9508
        %v9637 = vmul.f32 %v8869, %v9509
        %v9638 = vmul.f32 %v8870, %v9510
        %v9639 = vmul.f32 %v8871, %v9511
        %v9640 = vmul.f32 %v8872, %v9512
        %v9641 = vmul.f32 %v8873, %v9513
        %v9642 = vmul.f32 %v8874, %v9514
        %v9643 = vmul.f32 %v8875, %v9515
        %v9644 = vmul.f32 %v8876, %v9516
        %v9645 = vmul.f32 %v8877, %v9517
        %v9646 = vmul.f32 %v8878, %v9518
        %v9647 = vmul.f32 %v8879, %v9519
        %v9648 = vmul.f32 %v8880, %v9520
        %v9649 = vmul.f32 %v8881, %v9521
        %v9650 = vmul.f32 %v8882, %v9522
        %v9651 = vmul.f32 %v8883, %v9523
        %v9652 = vmul.f32 %v8884, %v9524
        %v9653 = vmul.f32 %v8885, %v9525
        %v9654 = vmul.f32 %v8886, %v9526
        %v9655 = vmul.f32 %v8887, %v9527
        %v9656 = vmul.f32 %v8888, %v9528
        %v9657 = vmul.f32 %v8889, %v9529
        %v9658 = vmul.f32 %v8890, %v9530
        %v9659 = vmul.f32 %v8891, %v9531
        %v9660 = vmul.f32 %v8892, %v9532
        %v9661 = vmul.f32 %v8893, %v9533
        %v9662 = vmul.f32 %v8894, %v9534
        %v9663 = vmul.f32 %v8895, %v9535
        %v9664 = vmul.f32 %v8896, %v9536
        %v9665 = vmul.f32 %v8897, %v9537
        %v9666 = vmul.f32 %v8898, %v9538
        %v9667 = vmul.f32 %v8899, %v9539
        %v9668 = vmul.f32 %v8900, %v9540
        %v9669 = vmul.f32 %v8901, %v9541
        %v9670 = vmul.f32 %v8902, %v9542
        %v9671 = vmul.f32 %v8903, %v9543
        %v9672 = vmul.f32 %v8904, %v9544
        %v9673 = vmul.f32 %v8905, %v9545
        %v9674 = vmul.f32 %v8906, %v9546
        %v9675 = vmul.f32 %v8907, %v9547
        %v9676 = vmul.f32 %v8908, %v9548
        %v9677 = vmul.f32 %v8909, %v9549
        %v9678 = vmul.f32 %v8910, %v9550
        %v9679 = vmul.f32 %v8911, %v9551
        %v9680 = vmul.f32 %v8912, %v9552
        %v9681 = vmul.f32 %v8913, %v9553
        %v9682 = vmul.f32 %v8914, %v9554
        %v9683 = vmul.f32 %v8915, %v9555
        %v9684 = vmul.f32 %v8916, %v9556
        %v9685 = vmul.f32 %v8917, %v9557
        %v9686 = vmul.f32 %v8918, %v9558
        %v9687 = vmul.f32 %v8919, %v9559
        %v9688 = vmul.f32 %v8920, %v9560
        %v9689 = vmul.f32 %v8921, %v9561
        %v9690 = vmul.f32 %v8922, %v9562
        %v9691 = vmul.f32 %v8923, %v9563
        %v9692 = vmul.f32 %v8924, %v9564
        %v9693 = vmul.f32 %v8925, %v9565
        %v9694 = vmul.f32 %v8926, %v9566
        %v9695 = vmul.f32 %v8927, %v9567
        %v9696 = vmul.f32 %v8928, %v9568
        %v9697 = vmul.f32 %v8929, %v9569
        %v9698 = vmul.f32 %v8930, %v9570
        %v9699 = vmul.f32 %v8931, %v9571
        %v9700 = vmul.f32 %v8932, %v9572
        %v9701 = vmul.f32 %v8933, %v9573
        %v9702 = vmul.f32 %v8934, %v9574
        %v9703 = vmul.f32 %v8935, %v9575
        %v9704 = vmul.f32 %v8936, %v9576
        %v9705 = vmul.f32 %v8937, %v9577
        %v9706 = vmul.f32 %v8938, %v9578
        %v9707 = vmul.f32 %v8939, %v9579
        %v9708 = vmul.f32 %v8940, %v9580
        %v9709 = vmul.f32 %v8941, %v9581
        %v9710 = vmul.f32 %v8942, %v9582
        %v9711 = vmul.f32 %v8943, %v9583
        %v9712 = vmul.f32 %v8944, %v9584
        %v9713 = vmul.f32 %v8945, %v9585
        %v9714 = vmul.f32 %v8946, %v9586
        %v9715 = vmul.f32 %v8947, %v9587
        %v9716 = vmul.f32 %v8948, %v9588
        %v9717 = vmul.f32 %v8949, %v9589
        %v9718 = vmul.f32 %v8950, %v9590
        %v9719 = vmul.f32 %v8951, %v9591
        %v9720 = vmul.f32 %v8952, %v9592
        %v9721 = vmul.f32 %v8953, %v9593
        %v9722 = vmul.f32 %v8954, %v9594
        %v9723 = vmul.f32 %v8955, %v9595
        %v9724 = vmul.f32 %v8956, %v9596
        %v9725 = vmul.f32 %v8957, %v9597
        %v9726 = vmul.f32 %v8958, %v9598
        %v9727 = vmul.f32 %v8959, %v9599
        %v9728 = vmul.f32 %v8960, %v9600
        %v9729 = vmul.f32 %v8961, %v9601
        %v9730 = vmul.f32 %v8962, %v9602
        %v9731 = vmul.f32 %v8963, %v9603
        %v9732 = vmul.f32 %v8964, %v9604
        %v9733 = vmul.f32 %v8965, %v9605
        %v9734 = vmul.f32 %v8966, %v9606
        %v9735 = vmul.f32 %v8967, %v9607
        %v9736 = vmul.f32 %v8968, %v9608
        %v9737 = vmul.f32 %v8969, %v9609
        %v9738 = vmul.f32 %v8970, %v9610
        %v9739 = vmul.f32 %v8971, %v9611
        %v9740 = vmul.f32 %v8972, %v9612
        %v9741 = vmul.f32 %v8973, %v9613
        %v9742 = vmul.f32 %v8974, %v9614
        %v9743 = vmul.f32 %v8975, %v9615
        %v9744 = vpack.c.bf16 %v9617, %v9616
        %v9745 = vpack.c.bf16 %v9619, %v9618
        %v9746 = vpack.c.bf16 %v9621, %v9620
        %v9747 = vpack.c.bf16 %v9623, %v9622
        %v9748 = vpack.c.bf16 %v9625, %v9624
        %v9749 = vpack.c.bf16 %v9627, %v9626
        %v9750 = vpack.c.bf16 %v9629, %v9628
        %v9751 = vpack.c.bf16 %v9631, %v9630
        %v9752 = vpack.c.bf16 %v9633, %v9632
        %v9753 = vpack.c.bf16 %v9635, %v9634
        %v9754 = vpack.c.bf16 %v9637, %v9636
        %v9755 = vpack.c.bf16 %v9639, %v9638
        %v9756 = vpack.c.bf16 %v9641, %v9640
        %v9757 = vpack.c.bf16 %v9643, %v9642
        %v9758 = vpack.c.bf16 %v9645, %v9644
        %v9759 = vpack.c.bf16 %v9647, %v9646
        %v9760 = vpack.c.bf16 %v9649, %v9648
        %v9761 = vpack.c.bf16 %v9651, %v9650
        %v9762 = vpack.c.bf16 %v9653, %v9652
        %v9763 = vpack.c.bf16 %v9655, %v9654
        %v9764 = vpack.c.bf16 %v9657, %v9656
        %v9765 = vpack.c.bf16 %v9659, %v9658
        %v9766 = vpack.c.bf16 %v9661, %v9660
        %v9767 = vpack.c.bf16 %v9663, %v9662
        %v9768 = vpack.c.bf16 %v9665, %v9664
        %v9769 = vpack.c.bf16 %v9667, %v9666
        %v9770 = vpack.c.bf16 %v9669, %v9668
        %v9771 = vpack.c.bf16 %v9671, %v9670
        %v9772 = vpack.c.bf16 %v9673, %v9672
        %v9773 = vpack.c.bf16 %v9675, %v9674
        %v9774 = vpack.c.bf16 %v9677, %v9676
        %v9775 = vpack.c.bf16 %v9679, %v9678
        %v9776 = vpack.c.bf16 %v9681, %v9680
        %v9777 = vpack.c.bf16 %v9683, %v9682
        %v9778 = vpack.c.bf16 %v9685, %v9684
        %v9779 = vpack.c.bf16 %v9687, %v9686
        %v9780 = vpack.c.bf16 %v9689, %v9688
        %v9781 = vpack.c.bf16 %v9691, %v9690
        %v9782 = vpack.c.bf16 %v9693, %v9692
        %v9783 = vpack.c.bf16 %v9695, %v9694
        %v9784 = vpack.c.bf16 %v9697, %v9696
        %v9785 = vpack.c.bf16 %v9699, %v9698
        %v9786 = vpack.c.bf16 %v9701, %v9700
        %v9787 = vpack.c.bf16 %v9703, %v9702
        %v9788 = vpack.c.bf16 %v9705, %v9704
        %v9789 = vpack.c.bf16 %v9707, %v9706
        %v9790 = vpack.c.bf16 %v9709, %v9708
        %v9791 = vpack.c.bf16 %v9711, %v9710
        %v9792 = vpack.c.bf16 %v9713, %v9712
        %v9793 = vpack.c.bf16 %v9715, %v9714
        %v9794 = vpack.c.bf16 %v9717, %v9716
        %v9795 = vpack.c.bf16 %v9719, %v9718
        %v9796 = vpack.c.bf16 %v9721, %v9720
        %v9797 = vpack.c.bf16 %v9723, %v9722
        %v9798 = vpack.c.bf16 %v9725, %v9724
        %v9799 = vpack.c.bf16 %v9727, %v9726
        %v9800 = vpack.c.bf16 %v9729, %v9728
        %v9801 = vpack.c.bf16 %v9731, %v9730
        %v9802 = vpack.c.bf16 %v9733, %v9732
        %v9803 = vpack.c.bf16 %v9735, %v9734
        %v9804 = vpack.c.bf16 %v9737, %v9736
        %v9805 = vpack.c.bf16 %v9739, %v9738
        %v9806 = vpack.c.bf16 %v9741, %v9740
        %v9807 = vpack.c.bf16 %v9743, %v9742
        %v9872 = vunpack.c.l.b16 %v9744
        %v9873 = vunpack.c.h.b16 %v9744
        %v9874 = vunpack.c.l.b16 %v9745
        %v9875 = vunpack.c.h.b16 %v9745
        %v9876 = vunpack.c.l.b16 %v9746
        %v9877 = vunpack.c.h.b16 %v9746
        %v9878 = vunpack.c.l.b16 %v9747
        %v9879 = vunpack.c.h.b16 %v9747
        %v9880 = vunpack.c.l.b16 %v9748
        %v9881 = vunpack.c.h.b16 %v9748
        %v9882 = vunpack.c.l.b16 %v9749
        %v9883 = vunpack.c.h.b16 %v9749
        %v9884 = vunpack.c.l.b16 %v9750
        %v9885 = vunpack.c.h.b16 %v9750
        %v9886 = vunpack.c.l.b16 %v9751
        %v9887 = vunpack.c.h.b16 %v9751
        %v9888 = vunpack.c.l.b16 %v9752
        %v9889 = vunpack.c.h.b16 %v9752
        %v9890 = vunpack.c.l.b16 %v9753
        %v9891 = vunpack.c.h.b16 %v9753
        %v9892 = vunpack.c.l.b16 %v9754
        %v9893 = vunpack.c.h.b16 %v9754
        %v9894 = vunpack.c.l.b16 %v9755
        %v9895 = vunpack.c.h.b16 %v9755
        %v9896 = vunpack.c.l.b16 %v9756
        %v9897 = vunpack.c.h.b16 %v9756
        %v9898 = vunpack.c.l.b16 %v9757
        %v9899 = vunpack.c.h.b16 %v9757
        %v9900 = vunpack.c.l.b16 %v9758
        %v9901 = vunpack.c.h.b16 %v9758
        %v9902 = vunpack.c.l.b16 %v9759
        %v9903 = vunpack.c.h.b16 %v9759
        %v9904 = vunpack.c.l.b16 %v9760
        %v9905 = vunpack.c.h.b16 %v9760
        %v9906 = vunpack.c.l.b16 %v9761
        %v9907 = vunpack.c.h.b16 %v9761
        %v9908 = vunpack.c.l.b16 %v9762
        %v9909 = vunpack.c.h.b16 %v9762
        %v9910 = vunpack.c.l.b16 %v9763
        %v9911 = vunpack.c.h.b16 %v9763
        %v9912 = vunpack.c.l.b16 %v9764
        %v9913 = vunpack.c.h.b16 %v9764
        %v9914 = vunpack.c.l.b16 %v9765
        %v9915 = vunpack.c.h.b16 %v9765
        %v9916 = vunpack.c.l.b16 %v9766
        %v9917 = vunpack.c.h.b16 %v9766
        %v9918 = vunpack.c.l.b16 %v9767
        %v9919 = vunpack.c.h.b16 %v9767
        %v9920 = vunpack.c.l.b16 %v9768
        %v9921 = vunpack.c.h.b16 %v9768
        %v9922 = vunpack.c.l.b16 %v9769
        %v9923 = vunpack.c.h.b16 %v9769
        %v9924 = vunpack.c.l.b16 %v9770
        %v9925 = vunpack.c.h.b16 %v9770
        %v9926 = vunpack.c.l.b16 %v9771
        %v9927 = vunpack.c.h.b16 %v9771
        %v9928 = vunpack.c.l.b16 %v9772
        %v9929 = vunpack.c.h.b16 %v9772
        %v9930 = vunpack.c.l.b16 %v9773
        %v9931 = vunpack.c.h.b16 %v9773
        %v9932 = vunpack.c.l.b16 %v9774
        %v9933 = vunpack.c.h.b16 %v9774
        %v9934 = vunpack.c.l.b16 %v9775
        %v9935 = vunpack.c.h.b16 %v9775
        %v9936 = vunpack.c.l.b16 %v9776
        %v9937 = vunpack.c.h.b16 %v9776
        %v9938 = vunpack.c.l.b16 %v9777
        %v9939 = vunpack.c.h.b16 %v9777
        %v9940 = vunpack.c.l.b16 %v9778
        %v9941 = vunpack.c.h.b16 %v9778
        %v9942 = vunpack.c.l.b16 %v9779
        %v9943 = vunpack.c.h.b16 %v9779
        %v9944 = vunpack.c.l.b16 %v9780
        %v9945 = vunpack.c.h.b16 %v9780
        %v9946 = vunpack.c.l.b16 %v9781
        %v9947 = vunpack.c.h.b16 %v9781
        %v9948 = vunpack.c.l.b16 %v9782
        %v9949 = vunpack.c.h.b16 %v9782
        %v9950 = vunpack.c.l.b16 %v9783
        %v9951 = vunpack.c.h.b16 %v9783
        %v9952 = vunpack.c.l.b16 %v9784
        %v9953 = vunpack.c.h.b16 %v9784
        %v9954 = vunpack.c.l.b16 %v9785
        %v9955 = vunpack.c.h.b16 %v9785
        %v9956 = vunpack.c.l.b16 %v9786
        %v9957 = vunpack.c.h.b16 %v9786
        %v9958 = vunpack.c.l.b16 %v9787
        %v9959 = vunpack.c.h.b16 %v9787
        %v9960 = vunpack.c.l.b16 %v9788
        %v9961 = vunpack.c.h.b16 %v9788
        %v9962 = vunpack.c.l.b16 %v9789
        %v9963 = vunpack.c.h.b16 %v9789
        %v9964 = vunpack.c.l.b16 %v9790
        %v9965 = vunpack.c.h.b16 %v9790
        %v9966 = vunpack.c.l.b16 %v9791
        %v9967 = vunpack.c.h.b16 %v9791
        %v9968 = vunpack.c.l.b16 %v9792
        %v9969 = vunpack.c.h.b16 %v9792
        %v9970 = vunpack.c.l.b16 %v9793
        %v9971 = vunpack.c.h.b16 %v9793
        %v9972 = vunpack.c.l.b16 %v9794
        %v9973 = vunpack.c.h.b16 %v9794
        %v9974 = vunpack.c.l.b16 %v9795
        %v9975 = vunpack.c.h.b16 %v9795
        %v9976 = vunpack.c.l.b16 %v9796
        %v9977 = vunpack.c.h.b16 %v9796
        %v9978 = vunpack.c.l.b16 %v9797
        %v9979 = vunpack.c.h.b16 %v9797
        %v9980 = vunpack.c.l.b16 %v9798
        %v9981 = vunpack.c.h.b16 %v9798
        %v9982 = vunpack.c.l.b16 %v9799
        %v9983 = vunpack.c.h.b16 %v9799
        %v9984 = vunpack.c.l.b16 %v9800
        %v9985 = vunpack.c.h.b16 %v9800
        %v9986 = vunpack.c.l.b16 %v9801
        %v9987 = vunpack.c.h.b16 %v9801
        %v9988 = vunpack.c.l.b16 %v9802
        %v9989 = vunpack.c.h.b16 %v9802
        %v9990 = vunpack.c.l.b16 %v9803
        %v9991 = vunpack.c.h.b16 %v9803
        %v9992 = vunpack.c.l.b16 %v9804
        %v9993 = vunpack.c.h.b16 %v9804
        %v9994 = vunpack.c.l.b16 %v9805
        %v9995 = vunpack.c.h.b16 %v9805
        %v9996 = vunpack.c.l.b16 %v9806
        %v9997 = vunpack.c.h.b16 %v9806
        %v9998 = vunpack.c.l.b16 %v9807
        %v9999 = vunpack.c.h.b16 %v9807
        %v10000 = vpack.c.b16 %v9872, %v9872
        %v10001 = vpack.c.b16 %v9873, %v9873
        %v10002 = vpack.c.b16 %v9874, %v9874
        %v10003 = vpack.c.b16 %v9875, %v9875
        %v10004 = vpack.c.b16 %v9876, %v9876
        %v10005 = vpack.c.b16 %v9877, %v9877
        %v10006 = vpack.c.b16 %v9878, %v9878
        %v10007 = vpack.c.b16 %v9879, %v9879
        %v10008 = vpack.c.b16 %v9880, %v9880
        %v10009 = vpack.c.b16 %v9881, %v9881
        %v10010 = vpack.c.b16 %v9882, %v9882
        %v10011 = vpack.c.b16 %v9883, %v9883
        %v10012 = vpack.c.b16 %v9884, %v9884
        %v10013 = vpack.c.b16 %v9885, %v9885
        %v10014 = vpack.c.b16 %v9886, %v9886
        %v10015 = vpack.c.b16 %v9887, %v9887
        %v10016 = vpack.c.b16 %v9888, %v9888
        %v10017 = vpack.c.b16 %v9889, %v9889
        %v10018 = vpack.c.b16 %v9890, %v9890
        %v10019 = vpack.c.b16 %v9891, %v9891
        %v10020 = vpack.c.b16 %v9892, %v9892
        %v10021 = vpack.c.b16 %v9893, %v9893
        %v10022 = vpack.c.b16 %v9894, %v9894
        %v10023 = vpack.c.b16 %v9895, %v9895
        %v10024 = vpack.c.b16 %v9896, %v9896
        %v10025 = vpack.c.b16 %v9897, %v9897
        %v10026 = vpack.c.b16 %v9898, %v9898
        %v10027 = vpack.c.b16 %v9899, %v9899
        %v10028 = vpack.c.b16 %v9900, %v9900
        %v10029 = vpack.c.b16 %v9901, %v9901
        %v10030 = vpack.c.b16 %v9902, %v9902
        %v10031 = vpack.c.b16 %v9903, %v9903
        %v10032 = vpack.c.b16 %v9904, %v9904
        %v10033 = vpack.c.b16 %v9905, %v9905
        %v10034 = vpack.c.b16 %v9906, %v9906
        %v10035 = vpack.c.b16 %v9907, %v9907
        %v10036 = vpack.c.b16 %v9908, %v9908
        %v10037 = vpack.c.b16 %v9909, %v9909
        %v10038 = vpack.c.b16 %v9910, %v9910
        %v10039 = vpack.c.b16 %v9911, %v9911
        %v10040 = vpack.c.b16 %v9912, %v9912
        %v10041 = vpack.c.b16 %v9913, %v9913
        %v10042 = vpack.c.b16 %v9914, %v9914
        %v10043 = vpack.c.b16 %v9915, %v9915
        %v10044 = vpack.c.b16 %v9916, %v9916
        %v10045 = vpack.c.b16 %v9917, %v9917
        %v10046 = vpack.c.b16 %v9918, %v9918
        %v10047 = vpack.c.b16 %v9919, %v9919
        %v10048 = vpack.c.b16 %v9920, %v9920
        %v10049 = vpack.c.b16 %v9921, %v9921
        %v10050 = vpack.c.b16 %v9922, %v9922
        %v10051 = vpack.c.b16 %v9923, %v9923
        %v10052 = vpack.c.b16 %v9924, %v9924
        %v10053 = vpack.c.b16 %v9925, %v9925
        %v10054 = vpack.c.b16 %v9926, %v9926
        %v10055 = vpack.c.b16 %v9927, %v9927
        %v10056 = vpack.c.b16 %v9928, %v9928
        %v10057 = vpack.c.b16 %v9929, %v9929
        %v10058 = vpack.c.b16 %v9930, %v9930
        %v10059 = vpack.c.b16 %v9931, %v9931
        %v10060 = vpack.c.b16 %v9932, %v9932
        %v10061 = vpack.c.b16 %v9933, %v9933
        %v10062 = vpack.c.b16 %v9934, %v9934
        %v10063 = vpack.c.b16 %v9935, %v9935
        %v10064 = vpack.c.b16 %v9936, %v9936
        %v10065 = vpack.c.b16 %v9937, %v9937
        %v10066 = vpack.c.b16 %v9938, %v9938
        %v10067 = vpack.c.b16 %v9939, %v9939
        %v10068 = vpack.c.b16 %v9940, %v9940
        %v10069 = vpack.c.b16 %v9941, %v9941
        %v10070 = vpack.c.b16 %v9942, %v9942
        %v10071 = vpack.c.b16 %v9943, %v9943
        %v10072 = vpack.c.b16 %v9944, %v9944
        %v10073 = vpack.c.b16 %v9945, %v9945
        %v10074 = vpack.c.b16 %v9946, %v9946
        %v10075 = vpack.c.b16 %v9947, %v9947
        %v10076 = vpack.c.b16 %v9948, %v9948
        %v10077 = vpack.c.b16 %v9949, %v9949
        %v10078 = vpack.c.b16 %v9950, %v9950
        %v10079 = vpack.c.b16 %v9951, %v9951
        %v10080 = vpack.c.b16 %v9952, %v9952
        %v10081 = vpack.c.b16 %v9953, %v9953
        %v10082 = vpack.c.b16 %v9954, %v9954
        %v10083 = vpack.c.b16 %v9955, %v9955
        %v10084 = vpack.c.b16 %v9956, %v9956
        %v10085 = vpack.c.b16 %v9957, %v9957
        %v10086 = vpack.c.b16 %v9958, %v9958
        %v10087 = vpack.c.b16 %v9959, %v9959
        %v10088 = vpack.c.b16 %v9960, %v9960
        %v10089 = vpack.c.b16 %v9961, %v9961
        %v10090 = vpack.c.b16 %v9962, %v9962
        %v10091 = vpack.c.b16 %v9963, %v9963
        %v10092 = vpack.c.b16 %v9964, %v9964
        %v10093 = vpack.c.b16 %v9965, %v9965
        %v10094 = vpack.c.b16 %v9966, %v9966
        %v10095 = vpack.c.b16 %v9967, %v9967
        %v10096 = vpack.c.b16 %v9968, %v9968
        %v10097 = vpack.c.b16 %v9969, %v9969
        %v10098 = vpack.c.b16 %v9970, %v9970
        %v10099 = vpack.c.b16 %v9971, %v9971
        %v10100 = vpack.c.b16 %v9972, %v9972
        %v10101 = vpack.c.b16 %v9973, %v9973
        %v10102 = vpack.c.b16 %v9974, %v9974
        %v10103 = vpack.c.b16 %v9975, %v9975
        %v10104 = vpack.c.b16 %v9976, %v9976
        %v10105 = vpack.c.b16 %v9977, %v9977
        %v10106 = vpack.c.b16 %v9978, %v9978
        %v10107 = vpack.c.b16 %v9979, %v9979
        %v10108 = vpack.c.b16 %v9980, %v9980
        %v10109 = vpack.c.b16 %v9981, %v9981
        %v10110 = vpack.c.b16 %v9982, %v9982
        %v10111 = vpack.c.b16 %v9983, %v9983
        %v10112 = vpack.c.b16 %v9984, %v9984
        %v10113 = vpack.c.b16 %v9985, %v9985
        %v10114 = vpack.c.b16 %v9986, %v9986
        %v10115 = vpack.c.b16 %v9987, %v9987
        %v10116 = vpack.c.b16 %v9988, %v9988
        %v10117 = vpack.c.b16 %v9989, %v9989
        %v10118 = vpack.c.b16 %v9990, %v9990
        %v10119 = vpack.c.b16 %v9991, %v9991
        %v10120 = vpack.c.b16 %v9992, %v9992
        %v10121 = vpack.c.b16 %v9993, %v9993
        %v10122 = vpack.c.b16 %v9994, %v9994
        %v10123 = vpack.c.b16 %v9995, %v9995
        %v10124 = vpack.c.b16 %v9996, %v9996
        %v10125 = vpack.c.b16 %v9997, %v9997
        %v10126 = vpack.c.b16 %v9998, %v9998
        %v10127 = vpack.c.b16 %v9999, %v9999
        %10256 = vst [vmem:[%s737] sm:$0xf] %v10000
        %10257 = vst [vmem:[%s737 + $0x4] sm:$0xf] %v10001
        %10258 = vst [vmem:[%s737 + $0x8] sm:$0xf] %v10002
        %10259 = vst [vmem:[%s737 + $0xc] sm:$0xf] %v10003
        %10260 = vst [vmem:[%s737 + $0x10] sm:$0xf] %v10004
        %10261 = vst [vmem:[%s737 + $0x14] sm:$0xf] %v10005
        %10262 = vst [vmem:[%s737 + $0x18] sm:$0xf] %v10006
        %10263 = vst [vmem:[%s737 + $0x1c] sm:$0xf] %v10007
        %10264 = vst [vmem:[%s737 + $0x20] sm:$0xf] %v10008
        %10265 = vst [vmem:[%s737 + $0x24] sm:$0xf] %v10009
        %10266 = vst [vmem:[%s737 + $0x28] sm:$0xf] %v10010
        %10267 = vst [vmem:[%s737 + $0x2c] sm:$0xf] %v10011
        %10268 = vst [vmem:[%s737 + $0x30] sm:$0xf] %v10012
        %10269 = vst [vmem:[%s737 + $0x34] sm:$0xf] %v10013
        %10270 = vst [vmem:[%s737 + $0x38] sm:$0xf] %v10014
        %10271 = vst [vmem:[%s737 + $0x3c] sm:$0xf] %v10015
        %10272 = vst [vmem:[%s737 + $0x40] sm:$0xf] %v10016
        %10273 = vst [vmem:[%s737 + $0x44] sm:$0xf] %v10017
        %10274 = vst [vmem:[%s737 + $0x48] sm:$0xf] %v10018
        %10275 = vst [vmem:[%s737 + $0x4c] sm:$0xf] %v10019
        %10276 = vst [vmem:[%s737 + $0x50] sm:$0xf] %v10020
        %10277 = vst [vmem:[%s737 + $0x54] sm:$0xf] %v10021
        %10278 = vst [vmem:[%s737 + $0x58] sm:$0xf] %v10022
        %10279 = vst [vmem:[%s737 + $0x5c] sm:$0xf] %v10023
        %10280 = vst [vmem:[%s737 + $0x60] sm:$0xf] %v10024
        %10281 = vst [vmem:[%s737 + $0x64] sm:$0xf] %v10025
        %10282 = vst [vmem:[%s737 + $0x68] sm:$0xf] %v10026
        %10283 = vst [vmem:[%s737 + $0x6c] sm:$0xf] %v10027
        %10284 = vst [vmem:[%s737 + $0x70] sm:$0xf] %v10028
        %10285 = vst [vmem:[%s737 + $0x74] sm:$0xf] %v10029
        %10286 = vst [vmem:[%s737 + $0x78] sm:$0xf] %v10030
        %10287 = vst [vmem:[%s737 + $0x7c] sm:$0xf] %v10031
        %10288 = vst [vmem:[%s737 + $0x80] sm:$0xf] %v10032
        %10289 = vst [vmem:[%s737 + $0x84] sm:$0xf] %v10033
        %10290 = vst [vmem:[%s737 + $0x88] sm:$0xf] %v10034
        %10291 = vst [vmem:[%s737 + $0x8c] sm:$0xf] %v10035
        %10292 = vst [vmem:[%s737 + $0x90] sm:$0xf] %v10036
        %10293 = vst [vmem:[%s737 + $0x94] sm:$0xf] %v10037
        %10294 = vst [vmem:[%s737 + $0x98] sm:$0xf] %v10038
        %10295 = vst [vmem:[%s737 + $0x9c] sm:$0xf] %v10039
        %10296 = vst [vmem:[%s737 + $0xa0] sm:$0xf] %v10040
        %10297 = vst [vmem:[%s737 + $0xa4] sm:$0xf] %v10041
        %10298 = vst [vmem:[%s737 + $0xa8] sm:$0xf] %v10042
        %10299 = vst [vmem:[%s737 + $0xac] sm:$0xf] %v10043
        %10300 = vst [vmem:[%s737 + $0xb0] sm:$0xf] %v10044
        %10301 = vst [vmem:[%s737 + $0xb4] sm:$0xf] %v10045
        %10302 = vst [vmem:[%s737 + $0xb8] sm:$0xf] %v10046
        %10303 = vst [vmem:[%s737 + $0xbc] sm:$0xf] %v10047
        %10304 = vst [vmem:[%s737 + $0xc0] sm:$0xf] %v10048
        %10305 = vst [vmem:[%s737 + $0xc4] sm:$0xf] %v10049
        %10306 = vst [vmem:[%s737 + $0xc8] sm:$0xf] %v10050
        %10307 = vst [vmem:[%s737 + $0xcc] sm:$0xf] %v10051
        %10308 = vst [vmem:[%s737 + $0xd0] sm:$0xf] %v10052
        %10309 = vst [vmem:[%s737 + $0xd4] sm:$0xf] %v10053
        %10310 = vst [vmem:[%s737 + $0xd8] sm:$0xf] %v10054
        %10311 = vst [vmem:[%s737 + $0xdc] sm:$0xf] %v10055
        %10312 = vst [vmem:[%s737 + $0xe0] sm:$0xf] %v10056
        %10313 = vst [vmem:[%s737 + $0xe4] sm:$0xf] %v10057
        %10314 = vst [vmem:[%s737 + $0xe8] sm:$0xf] %v10058
        %10315 = vst [vmem:[%s737 + $0xec] sm:$0xf] %v10059
        %10316 = vst [vmem:[%s737 + $0xf0] sm:$0xf] %v10060
        %10317 = vst [vmem:[%s737 + $0xf4] sm:$0xf] %v10061
        %10318 = vst [vmem:[%s737 + $0xf8] sm:$0xf] %v10062
        %10319 = vst [vmem:[%s737 + $0xfc] sm:$0xf] %v10063
        %10320 = vst [vmem:[%s737 + $0x100] sm:$0xf] %v10064
        %10321 = vst [vmem:[%s737 + $0x104] sm:$0xf] %v10065
        %10322 = vst [vmem:[%s737 + $0x108] sm:$0xf] %v10066
        %10323 = vst [vmem:[%s737 + $0x10c] sm:$0xf] %v10067
        %10324 = vst [vmem:[%s737 + $0x110] sm:$0xf] %v10068
        %10325 = vst [vmem:[%s737 + $0x114] sm:$0xf] %v10069
        %10326 = vst [vmem:[%s737 + $0x118] sm:$0xf] %v10070
        %10327 = vst [vmem:[%s737 + $0x11c] sm:$0xf] %v10071
        %10328 = vst [vmem:[%s737 + $0x120] sm:$0xf] %v10072
        %10329 = vst [vmem:[%s737 + $0x124] sm:$0xf] %v10073
        %10330 = vst [vmem:[%s737 + $0x128] sm:$0xf] %v10074
        %10331 = vst [vmem:[%s737 + $0x12c] sm:$0xf] %v10075
        %10332 = vst [vmem:[%s737 + $0x130] sm:$0xf] %v10076
        %10333 = vst [vmem:[%s737 + $0x134] sm:$0xf] %v10077
        %10334 = vst [vmem:[%s737 + $0x138] sm:$0xf] %v10078
        %10335 = vst [vmem:[%s737 + $0x13c] sm:$0xf] %v10079
        %10336 = vst [vmem:[%s737 + $0x140] sm:$0xf] %v10080
        %10337 = vst [vmem:[%s737 + $0x144] sm:$0xf] %v10081
        %10338 = vst [vmem:[%s737 + $0x148] sm:$0xf] %v10082
        %10339 = vst [vmem:[%s737 + $0x14c] sm:$0xf] %v10083
        %10340 = vst [vmem:[%s737 + $0x150] sm:$0xf] %v10084
        %10341 = vst [vmem:[%s737 + $0x154] sm:$0xf] %v10085
        %10342 = vst [vmem:[%s737 + $0x158] sm:$0xf] %v10086
        %10343 = vst [vmem:[%s737 + $0x15c] sm:$0xf] %v10087
        %10344 = vst [vmem:[%s737 + $0x160] sm:$0xf] %v10088
        %10345 = vst [vmem:[%s737 + $0x164] sm:$0xf] %v10089
        %10346 = vst [vmem:[%s737 + $0x168] sm:$0xf] %v10090
        %10347 = vst [vmem:[%s737 + $0x16c] sm:$0xf] %v10091
        %10348 = vst [vmem:[%s737 + $0x170] sm:$0xf] %v10092
        %10349 = vst [vmem:[%s737 + $0x174] sm:$0xf] %v10093
        %10350 = vst [vmem:[%s737 + $0x178] sm:$0xf] %v10094
        %10351 = vst [vmem:[%s737 + $0x17c] sm:$0xf] %v10095
        %10352 = vst [vmem:[%s737 + $0x180] sm:$0xf] %v10096
        %10353 = vst [vmem:[%s737 + $0x184] sm:$0xf] %v10097
        %10354 = vst [vmem:[%s737 + $0x188] sm:$0xf] %v10098
        %10355 = vst [vmem:[%s737 + $0x18c] sm:$0xf] %v10099
        %10356 = vst [vmem:[%s737 + $0x190] sm:$0xf] %v10100
        %10357 = vst [vmem:[%s737 + $0x194] sm:$0xf] %v10101
        %10358 = vst [vmem:[%s737 + $0x198] sm:$0xf] %v10102
        %10359 = vst [vmem:[%s737 + $0x19c] sm:$0xf] %v10103
        %10360 = vst [vmem:[%s737 + $0x1a0] sm:$0xf] %v10104
        %10361 = vst [vmem:[%s737 + $0x1a4] sm:$0xf] %v10105
        %10362 = vst [vmem:[%s737 + $0x1a8] sm:$0xf] %v10106
        %10363 = vst [vmem:[%s737 + $0x1ac] sm:$0xf] %v10107
        %10364 = vst [vmem:[%s737 + $0x1b0] sm:$0xf] %v10108
        %10365 = vst [vmem:[%s737 + $0x1b4] sm:$0xf] %v10109
        %10366 = vst [vmem:[%s737 + $0x1b8] sm:$0xf] %v10110
        %10367 = vst [vmem:[%s737 + $0x1bc] sm:$0xf] %v10111
        %10368 = vst [vmem:[%s737 + $0x1c0] sm:$0xf] %v10112
        %10369 = vst [vmem:[%s737 + $0x1c4] sm:$0xf] %v10113
        %10370 = vst [vmem:[%s737 + $0x1c8] sm:$0xf] %v10114
        %10371 = vst [vmem:[%s737 + $0x1cc] sm:$0xf] %v10115
        %10372 = vst [vmem:[%s737 + $0x1d0] sm:$0xf] %v10116
        %10373 = vst [vmem:[%s737 + $0x1d4] sm:$0xf] %v10117
        %10374 = vst [vmem:[%s737 + $0x1d8] sm:$0xf] %v10118
        %10375 = vst [vmem:[%s737 + $0x1dc] sm:$0xf] %v10119
        %10376 = vst [vmem:[%s737 + $0x1e0] sm:$0xf] %v10120
        %10377 = vst [vmem:[%s737 + $0x1e4] sm:$0xf] %v10121
        %10378 = vst [vmem:[%s737 + $0x1e8] sm:$0xf] %v10122
        %10379 = vst [vmem:[%s737 + $0x1ec] sm:$0xf] %v10123
        %10380 = vst [vmem:[%s737 + $0x1f0] sm:$0xf] %v10124
        %10381 = vst [vmem:[%s737 + $0x1f4] sm:$0xf] %v10125
        %10382 = vst [vmem:[%s737 + $0x1f8] sm:$0xf] %v10126
        %10383 = vst [vmem:[%s737 + $0x1fc] sm:$0xf] %v10127
        %s10384 = sand.u32 %s390, 1
        %s10385 = scalar_lea.sflag [#allocation4], %s10384
        %s10386 = sand.u32 %s390, 1
        %s10387 = smul.addr %s10386, 512
        %s10388 = scalar_lea.vmem [#allocation28], %s10387
        // Predicated region
        $region149: #{tpu_custom_call.1} parent=83 // pred_check
          %p10389 = pneg %p400
        $region150: #{tpu_custom_call.1} parent=83 // pred_check_branch
          %10391 = sbr.rel (%p10389) target = $region152
        $region151: #{tpu_custom_call.1} parent=83 // pred_region
          %s10392 = smul.u32 128, %s41
          %s10394 = ssub.s32 8192, 8192
          %10395 = vsyncadd %s10385, %s10394
          %s10396 = smul.addr %s10392, 64
          %s10397 = scalar_lea.hbm %s16, %s10396
          %s10398 = sshll.u32 %s10388, 4
          %s10399 = int_to_ptr.vmem [resolvable:$true] %s10398
          %10404 = dma.vmem_to_hbm [thread:$0]  %s10399, 8192, %s10397, %s10385, 64, 64, 4
        $region152: #{tpu_custom_call.1} parent=83 // pred_fallthru
          _
      $region84: #{tpu_custom_call.1} parent=5 // pred_fallthru
        _
      %p10405 = scmp.le.s32.totalorder 2, %s36
      // Predicated region
      $region153: #{tpu_custom_call.1} parent=5 // pred_check
        %p10406 = pneg %p10405
      $region154: #{tpu_custom_call.1} parent=5 // pred_check_branch
        %10408 = sbr.rel (%p10406) target = $region156
      $region155: #{tpu_custom_call.1} parent=5 // pred_region
        %s10409 = ssub.s32 %s36, 2
        // Predicated region
        $region157: #{tpu_custom_call.1} parent=155 // pred_check
          %p10410 = pneg %p406
        $region158: #{tpu_custom_call.1} parent=155 // pred_check_branch
          %10412 = sbr.rel (%p10410) target = $region160
        $region159: #{tpu_custom_call.1} parent=155 // pred_region
          %s10413 = sand.u32 %s391, 1
          %s10414 = scalar_lea.sflag [#allocation4], %s10413
          %s10415 = sand.u32 %s391, 1
          %s10416 = smul.addr %s10415, 512
          %s10417 = scalar_lea.vmem [#allocation28], %s10416
          %10418 = dma.done %s10414, 8192
        $region160: #{tpu_custom_call.1} parent=155 // pred_fallthru
          _
      $region156: #{tpu_custom_call.1} parent=5 // pred_fallthru
        _
    $region6: #{tpu_custom_call.1} parent=1 // loop_footer
      %s40 = sadd.s32 1, %s36
    $region7: #{tpu_custom_call.1} parent=1 // loop_footer_branch
      %35 = sbr.rel target = $region3
    $region8: #{tpu_custom_call.1} parent=1 // loop_exit
      _
    %10419 = vsyncpa [#allocation3], 1
    %s10420 = scalar_lea.sflag [#allocation3], 1
    %10421 = vsyncpa %s10420, 1
    %10422 = vsyncpa [#allocation6], 1
    %10423 = vsyncpa [#allocation9], 1
    %10424 = vsyncpa [#allocation12], 1
    %10425 = vsyncpa [#allocation15], 1
    %10426 = vsyncpa [#allocation18], 1
    %10427 = vsyncpa [#allocation21], 1
    %10428 = vsyncpa [#allocation24], 1
    %10429 = vsyncpa [#allocation27], 1
    %10430 = vsyncpa [#allocation4], 1
    %s10431 = scalar_lea.sflag [#allocation4], 1
    %10432 = vsyncpa %s10431, 1

</llo_original>
